<compile_context>
chip_gen: v7x
topology: tpu7x:2x2x1
jax: 0.10.0
libtpu: 0.0.40
codegen_flags: <defaults>
</compile_context>

<pallas_src>
import numpy as np

import jax
import jax.numpy as jnp
from jax.experimental import pallas as pl
from jax.experimental.pallas import tpu as pltpu

TB = 8  # batch tile handled per grid step


# ----------------------------------------------------------------------------
# Fused forward kernel
# ----------------------------------------------------------------------------
def _lenet_fused_kernel(xp_ref, t1e_ref, t1o_ref, b1_ref,
                        t2e_ref, t2o_ref, b2_ref,
                        w0_ref, b0_ref, w1_ref, b1f_ref, w2_ref, b2f_ref,
                        o_ref, r1_s, r2_s):
    f32 = jnp.float32
    tb = xp_ref.shape[0]
    xp = xp_ref[...]                                   # (tb, 36, 32) padded input

    # ---- conv1 (5x5, pad=2) + bias + ReLU + 2x2 maxpool ---------------------
    # Even / odd output columns via Toeplitz-packed weights, so the horizontal
    # half of the pool is an elementwise max.  Output rows h = 0..31
    # (rows 28..31 are never consumed downstream).
    y1e = jnp.zeros((tb * 32, 128), f32)
    y1o = jnp.zeros((tb * 32, 128), f32)
    for di in range(5):
        a = xp[:, di:di + 32, :].reshape(tb * 32, 32)
        y1e = y1e + jnp.dot(a, t1e_ref[di], preferred_element_type=f32)
        y1o = y1o + jnp.dot(a, t1o_ref[di], preferred_element_type=f32)
    r1_s[...] = jnp.maximum(jnp.maximum(y1e, y1o) + b1_ref[...], 0.0)
    # Vertical half of the pool: stride-2 sublane reads from VMEM scratch.
    p1 = jnp.maximum(r1_s[pl.ds(0, tb * 16, stride=2), :],
                     r1_s[pl.ds(1, tb * 16, stride=2), :])        # (tb*16, 128)
    p1 = p1.reshape(tb, 16, 128)
    p1 = jnp.concatenate([p1, jnp.zeros((tb, 8, 128), f32)], axis=1)  # zero halo

    # ---- conv2 (5x5, valid) + bias + ReLU + 2x2 maxpool ---------------------
    y2e = jnp.zeros((tb * 16, 128), f32)
    y2o = jnp.zeros((tb * 16, 128), f32)
    for di in range(5):
        a = p1[:, di:di + 16, :].reshape(tb * 16, 128)
        y2e = y2e + jnp.dot(a, t2e_ref[di], preferred_element_type=f32)
        y2o = y2o + jnp.dot(a, t2o_ref[di], preferred_element_type=f32)
    r2_s[...] = jnp.maximum(jnp.maximum(y2e, y2o) + b2_ref[...], 0.0)
    p2 = jnp.maximum(r2_s[pl.ds(0, tb * 8, stride=2), :],
                     r2_s[pl.ds(1, tb * 8, stride=2), :])         # (tb*8, 128)
    p2 = p2.reshape(tb, 8, 128)                                   # rows 5..7 junk

    # ---- fc(400->120)+ReLU -> fc1(120->84)+ReLU -> fc2(84->10) --------------
    # The NCHW flatten is folded into the row order of w0; all feature dims are
    # zero-padded to 128 so every store / matmul is lane-dense.
    z = jnp.zeros((tb, 128), f32)
    for hp in range(5):
        z = z + jnp.dot(p2[:, hp, :], w0_ref[hp], preferred_element_type=f32)
    z = jnp.maximum(z + b0_ref[...], 0.0)
    z = jnp.maximum(jnp.dot(z, w1_ref[...], preferred_element_type=f32)
                    + b1f_ref[...], 0.0)
    z = jnp.dot(z, w2_ref[...], preferred_element_type=f32) + b2f_ref[...]
    o_ref[...] = z                                                # (tb, 128)


# ----------------------------------------------------------------------------
# One-time weight repacking (torch layout -> lane-dense, MXU-ready matrices)
# ----------------------------------------------------------------------------
def pack_params(params):
    f32 = jnp.float32
    w1, b1 = params["w1"], params["b1"]       # (6,1,5,5), (6,)
    w2, b2 = params["w2"], params["b2"]       # (16,6,5,5), (16,)
    wf0, bf0 = params["wf0"], params["bf0"]   # (400,120), (120,)
    wf1, bf1 = params["wf1"], params["bf1"]   # (120,84), (84,)
    wf2, bf2 = params["wf2"], params["bf2"]   # (84,10), (10,)

    # conv1: per row-offset di, a (32,128) matrix mapping the 32 padded input
    # columns to lanes (oc*14 + pooled_col), separately for even/odd columns.
    oc, t, dj = np.meshgrid(np.arange(6), np.arange(14), np.arange(5),
                            indexing="ij")
    cols = (oc * 14 + t).ravel()
    rows_e = (2 * t + dj).ravel()
    rows_o = (2 * t + 1 + dj).ravel()
    t1e = jnp.zeros((5, 32, 128), f32)
    t1o = jnp.zeros((5, 32, 128), f32)
    for di in range(5):
        vals = w1[oc.ravel(), 0, di, dj.ravel()].astype(f32)
        t1e = t1e.at[di, rows_e, cols].set(vals)
        t1o = t1o.at[di, rows_o, cols].set(vals)
    occ, tt = np.meshgrid(np.arange(6), np.arange(14), indexing="ij")
    b1r = jnp.zeros((1, 128), f32).at[0, (occ * 14 + tt).ravel()].set(
        b1[occ.ravel()].astype(f32))

    # conv2: per row-offset di, a (128,128) matrix mapping lanes (ic*14 + col)
    # of the pooled layer-1 output to lanes (oc2*5 + pooled_col).
    oc2, ic, t2, dj2 = np.meshgrid(np.arange(16), np.arange(6), np.arange(5),
                                   np.arange(5), indexing="ij")
    cols2 = (oc2 * 5 + t2).ravel()
    rows2e = (ic * 14 + 2 * t2 + dj2).ravel()
    rows2o = (ic * 14 + 2 * t2 + 1 + dj2).ravel()
    t2e = jnp.zeros((5, 128, 128), f32)
    t2o = jnp.zeros((5, 128, 128), f32)
    for di in range(5):
        vals = w2[oc2.ravel(), ic.ravel(), di, dj2.ravel()].astype(f32)
        t2e = t2e.at[di, rows2e, cols2].set(vals)
        t2o = t2o.at[di, rows2o, cols2].set(vals)
    oc2c, t2c = np.meshgrid(np.arange(16), np.arange(5), indexing="ij")
    b2r = jnp.zeros((1, 128), f32).at[0, (oc2c * 5 + t2c).ravel()].set(
        b2[oc2c.ravel()].astype(f32))

    # fc0: rows re-indexed so the kernel's (hp, oc2*5+wp) layout matches the
    # torch NCHW flatten index oc2*25 + hp*5 + wp; out-features padded to 128.
    ocf, wpf = np.meshgrid(np.arange(16), np.arange(5), indexing="ij")
    lane = (ocf * 5 + wpf).ravel()
    w0 = jnp.zeros((5, 128, 128), f32)
    for hp in range(5):
        tidx = (ocf * 25 + hp * 5 + wpf).ravel()
        w0 = w0.at[hp, lane, :120].set(wf0[tidx, :].astype(f32))
    b0r = jnp.zeros((1, 128), f32).at[0, :120].set(bf0.astype(f32))

    w1p = jnp.zeros((128, 128), f32).at[:120, :84].set(wf1.astype(f32))
    b1fr = jnp.zeros((1, 128), f32).at[0, :84].set(bf1.astype(f32))
    w2p = jnp.zeros((128, 128), f32).at[:84, :10].set(wf2.astype(f32))
    b2fr = jnp.zeros((1, 128), f32).at[0, :10].set(bf2.astype(f32))

    return dict(t1e=t1e, t1o=t1o, b1=b1r, t2e=t2e, t2o=t2o, b2=b2r,
                w0=w0, b0=b0r, w1=w1p, b1f=b1fr, w2=w2p, b2f=b2fr)


# ----------------------------------------------------------------------------
# Forward wrapper
# ----------------------------------------------------------------------------
def cnn_forward(packed, x_nchw):
    B = x_nchw.shape[0]
    x = x_nchw.reshape(B, 28, 28).astype(jnp.float32)
    # conv1 padding (=2) plus extra zero rows so every 32-row slab the kernel
    # reads stays in bounds: width 28 -> 32, height 28 -> 36.
    xp = jnp.pad(x, ((0, 0), (2, 6), (2, 2)))
    Bp = ((B + TB - 1) // TB) * TB
    if Bp != B:
        xp = jnp.pad(xp, ((0, Bp - B), (0, 0), (0, 0)))
    nb = Bp // TB

    out = pl.pallas_call(
        _lenet_fused_kernel,
        out_shape=jax.ShapeDtypeStruct((Bp, 128), jnp.float32),
        grid=(nb,),
        in_specs=[
            pl.BlockSpec((TB, 36, 32), lambda i: (i, 0, 0)),      # input tile
            pl.BlockSpec((5, 32, 128), lambda i: (0, 0, 0)),      # conv1 even
            pl.BlockSpec((5, 32, 128), lambda i: (0, 0, 0)),      # conv1 odd
            pl.BlockSpec((1, 128), lambda i: (0, 0)),             # conv1 bias
            pl.BlockSpec((5, 128, 128), lambda i: (0, 0, 0)),     # conv2 even
            pl.BlockSpec((5, 128, 128), lambda i: (0, 0, 0)),     # conv2 odd
            pl.BlockSpec((1, 128), lambda i: (0, 0)),             # conv2 bias
            pl.BlockSpec((5, 128, 128), lambda i: (0, 0, 0)),     # fc0 weights
            pl.BlockSpec((1, 128), lambda i: (0, 0)),             # fc0 bias
            pl.BlockSpec((128, 128), lambda i: (0, 0)),           # fc1 weights
            pl.BlockSpec((1, 128), lambda i: (0, 0)),             # fc1 bias
            pl.BlockSpec((128, 128), lambda i: (0, 0)),           # fc2 weights
            pl.BlockSpec((1, 128), lambda i: (0, 0)),             # fc2 bias
        ],
        out_specs=pl.BlockSpec((TB, 128), lambda i: (i, 0)),
        scratch_shapes=[
            pltpu.VMEM((TB * 32, 128), jnp.float32),              # conv1 pre-pool
            pltpu.VMEM((TB * 16, 128), jnp.float32),              # conv2 pre-pool
        ],
        compiler_params=pltpu.CompilerParams(
            dimension_semantics=("parallel",)),
    )(xp, packed["t1e"], packed["t1o"], packed["b1"],
      packed["t2e"], packed["t2o"], packed["b2"],
      packed["w0"], packed["b0"], packed["w1"], packed["b1f"],
      packed["w2"], packed["b2f"])
    return out[:B, :10]


# ----------------------------------------------------------------------------
# Synthetic params + pure-JAX reference (for a correctness self-check)
# ----------------------------------------------------------------------------
def init_params(key):
    """Deterministic synthetic params, PyTorch-default-style U(-1/sqrt(fan_in))."""
    ks = jax.random.split(key, 10)

    def u(k, shape, fan_in):
        bound = 1.0 / (float(fan_in) ** 0.5)
        return jax.random.uniform(k, shape, jnp.float32, -bound, bound)

    return {
        "w1": u(ks[0], (6, 1, 5, 5), 25),    "b1": u(ks[1], (6,), 25),
        "w2": u(ks[2], (16, 6, 5, 5), 150),  "b2": u(ks[3], (16,), 150),
        "wf0": u(ks[4], (400, 120), 400),    "bf0": u(ks[5], (120,), 400),
        "wf1": u(ks[6], (120, 84), 120),     "bf1": u(ks[7], (84,), 120),
        "wf2": u(ks[8], (84, 10), 84),       "bf2": u(ks[9], (10,), 84),
    }


def cnn_reference(params, x_nchw):
    hi = jax.lax.Precision.HIGHEST
    x = x_nchw.astype(jnp.float32)

    def conv_relu(x, w, b, pad):
        y = jax.lax.conv_general_dilated(
            x, w, (1, 1), [(pad, pad), (pad, pad)],
            dimension_numbers=("NCHW", "OIHW", "NCHW"), precision=hi)
        return jax.nn.relu(y + b.reshape(1, -1, 1, 1))

    def pool(x):
        return jax.lax.reduce_window(x, -jnp.inf, jax.lax.max,
                                     (1, 1, 2, 2), (1, 1, 2, 2), "VALID")

    x = pool(conv_relu(x, params["w1"], params["b1"], 2))
    x = pool(conv_relu(x, params["w2"], params["b2"], 0))
    x = x.reshape(x.shape[0], -1)
    x = jax.nn.relu(jnp.dot(x, params["wf0"], precision=hi) + params["bf0"])
    x = jax.nn.relu(jnp.dot(x, params["wf1"], precision=hi) + params["bf1"])
    return jnp.dot(x, params["wf2"], precision=hi) + params["bf2"]


if __name__ == "__main__":
    key = jax.random.PRNGKey(0)
    pkey, xkey = jax.random.split(key)
    params = init_params(pkey)
    packed = pack_params(params)                       # one-time weight repack

    # LeNet-style input: the fc layer's 400 features imply 1x28x28 images.
    x = jax.random.normal(xkey, (2, 1, 28, 28), jnp.float32)

    out = jax.block_until_ready(jax.jit(cnn_forward)(packed, x))
    assert out.shape == (2, 10) and out.dtype == jnp.float32

    ref = jax.block_until_ready(jax.jit(cnn_reference)(params, x))
    assert jnp.allclose(out, ref, rtol=2e-2, atol=2e-2), (
        "mismatch vs reference, max abs err = "
        f"{float(jnp.max(jnp.abs(out - ref)))}")
    print("KERNEL_OK")
</pallas_src>

<mosaic_0001>
module attributes {stable_mosaic.version = 11 : i64} {
  func.func @_lenet_fused_kernel(%arg0: i32, %arg1: memref<8x36x32xf32, #tpu.memory_space<vmem>>, %arg2: memref<5x32x128xf32, #tpu.memory_space<vmem>>, %arg3: memref<5x32x128xf32, #tpu.memory_space<vmem>>, %arg4: memref<1x128xf32, #tpu.memory_space<vmem>>, %arg5: memref<5x128x128xf32, #tpu.memory_space<vmem>>, %arg6: memref<5x128x128xf32, #tpu.memory_space<vmem>>, %arg7: memref<1x128xf32, #tpu.memory_space<vmem>>, %arg8: memref<5x128x128xf32, #tpu.memory_space<vmem>>, %arg9: memref<1x128xf32, #tpu.memory_space<vmem>>, %arg10: memref<128x128xf32, #tpu.memory_space<vmem>>, %arg11: memref<1x128xf32, #tpu.memory_space<vmem>>, %arg12: memref<128x128xf32, #tpu.memory_space<vmem>>, %arg13: memref<1x128xf32, #tpu.memory_space<vmem>>, %arg14: memref<8x128xf32, #tpu.memory_space<vmem>>, %arg15: memref<256x128xf32, #tpu.memory_space<vmem>>, %arg16: memref<128x128xf32, #tpu.memory_space<vmem>>) attributes {dimension_semantics = [#tpu.dimension_semantics<parallel>], iteration_bounds = array<i64: 1>, scalar_prefetch = 0 : i64, scratch_operands = 2 : i64, tpu.core_type = #tpu.core_type<tc>, window_params = [{transform_indices = @transform_0, window_bounds = array<i64: 8, 36, 32>}, {pipeline_mode = #tpu.pipeline_mode<synchronous>, transform_indices = @transform_1, window_bounds = array<i64: 5, 32, 128>}, {pipeline_mode = #tpu.pipeline_mode<synchronous>, transform_indices = @transform_2, window_bounds = array<i64: 5, 32, 128>}, {pipeline_mode = #tpu.pipeline_mode<synchronous>, transform_indices = @transform_3, window_bounds = array<i64: 1, 128>}, {pipeline_mode = #tpu.pipeline_mode<synchronous>, transform_indices = @transform_4, window_bounds = array<i64: 5, 128, 128>}, {pipeline_mode = #tpu.pipeline_mode<synchronous>, transform_indices = @transform_5, window_bounds = array<i64: 5, 128, 128>}, {pipeline_mode = #tpu.pipeline_mode<synchronous>, transform_indices = @transform_6, window_bounds = array<i64: 1, 128>}, {pipeline_mode = #tpu.pipeline_mode<synchronous>, transform_indices = @transform_7, window_bounds = array<i64: 5, 128, 128>}, {pipeline_mode = #tpu.pipeline_mode<synchronous>, transform_indices = @transform_8, window_bounds = array<i64: 1, 128>}, {pipeline_mode = #tpu.pipeline_mode<synchronous>, transform_indices = @transform_9, window_bounds = array<i64: 128, 128>}, {pipeline_mode = #tpu.pipeline_mode<synchronous>, transform_indices = @transform_10, window_bounds = array<i64: 1, 128>}, {pipeline_mode = #tpu.pipeline_mode<synchronous>, transform_indices = @transform_11, window_bounds = array<i64: 128, 128>}, {pipeline_mode = #tpu.pipeline_mode<synchronous>, transform_indices = @transform_12, window_bounds = array<i64: 1, 128>}, {transform_indices = @transform_13, window_bounds = array<i64: 8, 128>}]} {
    %c0 = arith.constant 0 : index
    %c0_0 = arith.constant 0 : index
    %c0_1 = arith.constant 0 : index
    %0 = vector.load %arg1[%c0, %c0_0, %c0_1] : memref<8x36x32xf32, #tpu.memory_space<vmem>>, vector<8x36x32xf32>
    %cst = arith.constant 0.000000e+00 : f32
    %1 = vector.broadcast %cst : f32 to vector<256x128xf32>
    %cst_2 = arith.constant 0.000000e+00 : f32
    %2 = vector.broadcast %cst_2 : f32 to vector<256x128xf32>
    %3 = vector.extract_strided_slice %0 {offsets = [0, 0, 0], sizes = [8, 32, 32], strides = [1, 1, 1]} : vector<8x36x32xf32> to vector<8x32x32xf32>
    %4 = vector.shape_cast %3 : vector<8x32x32xf32> to vector<256x32xf32>
    %c0_3 = arith.constant 0 : index
    %c0_4 = arith.constant 0 : index
    %c0_5 = arith.constant 0 : index
    %5 = vector.load %arg2[%c0_3, %c0_4, %c0_5] : memref<5x32x128xf32, #tpu.memory_space<vmem>>, vector<1x32x128xf32>
    %6 = vector.shape_cast %5 : vector<1x32x128xf32> to vector<32x128xf32>
    %cst_6 = arith.constant dense<0.000000e+00> : vector<256x128xf32>
    %7 = tpu.matmul %4, %6, %cst_6 {dimension_numbers = #tpu.dot_dimension_numbers<[1], [0], [0], [1], [0, 0, 1, 1], [], []>} : vector<256x32xf32>, vector<32x128xf32>, vector<256x128xf32> -> vector<256x128xf32>
    %8 = arith.addf %1, %7 : vector<256x128xf32>
    %c0_7 = arith.constant 0 : index
    %c0_8 = arith.constant 0 : index
    %c0_9 = arith.constant 0 : index
    %9 = vector.load %arg3[%c0_7, %c0_8, %c0_9] : memref<5x32x128xf32, #tpu.memory_space<vmem>>, vector<1x32x128xf32>
    %10 = vector.shape_cast %9 : vector<1x32x128xf32> to vector<32x128xf32>
    %cst_10 = arith.constant dense<0.000000e+00> : vector<256x128xf32>
    %11 = tpu.matmul %4, %10, %cst_10 {dimension_numbers = #tpu.dot_dimension_numbers<[1], [0], [0], [1], [0, 0, 1, 1], [], []>} : vector<256x32xf32>, vector<32x128xf32>, vector<256x128xf32> -> vector<256x128xf32>
    %12 = arith.addf %2, %11 : vector<256x128xf32>
    %13 = vector.extract_strided_slice %0 {offsets = [0, 1, 0], sizes = [8, 32, 32], strides = [1, 1, 1]} : vector<8x36x32xf32> to vector<8x32x32xf32>
    %14 = vector.shape_cast %13 : vector<8x32x32xf32> to vector<256x32xf32>
    %c1 = arith.constant 1 : index
    %c0_11 = arith.constant 0 : index
    %c0_12 = arith.constant 0 : index
    %15 = vector.load %arg2[%c1, %c0_11, %c0_12] : memref<5x32x128xf32, #tpu.memory_space<vmem>>, vector<1x32x128xf32>
    %16 = vector.shape_cast %15 : vector<1x32x128xf32> to vector<32x128xf32>
    %cst_13 = arith.constant dense<0.000000e+00> : vector<256x128xf32>
    %17 = tpu.matmul %14, %16, %cst_13 {dimension_numbers = #tpu.dot_dimension_numbers<[1], [0], [0], [1], [0, 0, 1, 1], [], []>} : vector<256x32xf32>, vector<32x128xf32>, vector<256x128xf32> -> vector<256x128xf32>
    %18 = arith.addf %8, %17 : vector<256x128xf32>
    %c1_14 = arith.constant 1 : index
    %c0_15 = arith.constant 0 : index
    %c0_16 = arith.constant 0 : index
    %19 = vector.load %arg3[%c1_14, %c0_15, %c0_16] : memref<5x32x128xf32, #tpu.memory_space<vmem>>, vector<1x32x128xf32>
    %20 = vector.shape_cast %19 : vector<1x32x128xf32> to vector<32x128xf32>
    %cst_17 = arith.constant dense<0.000000e+00> : vector<256x128xf32>
    %21 = tpu.matmul %14, %20, %cst_17 {dimension_numbers = #tpu.dot_dimension_numbers<[1], [0], [0], [1], [0, 0, 1, 1], [], []>} : vector<256x32xf32>, vector<32x128xf32>, vector<256x128xf32> -> vector<256x128xf32>
    %22 = arith.addf %12, %21 : vector<256x128xf32>
    %23 = vector.extract_strided_slice %0 {offsets = [0, 2, 0], sizes = [8, 32, 32], strides = [1, 1, 1]} : vector<8x36x32xf32> to vector<8x32x32xf32>
    %24 = vector.shape_cast %23 : vector<8x32x32xf32> to vector<256x32xf32>
    %c2 = arith.constant 2 : index
    %c0_18 = arith.constant 0 : index
    %c0_19 = arith.constant 0 : index
    %25 = vector.load %arg2[%c2, %c0_18, %c0_19] : memref<5x32x128xf32, #tpu.memory_space<vmem>>, vector<1x32x128xf32>
    %26 = vector.shape_cast %25 : vector<1x32x128xf32> to vector<32x128xf32>
    %cst_20 = arith.constant dense<0.000000e+00> : vector<256x128xf32>
    %27 = tpu.matmul %24, %26, %cst_20 {dimension_numbers = #tpu.dot_dimension_numbers<[1], [0], [0], [1], [0, 0, 1, 1], [], []>} : vector<256x32xf32>, vector<32x128xf32>, vector<256x128xf32> -> vector<256x128xf32>
    %28 = arith.addf %18, %27 : vector<256x128xf32>
    %c2_21 = arith.constant 2 : index
    %c0_22 = arith.constant 0 : index
    %c0_23 = arith.constant 0 : index
    %29 = vector.load %arg3[%c2_21, %c0_22, %c0_23] : memref<5x32x128xf32, #tpu.memory_space<vmem>>, vector<1x32x128xf32>
    %30 = vector.shape_cast %29 : vector<1x32x128xf32> to vector<32x128xf32>
    %cst_24 = arith.constant dense<0.000000e+00> : vector<256x128xf32>
    %31 = tpu.matmul %24, %30, %cst_24 {dimension_numbers = #tpu.dot_dimension_numbers<[1], [0], [0], [1], [0, 0, 1, 1], [], []>} : vector<256x32xf32>, vector<32x128xf32>, vector<256x128xf32> -> vector<256x128xf32>
    %32 = arith.addf %22, %31 : vector<256x128xf32>
    %33 = vector.extract_strided_slice %0 {offsets = [0, 3, 0], sizes = [8, 32, 32], strides = [1, 1, 1]} : vector<8x36x32xf32> to vector<8x32x32xf32>
    %34 = vector.shape_cast %33 : vector<8x32x32xf32> to vector<256x32xf32>
    %c3 = arith.constant 3 : index
    %c0_25 = arith.constant 0 : index
    %c0_26 = arith.constant 0 : index
    %35 = vector.load %arg2[%c3, %c0_25, %c0_26] : memref<5x32x128xf32, #tpu.memory_space<vmem>>, vector<1x32x128xf32>
    %36 = vector.shape_cast %35 : vector<1x32x128xf32> to vector<32x128xf32>
    %cst_27 = arith.constant dense<0.000000e+00> : vector<256x128xf32>
    %37 = tpu.matmul %34, %36, %cst_27 {dimension_numbers = #tpu.dot_dimension_numbers<[1], [0], [0], [1], [0, 0, 1, 1], [], []>} : vector<256x32xf32>, vector<32x128xf32>, vector<256x128xf32> -> vector<256x128xf32>
    %38 = arith.addf %28, %37 : vector<256x128xf32>
    %c3_28 = arith.constant 3 : index
    %c0_29 = arith.constant 0 : index
    %c0_30 = arith.constant 0 : index
    %39 = vector.load %arg3[%c3_28, %c0_29, %c0_30] : memref<5x32x128xf32, #tpu.memory_space<vmem>>, vector<1x32x128xf32>
    %40 = vector.shape_cast %39 : vector<1x32x128xf32> to vector<32x128xf32>
    %cst_31 = arith.constant dense<0.000000e+00> : vector<256x128xf32>
    %41 = tpu.matmul %34, %40, %cst_31 {dimension_numbers = #tpu.dot_dimension_numbers<[1], [0], [0], [1], [0, 0, 1, 1], [], []>} : vector<256x32xf32>, vector<32x128xf32>, vector<256x128xf32> -> vector<256x128xf32>
    %42 = arith.addf %32, %41 : vector<256x128xf32>
    %43 = vector.extract_strided_slice %0 {offsets = [0, 4, 0], sizes = [8, 32, 32], strides = [1, 1, 1]} : vector<8x36x32xf32> to vector<8x32x32xf32>
    %44 = vector.shape_cast %43 : vector<8x32x32xf32> to vector<256x32xf32>
    %c4 = arith.constant 4 : index
    %c0_32 = arith.constant 0 : index
    %c0_33 = arith.constant 0 : index
    %45 = vector.load %arg2[%c4, %c0_32, %c0_33] : memref<5x32x128xf32, #tpu.memory_space<vmem>>, vector<1x32x128xf32>
    %46 = vector.shape_cast %45 : vector<1x32x128xf32> to vector<32x128xf32>
    %cst_34 = arith.constant dense<0.000000e+00> : vector<256x128xf32>
    %47 = tpu.matmul %44, %46, %cst_34 {dimension_numbers = #tpu.dot_dimension_numbers<[1], [0], [0], [1], [0, 0, 1, 1], [], []>} : vector<256x32xf32>, vector<32x128xf32>, vector<256x128xf32> -> vector<256x128xf32>
    %48 = arith.addf %38, %47 : vector<256x128xf32>
    %c4_35 = arith.constant 4 : index
    %c0_36 = arith.constant 0 : index
    %c0_37 = arith.constant 0 : index
    %49 = vector.load %arg3[%c4_35, %c0_36, %c0_37] : memref<5x32x128xf32, #tpu.memory_space<vmem>>, vector<1x32x128xf32>
    %50 = vector.shape_cast %49 : vector<1x32x128xf32> to vector<32x128xf32>
    %cst_38 = arith.constant dense<0.000000e+00> : vector<256x128xf32>
    %51 = tpu.matmul %44, %50, %cst_38 {dimension_numbers = #tpu.dot_dimension_numbers<[1], [0], [0], [1], [0, 0, 1, 1], [], []>} : vector<256x32xf32>, vector<32x128xf32>, vector<256x128xf32> -> vector<256x128xf32>
    %52 = arith.addf %42, %51 : vector<256x128xf32>
    %53 = arith.maximumf %48, %52 : vector<256x128xf32>
    %c0_39 = arith.constant 0 : index
    %c0_40 = arith.constant 0 : index
    %54 = vector.load %arg4[%c0_39, %c0_40] : memref<1x128xf32, #tpu.memory_space<vmem>>, vector<1x128xf32>
    %55 = vector.broadcast %54 : vector<1x128xf32> to vector<256x128xf32>
    %56 = arith.addf %53, %55 : vector<256x128xf32>
    %cst_41 = arith.constant 0.000000e+00 : f32
    %57 = vector.broadcast %cst_41 : f32 to vector<256x128xf32>
    %58 = arith.maximumf %56, %57 : vector<256x128xf32>
    %c0_42 = arith.constant 0 : index
    %c0_43 = arith.constant 0 : index
    %59 = vector.load %arg15[%c0_42, %c0_43] : memref<256x128xf32, #tpu.memory_space<vmem>>, vector<256x128xf32>
    tpu.vector_store %arg15[%c0_42, %c0_43], %58 {strides = array<i32>} : memref<256x128xf32, #tpu.memory_space<vmem>>, vector<256x128xf32>,
    %c0_44 = arith.constant 0 : index
    %c0_45 = arith.constant 0 : index
    %60 = tpu.strided_load %arg15[%c0_44, %c0_45] {strides = array<i32: 2, 1>} : memref<256x128xf32, #tpu.memory_space<vmem>>, vector<128x128xf32>
    %c1_46 = arith.constant 1 : index
    %c0_47 = arith.constant 0 : index
    %61 = tpu.strided_load %arg15[%c1_46, %c0_47] {strides = array<i32: 2, 1>} : memref<256x128xf32, #tpu.memory_space<vmem>>, vector<128x128xf32>
    %62 = arith.maximumf %60, %61 : vector<128x128xf32>
    %63 = vector.shape_cast %62 : vector<128x128xf32> to vector<8x16x128xf32>
    %cst_48 = arith.constant 0.000000e+00 : f32
    %64 = vector.broadcast %cst_48 : f32 to vector<8x8x128xf32>
    %65 = tpu.concatenate %63, %64 in 1 : vector<8x16x128xf32>, vector<8x8x128xf32> -> vector<8x24x128xf32>
    %cst_49 = arith.constant 0.000000e+00 : f32
    %66 = vector.broadcast %cst_49 : f32 to vector<128x128xf32>
    %cst_50 = arith.constant 0.000000e+00 : f32
    %67 = vector.broadcast %cst_50 : f32 to vector<128x128xf32>
    %68 = vector.extract_strided_slice %65 {offsets = [0, 0, 0], sizes = [8, 16, 128], strides = [1, 1, 1]} : vector<8x24x128xf32> to vector<8x16x128xf32>
    %69 = vector.shape_cast %68 : vector<8x16x128xf32> to vector<128x128xf32>
    %c0_51 = arith.constant 0 : index
    %c0_52 = arith.constant 0 : index
    %c0_53 = arith.constant 0 : index
    %70 = vector.load %arg5[%c0_51, %c0_52, %c0_53] : memref<5x128x128xf32, #tpu.memory_space<vmem>>, vector<1x128x128xf32>
    %71 = vector.shape_cast %70 : vector<1x128x128xf32> to vector<128x128xf32>
    %cst_54 = arith.constant dense<0.000000e+00> : vector<128x128xf32>
    %72 = tpu.matmul %69, %71, %cst_54 {dimension_numbers = #tpu.dot_dimension_numbers<[1], [0], [0], [1], [0, 0, 1, 1], [], []>} : vector<128x128xf32>, vector<128x128xf32>, vector<128x128xf32> -> vector<128x128xf32>
    %73 = arith.addf %66, %72 : vector<128x128xf32>
    %c0_55 = arith.constant 0 : index
    %c0_56 = arith.constant 0 : index
    %c0_57 = arith.constant 0 : index
    %74 = vector.load %arg6[%c0_55, %c0_56, %c0_57] : memref<5x128x128xf32, #tpu.memory_space<vmem>>, vector<1x128x128xf32>
    %75 = vector.shape_cast %74 : vector<1x128x128xf32> to vector<128x128xf32>
    %cst_58 = arith.constant dense<0.000000e+00> : vector<128x128xf32>
    %76 = tpu.matmul %69, %75, %cst_58 {dimension_numbers = #tpu.dot_dimension_numbers<[1], [0], [0], [1], [0, 0, 1, 1], [], []>} : vector<128x128xf32>, vector<128x128xf32>, vector<128x128xf32> -> vector<128x128xf32>
    %77 = arith.addf %67, %76 : vector<128x128xf32>
    %78 = vector.extract_strided_slice %65 {offsets = [0, 1, 0], sizes = [8, 16, 128], strides = [1, 1, 1]} : vector<8x24x128xf32> to vector<8x16x128xf32>
    %79 = vector.shape_cast %78 : vector<8x16x128xf32> to vector<128x128xf32>
    %c1_59 = arith.constant 1 : index
    %c0_60 = arith.constant 0 : index
    %c0_61 = arith.constant 0 : index
    %80 = vector.load %arg5[%c1_59, %c0_60, %c0_61] : memref<5x128x128xf32, #tpu.memory_space<vmem>>, vector<1x128x128xf32>
    %81 = vector.shape_cast %80 : vector<1x128x128xf32> to vector<128x128xf32>
    %cst_62 = arith.constant dense<0.000000e+00> : vector<128x128xf32>
    %82 = tpu.matmul %79, %81, %cst_62 {dimension_numbers = #tpu.dot_dimension_numbers<[1], [0], [0], [1], [0, 0, 1, 1], [], []>} : vector<128x128xf32>, vector<128x128xf32>, vector<128x128xf32> -> vector<128x128xf32>
    %83 = arith.addf %73, %82 : vector<128x128xf32>
    %c1_63 = arith.constant 1 : index
    %c0_64 = arith.constant 0 : index
    %c0_65 = arith.constant 0 : index
    %84 = vector.load %arg6[%c1_63, %c0_64, %c0_65] : memref<5x128x128xf32, #tpu.memory_space<vmem>>, vector<1x128x128xf32>
    %85 = vector.shape_cast %84 : vector<1x128x128xf32> to vector<128x128xf32>
    %cst_66 = arith.constant dense<0.000000e+00> : vector<128x128xf32>
    %86 = tpu.matmul %79, %85, %cst_66 {dimension_numbers = #tpu.dot_dimension_numbers<[1], [0], [0], [1], [0, 0, 1, 1], [], []>} : vector<128x128xf32>, vector<128x128xf32>, vector<128x128xf32> -> vector<128x128xf32>
    %87 = arith.addf %77, %86 : vector<128x128xf32>
    %88 = vector.extract_strided_slice %65 {offsets = [0, 2, 0], sizes = [8, 16, 128], strides = [1, 1, 1]} : vector<8x24x128xf32> to vector<8x16x128xf32>
    %89 = vector.shape_cast %88 : vector<8x16x128xf32> to vector<128x128xf32>
    %c2_67 = arith.constant 2 : index
    %c0_68 = arith.constant 0 : index
    %c0_69 = arith.constant 0 : index
    %90 = vector.load %arg5[%c2_67, %c0_68, %c0_69] : memref<5x128x128xf32, #tpu.memory_space<vmem>>, vector<1x128x128xf32>
    %91 = vector.shape_cast %90 : vector<1x128x128xf32> to vector<128x128xf32>
    %cst_70 = arith.constant dense<0.000000e+00> : vector<128x128xf32>
    %92 = tpu.matmul %89, %91, %cst_70 {dimension_numbers = #tpu.dot_dimension_numbers<[1], [0], [0], [1], [0, 0, 1, 1], [], []>} : vector<128x128xf32>, vector<128x128xf32>, vector<128x128xf32> -> vector<128x128xf32>
    %93 = arith.addf %83, %92 : vector<128x128xf32>
    %c2_71 = arith.constant 2 : index
    %c0_72 = arith.constant 0 : index
    %c0_73 = arith.constant 0 : index
    %94 = vector.load %arg6[%c2_71, %c0_72, %c0_73] : memref<5x128x128xf32, #tpu.memory_space<vmem>>, vector<1x128x128xf32>
    %95 = vector.shape_cast %94 : vector<1x128x128xf32> to vector<128x128xf32>
    %cst_74 = arith.constant dense<0.000000e+00> : vector<128x128xf32>
    %96 = tpu.matmul %89, %95, %cst_74 {dimension_numbers = #tpu.dot_dimension_numbers<[1], [0], [0], [1], [0, 0, 1, 1], [], []>} : vector<128x128xf32>, vector<128x128xf32>, vector<128x128xf32> -> vector<128x128xf32>
    %97 = arith.addf %87, %96 : vector<128x128xf32>
    %98 = vector.extract_strided_slice %65 {offsets = [0, 3, 0], sizes = [8, 16, 128], strides = [1, 1, 1]} : vector<8x24x128xf32> to vector<8x16x128xf32>
    %99 = vector.shape_cast %98 : vector<8x16x128xf32> to vector<128x128xf32>
    %c3_75 = arith.constant 3 : index
    %c0_76 = arith.constant 0 : index
    %c0_77 = arith.constant 0 : index
    %100 = vector.load %arg5[%c3_75, %c0_76, %c0_77] : memref<5x128x128xf32, #tpu.memory_space<vmem>>, vector<1x128x128xf32>
    %101 = vector.shape_cast %100 : vector<1x128x128xf32> to vector<128x128xf32>
    %cst_78 = arith.constant dense<0.000000e+00> : vector<128x128xf32>
    %102 = tpu.matmul %99, %101, %cst_78 {dimension_numbers = #tpu.dot_dimension_numbers<[1], [0], [0], [1], [0, 0, 1, 1], [], []>} : vector<128x128xf32>, vector<128x128xf32>, vector<128x128xf32> -> vector<128x128xf32>
    %103 = arith.addf %93, %102 : vector<128x128xf32>
    %c3_79 = arith.constant 3 : index
    %c0_80 = arith.constant 0 : index
    %c0_81 = arith.constant 0 : index
    %104 = vector.load %arg6[%c3_79, %c0_80, %c0_81] : memref<5x128x128xf32, #tpu.memory_space<vmem>>, vector<1x128x128xf32>
    %105 = vector.shape_cast %104 : vector<1x128x128xf32> to vector<128x128xf32>
    %cst_82 = arith.constant dense<0.000000e+00> : vector<128x128xf32>
    %106 = tpu.matmul %99, %105, %cst_82 {dimension_numbers = #tpu.dot_dimension_numbers<[1], [0], [0], [1], [0, 0, 1, 1], [], []>} : vector<128x128xf32>, vector<128x128xf32>, vector<128x128xf32> -> vector<128x128xf32>
    %107 = arith.addf %97, %106 : vector<128x128xf32>
    %108 = vector.extract_strided_slice %65 {offsets = [0, 4, 0], sizes = [8, 16, 128], strides = [1, 1, 1]} : vector<8x24x128xf32> to vector<8x16x128xf32>
    %109 = vector.shape_cast %108 : vector<8x16x128xf32> to vector<128x128xf32>
    %c4_83 = arith.constant 4 : index
    %c0_84 = arith.constant 0 : index
    %c0_85 = arith.constant 0 : index
    %110 = vector.load %arg5[%c4_83, %c0_84, %c0_85] : memref<5x128x128xf32, #tpu.memory_space<vmem>>, vector<1x128x128xf32>
    %111 = vector.shape_cast %110 : vector<1x128x128xf32> to vector<128x128xf32>
    %cst_86 = arith.constant dense<0.000000e+00> : vector<128x128xf32>
    %112 = tpu.matmul %109, %111, %cst_86 {dimension_numbers = #tpu.dot_dimension_numbers<[1], [0], [0], [1], [0, 0, 1, 1], [], []>} : vector<128x128xf32>, vector<128x128xf32>, vector<128x128xf32> -> vector<128x128xf32>
    %113 = arith.addf %103, %112 : vector<128x128xf32>
    %c4_87 = arith.constant 4 : index
    %c0_88 = arith.constant 0 : index
    %c0_89 = arith.constant 0 : index
    %114 = vector.load %arg6[%c4_87, %c0_88, %c0_89] : memref<5x128x128xf32, #tpu.memory_space<vmem>>, vector<1x128x128xf32>
    %115 = vector.shape_cast %114 : vector<1x128x128xf32> to vector<128x128xf32>
    %cst_90 = arith.constant dense<0.000000e+00> : vector<128x128xf32>
    %116 = tpu.matmul %109, %115, %cst_90 {dimension_numbers = #tpu.dot_dimension_numbers<[1], [0], [0], [1], [0, 0, 1, 1], [], []>} : vector<128x128xf32>, vector<128x128xf32>, vector<128x128xf32> -> vector<128x128xf32>
    %117 = arith.addf %107, %116 : vector<128x128xf32>
    %118 = arith.maximumf %113, %117 : vector<128x128xf32>
    %c0_91 = arith.constant 0 : index
    %c0_92 = arith.constant 0 : index
    %119 = vector.load %arg7[%c0_91, %c0_92] : memref<1x128xf32, #tpu.memory_space<vmem>>, vector<1x128xf32>
    %120 = vector.broadcast %119 : vector<1x128xf32> to vector<128x128xf32>
    %121 = arith.addf %118, %120 : vector<128x128xf32>
    %cst_93 = arith.constant 0.000000e+00 : f32
    %122 = vector.broadcast %cst_93 : f32 to vector<128x128xf32>
    %123 = arith.maximumf %121, %122 : vector<128x128xf32>
    %c0_94 = arith.constant 0 : index
    %c0_95 = arith.constant 0 : index
    %124 = vector.load %arg16[%c0_94, %c0_95] : memref<128x128xf32, #tpu.memory_space<vmem>>, vector<128x128xf32>
    tpu.vector_store %arg16[%c0_94, %c0_95], %123 {strides = array<i32>} : memref<128x128xf32, #tpu.memory_space<vmem>>, vector<128x128xf32>,
    %c0_96 = arith.constant 0 : index
    %c0_97 = arith.constant 0 : index
    %125 = tpu.strided_load %arg16[%c0_96, %c0_97] {strides = array<i32: 2, 1>} : memref<128x128xf32, #tpu.memory_space<vmem>>, vector<64x128xf32>
    %c1_98 = arith.constant 1 : index
    %c0_99 = arith.constant 0 : index
    %126 = tpu.strided_load %arg16[%c1_98, %c0_99] {strides = array<i32: 2, 1>} : memref<128x128xf32, #tpu.memory_space<vmem>>, vector<64x128xf32>
    %127 = arith.maximumf %125, %126 : vector<64x128xf32>
    %128 = vector.shape_cast %127 : vector<64x128xf32> to vector<8x8x128xf32>
    %cst_100 = arith.constant 0.000000e+00 : f32
    %129 = vector.broadcast %cst_100 : f32 to vector<8x128xf32>
    %130 = vector.extract_strided_slice %128 {offsets = [0, 0, 0], sizes = [8, 1, 128], strides = [1, 1, 1]} : vector<8x8x128xf32> to vector<8x1x128xf32>
    %131 = vector.shape_cast %130 : vector<8x1x128xf32> to vector<8x128xf32>
    %c0_101 = arith.constant 0 : index
    %c0_102 = arith.constant 0 : index
    %c0_103 = arith.constant 0 : index
    %132 = vector.load %arg8[%c0_101, %c0_102, %c0_103] : memref<5x128x128xf32, #tpu.memory_space<vmem>>, vector<1x128x128xf32>
    %133 = vector.shape_cast %132 : vector<1x128x128xf32> to vector<128x128xf32>
    %cst_104 = arith.constant dense<0.000000e+00> : vector<8x128xf32>
    %134 = tpu.matmul %131, %133, %cst_104 {dimension_numbers = #tpu.dot_dimension_numbers<[1], [0], [0], [1], [0, 0, 1, 1], [], []>} : vector<8x128xf32>, vector<128x128xf32>, vector<8x128xf32> -> vector<8x128xf32>
    %135 = arith.addf %129, %134 : vector<8x128xf32>
    %136 = vector.extract_strided_slice %128 {offsets = [0, 1, 0], sizes = [8, 1, 128], strides = [1, 1, 1]} : vector<8x8x128xf32> to vector<8x1x128xf32>
    %137 = vector.shape_cast %136 : vector<8x1x128xf32> to vector<8x128xf32>
    %c1_105 = arith.constant 1 : index
    %c0_106 = arith.constant 0 : index
    %c0_107 = arith.constant 0 : index
    %138 = vector.load %arg8[%c1_105, %c0_106, %c0_107] : memref<5x128x128xf32, #tpu.memory_space<vmem>>, vector<1x128x128xf32>
    %139 = vector.shape_cast %138 : vector<1x128x128xf32> to vector<128x128xf32>
    %cst_108 = arith.constant dense<0.000000e+00> : vector<8x128xf32>
    %140 = tpu.matmul %137, %139, %cst_108 {dimension_numbers = #tpu.dot_dimension_numbers<[1], [0], [0], [1], [0, 0, 1, 1], [], []>} : vector<8x128xf32>, vector<128x128xf32>, vector<8x128xf32> -> vector<8x128xf32>
    %141 = arith.addf %135, %140 : vector<8x128xf32>
    %142 = vector.extract_strided_slice %128 {offsets = [0, 2, 0], sizes = [8, 1, 128], strides = [1, 1, 1]} : vector<8x8x128xf32> to vector<8x1x128xf32>
    %143 = vector.shape_cast %142 : vector<8x1x128xf32> to vector<8x128xf32>
    %c2_109 = arith.constant 2 : index
    %c0_110 = arith.constant 0 : index
    %c0_111 = arith.constant 0 : index
    %144 = vector.load %arg8[%c2_109, %c0_110, %c0_111] : memref<5x128x128xf32, #tpu.memory_space<vmem>>, vector<1x128x128xf32>
    %145 = vector.shape_cast %144 : vector<1x128x128xf32> to vector<128x128xf32>
    %cst_112 = arith.constant dense<0.000000e+00> : vector<8x128xf32>
    %146 = tpu.matmul %143, %145, %cst_112 {dimension_numbers = #tpu.dot_dimension_numbers<[1], [0], [0], [1], [0, 0, 1, 1], [], []>} : vector<8x128xf32>, vector<128x128xf32>, vector<8x128xf32> -> vector<8x128xf32>
    %147 = arith.addf %141, %146 : vector<8x128xf32>
    %148 = vector.extract_strided_slice %128 {offsets = [0, 3, 0], sizes = [8, 1, 128], strides = [1, 1, 1]} : vector<8x8x128xf32> to vector<8x1x128xf32>
    %149 = vector.shape_cast %148 : vector<8x1x128xf32> to vector<8x128xf32>
    %c3_113 = arith.constant 3 : index
    %c0_114 = arith.constant 0 : index
    %c0_115 = arith.constant 0 : index
    %150 = vector.load %arg8[%c3_113, %c0_114, %c0_115] : memref<5x128x128xf32, #tpu.memory_space<vmem>>, vector<1x128x128xf32>
    %151 = vector.shape_cast %150 : vector<1x128x128xf32> to vector<128x128xf32>
    %cst_116 = arith.constant dense<0.000000e+00> : vector<8x128xf32>
    %152 = tpu.matmul %149, %151, %cst_116 {dimension_numbers = #tpu.dot_dimension_numbers<[1], [0], [0], [1], [0, 0, 1, 1], [], []>} : vector<8x128xf32>, vector<128x128xf32>, vector<8x128xf32> -> vector<8x128xf32>
    %153 = arith.addf %147, %152 : vector<8x128xf32>
    %154 = vector.extract_strided_slice %128 {offsets = [0, 4, 0], sizes = [8, 1, 128], strides = [1, 1, 1]} : vector<8x8x128xf32> to vector<8x1x128xf32>
    %155 = vector.shape_cast %154 : vector<8x1x128xf32> to vector<8x128xf32>
    %c4_117 = arith.constant 4 : index
    %c0_118 = arith.constant 0 : index
    %c0_119 = arith.constant 0 : index
    %156 = vector.load %arg8[%c4_117, %c0_118, %c0_119] : memref<5x128x128xf32, #tpu.memory_space<vmem>>, vector<1x128x128xf32>
    %157 = vector.shape_cast %156 : vector<1x128x128xf32> to vector<128x128xf32>
    %cst_120 = arith.constant dense<0.000000e+00> : vector<8x128xf32>
    %158 = tpu.matmul %155, %157, %cst_120 {dimension_numbers = #tpu.dot_dimension_numbers<[1], [0], [0], [1], [0, 0, 1, 1], [], []>} : vector<8x128xf32>, vector<128x128xf32>, vector<8x128xf32> -> vector<8x128xf32>
    %159 = arith.addf %153, %158 : vector<8x128xf32>
    %c0_121 = arith.constant 0 : index
    %c0_122 = arith.constant 0 : index
    %160 = vector.load %arg9[%c0_121, %c0_122] : memref<1x128xf32, #tpu.memory_space<vmem>>, vector<1x128xf32>
    %161 = vector.broadcast %160 : vector<1x128xf32> to vector<8x128xf32>
    %162 = arith.addf %159, %161 : vector<8x128xf32>
    %cst_123 = arith.constant 0.000000e+00 : f32
    %163 = vector.broadcast %cst_123 : f32 to vector<8x128xf32>
    %164 = arith.maximumf %162, %163 : vector<8x128xf32>
    %c0_124 = arith.constant 0 : index
    %c0_125 = arith.constant 0 : index
    %165 = vector.load %arg10[%c0_124, %c0_125] : memref<128x128xf32, #tpu.memory_space<vmem>>, vector<128x128xf32>
    %cst_126 = arith.constant dense<0.000000e+00> : vector<8x128xf32>
    %166 = tpu.matmul %164, %165, %cst_126 {dimension_numbers = #tpu.dot_dimension_numbers<[1], [0], [0], [1], [0, 0, 1, 1], [], []>} : vector<8x128xf32>, vector<128x128xf32>, vector<8x128xf32> -> vector<8x128xf32>
    %c0_127 = arith.constant 0 : index
    %c0_128 = arith.constant 0 : index
    %167 = vector.load %arg11[%c0_127, %c0_128] : memref<1x128xf32, #tpu.memory_space<vmem>>, vector<1x128xf32>
    %168 = vector.broadcast %167 : vector<1x128xf32> to vector<8x128xf32>
    %169 = arith.addf %166, %168 : vector<8x128xf32>
    %cst_129 = arith.constant 0.000000e+00 : f32
    %170 = vector.broadcast %cst_129 : f32 to vector<8x128xf32>
    %171 = arith.maximumf %169, %170 : vector<8x128xf32>
    %c0_130 = arith.constant 0 : index
    %c0_131 = arith.constant 0 : index
    %172 = vector.load %arg12[%c0_130, %c0_131] : memref<128x128xf32, #tpu.memory_space<vmem>>, vector<128x128xf32>
    %cst_132 = arith.constant dense<0.000000e+00> : vector<8x128xf32>
    %173 = tpu.matmul %171, %172, %cst_132 {dimension_numbers = #tpu.dot_dimension_numbers<[1], [0], [0], [1], [0, 0, 1, 1], [], []>} : vector<8x128xf32>, vector<128x128xf32>, vector<8x128xf32> -> vector<8x128xf32>
    %c0_133 = arith.constant 0 : index
    %c0_134 = arith.constant 0 : index
    %174 = vector.load %arg13[%c0_133, %c0_134] : memref<1x128xf32, #tpu.memory_space<vmem>>, vector<1x128xf32>
    %175 = vector.broadcast %174 : vector<1x128xf32> to vector<8x128xf32>
    %176 = arith.addf %173, %175 : vector<8x128xf32>
    %c0_135 = arith.constant 0 : index
    %c0_136 = arith.constant 0 : index
    %177 = vector.load %arg14[%c0_135, %c0_136] : memref<8x128xf32, #tpu.memory_space<vmem>>, vector<8x128xf32>
    tpu.vector_store %arg14[%c0_135, %c0_136], %176 {strides = array<i32>} : memref<8x128xf32, #tpu.memory_space<vmem>>, vector<8x128xf32>,
    return
  }
  func.func @transform_0(%arg0: i32) -> (i32, i32, i32) {
    %c0_i32 = arith.constant 0 : i32
    %c0_i32_0 = arith.constant 0 : i32
    %c0_i32_1 = arith.constant 0 : i32
    return %arg0, %c0_i32, %c0_i32_0 : i32, i32, i32
  }
  func.func @transform_1(%arg0: i32) -> (i32, i32, i32) {
    %c0_i32 = arith.constant 0 : i32
    %c0_i32_0 = arith.constant 0 : i32
    %c0_i32_1 = arith.constant 0 : i32
    %c0_i32_2 = arith.constant 0 : i32
    return %c0_i32, %c0_i32_0, %c0_i32_1 : i32, i32, i32
  }
  func.func @transform_2(%arg0: i32) -> (i32, i32, i32) {
    %c0_i32 = arith.constant 0 : i32
    %c0_i32_0 = arith.constant 0 : i32
    %c0_i32_1 = arith.constant 0 : i32
    %c0_i32_2 = arith.constant 0 : i32
    return %c0_i32, %c0_i32_0, %c0_i32_1 : i32, i32, i32
  }
  func.func @transform_3(%arg0: i32) -> (i32, i32) {
    %c0_i32 = arith.constant 0 : i32
    %c0_i32_0 = arith.constant 0 : i32
    %c0_i32_1 = arith.constant 0 : i32
    return %c0_i32, %c0_i32_0 : i32, i32
  }
  func.func @transform_4(%arg0: i32) -> (i32, i32, i32) {
    %c0_i32 = arith.constant 0 : i32
    %c0_i32_0 = arith.constant 0 : i32
    %c0_i32_1 = arith.constant 0 : i32
    %c0_i32_2 = arith.constant 0 : i32
    return %c0_i32, %c0_i32_0, %c0_i32_1 : i32, i32, i32
  }
  func.func @transform_5(%arg0: i32) -> (i32, i32, i32) {
    %c0_i32 = arith.constant 0 : i32
    %c0_i32_0 = arith.constant 0 : i32
    %c0_i32_1 = arith.constant 0 : i32
    %c0_i32_2 = arith.constant 0 : i32
    return %c0_i32, %c0_i32_0, %c0_i32_1 : i32, i32, i32
  }
  func.func @transform_6(%arg0: i32) -> (i32, i32) {
    %c0_i32 = arith.constant 0 : i32
    %c0_i32_0 = arith.constant 0 : i32
    %c0_i32_1 = arith.constant 0 : i32
    return %c0_i32, %c0_i32_0 : i32, i32
  }
  func.func @transform_7(%arg0: i32) -> (i32, i32, i32) {
    %c0_i32 = arith.constant 0 : i32
    %c0_i32_0 = arith.constant 0 : i32
    %c0_i32_1 = arith.constant 0 : i32
    %c0_i32_2 = arith.constant 0 : i32
    return %c0_i32, %c0_i32_0, %c0_i32_1 : i32, i32, i32
  }
  func.func @transform_8(%arg0: i32) -> (i32, i32) {
    %c0_i32 = arith.constant 0 : i32
    %c0_i32_0 = arith.constant 0 : i32
    %c0_i32_1 = arith.constant 0 : i32
    return %c0_i32, %c0_i32_0 : i32, i32
  }
  func.func @transform_9(%arg0: i32) -> (i32, i32) {
    %c0_i32 = arith.constant 0 : i32
    %c0_i32_0 = arith.constant 0 : i32
    %c0_i32_1 = arith.constant 0 : i32
    return %c0_i32, %c0_i32_0 : i32, i32
  }
  func.func @transform_10(%arg0: i32) -> (i32, i32) {
    %c0_i32 = arith.constant 0 : i32
    %c0_i32_0 = arith.constant 0 : i32
    %c0_i32_1 = arith.constant 0 : i32
    return %c0_i32, %c0_i32_0 : i32, i32
  }
  func.func @transform_11(%arg0: i32) -> (i32, i32) {
    %c0_i32 = arith.constant 0 : i32
    %c0_i32_0 = arith.constant 0 : i32
    %c0_i32_1 = arith.constant 0 : i32
    return %c0_i32, %c0_i32_0 : i32, i32
  }
  func.func @transform_12(%arg0: i32) -> (i32, i32) {
    %c0_i32 = arith.constant 0 : i32
    %c0_i32_0 = arith.constant 0 : i32
    %c0_i32_1 = arith.constant 0 : i32
    return %c0_i32, %c0_i32_0 : i32, i32
  }
  func.func @transform_13(%arg0: i32) -> (i32, i32) {
    %c0_i32 = arith.constant 0 : i32
    %c0_i32_0 = arith.constant 0 : i32
    return %arg0, %c0_i32 : i32, i32
  }
}

</mosaic_0001>

<llo_original>
// kernel: cnn_forward.1
$region0: #{cnn_forward.1}
  #allocation0 [shape = 'u32[]', space=smem, size = 0x4, offset = 0x4, fixed_abs, tag = 'smem constant byte address 0x4 - core index']
  #allocation1 [shape = 'u32[144,128]{1,0:T(1,128)}', space=vmem, size = 0x12000, scoped, tag = 'internal scratch']
  #allocation2 [shape = 'f32[256,128]{1,0:T(8,128)}', space=vmem, size = 0x20000, scoped, tag = 'scratch operand']
  #allocation3 [shape = 'f32[128,128]{1,0:T(8,128)}', space=vmem, size = 0x10000, scoped, tag = 'scratch operand']
  %s0 = inlined_call_operand.vmem [shape: f32[8,36,32], index: 0, kind: input, shape index: {}]
  %s1 = inlined_call_operand.hbm [shape: f32[5,32,128], index: 1, kind: input, shape index: {}]
  %s2 = inlined_call_operand.hbm [shape: f32[5,32,128], index: 2, kind: input, shape index: {}]
  %s3 = inlined_call_operand.vmem [shape: f32[1,128], index: 3, kind: input, shape index: {}]
  %s4 = inlined_call_operand.vmem [shape: f32[5,128,128], index: 4, kind: input, shape index: {}]
  %s5 = inlined_call_operand.hbm [shape: f32[5,128,128], index: 5, kind: input, shape index: {}]
  %s6 = inlined_call_operand.vmem [shape: f32[1,128], index: 6, kind: input, shape index: {}]
  %s7 = inlined_call_operand.hbm [shape: f32[5,128,128], index: 7, kind: input, shape index: {}]
  %s8 = inlined_call_operand.vmem [shape: f32[1,128], index: 8, kind: input, shape index: {}]
  %s9 = inlined_call_operand.hbm [shape: f32[128,128], index: 9, kind: input, shape index: {}]
  %s10 = inlined_call_operand.hbm [shape: f32[1,128], index: 10, kind: input, shape index: {}]
  %s11 = inlined_call_operand.hbm [shape: f32[128,128], index: 11, kind: input, shape index: {}]
  %s12 = inlined_call_operand.hbm [shape: f32[1,128], index: 12, kind: input, shape index: {}]
  %s13 = inlined_call_operand.vmem [shape: f32[8,128], index: 13, kind: output, shape index: {}]
  %s14 = sld [smem:[#allocation0]]
  $region94: #{cnn_forward.1} parent=0
    _
  %s16 = ssub.s32 1, %s14
  %s17 = scalar_select 0, %s16, %s14
  $region1: #{cnn_forward.1} parent=0
    #allocation4 [shape = 'u8[81920]{0}', space=vmem, size = 0x14000, scoped, tag = 'input window, operand 1, single buffered']
    #allocation5 [shape = 's32[1]{0}', space=sflag, size = 0x4, scoped, tag = 'scoped memory for cnn_forward.1']
    #allocation6 [shape = 'u8[81920]{0}', space=vmem, size = 0x14000, scoped, tag = 'input window, operand 2, single buffered']
    #allocation7 [shape = 's32[1]{0}', space=sflag, size = 0x4, scoped, tag = 'scoped memory for cnn_forward.1']
    #allocation8 [shape = 'u8[327680]{0}', space=vmem, size = 0x50000, scoped, tag = 'input window, operand 5, single buffered']
    #allocation9 [shape = 'u8[327680]{0}', space=vmem, size = 0x50000, scoped, tag = 'input window, operand 7, single buffered']
    #allocation10 [shape = 's32[1]{0}', space=sflag, size = 0x4, scoped, tag = 'scoped memory for cnn_forward.1']
    #allocation11 [shape = 'u8[65536]{0}', space=vmem, size = 0x10000, scoped, tag = 'input window, operand 9, single buffered']
    #allocation12 [shape = 'u8[512]{0}', space=vmem, size = 0x400, scoped, tag = 'input window, operand 10, single buffered']
    #allocation13 [shape = 's32[1]{0}', space=sflag, size = 0x4, scoped, tag = 'scoped memory for cnn_forward.1']
    #allocation14 [shape = 'u8[65536]{0}', space=vmem, size = 0x10000, scoped, tag = 'input window, operand 11, single buffered']
    #allocation15 [shape = 'u8[512]{0}', space=vmem, size = 0x400, scoped, tag = 'input window, operand 12, single buffered']
    #allocation16 [shape = 's32[1]{0}', space=sflag, size = 0x4, scoped, tag = 'scoped memory for cnn_forward.1']
    %18 = vsyncpa [#allocation5], 0
    %19 = vsyncpa [#allocation7], 0
    %20 = vsyncpa [#allocation10], 0
    %21 = vsyncpa [#allocation13], 0
    %22 = vsyncpa [#allocation16], 0
    // Predicated region
    $region2: #{cnn_forward.1} parent=1 // pred_check
      _
    $region3: #{cnn_forward.1} parent=1 // pred_check_branch
      %24 = sbr.rel (0) target = $region5
    $region4: #{cnn_forward.1} parent=1 // pred_region
      _
    $region5: #{cnn_forward.1} parent=1 // pred_fallthru
      _
    // Predicated region
    $region6: #{cnn_forward.1} parent=1 // pred_check
      _
    $region7: #{cnn_forward.1} parent=1 // pred_check_branch
      %26 = sbr.rel (0) target = $region9
    $region8: #{cnn_forward.1} parent=1 // pred_region
      %s28 = ssub.s32 2560, 2560
      %29 = vsyncadd [#allocation5], %s28
      %s30 = sshll.u32 [#allocation4], 4
      %s31 = int_to_ptr.vmem [resolvable:$true] %s30
      %36 = dma.hbm_to_vmem [thread:$0]  %s1, 2560, %s31, [#allocation5], 128, 128, 8
    $region9: #{cnn_forward.1} parent=1 // pred_fallthru
      _
    // Predicated region
    $region10: #{cnn_forward.1} parent=1 // pred_check
      _
    $region11: #{cnn_forward.1} parent=1 // pred_check_branch
      %38 = sbr.rel (0) target = $region13
    $region12: #{cnn_forward.1} parent=1 // pred_region
      %s40 = ssub.s32 2560, 2560
      %41 = vsyncadd [#allocation7], %s40
      %s42 = sshll.u32 [#allocation6], 4
      %s43 = int_to_ptr.vmem [resolvable:$true] %s42
      %48 = dma.hbm_to_vmem [thread:$0]  %s2, 2560, %s43, [#allocation7], 128, 128, 8
    $region13: #{cnn_forward.1} parent=1 // pred_fallthru
      _
    // Predicated region
    $region14: #{cnn_forward.1} parent=1 // pred_check
      _
    $region15: #{cnn_forward.1} parent=1 // pred_check_branch
      %50 = sbr.rel (0) target = $region17
    $region16: #{cnn_forward.1} parent=1 // pred_region
      _
    $region17: #{cnn_forward.1} parent=1 // pred_fallthru
      _
    // Predicated region
    $region18: #{cnn_forward.1} parent=1 // pred_check
      _
    $region19: #{cnn_forward.1} parent=1 // pred_check_branch
      %52 = sbr.rel (0) target = $region21
    $region20: #{cnn_forward.1} parent=1 // pred_region
      _
    $region21: #{cnn_forward.1} parent=1 // pred_fallthru
      _
    // Predicated region
    $region22: #{cnn_forward.1} parent=1 // pred_check
      _
    $region23: #{cnn_forward.1} parent=1 // pred_check_branch
      %54 = sbr.rel (0) target = $region25
    $region24: #{cnn_forward.1} parent=1 // pred_region
      %s56 = ssub.s32 10240, 10240
      %57 = vsyncadd [#allocation7], %s56
      %s58 = sshll.u32 [#allocation8], 4
      %s59 = int_to_ptr.vmem [resolvable:$true] %s58
      %64 = dma.hbm_to_vmem [thread:$0]  %s5, 10240, %s59, [#allocation7], 128, 128, 8
    $region25: #{cnn_forward.1} parent=1 // pred_fallthru
      _
    // Predicated region
    $region26: #{cnn_forward.1} parent=1 // pred_check
      _
    $region27: #{cnn_forward.1} parent=1 // pred_check_branch
      %66 = sbr.rel (0) target = $region29
    $region28: #{cnn_forward.1} parent=1 // pred_region
      _
    $region29: #{cnn_forward.1} parent=1 // pred_fallthru
      _
    // Predicated region
    $region30: #{cnn_forward.1} parent=1 // pred_check
      _
    $region31: #{cnn_forward.1} parent=1 // pred_check_branch
      %68 = sbr.rel (0) target = $region33
    $region32: #{cnn_forward.1} parent=1 // pred_region
      %s70 = ssub.s32 10240, 10240
      %71 = vsyncadd [#allocation10], %s70
      %s72 = sshll.u32 [#allocation9], 4
      %s73 = int_to_ptr.vmem [resolvable:$true] %s72
      %78 = dma.hbm_to_vmem [thread:$0]  %s7, 10240, %s73, [#allocation10], 128, 128, 8
    $region33: #{cnn_forward.1} parent=1 // pred_fallthru
      _
    // Predicated region
    $region34: #{cnn_forward.1} parent=1 // pred_check
      _
    $region35: #{cnn_forward.1} parent=1 // pred_check_branch
      %80 = sbr.rel (0) target = $region37
    $region36: #{cnn_forward.1} parent=1 // pred_region
      _
    $region37: #{cnn_forward.1} parent=1 // pred_fallthru
      _
    // Predicated region
    $region38: #{cnn_forward.1} parent=1 // pred_check
      _
    $region39: #{cnn_forward.1} parent=1 // pred_check_branch
      %82 = sbr.rel (0) target = $region41
    $region40: #{cnn_forward.1} parent=1 // pred_region
      %s84 = ssub.s32 2048, 2048
      %85 = vsyncadd [#allocation10], %s84
      %s86 = sshll.u32 [#allocation11], 4
      %s87 = int_to_ptr.vmem [resolvable:$true] %s86
      %92 = dma.hbm_to_vmem [thread:$0]  %s9, 2048, %s87, [#allocation10], 128, 128, 8
    $region41: #{cnn_forward.1} parent=1 // pred_fallthru
      _
    // Predicated region
    $region42: #{cnn_forward.1} parent=1 // pred_check
      _
    $region43: #{cnn_forward.1} parent=1 // pred_check_branch
      %94 = sbr.rel (0) target = $region45
    $region44: #{cnn_forward.1} parent=1 // pred_region
      %s96 = ssub.s32 16, 16
      %97 = vsyncadd [#allocation13], %s96
      %s99 = sshll.u32 [#allocation12], 4
      %s100 = int_to_ptr.vmem [resolvable:$true] %s99
      %102 = dma.hbm_to_vmem [thread:$0]  %s10, 16, %s100, [#allocation13]
    $region45: #{cnn_forward.1} parent=1 // pred_fallthru
      _
    // Predicated region
    $region46: #{cnn_forward.1} parent=1 // pred_check
      _
    $region47: #{cnn_forward.1} parent=1 // pred_check_branch
      %104 = sbr.rel (0) target = $region49
    $region48: #{cnn_forward.1} parent=1 // pred_region
      %s106 = ssub.s32 2048, 2048
      %107 = vsyncadd [#allocation13], %s106
      %s108 = sshll.u32 [#allocation14], 4
      %s109 = int_to_ptr.vmem [resolvable:$true] %s108
      %114 = dma.hbm_to_vmem [thread:$0]  %s11, 2048, %s109, [#allocation13], 128, 128, 8
    $region49: #{cnn_forward.1} parent=1 // pred_fallthru
      _
    // Predicated region
    $region50: #{cnn_forward.1} parent=1 // pred_check
      _
    $region51: #{cnn_forward.1} parent=1 // pred_check_branch
      %116 = sbr.rel (0) target = $region53
    $region52: #{cnn_forward.1} parent=1 // pred_region
      %s118 = ssub.s32 16, 16
      %119 = vsyncadd [#allocation16], %s118
      %s121 = sshll.u32 [#allocation15], 4
      %s122 = int_to_ptr.vmem [resolvable:$true] %s121
      %124 = dma.hbm_to_vmem [thread:$0]  %s12, 16, %s122, [#allocation16]
    $region53: #{cnn_forward.1} parent=1 // pred_fallthru
      _
    // Predicated region
    $region54: #{cnn_forward.1} parent=1 // pred_check
      _
    $region55: #{cnn_forward.1} parent=1 // pred_check_branch
      %126 = sbr.rel (0) target = $region57
    $region56: #{cnn_forward.1} parent=1 // pred_region
      %127 = dma.done [#allocation5], 2560
    $region57: #{cnn_forward.1} parent=1 // pred_fallthru
      _
    // Predicated region
    $region58: #{cnn_forward.1} parent=1 // pred_check
      _
    $region59: #{cnn_forward.1} parent=1 // pred_check_branch
      %129 = sbr.rel (0) target = $region61
    $region60: #{cnn_forward.1} parent=1 // pred_region
      %130 = dma.done [#allocation7], 2560
    $region61: #{cnn_forward.1} parent=1 // pred_fallthru
      _
    // Predicated region
    $region62: #{cnn_forward.1} parent=1 // pred_check
      _
    $region63: #{cnn_forward.1} parent=1 // pred_check_branch
      %132 = sbr.rel (0) target = $region65
    $region64: #{cnn_forward.1} parent=1 // pred_region
      %133 = dma.done [#allocation7], 10240
    $region65: #{cnn_forward.1} parent=1 // pred_fallthru
      _
    // Predicated region
    $region66: #{cnn_forward.1} parent=1 // pred_check
      _
    $region67: #{cnn_forward.1} parent=1 // pred_check_branch
      %135 = sbr.rel (0) target = $region69
    $region68: #{cnn_forward.1} parent=1 // pred_region
      %136 = dma.done [#allocation10], 10240
    $region69: #{cnn_forward.1} parent=1 // pred_fallthru
      _
    // Predicated region
    $region70: #{cnn_forward.1} parent=1 // pred_check
      _
    $region71: #{cnn_forward.1} parent=1 // pred_check_branch
      %138 = sbr.rel (0) target = $region73
    $region72: #{cnn_forward.1} parent=1 // pred_region
      %139 = dma.done [#allocation10], 2048
    $region73: #{cnn_forward.1} parent=1 // pred_fallthru
      _
    // Predicated region
    $region74: #{cnn_forward.1} parent=1 // pred_check
      _
    $region75: #{cnn_forward.1} parent=1 // pred_check_branch
      %141 = sbr.rel (0) target = $region77
    $region76: #{cnn_forward.1} parent=1 // pred_region
      %142 = dma.done [#allocation13], 16
    $region77: #{cnn_forward.1} parent=1 // pred_fallthru
      _
    // Predicated region
    $region78: #{cnn_forward.1} parent=1 // pred_check
      _
    $region79: #{cnn_forward.1} parent=1 // pred_check_branch
      %144 = sbr.rel (0) target = $region81
    $region80: #{cnn_forward.1} parent=1 // pred_region
      %145 = dma.done [#allocation13], 2048
    $region81: #{cnn_forward.1} parent=1 // pred_fallthru
      _
    // Predicated region
    $region82: #{cnn_forward.1} parent=1 // pred_check
      _
    $region83: #{cnn_forward.1} parent=1 // pred_check_branch
      %147 = sbr.rel (0) target = $region85
    $region84: #{cnn_forward.1} parent=1 // pred_region
      %148 = dma.done [#allocation16], 16
    $region85: #{cnn_forward.1} parent=1 // pred_fallthru
      _
    %v149 = vld [vmem:[%s0] sm:$0xff]
    %v150 = vld [vmem:[%s0 + $0x8] sm:$0xff]
    %v151 = vld [vmem:[%s0 + $0x10] sm:$0xff]
    %v152 = vld [vmem:[%s0 + $0x18] sm:$0xff]
    %v153 = vld [vmem:[%s0 + $0x20] sm:$0xf]
    %v154 = vld [vmem:[%s0 + $0x28] sm:$0xff]
    %v155 = vld [vmem:[%s0 + $0x30] sm:$0xff]
    %v156 = vld [vmem:[%s0 + $0x38] sm:$0xff]
    %v157 = vld [vmem:[%s0 + $0x40] sm:$0xff]
    %v158 = vld [vmem:[%s0 + $0x48] sm:$0xf]
    %v159 = vld [vmem:[%s0 + $0x50] sm:$0xff]
    %v160 = vld [vmem:[%s0 + $0x58] sm:$0xff]
    %v161 = vld [vmem:[%s0 + $0x60] sm:$0xff]
    %v162 = vld [vmem:[%s0 + $0x68] sm:$0xff]
    %v163 = vld [vmem:[%s0 + $0x70] sm:$0xf]
    %v164 = vld [vmem:[%s0 + $0x78] sm:$0xff]
    %v165 = vld [vmem:[%s0 + $0x80] sm:$0xff]
    %v166 = vld [vmem:[%s0 + $0x88] sm:$0xff]
    %v167 = vld [vmem:[%s0 + $0x90] sm:$0xff]
    %v168 = vld [vmem:[%s0 + $0x98] sm:$0xf]
    %v169 = vld [vmem:[%s0 + $0xa0] sm:$0xff]
    %v170 = vld [vmem:[%s0 + $0xa8] sm:$0xff]
    %v171 = vld [vmem:[%s0 + $0xb0] sm:$0xff]
    %v172 = vld [vmem:[%s0 + $0xb8] sm:$0xff]
    %v173 = vld [vmem:[%s0 + $0xc0] sm:$0xf]
    %v174 = vld [vmem:[%s0 + $0xc8] sm:$0xff]
    %v175 = vld [vmem:[%s0 + $0xd0] sm:$0xff]
    %v176 = vld [vmem:[%s0 + $0xd8] sm:$0xff]
    %v177 = vld [vmem:[%s0 + $0xe0] sm:$0xff]
    %v178 = vld [vmem:[%s0 + $0xe8] sm:$0xf]
    %v179 = vld [vmem:[%s0 + $0xf0] sm:$0xff]
    %v180 = vld [vmem:[%s0 + $0xf8] sm:$0xff]
    %v181 = vld [vmem:[%s0 + $0x100] sm:$0xff]
    %v182 = vld [vmem:[%s0 + $0x108] sm:$0xff]
    %v183 = vld [vmem:[%s0 + $0x110] sm:$0xf]
    %v184 = vld [vmem:[%s0 + $0x118] sm:$0xff]
    %v185 = vld [vmem:[%s0 + $0x120] sm:$0xff]
    %v186 = vld [vmem:[%s0 + $0x128] sm:$0xff]
    %v187 = vld [vmem:[%s0 + $0x130] sm:$0xff]
    %v188 = vld [vmem:[%s0 + $0x138] sm:$0xf]
    %v189 = vld [vmem:[#allocation4] sm:$0xff]
    %v190 = vld [vmem:[#allocation4 + $0x8] sm:$0xff]
    %v191 = vld [vmem:[#allocation4 + $0x10] sm:$0xff]
    %v192 = vld [vmem:[#allocation4 + $0x18] sm:$0xff]
    %v193 = vld [vmem:[#allocation6] sm:$0xff]
    %v194 = vld [vmem:[#allocation6 + $0x8] sm:$0xff]
    %v195 = vld [vmem:[#allocation6 + $0x10] sm:$0xff]
    %v196 = vld [vmem:[#allocation6 + $0x18] sm:$0xff]
    %vm237 = vcmask 1046528
    %v238 = vrot.slane %v149, 1
    %v239 = vrot.slane %v150, 1
    %v240 = vsel %vm237, %v238, %v239
    %v241 = vrot.slane %v151, 1
    %v242 = vsel %vm237, %v239, %v241
    %v243 = vrot.slane %v152, 1
    %v244 = vsel %vm237, %v241, %v243
    %v245 = vrot.slane %v153, 1
    %v246 = vsel %vm237, %v243, %v245
    %v247 = vrot.slane %v154, 1
    %v248 = vrot.slane %v155, 1
    %v249 = vsel %vm237, %v247, %v248
    %v250 = vrot.slane %v156, 1
    %v251 = vsel %vm237, %v248, %v250
    %v252 = vrot.slane %v157, 1
    %v253 = vsel %vm237, %v250, %v252
    %v254 = vrot.slane %v158, 1
    %v255 = vsel %vm237, %v252, %v254
    %v256 = vrot.slane %v159, 1
    %v257 = vrot.slane %v160, 1
    %v258 = vsel %vm237, %v256, %v257
    %v259 = vrot.slane %v161, 1
    %v260 = vsel %vm237, %v257, %v259
    %v261 = vrot.slane %v162, 1
    %v262 = vsel %vm237, %v259, %v261
    %v263 = vrot.slane %v163, 1
    %v264 = vsel %vm237, %v261, %v263
    %v265 = vrot.slane %v164, 1
    %v266 = vrot.slane %v165, 1
    %v267 = vsel %vm237, %v265, %v266
    %v268 = vrot.slane %v166, 1
    %v269 = vsel %vm237, %v266, %v268
    %v270 = vrot.slane %v167, 1
    %v271 = vsel %vm237, %v268, %v270
    %v272 = vrot.slane %v168, 1
    %v273 = vsel %vm237, %v270, %v272
    %v274 = vrot.slane %v169, 1
    %v275 = vrot.slane %v170, 1
    %v276 = vsel %vm237, %v274, %v275
    %v277 = vrot.slane %v171, 1
    %v278 = vsel %vm237, %v275, %v277
    %v279 = vrot.slane %v172, 1
    %v280 = vsel %vm237, %v277, %v279
    %v281 = vrot.slane %v173, 1
    %v282 = vsel %vm237, %v279, %v281
    %v283 = vrot.slane %v174, 1
    %v284 = vrot.slane %v175, 1
    %v285 = vsel %vm237, %v283, %v284
    %v286 = vrot.slane %v176, 1
    %v287 = vsel %vm237, %v284, %v286
    %v288 = vrot.slane %v177, 1
    %v289 = vsel %vm237, %v286, %v288
    %v290 = vrot.slane %v178, 1
    %v291 = vsel %vm237, %v288, %v290
    %v292 = vrot.slane %v179, 1
    %v293 = vrot.slane %v180, 1
    %v294 = vsel %vm237, %v292, %v293
    %v295 = vrot.slane %v181, 1
    %v296 = vsel %vm237, %v293, %v295
    %v297 = vrot.slane %v182, 1
    %v298 = vsel %vm237, %v295, %v297
    %v299 = vrot.slane %v183, 1
    %v300 = vsel %vm237, %v297, %v299
    %v301 = vrot.slane %v184, 1
    %v302 = vrot.slane %v185, 1
    %v303 = vsel %vm237, %v301, %v302
    %v304 = vrot.slane %v186, 1
    %v305 = vsel %vm237, %v302, %v304
    %v306 = vrot.slane %v187, 1
    %v307 = vsel %vm237, %v304, %v306
    %v308 = vrot.slane %v188, 1
    %v309 = vsel %vm237, %v306, %v308
    %s310 = scalar_lea.vmem [#allocation4], 32
    %v311 = vld [vmem:[%s310] sm:$0xff]
    %v312 = vld [vmem:[%s310 + $0x8] sm:$0xff]
    %v313 = vld [vmem:[%s310 + $0x10] sm:$0xff]
    %v314 = vld [vmem:[%s310 + $0x18] sm:$0xff]
    %vm315 = vcmask 261120
    %v316 = vsel %vm315, %v240, 0
    %v318 = vsel %vm315, %v242, 0
    %v320 = vsel %vm315, %v244, 0
    %v322 = vsel %vm315, %v246, 0
    %v324 = vsel %vm315, %v249, 0
    %v326 = vsel %vm315, %v251, 0
    %v328 = vsel %vm315, %v253, 0
    %v330 = vsel %vm315, %v255, 0
    %v332 = vsel %vm315, %v258, 0
    %v334 = vsel %vm315, %v260, 0
    %v336 = vsel %vm315, %v262, 0
    %v338 = vsel %vm315, %v264, 0
    %v340 = vsel %vm315, %v267, 0
    %v342 = vsel %vm315, %v269, 0
    %v344 = vsel %vm315, %v271, 0
    %v346 = vsel %vm315, %v273, 0
    %v348 = vsel %vm315, %v276, 0
    %v350 = vsel %vm315, %v278, 0
    %v352 = vsel %vm315, %v280, 0
    %v354 = vsel %vm315, %v282, 0
    %v356 = vsel %vm315, %v285, 0
    %v358 = vsel %vm315, %v287, 0
    %v360 = vsel %vm315, %v289, 0
    %v362 = vsel %vm315, %v291, 0
    %v364 = vsel %vm315, %v294, 0
    %v366 = vsel %vm315, %v296, 0
    %v368 = vsel %vm315, %v298, 0
    %v370 = vsel %vm315, %v300, 0
    %v372 = vsel %vm315, %v303, 0
    %v374 = vsel %vm315, %v305, 0
    %v376 = vsel %vm315, %v307, 0
    %v378 = vsel %vm315, %v309, 0
    %380 = vmatprep.subr.mxu0 0.0
    %381 = vmatpush1.msra.mxu0 %v311
    %382 = vmatprep.subr.mxu0 0.0
    %383 = vmatpush1.msra.mxu0 %v312
    %384 = vmatprep.subr.mxu0 0.0
    %385 = vmatpush1.msra.mxu0 %v313
    %386 = vmatprep.subr.mxu0 0.0
    %387 = vmatpush1.msra.mxu0 %v314
    %388 = vmatprep.subr.mxu0 0.0
    %389 = vmatpush1.msra.mxu0 0.0
    %390 = vmatprep.subr.mxu0 0.0
    %391 = vmatpush1.msra.mxu0 0.0
    %392 = vmatprep.subr.mxu0 0.0
    %393 = vmatpush1.msra.mxu0 0.0
    %394 = vmatprep.subr.mxu0 0.0
    %395 = vmatpush1.msra.mxu0 0.0
    %396 = vmatprep.subr.mxu0 0.0
    %397 = vmatpush1.msra.mxu0 0.0
    %398 = vmatprep.subr.mxu0 0.0
    %399 = vmatpush1.msra.mxu0 0.0
    %400 = vmatprep.subr.mxu0 0.0
    %401 = vmatpush1.msra.mxu0 0.0
    %402 = vmatprep.subr.mxu0 0.0
    %403 = vmatpush1.msra.mxu0 0.0
    %404 = vmatprep.subr.mxu0 0.0
    %405 = vmatpush1.msra.mxu0 0.0
    %406 = vmatprep.subr.mxu0 0.0
    %407 = vmatpush1.msra.mxu0 0.0
    %408 = vmatprep.subr.mxu0 0.0
    %409 = vmatpush1.msra.mxu0 0.0
    %410 = vmatprep.subr.mxu0 0.0
    %411 = vmatpush1.msra.mxu0 0.0
    %412 = vmatprep.subr.mxu0 0.0
    %413 = vmatpush1.msra.mxu0 0.0
    %414 = vmatprep.subr.mxu0 0.0
    %415 = vmatpush1.msra.mxu0 0.0
    %416 = vmatprep.subr.mxu0 0.0
    %417 = vmatpush1.msra.mxu0 0.0
    %418 = vmatprep.subr.mxu0 0.0
    %419 = vmatpush1.msra.mxu0 0.0
    %420 = vmatprep.subr.mxu0 0.0
    %421 = vmatpush1.msra.mxu0 0.0
    %422 = vmatprep.subr.mxu0 0.0
    %423 = vmatpush1.msra.mxu0 0.0
    %424 = vmatprep.subr.mxu0 0.0
    %425 = vmatpush1.msra.mxu0 0.0
    %426 = vmatprep.subr.mxu0 0.0
    %427 = vmatpush1.msra.mxu0 0.0
    %428 = vmatprep.subr.mxu0 0.0
    %429 = vmatpush1.msra.mxu0 0.0
    %430 = vmatprep.subr.mxu0 0.0
    %431 = vmatpush1.msra.mxu0 0.0
    %432 = vmatprep.subr.mxu0 0.0
    %433 = vmatpush1.msra.mxu0 0.0
    %434 = vmatprep.subr.mxu0 0.0
    %435 = vmatpush1.msra.mxu0 0.0
    %436 = vmatprep.subr.mxu0 0.0
    %437 = vmatpush1.msra.mxu0 0.0
    %438 = vmatprep.subr.mxu0 0.0
    %439 = vmatpush1.msra.mxu0 0.0
    %440 = vmatprep.subr.mxu0 0.0
    %441 = vmatpush1.msra.mxu0 0.0
    %442 = vmatprep.subr.mxu0 0.0
    %443 = vmatpush1.msra.mxu0 0.0
    %444 = vmatprep.mubr.f32.mxu0 0.0
    %445 = vmatmul.mubr.f32.gmra.mrb[0].mxu0 %v316
    %v446 = vpop.f32.mrb[0].mxu0
    %v447 = vadd.f32 0.0, %v446
    %v448 = vpop.f32.mrb[0].mxu0
    %449 = vmatprep.mubr.f32.mxu0 0.0
    %450 = vmatmul.mubr.f32.gmra.mrb[0].mxu0 %v318
    %v451 = vpop.f32.mrb[0].mxu0
    %v452 = vadd.f32 0.0, %v451
    %v453 = vpop.f32.mrb[0].mxu0
    %454 = vmatprep.mubr.f32.mxu0 0.0
    %455 = vmatmul.mubr.f32.gmra.mrb[0].mxu0 %v320
    %v456 = vpop.f32.mrb[0].mxu0
    %v457 = vadd.f32 0.0, %v456
    %v458 = vpop.f32.mrb[0].mxu0
    %459 = vmatprep.mubr.f32.mxu0 0.0
    %460 = vmatmul.mubr.f32.gmra.mrb[0].mxu0 %v322
    %v461 = vpop.f32.mrb[0].mxu0
    %v462 = vadd.f32 0.0, %v461
    %v463 = vpop.f32.mrb[0].mxu0
    %464 = vmatprep.mubr.f32.mxu0 0.0
    %465 = vmatmul.mubr.f32.gmra.mrb[0].mxu0 %v324
    %v466 = vpop.f32.mrb[0].mxu0
    %v467 = vadd.f32 0.0, %v466
    %v468 = vpop.f32.mrb[0].mxu0
    %469 = vmatprep.mubr.f32.mxu0 0.0
    %470 = vmatmul.mubr.f32.gmra.mrb[0].mxu0 %v326
    %v471 = vpop.f32.mrb[0].mxu0
    %v472 = vadd.f32 0.0, %v471
    %v473 = vpop.f32.mrb[0].mxu0
    %474 = vmatprep.mubr.f32.mxu0 0.0
    %475 = vmatmul.mubr.f32.gmra.mrb[0].mxu0 %v328
    %v476 = vpop.f32.mrb[0].mxu0
    %v477 = vadd.f32 0.0, %v476
    %v478 = vpop.f32.mrb[0].mxu0
    %479 = vmatprep.mubr.f32.mxu0 0.0
    %480 = vmatmul.mubr.f32.gmra.mrb[0].mxu0 %v330
    %v481 = vpop.f32.mrb[0].mxu0
    %v482 = vadd.f32 0.0, %v481
    %v483 = vpop.f32.mrb[0].mxu0
    %484 = vmatprep.mubr.f32.mxu0 0.0
    %485 = vmatmul.mubr.f32.gmra.mrb[0].mxu0 %v332
    %v486 = vpop.f32.mrb[0].mxu0
    %v487 = vadd.f32 0.0, %v486
    %v488 = vpop.f32.mrb[0].mxu0
    %489 = vmatprep.mubr.f32.mxu0 0.0
    %490 = vmatmul.mubr.f32.gmra.mrb[0].mxu0 %v334
    %v491 = vpop.f32.mrb[0].mxu0
    %v492 = vadd.f32 0.0, %v491
    %v493 = vpop.f32.mrb[0].mxu0
    %494 = vmatprep.mubr.f32.mxu0 0.0
    %495 = vmatmul.mubr.f32.gmra.mrb[0].mxu0 %v336
    %v496 = vpop.f32.mrb[0].mxu0
    %v497 = vadd.f32 0.0, %v496
    %v498 = vpop.f32.mrb[0].mxu0
    %499 = vmatprep.mubr.f32.mxu0 0.0
    %500 = vmatmul.mubr.f32.gmra.mrb[0].mxu0 %v338
    %v501 = vpop.f32.mrb[0].mxu0
    %v502 = vadd.f32 0.0, %v501
    %v503 = vpop.f32.mrb[0].mxu0
    %504 = vmatprep.mubr.f32.mxu0 0.0
    %505 = vmatmul.mubr.f32.gmra.mrb[0].mxu0 %v340
    %v506 = vpop.f32.mrb[0].mxu0
    %v507 = vadd.f32 0.0, %v506
    %v508 = vpop.f32.mrb[0].mxu0
    %509 = vmatprep.mubr.f32.mxu0 0.0
    %510 = vmatmul.mubr.f32.gmra.mrb[0].mxu0 %v342
    %v511 = vpop.f32.mrb[0].mxu0
    %v512 = vadd.f32 0.0, %v511
    %v513 = vpop.f32.mrb[0].mxu0
    %514 = vmatprep.mubr.f32.mxu0 0.0
    %515 = vmatmul.mubr.f32.gmra.mrb[0].mxu0 %v344
    %v516 = vpop.f32.mrb[0].mxu0
    %v517 = vadd.f32 0.0, %v516
    %v518 = vpop.f32.mrb[0].mxu0
    %519 = vmatprep.mubr.f32.mxu0 0.0
    %520 = vmatmul.mubr.f32.gmra.mrb[0].mxu0 %v346
    %v521 = vpop.f32.mrb[0].mxu0
    %v522 = vadd.f32 0.0, %v521
    %v523 = vpop.f32.mrb[0].mxu0
    %524 = vmatprep.mubr.f32.mxu0 0.0
    %525 = vmatmul.mubr.f32.gmra.mrb[0].mxu0 %v348
    %v526 = vpop.f32.mrb[0].mxu0
    %v527 = vadd.f32 0.0, %v526
    %v528 = vpop.f32.mrb[0].mxu0
    %529 = vmatprep.mubr.f32.mxu0 0.0
    %530 = vmatmul.mubr.f32.gmra.mrb[0].mxu0 %v350
    %v531 = vpop.f32.mrb[0].mxu0
    %v532 = vadd.f32 0.0, %v531
    %v533 = vpop.f32.mrb[0].mxu0
    %534 = vmatprep.mubr.f32.mxu0 0.0
    %535 = vmatmul.mubr.f32.gmra.mrb[0].mxu0 %v352
    %v536 = vpop.f32.mrb[0].mxu0
    %v537 = vadd.f32 0.0, %v536
    %v538 = vpop.f32.mrb[0].mxu0
    %539 = vmatprep.mubr.f32.mxu0 0.0
    %540 = vmatmul.mubr.f32.gmra.mrb[0].mxu0 %v354
    %v541 = vpop.f32.mrb[0].mxu0
    %v542 = vadd.f32 0.0, %v541
    %v543 = vpop.f32.mrb[0].mxu0
    %544 = vmatprep.mubr.f32.mxu0 0.0
    %545 = vmatmul.mubr.f32.gmra.mrb[0].mxu0 %v356
    %v546 = vpop.f32.mrb[0].mxu0
    %v547 = vadd.f32 0.0, %v546
    %v548 = vpop.f32.mrb[0].mxu0
    %549 = vmatprep.mubr.f32.mxu0 0.0
    %550 = vmatmul.mubr.f32.gmra.mrb[0].mxu0 %v358
    %v551 = vpop.f32.mrb[0].mxu0
    %v552 = vadd.f32 0.0, %v551
    %v553 = vpop.f32.mrb[0].mxu0
    %554 = vmatprep.mubr.f32.mxu0 0.0
    %555 = vmatmul.mubr.f32.gmra.mrb[0].mxu0 %v360
    %v556 = vpop.f32.mrb[0].mxu0
    %v557 = vadd.f32 0.0, %v556
    %v558 = vpop.f32.mrb[0].mxu0
    %559 = vmatprep.mubr.f32.mxu0 0.0
    %560 = vmatmul.mubr.f32.gmra.mrb[0].mxu0 %v362
    %v561 = vpop.f32.mrb[0].mxu0
    %v562 = vadd.f32 0.0, %v561
    %v563 = vpop.f32.mrb[0].mxu0
    %564 = vmatprep.mubr.f32.mxu0 0.0
    %565 = vmatmul.mubr.f32.gmra.mrb[0].mxu0 %v364
    %v566 = vpop.f32.mrb[0].mxu0
    %v567 = vadd.f32 0.0, %v566
    %v568 = vpop.f32.mrb[0].mxu0
    %569 = vmatprep.mubr.f32.mxu0 0.0
    %570 = vmatmul.mubr.f32.gmra.mrb[0].mxu0 %v366
    %v571 = vpop.f32.mrb[0].mxu0
    %v572 = vadd.f32 0.0, %v571
    %v573 = vpop.f32.mrb[0].mxu0
    %574 = vmatprep.mubr.f32.mxu0 0.0
    %575 = vmatmul.mubr.f32.gmra.mrb[0].mxu0 %v368
    %v576 = vpop.f32.mrb[0].mxu0
    %v577 = vadd.f32 0.0, %v576
    %v578 = vpop.f32.mrb[0].mxu0
    %579 = vmatprep.mubr.f32.mxu0 0.0
    %580 = vmatmul.mubr.f32.gmra.mrb[0].mxu0 %v370
    %v581 = vpop.f32.mrb[0].mxu0
    %v582 = vadd.f32 0.0, %v581
    %v583 = vpop.f32.mrb[0].mxu0
    %584 = vmatprep.mubr.f32.mxu0 0.0
    %585 = vmatmul.mubr.f32.gmra.mrb[0].mxu0 %v372
    %v586 = vpop.f32.mrb[0].mxu0
    %v587 = vadd.f32 0.0, %v586
    %v588 = vpop.f32.mrb[0].mxu0
    %589 = vmatprep.mubr.f32.mxu0 0.0
    %590 = vmatmul.mubr.f32.gmra.mrb[0].mxu0 %v374
    %v591 = vpop.f32.mrb[0].mxu0
    %v592 = vadd.f32 0.0, %v591
    %v593 = vpop.f32.mrb[0].mxu0
    %594 = vmatprep.mubr.f32.mxu0 0.0
    %595 = vmatmul.mubr.f32.gmra.mrb[0].mxu0 %v376
    %v596 = vpop.f32.mrb[0].mxu0
    %v597 = vadd.f32 0.0, %v596
    %v598 = vpop.f32.mrb[0].mxu0
    %599 = vmatprep.mubr.f32.mxu0 0.0
    %600 = vmatmul.mubr.f32.gmra.mrb[0].mxu0 %v378
    %v601 = vpop.f32.mrb[0].mxu0
    %v602 = vadd.f32 0.0, %v601
    %v603 = vpop.f32.mrb[0].mxu0
    %604 = vdwg.mxu0
    %v605 = vsel %vm315, %v149, 0
    %v607 = vsel %vm315, %v150, 0
    %v609 = vsel %vm315, %v151, 0
    %v611 = vsel %vm315, %v152, 0
    %v613 = vsel %vm315, %v154, 0
    %v615 = vsel %vm315, %v155, 0
    %v617 = vsel %vm315, %v156, 0
    %v619 = vsel %vm315, %v157, 0
    %v621 = vsel %vm315, %v159, 0
    %v623 = vsel %vm315, %v160, 0
    %v625 = vsel %vm315, %v161, 0
    %v627 = vsel %vm315, %v162, 0
    %v629 = vsel %vm315, %v164, 0
    %v631 = vsel %vm315, %v165, 0
    %v633 = vsel %vm315, %v166, 0
    %v635 = vsel %vm315, %v167, 0
    %v637 = vsel %vm315, %v169, 0
    %v639 = vsel %vm315, %v170, 0
    %v641 = vsel %vm315, %v171, 0
    %v643 = vsel %vm315, %v172, 0
    %v645 = vsel %vm315, %v174, 0
    %v647 = vsel %vm315, %v175, 0
    %v649 = vsel %vm315, %v176, 0
    %v651 = vsel %vm315, %v177, 0
    %v653 = vsel %vm315, %v179, 0
    %v655 = vsel %vm315, %v180, 0
    %v657 = vsel %vm315, %v181, 0
    %v659 = vsel %vm315, %v182, 0
    %v661 = vsel %vm315, %v184, 0
    %v663 = vsel %vm315, %v185, 0
    %v665 = vsel %vm315, %v186, 0
    %v667 = vsel %vm315, %v187, 0
    %669 = vmatprep.subr.mxu0 0.0
    %670 = vmatpush1.msra.mxu0 %v189
    %671 = vmatprep.subr.mxu0 0.0
    %672 = vmatpush1.msra.mxu0 %v190
    %673 = vmatprep.subr.mxu0 0.0
    %674 = vmatpush1.msra.mxu0 %v191
    %675 = vmatprep.subr.mxu0 0.0
    %676 = vmatpush1.msra.mxu0 %v192
    %677 = vmatprep.subr.mxu0 0.0
    %678 = vmatpush1.msra.mxu0 0.0
    %679 = vmatprep.subr.mxu0 0.0
    %680 = vmatpush1.msra.mxu0 0.0
    %681 = vmatprep.subr.mxu0 0.0
    %682 = vmatpush1.msra.mxu0 0.0
    %683 = vmatprep.subr.mxu0 0.0
    %684 = vmatpush1.msra.mxu0 0.0
    %685 = vmatprep.subr.mxu0 0.0
    %686 = vmatpush1.msra.mxu0 0.0
    %687 = vmatprep.subr.mxu0 0.0
    %688 = vmatpush1.msra.mxu0 0.0
    %689 = vmatprep.subr.mxu0 0.0
    %690 = vmatpush1.msra.mxu0 0.0
    %691 = vmatprep.subr.mxu0 0.0
    %692 = vmatpush1.msra.mxu0 0.0
    %693 = vmatprep.subr.mxu0 0.0
    %694 = vmatpush1.msra.mxu0 0.0
    %695 = vmatprep.subr.mxu0 0.0
    %696 = vmatpush1.msra.mxu0 0.0
    %697 = vmatprep.subr.mxu0 0.0
    %698 = vmatpush1.msra.mxu0 0.0
    %699 = vmatprep.subr.mxu0 0.0
    %700 = vmatpush1.msra.mxu0 0.0
    %701 = vmatprep.subr.mxu0 0.0
    %702 = vmatpush1.msra.mxu0 0.0
    %703 = vmatprep.subr.mxu0 0.0
    %704 = vmatpush1.msra.mxu0 0.0
    %705 = vmatprep.subr.mxu0 0.0
    %706 = vmatpush1.msra.mxu0 0.0
    %707 = vmatprep.subr.mxu0 0.0
    %708 = vmatpush1.msra.mxu0 0.0
    %709 = vmatprep.subr.mxu0 0.0
    %710 = vmatpush1.msra.mxu0 0.0
    %711 = vmatprep.subr.mxu0 0.0
    %712 = vmatpush1.msra.mxu0 0.0
    %713 = vmatprep.subr.mxu0 0.0
    %714 = vmatpush1.msra.mxu0 0.0
    %715 = vmatprep.subr.mxu0 0.0
    %716 = vmatpush1.msra.mxu0 0.0
    %717 = vmatprep.subr.mxu0 0.0
    %718 = vmatpush1.msra.mxu0 0.0
    %719 = vmatprep.subr.mxu0 0.0
    %720 = vmatpush1.msra.mxu0 0.0
    %721 = vmatprep.subr.mxu0 0.0
    %722 = vmatpush1.msra.mxu0 0.0
    %723 = vmatprep.subr.mxu0 0.0
    %724 = vmatpush1.msra.mxu0 0.0
    %725 = vmatprep.subr.mxu0 0.0
    %726 = vmatpush1.msra.mxu0 0.0
    %727 = vmatprep.subr.mxu0 0.0
    %728 = vmatpush1.msra.mxu0 0.0
    %729 = vmatprep.subr.mxu0 0.0
    %730 = vmatpush1.msra.mxu0 0.0
    %731 = vmatprep.subr.mxu0 0.0
    %732 = vmatpush1.msra.mxu0 0.0
    %733 = vmatprep.mubr.f32.mxu0 0.0
    %734 = vmatmul.mubr.f32.gmra.mrb[0].mxu0 %v605
    %v735 = vpop.f32.mrb[0].mxu0
    %v736 = vadd.f32 %v447, %v735
    %v737 = vpop.f32.mrb[0].mxu0
    %738 = vmatprep.mubr.f32.mxu0 0.0
    %739 = vmatmul.mubr.f32.gmra.mrb[0].mxu0 %v607
    %v740 = vpop.f32.mrb[0].mxu0
    %v741 = vadd.f32 %v452, %v740
    %v742 = vpop.f32.mrb[0].mxu0
    %743 = vmatprep.mubr.f32.mxu0 0.0
    %744 = vmatmul.mubr.f32.gmra.mrb[0].mxu0 %v609
    %v745 = vpop.f32.mrb[0].mxu0
    %v746 = vadd.f32 %v457, %v745
    %v747 = vpop.f32.mrb[0].mxu0
    %748 = vmatprep.mubr.f32.mxu0 0.0
    %749 = vmatmul.mubr.f32.gmra.mrb[0].mxu0 %v611
    %v750 = vpop.f32.mrb[0].mxu0
    %v751 = vadd.f32 %v462, %v750
    %v752 = vpop.f32.mrb[0].mxu0
    %753 = vmatprep.mubr.f32.mxu0 0.0
    %754 = vmatmul.mubr.f32.gmra.mrb[0].mxu0 %v613
    %v755 = vpop.f32.mrb[0].mxu0
    %v756 = vadd.f32 %v467, %v755
    %v757 = vpop.f32.mrb[0].mxu0
    %758 = vmatprep.mubr.f32.mxu0 0.0
    %759 = vmatmul.mubr.f32.gmra.mrb[0].mxu0 %v615
    %v760 = vpop.f32.mrb[0].mxu0
    %v761 = vadd.f32 %v472, %v760
    %v762 = vpop.f32.mrb[0].mxu0
    %763 = vmatprep.mubr.f32.mxu0 0.0
    %764 = vmatmul.mubr.f32.gmra.mrb[0].mxu0 %v617
    %v765 = vpop.f32.mrb[0].mxu0
    %v766 = vadd.f32 %v477, %v765
    %v767 = vpop.f32.mrb[0].mxu0
    %768 = vmatprep.mubr.f32.mxu0 0.0
    %769 = vmatmul.mubr.f32.gmra.mrb[0].mxu0 %v619
    %v770 = vpop.f32.mrb[0].mxu0
    %v771 = vadd.f32 %v482, %v770
    %v772 = vpop.f32.mrb[0].mxu0
    %773 = vmatprep.mubr.f32.mxu0 0.0
    %774 = vmatmul.mubr.f32.gmra.mrb[0].mxu0 %v621
    %v775 = vpop.f32.mrb[0].mxu0
    %v776 = vadd.f32 %v487, %v775
    %v777 = vpop.f32.mrb[0].mxu0
    %778 = vmatprep.mubr.f32.mxu0 0.0
    %779 = vmatmul.mubr.f32.gmra.mrb[0].mxu0 %v623
    %v780 = vpop.f32.mrb[0].mxu0
    %v781 = vadd.f32 %v492, %v780
    %v782 = vpop.f32.mrb[0].mxu0
    %783 = vmatprep.mubr.f32.mxu0 0.0
    %784 = vmatmul.mubr.f32.gmra.mrb[0].mxu0 %v625
    %v785 = vpop.f32.mrb[0].mxu0
    %v786 = vadd.f32 %v497, %v785
    %v787 = vpop.f32.mrb[0].mxu0
    %788 = vmatprep.mubr.f32.mxu0 0.0
    %789 = vmatmul.mubr.f32.gmra.mrb[0].mxu0 %v627
    %v790 = vpop.f32.mrb[0].mxu0
    %v791 = vadd.f32 %v502, %v790
    %v792 = vpop.f32.mrb[0].mxu0
    %793 = vmatprep.mubr.f32.mxu0 0.0
    %794 = vmatmul.mubr.f32.gmra.mrb[0].mxu0 %v629
    %v795 = vpop.f32.mrb[0].mxu0
    %v796 = vadd.f32 %v507, %v795
    %v797 = vpop.f32.mrb[0].mxu0
    %798 = vmatprep.mubr.f32.mxu0 0.0
    %799 = vmatmul.mubr.f32.gmra.mrb[0].mxu0 %v631
    %v800 = vpop.f32.mrb[0].mxu0
    %v801 = vadd.f32 %v512, %v800
    %v802 = vpop.f32.mrb[0].mxu0
    %803 = vmatprep.mubr.f32.mxu0 0.0
    %804 = vmatmul.mubr.f32.gmra.mrb[0].mxu0 %v633
    %v805 = vpop.f32.mrb[0].mxu0
    %v806 = vadd.f32 %v517, %v805
    %v807 = vpop.f32.mrb[0].mxu0
    %808 = vmatprep.mubr.f32.mxu0 0.0
    %809 = vmatmul.mubr.f32.gmra.mrb[0].mxu0 %v635
    %v810 = vpop.f32.mrb[0].mxu0
    %v811 = vadd.f32 %v522, %v810
    %v812 = vpop.f32.mrb[0].mxu0
    %813 = vmatprep.mubr.f32.mxu0 0.0
    %814 = vmatmul.mubr.f32.gmra.mrb[0].mxu0 %v637
    %v815 = vpop.f32.mrb[0].mxu0
    %v816 = vadd.f32 %v527, %v815
    %v817 = vpop.f32.mrb[0].mxu0
    %818 = vmatprep.mubr.f32.mxu0 0.0
    %819 = vmatmul.mubr.f32.gmra.mrb[0].mxu0 %v639
    %v820 = vpop.f32.mrb[0].mxu0
    %v821 = vadd.f32 %v532, %v820
    %v822 = vpop.f32.mrb[0].mxu0
    %823 = vmatprep.mubr.f32.mxu0 0.0
    %824 = vmatmul.mubr.f32.gmra.mrb[0].mxu0 %v641
    %v825 = vpop.f32.mrb[0].mxu0
    %v826 = vadd.f32 %v537, %v825
    %v827 = vpop.f32.mrb[0].mxu0
    %828 = vmatprep.mubr.f32.mxu0 0.0
    %829 = vmatmul.mubr.f32.gmra.mrb[0].mxu0 %v643
    %v830 = vpop.f32.mrb[0].mxu0
    %v831 = vadd.f32 %v542, %v830
    %v832 = vpop.f32.mrb[0].mxu0
    %833 = vmatprep.mubr.f32.mxu0 0.0
    %834 = vmatmul.mubr.f32.gmra.mrb[0].mxu0 %v645
    %v835 = vpop.f32.mrb[0].mxu0
    %v836 = vadd.f32 %v547, %v835
    %v837 = vpop.f32.mrb[0].mxu0
    %838 = vmatprep.mubr.f32.mxu0 0.0
    %839 = vmatmul.mubr.f32.gmra.mrb[0].mxu0 %v647
    %v840 = vpop.f32.mrb[0].mxu0
    %v841 = vadd.f32 %v552, %v840
    %v842 = vpop.f32.mrb[0].mxu0
    %843 = vmatprep.mubr.f32.mxu0 0.0
    %844 = vmatmul.mubr.f32.gmra.mrb[0].mxu0 %v649
    %v845 = vpop.f32.mrb[0].mxu0
    %v846 = vadd.f32 %v557, %v845
    %v847 = vpop.f32.mrb[0].mxu0
    %848 = vmatprep.mubr.f32.mxu0 0.0
    %849 = vmatmul.mubr.f32.gmra.mrb[0].mxu0 %v651
    %v850 = vpop.f32.mrb[0].mxu0
    %v851 = vadd.f32 %v562, %v850
    %v852 = vpop.f32.mrb[0].mxu0
    %853 = vmatprep.mubr.f32.mxu0 0.0
    %854 = vmatmul.mubr.f32.gmra.mrb[0].mxu0 %v653
    %v855 = vpop.f32.mrb[0].mxu0
    %v856 = vadd.f32 %v567, %v855
    %v857 = vpop.f32.mrb[0].mxu0
    %858 = vmatprep.mubr.f32.mxu0 0.0
    %859 = vmatmul.mubr.f32.gmra.mrb[0].mxu0 %v655
    %v860 = vpop.f32.mrb[0].mxu0
    %v861 = vadd.f32 %v572, %v860
    %v862 = vpop.f32.mrb[0].mxu0
    %863 = vmatprep.mubr.f32.mxu0 0.0
    %864 = vmatmul.mubr.f32.gmra.mrb[0].mxu0 %v657
    %v865 = vpop.f32.mrb[0].mxu0
    %v866 = vadd.f32 %v577, %v865
    %v867 = vpop.f32.mrb[0].mxu0
    %868 = vmatprep.mubr.f32.mxu0 0.0
    %869 = vmatmul.mubr.f32.gmra.mrb[0].mxu0 %v659
    %v870 = vpop.f32.mrb[0].mxu0
    %v871 = vadd.f32 %v582, %v870
    %v872 = vpop.f32.mrb[0].mxu0
    %873 = vmatprep.mubr.f32.mxu0 0.0
    %874 = vmatmul.mubr.f32.gmra.mrb[0].mxu0 %v661
    %v875 = vpop.f32.mrb[0].mxu0
    %v876 = vadd.f32 %v587, %v875
    %v877 = vpop.f32.mrb[0].mxu0
    %878 = vmatprep.mubr.f32.mxu0 0.0
    %879 = vmatmul.mubr.f32.gmra.mrb[0].mxu0 %v663
    %v880 = vpop.f32.mrb[0].mxu0
    %v881 = vadd.f32 %v592, %v880
    %v882 = vpop.f32.mrb[0].mxu0
    %883 = vmatprep.mubr.f32.mxu0 0.0
    %884 = vmatmul.mubr.f32.gmra.mrb[0].mxu0 %v665
    %v885 = vpop.f32.mrb[0].mxu0
    %v886 = vadd.f32 %v597, %v885
    %v887 = vpop.f32.mrb[0].mxu0
    %888 = vmatprep.mubr.f32.mxu0 0.0
    %889 = vmatmul.mubr.f32.gmra.mrb[0].mxu0 %v667
    %v890 = vpop.f32.mrb[0].mxu0
    %v891 = vadd.f32 %v602, %v890
    %v892 = vpop.f32.mrb[0].mxu0
    %893 = vdwg.mxu0
    %s894 = scalar_lea.vmem [#allocation6], 32
    %v895 = vld [vmem:[%s894] sm:$0xff]
    %v896 = vld [vmem:[%s894 + $0x8] sm:$0xff]
    %v897 = vld [vmem:[%s894 + $0x10] sm:$0xff]
    %v898 = vld [vmem:[%s894 + $0x18] sm:$0xff]
    %899 = vmatprep.subr.mxu0 0.0
    %900 = vmatpush1.msra.mxu0 %v895
    %901 = vmatprep.subr.mxu0 0.0
    %902 = vmatpush1.msra.mxu0 %v896
    %903 = vmatprep.subr.mxu0 0.0
    %904 = vmatpush1.msra.mxu0 %v897
    %905 = vmatprep.subr.mxu0 0.0
    %906 = vmatpush1.msra.mxu0 %v898
    %907 = vmatprep.subr.mxu0 0.0
    %908 = vmatpush1.msra.mxu0 0.0
    %909 = vmatprep.subr.mxu0 0.0
    %910 = vmatpush1.msra.mxu0 0.0
    %911 = vmatprep.subr.mxu0 0.0
    %912 = vmatpush1.msra.mxu0 0.0
    %913 = vmatprep.subr.mxu0 0.0
    %914 = vmatpush1.msra.mxu0 0.0
    %915 = vmatprep.subr.mxu0 0.0
    %916 = vmatpush1.msra.mxu0 0.0
    %917 = vmatprep.subr.mxu0 0.0
    %918 = vmatpush1.msra.mxu0 0.0
    %919 = vmatprep.subr.mxu0 0.0
    %920 = vmatpush1.msra.mxu0 0.0
    %921 = vmatprep.subr.mxu0 0.0
    %922 = vmatpush1.msra.mxu0 0.0
    %923 = vmatprep.subr.mxu0 0.0
    %924 = vmatpush1.msra.mxu0 0.0
    %925 = vmatprep.subr.mxu0 0.0
    %926 = vmatpush1.msra.mxu0 0.0
    %927 = vmatprep.subr.mxu0 0.0
    %928 = vmatpush1.msra.mxu0 0.0
    %929 = vmatprep.subr.mxu0 0.0
    %930 = vmatpush1.msra.mxu0 0.0
    %931 = vmatprep.subr.mxu0 0.0
    %932 = vmatpush1.msra.mxu0 0.0
    %933 = vmatprep.subr.mxu0 0.0
    %934 = vmatpush1.msra.mxu0 0.0
    %935 = vmatprep.subr.mxu0 0.0
    %936 = vmatpush1.msra.mxu0 0.0
    %937 = vmatprep.subr.mxu0 0.0
    %938 = vmatpush1.msra.mxu0 0.0
    %939 = vmatprep.subr.mxu0 0.0
    %940 = vmatpush1.msra.mxu0 0.0
    %941 = vmatprep.subr.mxu0 0.0
    %942 = vmatpush1.msra.mxu0 0.0
    %943 = vmatprep.subr.mxu0 0.0
    %944 = vmatpush1.msra.mxu0 0.0
    %945 = vmatprep.subr.mxu0 0.0
    %946 = vmatpush1.msra.mxu0 0.0
    %947 = vmatprep.subr.mxu0 0.0
    %948 = vmatpush1.msra.mxu0 0.0
    %949 = vmatprep.subr.mxu0 0.0
    %950 = vmatpush1.msra.mxu0 0.0
    %951 = vmatprep.subr.mxu0 0.0
    %952 = vmatpush1.msra.mxu0 0.0
    %953 = vmatprep.subr.mxu0 0.0
    %954 = vmatpush1.msra.mxu0 0.0
    %955 = vmatprep.subr.mxu0 0.0
    %956 = vmatpush1.msra.mxu0 0.0
    %957 = vmatprep.subr.mxu0 0.0
    %958 = vmatpush1.msra.mxu0 0.0
    %959 = vmatprep.subr.mxu0 0.0
    %960 = vmatpush1.msra.mxu0 0.0
    %961 = vmatprep.subr.mxu0 0.0
    %962 = vmatpush1.msra.mxu0 0.0
    %963 = vmatprep.mubr.f32.mxu0 0.0
    %964 = vmatmul.mubr.f32.gmra.mrb[0].mxu0 %v316
    %v965 = vpop.f32.mrb[0].mxu0
    %v966 = vadd.f32 0.0, %v965
    %v967 = vpop.f32.mrb[0].mxu0
    %968 = vmatprep.mubr.f32.mxu0 0.0
    %969 = vmatmul.mubr.f32.gmra.mrb[0].mxu0 %v318
    %v970 = vpop.f32.mrb[0].mxu0
    %v971 = vadd.f32 0.0, %v970
    %v972 = vpop.f32.mrb[0].mxu0
    %973 = vmatprep.mubr.f32.mxu0 0.0
    %974 = vmatmul.mubr.f32.gmra.mrb[0].mxu0 %v320
    %v975 = vpop.f32.mrb[0].mxu0
    %v976 = vadd.f32 0.0, %v975
    %v977 = vpop.f32.mrb[0].mxu0
    %978 = vmatprep.mubr.f32.mxu0 0.0
    %979 = vmatmul.mubr.f32.gmra.mrb[0].mxu0 %v322
    %v980 = vpop.f32.mrb[0].mxu0
    %v981 = vadd.f32 0.0, %v980
    %v982 = vpop.f32.mrb[0].mxu0
    %983 = vmatprep.mubr.f32.mxu0 0.0
    %984 = vmatmul.mubr.f32.gmra.mrb[0].mxu0 %v324
    %v985 = vpop.f32.mrb[0].mxu0
    %v986 = vadd.f32 0.0, %v985
    %v987 = vpop.f32.mrb[0].mxu0
    %988 = vmatprep.mubr.f32.mxu0 0.0
    %989 = vmatmul.mubr.f32.gmra.mrb[0].mxu0 %v326
    %v990 = vpop.f32.mrb[0].mxu0
    %v991 = vadd.f32 0.0, %v990
    %v992 = vpop.f32.mrb[0].mxu0
    %993 = vmatprep.mubr.f32.mxu0 0.0
    %994 = vmatmul.mubr.f32.gmra.mrb[0].mxu0 %v328
    %v995 = vpop.f32.mrb[0].mxu0
    %v996 = vadd.f32 0.0, %v995
    %v997 = vpop.f32.mrb[0].mxu0
    %998 = vmatprep.mubr.f32.mxu0 0.0
    %999 = vmatmul.mubr.f32.gmra.mrb[0].mxu0 %v330
    %v1000 = vpop.f32.mrb[0].mxu0
    %v1001 = vadd.f32 0.0, %v1000
    %v1002 = vpop.f32.mrb[0].mxu0
    %1003 = vmatprep.mubr.f32.mxu0 0.0
    %1004 = vmatmul.mubr.f32.gmra.mrb[0].mxu0 %v332
    %v1005 = vpop.f32.mrb[0].mxu0
    %v1006 = vadd.f32 0.0, %v1005
    %v1007 = vpop.f32.mrb[0].mxu0
    %1008 = vmatprep.mubr.f32.mxu0 0.0
    %1009 = vmatmul.mubr.f32.gmra.mrb[0].mxu0 %v334
    %v1010 = vpop.f32.mrb[0].mxu0
    %v1011 = vadd.f32 0.0, %v1010
    %v1012 = vpop.f32.mrb[0].mxu0
    %1013 = vmatprep.mubr.f32.mxu0 0.0
    %1014 = vmatmul.mubr.f32.gmra.mrb[0].mxu0 %v336
    %v1015 = vpop.f32.mrb[0].mxu0
    %v1016 = vadd.f32 0.0, %v1015
    %v1017 = vpop.f32.mrb[0].mxu0
    %1018 = vmatprep.mubr.f32.mxu0 0.0
    %1019 = vmatmul.mubr.f32.gmra.mrb[0].mxu0 %v338
    %v1020 = vpop.f32.mrb[0].mxu0
    %v1021 = vadd.f32 0.0, %v1020
    %v1022 = vpop.f32.mrb[0].mxu0
    %1023 = vmatprep.mubr.f32.mxu0 0.0
    %1024 = vmatmul.mubr.f32.gmra.mrb[0].mxu0 %v340
    %v1025 = vpop.f32.mrb[0].mxu0
    %v1026 = vadd.f32 0.0, %v1025
    %v1027 = vpop.f32.mrb[0].mxu0
    %1028 = vmatprep.mubr.f32.mxu0 0.0
    %1029 = vmatmul.mubr.f32.gmra.mrb[0].mxu0 %v342
    %v1030 = vpop.f32.mrb[0].mxu0
    %v1031 = vadd.f32 0.0, %v1030
    %v1032 = vpop.f32.mrb[0].mxu0
    %1033 = vmatprep.mubr.f32.mxu0 0.0
    %1034 = vmatmul.mubr.f32.gmra.mrb[0].mxu0 %v344
    %v1035 = vpop.f32.mrb[0].mxu0
    %v1036 = vadd.f32 0.0, %v1035
    %v1037 = vpop.f32.mrb[0].mxu0
    %1038 = vmatprep.mubr.f32.mxu0 0.0
    %1039 = vmatmul.mubr.f32.gmra.mrb[0].mxu0 %v346
    %v1040 = vpop.f32.mrb[0].mxu0
    %v1041 = vadd.f32 0.0, %v1040
    %v1042 = vpop.f32.mrb[0].mxu0
    %1043 = vmatprep.mubr.f32.mxu0 0.0
    %1044 = vmatmul.mubr.f32.gmra.mrb[0].mxu0 %v348
    %v1045 = vpop.f32.mrb[0].mxu0
    %v1046 = vadd.f32 0.0, %v1045
    %v1047 = vpop.f32.mrb[0].mxu0
    %1048 = vmatprep.mubr.f32.mxu0 0.0
    %1049 = vmatmul.mubr.f32.gmra.mrb[0].mxu0 %v350
    %v1050 = vpop.f32.mrb[0].mxu0
    %v1051 = vadd.f32 0.0, %v1050
    %v1052 = vpop.f32.mrb[0].mxu0
    %1053 = vmatprep.mubr.f32.mxu0 0.0
    %1054 = vmatmul.mubr.f32.gmra.mrb[0].mxu0 %v352
    %v1055 = vpop.f32.mrb[0].mxu0
    %v1056 = vadd.f32 0.0, %v1055
    %v1057 = vpop.f32.mrb[0].mxu0
    %1058 = vmatprep.mubr.f32.mxu0 0.0
    %1059 = vmatmul.mubr.f32.gmra.mrb[0].mxu0 %v354
    %v1060 = vpop.f32.mrb[0].mxu0
    %v1061 = vadd.f32 0.0, %v1060
    %v1062 = vpop.f32.mrb[0].mxu0
    %1063 = vmatprep.mubr.f32.mxu0 0.0
    %1064 = vmatmul.mubr.f32.gmra.mrb[0].mxu0 %v356
    %v1065 = vpop.f32.mrb[0].mxu0
    %v1066 = vadd.f32 0.0, %v1065
    %v1067 = vpop.f32.mrb[0].mxu0
    %1068 = vmatprep.mubr.f32.mxu0 0.0
    %1069 = vmatmul.mubr.f32.gmra.mrb[0].mxu0 %v358
    %v1070 = vpop.f32.mrb[0].mxu0
    %v1071 = vadd.f32 0.0, %v1070
    %v1072 = vpop.f32.mrb[0].mxu0
    %1073 = vmatprep.mubr.f32.mxu0 0.0
    %1074 = vmatmul.mubr.f32.gmra.mrb[0].mxu0 %v360
    %v1075 = vpop.f32.mrb[0].mxu0
    %v1076 = vadd.f32 0.0, %v1075
    %v1077 = vpop.f32.mrb[0].mxu0
    %1078 = vmatprep.mubr.f32.mxu0 0.0
    %1079 = vmatmul.mubr.f32.gmra.mrb[0].mxu0 %v362
    %v1080 = vpop.f32.mrb[0].mxu0
    %v1081 = vadd.f32 0.0, %v1080
    %v1082 = vpop.f32.mrb[0].mxu0
    %1083 = vmatprep.mubr.f32.mxu0 0.0
    %1084 = vmatmul.mubr.f32.gmra.mrb[0].mxu0 %v364
    %v1085 = vpop.f32.mrb[0].mxu0
    %v1086 = vadd.f32 0.0, %v1085
    %v1087 = vpop.f32.mrb[0].mxu0
    %1088 = vmatprep.mubr.f32.mxu0 0.0
    %1089 = vmatmul.mubr.f32.gmra.mrb[0].mxu0 %v366
    %v1090 = vpop.f32.mrb[0].mxu0
    %v1091 = vadd.f32 0.0, %v1090
    %v1092 = vpop.f32.mrb[0].mxu0
    %1093 = vmatprep.mubr.f32.mxu0 0.0
    %1094 = vmatmul.mubr.f32.gmra.mrb[0].mxu0 %v368
    %v1095 = vpop.f32.mrb[0].mxu0
    %v1096 = vadd.f32 0.0, %v1095
    %v1097 = vpop.f32.mrb[0].mxu0
    %1098 = vmatprep.mubr.f32.mxu0 0.0
    %1099 = vmatmul.mubr.f32.gmra.mrb[0].mxu0 %v370
    %v1100 = vpop.f32.mrb[0].mxu0
    %v1101 = vadd.f32 0.0, %v1100
    %v1102 = vpop.f32.mrb[0].mxu0
    %1103 = vmatprep.mubr.f32.mxu0 0.0
    %1104 = vmatmul.mubr.f32.gmra.mrb[0].mxu0 %v372
    %v1105 = vpop.f32.mrb[0].mxu0
    %v1106 = vadd.f32 0.0, %v1105
    %v1107 = vpop.f32.mrb[0].mxu0
    %1108 = vmatprep.mubr.f32.mxu0 0.0
    %1109 = vmatmul.mubr.f32.gmra.mrb[0].mxu0 %v374
    %v1110 = vpop.f32.mrb[0].mxu0
    %v1111 = vadd.f32 0.0, %v1110
    %v1112 = vpop.f32.mrb[0].mxu0
    %1113 = vmatprep.mubr.f32.mxu0 0.0
    %1114 = vmatmul.mubr.f32.gmra.mrb[0].mxu0 %v376
    %v1115 = vpop.f32.mrb[0].mxu0
    %v1116 = vadd.f32 0.0, %v1115
    %v1117 = vpop.f32.mrb[0].mxu0
    %1118 = vmatprep.mubr.f32.mxu0 0.0
    %1119 = vmatmul.mubr.f32.gmra.mrb[0].mxu0 %v378
    %v1120 = vpop.f32.mrb[0].mxu0
    %v1121 = vadd.f32 0.0, %v1120
    %v1122 = vpop.f32.mrb[0].mxu0
    %1123 = vdwg.mxu0
    %1124 = vmatprep.subr.mxu0 0.0
    %1125 = vmatpush1.msra.mxu0 %v193
    %1126 = vmatprep.subr.mxu0 0.0
    %1127 = vmatpush1.msra.mxu0 %v194
    %1128 = vmatprep.subr.mxu0 0.0
    %1129 = vmatpush1.msra.mxu0 %v195
    %1130 = vmatprep.subr.mxu0 0.0
    %1131 = vmatpush1.msra.mxu0 %v196
    %1132 = vmatprep.subr.mxu0 0.0
    %1133 = vmatpush1.msra.mxu0 0.0
    %1134 = vmatprep.subr.mxu0 0.0
    %1135 = vmatpush1.msra.mxu0 0.0
    %1136 = vmatprep.subr.mxu0 0.0
    %1137 = vmatpush1.msra.mxu0 0.0
    %1138 = vmatprep.subr.mxu0 0.0
    %1139 = vmatpush1.msra.mxu0 0.0
    %1140 = vmatprep.subr.mxu0 0.0
    %1141 = vmatpush1.msra.mxu0 0.0
    %1142 = vmatprep.subr.mxu0 0.0
    %1143 = vmatpush1.msra.mxu0 0.0
    %1144 = vmatprep.subr.mxu0 0.0
    %1145 = vmatpush1.msra.mxu0 0.0
    %1146 = vmatprep.subr.mxu0 0.0
    %1147 = vmatpush1.msra.mxu0 0.0
    %1148 = vmatprep.subr.mxu0 0.0
    %1149 = vmatpush1.msra.mxu0 0.0
    %1150 = vmatprep.subr.mxu0 0.0
    %1151 = vmatpush1.msra.mxu0 0.0
    %1152 = vmatprep.subr.mxu0 0.0
    %1153 = vmatpush1.msra.mxu0 0.0
    %1154 = vmatprep.subr.mxu0 0.0
    %1155 = vmatpush1.msra.mxu0 0.0
    %1156 = vmatprep.subr.mxu0 0.0
    %1157 = vmatpush1.msra.mxu0 0.0
    %1158 = vmatprep.subr.mxu0 0.0
    %1159 = vmatpush1.msra.mxu0 0.0
    %1160 = vmatprep.subr.mxu0 0.0
    %1161 = vmatpush1.msra.mxu0 0.0
    %1162 = vmatprep.subr.mxu0 0.0
    %1163 = vmatpush1.msra.mxu0 0.0
    %1164 = vmatprep.subr.mxu0 0.0
    %1165 = vmatpush1.msra.mxu0 0.0
    %1166 = vmatprep.subr.mxu0 0.0
    %1167 = vmatpush1.msra.mxu0 0.0
    %1168 = vmatprep.subr.mxu0 0.0
    %1169 = vmatpush1.msra.mxu0 0.0
    %1170 = vmatprep.subr.mxu0 0.0
    %1171 = vmatpush1.msra.mxu0 0.0
    %1172 = vmatprep.subr.mxu0 0.0
    %1173 = vmatpush1.msra.mxu0 0.0
    %1174 = vmatprep.subr.mxu0 0.0
    %1175 = vmatpush1.msra.mxu0 0.0
    %1176 = vmatprep.subr.mxu0 0.0
    %1177 = vmatpush1.msra.mxu0 0.0
    %1178 = vmatprep.subr.mxu0 0.0
    %1179 = vmatpush1.msra.mxu0 0.0
    %1180 = vmatprep.subr.mxu0 0.0
    %1181 = vmatpush1.msra.mxu0 0.0
    %1182 = vmatprep.subr.mxu0 0.0
    %1183 = vmatpush1.msra.mxu0 0.0
    %1184 = vmatprep.subr.mxu0 0.0
    %1185 = vmatpush1.msra.mxu0 0.0
    %1186 = vmatprep.subr.mxu0 0.0
    %1187 = vmatpush1.msra.mxu0 0.0
    %1188 = vmatprep.mubr.f32.mxu0 0.0
    %1189 = vmatmul.mubr.f32.gmra.mrb[0].mxu0 %v605
    %v1190 = vpop.f32.mrb[0].mxu0
    %v1191 = vadd.f32 %v966, %v1190
    %v1192 = vpop.f32.mrb[0].mxu0
    %1193 = vmatprep.mubr.f32.mxu0 0.0
    %1194 = vmatmul.mubr.f32.gmra.mrb[0].mxu0 %v607
    %v1195 = vpop.f32.mrb[0].mxu0
    %v1196 = vadd.f32 %v971, %v1195
    %v1197 = vpop.f32.mrb[0].mxu0
    %1198 = vmatprep.mubr.f32.mxu0 0.0
    %1199 = vmatmul.mubr.f32.gmra.mrb[0].mxu0 %v609
    %v1200 = vpop.f32.mrb[0].mxu0
    %v1201 = vadd.f32 %v976, %v1200
    %v1202 = vpop.f32.mrb[0].mxu0
    %1203 = vmatprep.mubr.f32.mxu0 0.0
    %1204 = vmatmul.mubr.f32.gmra.mrb[0].mxu0 %v611
    %v1205 = vpop.f32.mrb[0].mxu0
    %v1206 = vadd.f32 %v981, %v1205
    %v1207 = vpop.f32.mrb[0].mxu0
    %1208 = vmatprep.mubr.f32.mxu0 0.0
    %1209 = vmatmul.mubr.f32.gmra.mrb[0].mxu0 %v613
    %v1210 = vpop.f32.mrb[0].mxu0
    %v1211 = vadd.f32 %v986, %v1210
    %v1212 = vpop.f32.mrb[0].mxu0
    %1213 = vmatprep.mubr.f32.mxu0 0.0
    %1214 = vmatmul.mubr.f32.gmra.mrb[0].mxu0 %v615
    %v1215 = vpop.f32.mrb[0].mxu0
    %v1216 = vadd.f32 %v991, %v1215
    %v1217 = vpop.f32.mrb[0].mxu0
    %1218 = vmatprep.mubr.f32.mxu0 0.0
    %1219 = vmatmul.mubr.f32.gmra.mrb[0].mxu0 %v617
    %v1220 = vpop.f32.mrb[0].mxu0
    %v1221 = vadd.f32 %v996, %v1220
    %v1222 = vpop.f32.mrb[0].mxu0
    %1223 = vmatprep.mubr.f32.mxu0 0.0
    %1224 = vmatmul.mubr.f32.gmra.mrb[0].mxu0 %v619
    %v1225 = vpop.f32.mrb[0].mxu0
    %v1226 = vadd.f32 %v1001, %v1225
    %v1227 = vpop.f32.mrb[0].mxu0
    %1228 = vmatprep.mubr.f32.mxu0 0.0
    %1229 = vmatmul.mubr.f32.gmra.mrb[0].mxu0 %v621
    %v1230 = vpop.f32.mrb[0].mxu0
    %v1231 = vadd.f32 %v1006, %v1230
    %v1232 = vpop.f32.mrb[0].mxu0
    %1233 = vmatprep.mubr.f32.mxu0 0.0
    %1234 = vmatmul.mubr.f32.gmra.mrb[0].mxu0 %v623
    %v1235 = vpop.f32.mrb[0].mxu0
    %v1236 = vadd.f32 %v1011, %v1235
    %v1237 = vpop.f32.mrb[0].mxu0
    %1238 = vmatprep.mubr.f32.mxu0 0.0
    %1239 = vmatmul.mubr.f32.gmra.mrb[0].mxu0 %v625
    %v1240 = vpop.f32.mrb[0].mxu0
    %v1241 = vadd.f32 %v1016, %v1240
    %v1242 = vpop.f32.mrb[0].mxu0
    %1243 = vmatprep.mubr.f32.mxu0 0.0
    %1244 = vmatmul.mubr.f32.gmra.mrb[0].mxu0 %v627
    %v1245 = vpop.f32.mrb[0].mxu0
    %v1246 = vadd.f32 %v1021, %v1245
    %v1247 = vpop.f32.mrb[0].mxu0
    %1248 = vmatprep.mubr.f32.mxu0 0.0
    %1249 = vmatmul.mubr.f32.gmra.mrb[0].mxu0 %v629
    %v1250 = vpop.f32.mrb[0].mxu0
    %v1251 = vadd.f32 %v1026, %v1250
    %v1252 = vpop.f32.mrb[0].mxu0
    %1253 = vmatprep.mubr.f32.mxu0 0.0
    %1254 = vmatmul.mubr.f32.gmra.mrb[0].mxu0 %v631
    %v1255 = vpop.f32.mrb[0].mxu0
    %v1256 = vadd.f32 %v1031, %v1255
    %v1257 = vpop.f32.mrb[0].mxu0
    %1258 = vmatprep.mubr.f32.mxu0 0.0
    %1259 = vmatmul.mubr.f32.gmra.mrb[0].mxu0 %v633
    %v1260 = vpop.f32.mrb[0].mxu0
    %v1261 = vadd.f32 %v1036, %v1260
    %v1262 = vpop.f32.mrb[0].mxu0
    %1263 = vmatprep.mubr.f32.mxu0 0.0
    %1264 = vmatmul.mubr.f32.gmra.mrb[0].mxu0 %v635
    %v1265 = vpop.f32.mrb[0].mxu0
    %v1266 = vadd.f32 %v1041, %v1265
    %v1267 = vpop.f32.mrb[0].mxu0
    %1268 = vmatprep.mubr.f32.mxu0 0.0
    %1269 = vmatmul.mubr.f32.gmra.mrb[0].mxu0 %v637
    %v1270 = vpop.f32.mrb[0].mxu0
    %v1271 = vadd.f32 %v1046, %v1270
    %v1272 = vpop.f32.mrb[0].mxu0
    %1273 = vmatprep.mubr.f32.mxu0 0.0
    %1274 = vmatmul.mubr.f32.gmra.mrb[0].mxu0 %v639
    %v1275 = vpop.f32.mrb[0].mxu0
    %v1276 = vadd.f32 %v1051, %v1275
    %v1277 = vpop.f32.mrb[0].mxu0
    %1278 = vmatprep.mubr.f32.mxu0 0.0
    %1279 = vmatmul.mubr.f32.gmra.mrb[0].mxu0 %v641
    %v1280 = vpop.f32.mrb[0].mxu0
    %v1281 = vadd.f32 %v1056, %v1280
    %v1282 = vpop.f32.mrb[0].mxu0
    %1283 = vmatprep.mubr.f32.mxu0 0.0
    %1284 = vmatmul.mubr.f32.gmra.mrb[0].mxu0 %v643
    %v1285 = vpop.f32.mrb[0].mxu0
    %v1286 = vadd.f32 %v1061, %v1285
    %v1287 = vpop.f32.mrb[0].mxu0
    %1288 = vmatprep.mubr.f32.mxu0 0.0
    %1289 = vmatmul.mubr.f32.gmra.mrb[0].mxu0 %v645
    %v1290 = vpop.f32.mrb[0].mxu0
    %v1291 = vadd.f32 %v1066, %v1290
    %v1292 = vpop.f32.mrb[0].mxu0
    %1293 = vmatprep.mubr.f32.mxu0 0.0
    %1294 = vmatmul.mubr.f32.gmra.mrb[0].mxu0 %v647
    %v1295 = vpop.f32.mrb[0].mxu0
    %v1296 = vadd.f32 %v1071, %v1295
    %v1297 = vpop.f32.mrb[0].mxu0
    %1298 = vmatprep.mubr.f32.mxu0 0.0
    %1299 = vmatmul.mubr.f32.gmra.mrb[0].mxu0 %v649
    %v1300 = vpop.f32.mrb[0].mxu0
    %v1301 = vadd.f32 %v1076, %v1300
    %v1302 = vpop.f32.mrb[0].mxu0
    %1303 = vmatprep.mubr.f32.mxu0 0.0
    %1304 = vmatmul.mubr.f32.gmra.mrb[0].mxu0 %v651
    %v1305 = vpop.f32.mrb[0].mxu0
    %v1306 = vadd.f32 %v1081, %v1305
    %v1307 = vpop.f32.mrb[0].mxu0
    %1308 = vmatprep.mubr.f32.mxu0 0.0
    %1309 = vmatmul.mubr.f32.gmra.mrb[0].mxu0 %v653
    %v1310 = vpop.f32.mrb[0].mxu0
    %v1311 = vadd.f32 %v1086, %v1310
    %v1312 = vpop.f32.mrb[0].mxu0
    %1313 = vmatprep.mubr.f32.mxu0 0.0
    %1314 = vmatmul.mubr.f32.gmra.mrb[0].mxu0 %v655
    %v1315 = vpop.f32.mrb[0].mxu0
    %v1316 = vadd.f32 %v1091, %v1315
    %v1317 = vpop.f32.mrb[0].mxu0
    %1318 = vmatprep.mubr.f32.mxu0 0.0
    %1319 = vmatmul.mubr.f32.gmra.mrb[0].mxu0 %v657
    %v1320 = vpop.f32.mrb[0].mxu0
    %v1321 = vadd.f32 %v1096, %v1320
    %v1322 = vpop.f32.mrb[0].mxu0
    %1323 = vmatprep.mubr.f32.mxu0 0.0
    %1324 = vmatmul.mubr.f32.gmra.mrb[0].mxu0 %v659
    %v1325 = vpop.f32.mrb[0].mxu0
    %v1326 = vadd.f32 %v1101, %v1325
    %v1327 = vpop.f32.mrb[0].mxu0
    %1328 = vmatprep.mubr.f32.mxu0 0.0
    %1329 = vmatmul.mubr.f32.gmra.mrb[0].mxu0 %v661
    %v1330 = vpop.f32.mrb[0].mxu0
    %v1331 = vadd.f32 %v1106, %v1330
    %v1332 = vpop.f32.mrb[0].mxu0
    %1333 = vmatprep.mubr.f32.mxu0 0.0
    %1334 = vmatmul.mubr.f32.gmra.mrb[0].mxu0 %v663
    %v1335 = vpop.f32.mrb[0].mxu0
    %v1336 = vadd.f32 %v1111, %v1335
    %v1337 = vpop.f32.mrb[0].mxu0
    %1338 = vmatprep.mubr.f32.mxu0 0.0
    %1339 = vmatmul.mubr.f32.gmra.mrb[0].mxu0 %v665
    %v1340 = vpop.f32.mrb[0].mxu0
    %v1341 = vadd.f32 %v1116, %v1340
    %v1342 = vpop.f32.mrb[0].mxu0
    %1343 = vmatprep.mubr.f32.mxu0 0.0
    %1344 = vmatmul.mubr.f32.gmra.mrb[0].mxu0 %v667
    %v1345 = vpop.f32.mrb[0].mxu0
    %v1346 = vadd.f32 %v1121, %v1345
    %v1347 = vpop.f32.mrb[0].mxu0
    %1348 = vdwg.mxu0
    %vm1349 = vcmask 1045504
    %v1350 = vrot.slane %v149, 2
    %v1351 = vrot.slane %v150, 2
    %v1352 = vsel %vm1349, %v1350, %v1351
    %v1353 = vrot.slane %v151, 2
    %v1354 = vsel %vm1349, %v1351, %v1353
    %v1355 = vrot.slane %v152, 2
    %v1356 = vsel %vm1349, %v1353, %v1355
    %v1357 = vrot.slane %v153, 2
    %v1358 = vsel %vm1349, %v1355, %v1357
    %v1359 = vrot.slane %v154, 2
    %v1360 = vrot.slane %v155, 2
    %v1361 = vsel %vm1349, %v1359, %v1360
    %v1362 = vrot.slane %v156, 2
    %v1363 = vsel %vm1349, %v1360, %v1362
    %v1364 = vrot.slane %v157, 2
    %v1365 = vsel %vm1349, %v1362, %v1364
    %v1366 = vrot.slane %v158, 2
    %v1367 = vsel %vm1349, %v1364, %v1366
    %v1368 = vrot.slane %v159, 2
    %v1369 = vrot.slane %v160, 2
    %v1370 = vsel %vm1349, %v1368, %v1369
    %v1371 = vrot.slane %v161, 2
    %v1372 = vsel %vm1349, %v1369, %v1371
    %v1373 = vrot.slane %v162, 2
    %v1374 = vsel %vm1349, %v1371, %v1373
    %v1375 = vrot.slane %v163, 2
    %v1376 = vsel %vm1349, %v1373, %v1375
    %v1377 = vrot.slane %v164, 2
    %v1378 = vrot.slane %v165, 2
    %v1379 = vsel %vm1349, %v1377, %v1378
    %v1380 = vrot.slane %v166, 2
    %v1381 = vsel %vm1349, %v1378, %v1380
    %v1382 = vrot.slane %v167, 2
    %v1383 = vsel %vm1349, %v1380, %v1382
    %v1384 = vrot.slane %v168, 2
    %v1385 = vsel %vm1349, %v1382, %v1384
    %v1386 = vrot.slane %v169, 2
    %v1387 = vrot.slane %v170, 2
    %v1388 = vsel %vm1349, %v1386, %v1387
    %v1389 = vrot.slane %v171, 2
    %v1390 = vsel %vm1349, %v1387, %v1389
    %v1391 = vrot.slane %v172, 2
    %v1392 = vsel %vm1349, %v1389, %v1391
    %v1393 = vrot.slane %v173, 2
    %v1394 = vsel %vm1349, %v1391, %v1393
    %v1395 = vrot.slane %v174, 2
    %v1396 = vrot.slane %v175, 2
    %v1397 = vsel %vm1349, %v1395, %v1396
    %v1398 = vrot.slane %v176, 2
    %v1399 = vsel %vm1349, %v1396, %v1398
    %v1400 = vrot.slane %v177, 2
    %v1401 = vsel %vm1349, %v1398, %v1400
    %v1402 = vrot.slane %v178, 2
    %v1403 = vsel %vm1349, %v1400, %v1402
    %v1404 = vrot.slane %v179, 2
    %v1405 = vrot.slane %v180, 2
    %v1406 = vsel %vm1349, %v1404, %v1405
    %v1407 = vrot.slane %v181, 2
    %v1408 = vsel %vm1349, %v1405, %v1407
    %v1409 = vrot.slane %v182, 2
    %v1410 = vsel %vm1349, %v1407, %v1409
    %v1411 = vrot.slane %v183, 2
    %v1412 = vsel %vm1349, %v1409, %v1411
    %v1413 = vrot.slane %v184, 2
    %v1414 = vrot.slane %v185, 2
    %v1415 = vsel %vm1349, %v1413, %v1414
    %v1416 = vrot.slane %v186, 2
    %v1417 = vsel %vm1349, %v1414, %v1416
    %v1418 = vrot.slane %v187, 2
    %v1419 = vsel %vm1349, %v1416, %v1418
    %v1420 = vrot.slane %v188, 2
    %v1421 = vsel %vm1349, %v1418, %v1420
    %s1422 = scalar_lea.vmem [#allocation4], 64
    %v1423 = vld [vmem:[%s1422] sm:$0xff]
    %v1424 = vld [vmem:[%s1422 + $0x8] sm:$0xff]
    %v1425 = vld [vmem:[%s1422 + $0x10] sm:$0xff]
    %v1426 = vld [vmem:[%s1422 + $0x18] sm:$0xff]
    %v1427 = vsel %vm315, %v1352, 0
    %v1429 = vsel %vm315, %v1354, 0
    %v1431 = vsel %vm315, %v1356, 0
    %v1433 = vsel %vm315, %v1358, 0
    %v1435 = vsel %vm315, %v1361, 0
    %v1437 = vsel %vm315, %v1363, 0
    %v1439 = vsel %vm315, %v1365, 0
    %v1441 = vsel %vm315, %v1367, 0
    %v1443 = vsel %vm315, %v1370, 0
    %v1445 = vsel %vm315, %v1372, 0
    %v1447 = vsel %vm315, %v1374, 0
    %v1449 = vsel %vm315, %v1376, 0
    %v1451 = vsel %vm315, %v1379, 0
    %v1453 = vsel %vm315, %v1381, 0
    %v1455 = vsel %vm315, %v1383, 0
    %v1457 = vsel %vm315, %v1385, 0
    %v1459 = vsel %vm315, %v1388, 0
    %v1461 = vsel %vm315, %v1390, 0
    %v1463 = vsel %vm315, %v1392, 0
    %v1465 = vsel %vm315, %v1394, 0
    %v1467 = vsel %vm315, %v1397, 0
    %v1469 = vsel %vm315, %v1399, 0
    %v1471 = vsel %vm315, %v1401, 0
    %v1473 = vsel %vm315, %v1403, 0
    %v1475 = vsel %vm315, %v1406, 0
    %v1477 = vsel %vm315, %v1408, 0
    %v1479 = vsel %vm315, %v1410, 0
    %v1481 = vsel %vm315, %v1412, 0
    %v1483 = vsel %vm315, %v1415, 0
    %v1485 = vsel %vm315, %v1417, 0
    %v1487 = vsel %vm315, %v1419, 0
    %v1489 = vsel %vm315, %v1421, 0
    %1491 = vmatprep.subr.mxu0 0.0
    %1492 = vmatpush1.msra.mxu0 %v1423
    %1493 = vmatprep.subr.mxu0 0.0
    %1494 = vmatpush1.msra.mxu0 %v1424
    %1495 = vmatprep.subr.mxu0 0.0
    %1496 = vmatpush1.msra.mxu0 %v1425
    %1497 = vmatprep.subr.mxu0 0.0
    %1498 = vmatpush1.msra.mxu0 %v1426
    %1499 = vmatprep.subr.mxu0 0.0
    %1500 = vmatpush1.msra.mxu0 0.0
    %1501 = vmatprep.subr.mxu0 0.0
    %1502 = vmatpush1.msra.mxu0 0.0
    %1503 = vmatprep.subr.mxu0 0.0
    %1504 = vmatpush1.msra.mxu0 0.0
    %1505 = vmatprep.subr.mxu0 0.0
    %1506 = vmatpush1.msra.mxu0 0.0
    %1507 = vmatprep.subr.mxu0 0.0
    %1508 = vmatpush1.msra.mxu0 0.0
    %1509 = vmatprep.subr.mxu0 0.0
    %1510 = vmatpush1.msra.mxu0 0.0
    %1511 = vmatprep.subr.mxu0 0.0
    %1512 = vmatpush1.msra.mxu0 0.0
    %1513 = vmatprep.subr.mxu0 0.0
    %1514 = vmatpush1.msra.mxu0 0.0
    %1515 = vmatprep.subr.mxu0 0.0
    %1516 = vmatpush1.msra.mxu0 0.0
    %1517 = vmatprep.subr.mxu0 0.0
    %1518 = vmatpush1.msra.mxu0 0.0
    %1519 = vmatprep.subr.mxu0 0.0
    %1520 = vmatpush1.msra.mxu0 0.0
    %1521 = vmatprep.subr.mxu0 0.0
    %1522 = vmatpush1.msra.mxu0 0.0
    %1523 = vmatprep.subr.mxu0 0.0
    %1524 = vmatpush1.msra.mxu0 0.0
    %1525 = vmatprep.subr.mxu0 0.0
    %1526 = vmatpush1.msra.mxu0 0.0
    %1527 = vmatprep.subr.mxu0 0.0
    %1528 = vmatpush1.msra.mxu0 0.0
    %1529 = vmatprep.subr.mxu0 0.0
    %1530 = vmatpush1.msra.mxu0 0.0
    %1531 = vmatprep.subr.mxu0 0.0
    %1532 = vmatpush1.msra.mxu0 0.0
    %1533 = vmatprep.subr.mxu0 0.0
    %1534 = vmatpush1.msra.mxu0 0.0
    %1535 = vmatprep.subr.mxu0 0.0
    %1536 = vmatpush1.msra.mxu0 0.0
    %1537 = vmatprep.subr.mxu0 0.0
    %1538 = vmatpush1.msra.mxu0 0.0
    %1539 = vmatprep.subr.mxu0 0.0
    %1540 = vmatpush1.msra.mxu0 0.0
    %1541 = vmatprep.subr.mxu0 0.0
    %1542 = vmatpush1.msra.mxu0 0.0
    %1543 = vmatprep.subr.mxu0 0.0
    %1544 = vmatpush1.msra.mxu0 0.0
    %1545 = vmatprep.subr.mxu0 0.0
    %1546 = vmatpush1.msra.mxu0 0.0
    %1547 = vmatprep.subr.mxu0 0.0
    %1548 = vmatpush1.msra.mxu0 0.0
    %1549 = vmatprep.subr.mxu0 0.0
    %1550 = vmatpush1.msra.mxu0 0.0
    %1551 = vmatprep.subr.mxu0 0.0
    %1552 = vmatpush1.msra.mxu0 0.0
    %1553 = vmatprep.subr.mxu0 0.0
    %1554 = vmatpush1.msra.mxu0 0.0
    %1555 = vmatprep.mubr.f32.mxu0 0.0
    %1556 = vmatmul.mubr.f32.gmra.mrb[0].mxu0 %v1427
    %v1557 = vpop.f32.mrb[0].mxu0
    %v1558 = vadd.f32 0.0, %v1557
    %v1559 = vpop.f32.mrb[0].mxu0
    %1560 = vmatprep.mubr.f32.mxu0 0.0
    %1561 = vmatmul.mubr.f32.gmra.mrb[0].mxu0 %v1429
    %v1562 = vpop.f32.mrb[0].mxu0
    %v1563 = vadd.f32 0.0, %v1562
    %v1564 = vpop.f32.mrb[0].mxu0
    %1565 = vmatprep.mubr.f32.mxu0 0.0
    %1566 = vmatmul.mubr.f32.gmra.mrb[0].mxu0 %v1431
    %v1567 = vpop.f32.mrb[0].mxu0
    %v1568 = vadd.f32 0.0, %v1567
    %v1569 = vpop.f32.mrb[0].mxu0
    %1570 = vmatprep.mubr.f32.mxu0 0.0
    %1571 = vmatmul.mubr.f32.gmra.mrb[0].mxu0 %v1433
    %v1572 = vpop.f32.mrb[0].mxu0
    %v1573 = vadd.f32 0.0, %v1572
    %v1574 = vpop.f32.mrb[0].mxu0
    %1575 = vmatprep.mubr.f32.mxu0 0.0
    %1576 = vmatmul.mubr.f32.gmra.mrb[0].mxu0 %v1435
    %v1577 = vpop.f32.mrb[0].mxu0
    %v1578 = vadd.f32 0.0, %v1577
    %v1579 = vpop.f32.mrb[0].mxu0
    %1580 = vmatprep.mubr.f32.mxu0 0.0
    %1581 = vmatmul.mubr.f32.gmra.mrb[0].mxu0 %v1437
    %v1582 = vpop.f32.mrb[0].mxu0
    %v1583 = vadd.f32 0.0, %v1582
    %v1584 = vpop.f32.mrb[0].mxu0
    %1585 = vmatprep.mubr.f32.mxu0 0.0
    %1586 = vmatmul.mubr.f32.gmra.mrb[0].mxu0 %v1439
    %v1587 = vpop.f32.mrb[0].mxu0
    %v1588 = vadd.f32 0.0, %v1587
    %v1589 = vpop.f32.mrb[0].mxu0
    %1590 = vmatprep.mubr.f32.mxu0 0.0
    %1591 = vmatmul.mubr.f32.gmra.mrb[0].mxu0 %v1441
    %v1592 = vpop.f32.mrb[0].mxu0
    %v1593 = vadd.f32 0.0, %v1592
    %v1594 = vpop.f32.mrb[0].mxu0
    %1595 = vmatprep.mubr.f32.mxu0 0.0
    %1596 = vmatmul.mubr.f32.gmra.mrb[0].mxu0 %v1443
    %v1597 = vpop.f32.mrb[0].mxu0
    %v1598 = vadd.f32 0.0, %v1597
    %v1599 = vpop.f32.mrb[0].mxu0
    %1600 = vmatprep.mubr.f32.mxu0 0.0
    %1601 = vmatmul.mubr.f32.gmra.mrb[0].mxu0 %v1445
    %v1602 = vpop.f32.mrb[0].mxu0
    %v1603 = vadd.f32 0.0, %v1602
    %v1604 = vpop.f32.mrb[0].mxu0
    %1605 = vmatprep.mubr.f32.mxu0 0.0
    %1606 = vmatmul.mubr.f32.gmra.mrb[0].mxu0 %v1447
    %v1607 = vpop.f32.mrb[0].mxu0
    %v1608 = vadd.f32 0.0, %v1607
    %v1609 = vpop.f32.mrb[0].mxu0
    %1610 = vmatprep.mubr.f32.mxu0 0.0
    %1611 = vmatmul.mubr.f32.gmra.mrb[0].mxu0 %v1449
    %v1612 = vpop.f32.mrb[0].mxu0
    %v1613 = vadd.f32 0.0, %v1612
    %v1614 = vpop.f32.mrb[0].mxu0
    %1615 = vmatprep.mubr.f32.mxu0 0.0
    %1616 = vmatmul.mubr.f32.gmra.mrb[0].mxu0 %v1451
    %v1617 = vpop.f32.mrb[0].mxu0
    %v1618 = vadd.f32 0.0, %v1617
    %v1619 = vpop.f32.mrb[0].mxu0
    %1620 = vmatprep.mubr.f32.mxu0 0.0
    %1621 = vmatmul.mubr.f32.gmra.mrb[0].mxu0 %v1453
    %v1622 = vpop.f32.mrb[0].mxu0
    %v1623 = vadd.f32 0.0, %v1622
    %v1624 = vpop.f32.mrb[0].mxu0
    %1625 = vmatprep.mubr.f32.mxu0 0.0
    %1626 = vmatmul.mubr.f32.gmra.mrb[0].mxu0 %v1455
    %v1627 = vpop.f32.mrb[0].mxu0
    %v1628 = vadd.f32 0.0, %v1627
    %v1629 = vpop.f32.mrb[0].mxu0
    %1630 = vmatprep.mubr.f32.mxu0 0.0
    %1631 = vmatmul.mubr.f32.gmra.mrb[0].mxu0 %v1457
    %v1632 = vpop.f32.mrb[0].mxu0
    %v1633 = vadd.f32 0.0, %v1632
    %v1634 = vpop.f32.mrb[0].mxu0
    %1635 = vmatprep.mubr.f32.mxu0 0.0
    %1636 = vmatmul.mubr.f32.gmra.mrb[0].mxu0 %v1459
    %v1637 = vpop.f32.mrb[0].mxu0
    %v1638 = vadd.f32 0.0, %v1637
    %v1639 = vpop.f32.mrb[0].mxu0
    %1640 = vmatprep.mubr.f32.mxu0 0.0
    %1641 = vmatmul.mubr.f32.gmra.mrb[0].mxu0 %v1461
    %v1642 = vpop.f32.mrb[0].mxu0
    %v1643 = vadd.f32 0.0, %v1642
    %v1644 = vpop.f32.mrb[0].mxu0
    %1645 = vmatprep.mubr.f32.mxu0 0.0
    %1646 = vmatmul.mubr.f32.gmra.mrb[0].mxu0 %v1463
    %v1647 = vpop.f32.mrb[0].mxu0
    %v1648 = vadd.f32 0.0, %v1647
    %v1649 = vpop.f32.mrb[0].mxu0
    %1650 = vmatprep.mubr.f32.mxu0 0.0
    %1651 = vmatmul.mubr.f32.gmra.mrb[0].mxu0 %v1465
    %v1652 = vpop.f32.mrb[0].mxu0
    %v1653 = vadd.f32 0.0, %v1652
    %v1654 = vpop.f32.mrb[0].mxu0
    %1655 = vmatprep.mubr.f32.mxu0 0.0
    %1656 = vmatmul.mubr.f32.gmra.mrb[0].mxu0 %v1467
    %v1657 = vpop.f32.mrb[0].mxu0
    %v1658 = vadd.f32 0.0, %v1657
    %v1659 = vpop.f32.mrb[0].mxu0
    %1660 = vmatprep.mubr.f32.mxu0 0.0
    %1661 = vmatmul.mubr.f32.gmra.mrb[0].mxu0 %v1469
    %v1662 = vpop.f32.mrb[0].mxu0
    %v1663 = vadd.f32 0.0, %v1662
    %v1664 = vpop.f32.mrb[0].mxu0
    %1665 = vmatprep.mubr.f32.mxu0 0.0
    %1666 = vmatmul.mubr.f32.gmra.mrb[0].mxu0 %v1471
    %v1667 = vpop.f32.mrb[0].mxu0
    %v1668 = vadd.f32 0.0, %v1667
    %v1669 = vpop.f32.mrb[0].mxu0
    %1670 = vmatprep.mubr.f32.mxu0 0.0
    %1671 = vmatmul.mubr.f32.gmra.mrb[0].mxu0 %v1473
    %v1672 = vpop.f32.mrb[0].mxu0
    %v1673 = vadd.f32 0.0, %v1672
    %v1674 = vpop.f32.mrb[0].mxu0
    %1675 = vmatprep.mubr.f32.mxu0 0.0
    %1676 = vmatmul.mubr.f32.gmra.mrb[0].mxu0 %v1475
    %v1677 = vpop.f32.mrb[0].mxu0
    %v1678 = vadd.f32 0.0, %v1677
    %v1679 = vpop.f32.mrb[0].mxu0
    %1680 = vmatprep.mubr.f32.mxu0 0.0
    %1681 = vmatmul.mubr.f32.gmra.mrb[0].mxu0 %v1477
    %v1682 = vpop.f32.mrb[0].mxu0
    %v1683 = vadd.f32 0.0, %v1682
    %v1684 = vpop.f32.mrb[0].mxu0
    %1685 = vmatprep.mubr.f32.mxu0 0.0
    %1686 = vmatmul.mubr.f32.gmra.mrb[0].mxu0 %v1479
    %v1687 = vpop.f32.mrb[0].mxu0
    %v1688 = vadd.f32 0.0, %v1687
    %v1689 = vpop.f32.mrb[0].mxu0
    %1690 = vmatprep.mubr.f32.mxu0 0.0
    %1691 = vmatmul.mubr.f32.gmra.mrb[0].mxu0 %v1481
    %v1692 = vpop.f32.mrb[0].mxu0
    %v1693 = vadd.f32 0.0, %v1692
    %v1694 = vpop.f32.mrb[0].mxu0
    %1695 = vmatprep.mubr.f32.mxu0 0.0
    %1696 = vmatmul.mubr.f32.gmra.mrb[0].mxu0 %v1483
    %v1697 = vpop.f32.mrb[0].mxu0
    %v1698 = vadd.f32 0.0, %v1697
    %v1699 = vpop.f32.mrb[0].mxu0
    %1700 = vmatprep.mubr.f32.mxu0 0.0
    %1701 = vmatmul.mubr.f32.gmra.mrb[0].mxu0 %v1485
    %v1702 = vpop.f32.mrb[0].mxu0
    %v1703 = vadd.f32 0.0, %v1702
    %v1704 = vpop.f32.mrb[0].mxu0
    %1705 = vmatprep.mubr.f32.mxu0 0.0
    %1706 = vmatmul.mubr.f32.gmra.mrb[0].mxu0 %v1487
    %v1707 = vpop.f32.mrb[0].mxu0
    %v1708 = vadd.f32 0.0, %v1707
    %v1709 = vpop.f32.mrb[0].mxu0
    %1710 = vmatprep.mubr.f32.mxu0 0.0
    %1711 = vmatmul.mubr.f32.gmra.mrb[0].mxu0 %v1489
    %v1712 = vpop.f32.mrb[0].mxu0
    %v1713 = vadd.f32 0.0, %v1712
    %v1714 = vpop.f32.mrb[0].mxu0
    %1715 = vdwg.mxu0
    %v1716 = vadd.f32 %v736, %v1558
    %v1717 = vadd.f32 %v741, %v1563
    %v1718 = vadd.f32 %v746, %v1568
    %v1719 = vadd.f32 %v751, %v1573
    %v1720 = vadd.f32 %v756, %v1578
    %v1721 = vadd.f32 %v761, %v1583
    %v1722 = vadd.f32 %v766, %v1588
    %v1723 = vadd.f32 %v771, %v1593
    %v1724 = vadd.f32 %v776, %v1598
    %v1725 = vadd.f32 %v781, %v1603
    %v1726 = vadd.f32 %v786, %v1608
    %v1727 = vadd.f32 %v791, %v1613
    %v1728 = vadd.f32 %v796, %v1618
    %v1729 = vadd.f32 %v801, %v1623
    %v1730 = vadd.f32 %v806, %v1628
    %v1731 = vadd.f32 %v811, %v1633
    %v1732 = vadd.f32 %v816, %v1638
    %v1733 = vadd.f32 %v821, %v1643
    %v1734 = vadd.f32 %v826, %v1648
    %v1735 = vadd.f32 %v831, %v1653
    %v1736 = vadd.f32 %v836, %v1658
    %v1737 = vadd.f32 %v841, %v1663
    %v1738 = vadd.f32 %v846, %v1668
    %v1739 = vadd.f32 %v851, %v1673
    %v1740 = vadd.f32 %v856, %v1678
    %v1741 = vadd.f32 %v861, %v1683
    %v1742 = vadd.f32 %v866, %v1688
    %v1743 = vadd.f32 %v871, %v1693
    %v1744 = vadd.f32 %v876, %v1698
    %v1745 = vadd.f32 %v881, %v1703
    %v1746 = vadd.f32 %v886, %v1708
    %v1747 = vadd.f32 %v891, %v1713
    %s1748 = scalar_lea.vmem [#allocation6], 64
    %v1749 = vld [vmem:[%s1748] sm:$0xff]
    %v1750 = vld [vmem:[%s1748 + $0x8] sm:$0xff]
    %v1751 = vld [vmem:[%s1748 + $0x10] sm:$0xff]
    %v1752 = vld [vmem:[%s1748 + $0x18] sm:$0xff]
    %1753 = vmatprep.subr.mxu0 0.0
    %1754 = vmatpush1.msra.mxu0 %v1749
    %1755 = vmatprep.subr.mxu0 0.0
    %1756 = vmatpush1.msra.mxu0 %v1750
    %1757 = vmatprep.subr.mxu0 0.0
    %1758 = vmatpush1.msra.mxu0 %v1751
    %1759 = vmatprep.subr.mxu0 0.0
    %1760 = vmatpush1.msra.mxu0 %v1752
    %1761 = vmatprep.subr.mxu0 0.0
    %1762 = vmatpush1.msra.mxu0 0.0
    %1763 = vmatprep.subr.mxu0 0.0
    %1764 = vmatpush1.msra.mxu0 0.0
    %1765 = vmatprep.subr.mxu0 0.0
    %1766 = vmatpush1.msra.mxu0 0.0
    %1767 = vmatprep.subr.mxu0 0.0
    %1768 = vmatpush1.msra.mxu0 0.0
    %1769 = vmatprep.subr.mxu0 0.0
    %1770 = vmatpush1.msra.mxu0 0.0
    %1771 = vmatprep.subr.mxu0 0.0
    %1772 = vmatpush1.msra.mxu0 0.0
    %1773 = vmatprep.subr.mxu0 0.0
    %1774 = vmatpush1.msra.mxu0 0.0
    %1775 = vmatprep.subr.mxu0 0.0
    %1776 = vmatpush1.msra.mxu0 0.0
    %1777 = vmatprep.subr.mxu0 0.0
    %1778 = vmatpush1.msra.mxu0 0.0
    %1779 = vmatprep.subr.mxu0 0.0
    %1780 = vmatpush1.msra.mxu0 0.0
    %1781 = vmatprep.subr.mxu0 0.0
    %1782 = vmatpush1.msra.mxu0 0.0
    %1783 = vmatprep.subr.mxu0 0.0
    %1784 = vmatpush1.msra.mxu0 0.0
    %1785 = vmatprep.subr.mxu0 0.0
    %1786 = vmatpush1.msra.mxu0 0.0
    %1787 = vmatprep.subr.mxu0 0.0
    %1788 = vmatpush1.msra.mxu0 0.0
    %1789 = vmatprep.subr.mxu0 0.0
    %1790 = vmatpush1.msra.mxu0 0.0
    %1791 = vmatprep.subr.mxu0 0.0
    %1792 = vmatpush1.msra.mxu0 0.0
    %1793 = vmatprep.subr.mxu0 0.0
    %1794 = vmatpush1.msra.mxu0 0.0
    %1795 = vmatprep.subr.mxu0 0.0
    %1796 = vmatpush1.msra.mxu0 0.0
    %1797 = vmatprep.subr.mxu0 0.0
    %1798 = vmatpush1.msra.mxu0 0.0
    %1799 = vmatprep.subr.mxu0 0.0
    %1800 = vmatpush1.msra.mxu0 0.0
    %1801 = vmatprep.subr.mxu0 0.0
    %1802 = vmatpush1.msra.mxu0 0.0
    %1803 = vmatprep.subr.mxu0 0.0
    %1804 = vmatpush1.msra.mxu0 0.0
    %1805 = vmatprep.subr.mxu0 0.0
    %1806 = vmatpush1.msra.mxu0 0.0
    %1807 = vmatprep.subr.mxu0 0.0
    %1808 = vmatpush1.msra.mxu0 0.0
    %1809 = vmatprep.subr.mxu0 0.0
    %1810 = vmatpush1.msra.mxu0 0.0
    %1811 = vmatprep.subr.mxu0 0.0
    %1812 = vmatpush1.msra.mxu0 0.0
    %1813 = vmatprep.subr.mxu0 0.0
    %1814 = vmatpush1.msra.mxu0 0.0
    %1815 = vmatprep.subr.mxu0 0.0
    %1816 = vmatpush1.msra.mxu0 0.0
    %1817 = vmatprep.mubr.f32.mxu0 0.0
    %1818 = vmatmul.mubr.f32.gmra.mrb[0].mxu0 %v1427
    %v1819 = vpop.f32.mrb[0].mxu0
    %v1820 = vadd.f32 0.0, %v1819
    %v1821 = vpop.f32.mrb[0].mxu0
    %1822 = vmatprep.mubr.f32.mxu0 0.0
    %1823 = vmatmul.mubr.f32.gmra.mrb[0].mxu0 %v1429
    %v1824 = vpop.f32.mrb[0].mxu0
    %v1825 = vadd.f32 0.0, %v1824
    %v1826 = vpop.f32.mrb[0].mxu0
    %1827 = vmatprep.mubr.f32.mxu0 0.0
    %1828 = vmatmul.mubr.f32.gmra.mrb[0].mxu0 %v1431
    %v1829 = vpop.f32.mrb[0].mxu0
    %v1830 = vadd.f32 0.0, %v1829
    %v1831 = vpop.f32.mrb[0].mxu0
    %1832 = vmatprep.mubr.f32.mxu0 0.0
    %1833 = vmatmul.mubr.f32.gmra.mrb[0].mxu0 %v1433
    %v1834 = vpop.f32.mrb[0].mxu0
    %v1835 = vadd.f32 0.0, %v1834
    %v1836 = vpop.f32.mrb[0].mxu0
    %1837 = vmatprep.mubr.f32.mxu0 0.0
    %1838 = vmatmul.mubr.f32.gmra.mrb[0].mxu0 %v1435
    %v1839 = vpop.f32.mrb[0].mxu0
    %v1840 = vadd.f32 0.0, %v1839
    %v1841 = vpop.f32.mrb[0].mxu0
    %1842 = vmatprep.mubr.f32.mxu0 0.0
    %1843 = vmatmul.mubr.f32.gmra.mrb[0].mxu0 %v1437
    %v1844 = vpop.f32.mrb[0].mxu0
    %v1845 = vadd.f32 0.0, %v1844
    %v1846 = vpop.f32.mrb[0].mxu0
    %1847 = vmatprep.mubr.f32.mxu0 0.0
    %1848 = vmatmul.mubr.f32.gmra.mrb[0].mxu0 %v1439
    %v1849 = vpop.f32.mrb[0].mxu0
    %v1850 = vadd.f32 0.0, %v1849
    %v1851 = vpop.f32.mrb[0].mxu0
    %1852 = vmatprep.mubr.f32.mxu0 0.0
    %1853 = vmatmul.mubr.f32.gmra.mrb[0].mxu0 %v1441
    %v1854 = vpop.f32.mrb[0].mxu0
    %v1855 = vadd.f32 0.0, %v1854
    %v1856 = vpop.f32.mrb[0].mxu0
    %1857 = vmatprep.mubr.f32.mxu0 0.0
    %1858 = vmatmul.mubr.f32.gmra.mrb[0].mxu0 %v1443
    %v1859 = vpop.f32.mrb[0].mxu0
    %v1860 = vadd.f32 0.0, %v1859
    %v1861 = vpop.f32.mrb[0].mxu0
    %1862 = vmatprep.mubr.f32.mxu0 0.0
    %1863 = vmatmul.mubr.f32.gmra.mrb[0].mxu0 %v1445
    %v1864 = vpop.f32.mrb[0].mxu0
    %v1865 = vadd.f32 0.0, %v1864
    %v1866 = vpop.f32.mrb[0].mxu0
    %1867 = vmatprep.mubr.f32.mxu0 0.0
    %1868 = vmatmul.mubr.f32.gmra.mrb[0].mxu0 %v1447
    %v1869 = vpop.f32.mrb[0].mxu0
    %v1870 = vadd.f32 0.0, %v1869
    %v1871 = vpop.f32.mrb[0].mxu0
    %1872 = vmatprep.mubr.f32.mxu0 0.0
    %1873 = vmatmul.mubr.f32.gmra.mrb[0].mxu0 %v1449
    %v1874 = vpop.f32.mrb[0].mxu0
    %v1875 = vadd.f32 0.0, %v1874
    %v1876 = vpop.f32.mrb[0].mxu0
    %1877 = vmatprep.mubr.f32.mxu0 0.0
    %1878 = vmatmul.mubr.f32.gmra.mrb[0].mxu0 %v1451
    %v1879 = vpop.f32.mrb[0].mxu0
    %v1880 = vadd.f32 0.0, %v1879
    %v1881 = vpop.f32.mrb[0].mxu0
    %1882 = vmatprep.mubr.f32.mxu0 0.0
    %1883 = vmatmul.mubr.f32.gmra.mrb[0].mxu0 %v1453
    %v1884 = vpop.f32.mrb[0].mxu0
    %v1885 = vadd.f32 0.0, %v1884
    %v1886 = vpop.f32.mrb[0].mxu0
    %1887 = vmatprep.mubr.f32.mxu0 0.0
    %1888 = vmatmul.mubr.f32.gmra.mrb[0].mxu0 %v1455
    %v1889 = vpop.f32.mrb[0].mxu0
    %v1890 = vadd.f32 0.0, %v1889
    %v1891 = vpop.f32.mrb[0].mxu0
    %1892 = vmatprep.mubr.f32.mxu0 0.0
    %1893 = vmatmul.mubr.f32.gmra.mrb[0].mxu0 %v1457
    %v1894 = vpop.f32.mrb[0].mxu0
    %v1895 = vadd.f32 0.0, %v1894
    %v1896 = vpop.f32.mrb[0].mxu0
    %1897 = vmatprep.mubr.f32.mxu0 0.0
    %1898 = vmatmul.mubr.f32.gmra.mrb[0].mxu0 %v1459
    %v1899 = vpop.f32.mrb[0].mxu0
    %v1900 = vadd.f32 0.0, %v1899
    %v1901 = vpop.f32.mrb[0].mxu0
    %1902 = vmatprep.mubr.f32.mxu0 0.0
    %1903 = vmatmul.mubr.f32.gmra.mrb[0].mxu0 %v1461
    %v1904 = vpop.f32.mrb[0].mxu0
    %v1905 = vadd.f32 0.0, %v1904
    %v1906 = vpop.f32.mrb[0].mxu0
    %1907 = vmatprep.mubr.f32.mxu0 0.0
    %1908 = vmatmul.mubr.f32.gmra.mrb[0].mxu0 %v1463
    %v1909 = vpop.f32.mrb[0].mxu0
    %v1910 = vadd.f32 0.0, %v1909
    %v1911 = vpop.f32.mrb[0].mxu0
    %1912 = vmatprep.mubr.f32.mxu0 0.0
    %1913 = vmatmul.mubr.f32.gmra.mrb[0].mxu0 %v1465
    %v1914 = vpop.f32.mrb[0].mxu0
    %v1915 = vadd.f32 0.0, %v1914
    %v1916 = vpop.f32.mrb[0].mxu0
    %1917 = vmatprep.mubr.f32.mxu0 0.0
    %1918 = vmatmul.mubr.f32.gmra.mrb[0].mxu0 %v1467
    %v1919 = vpop.f32.mrb[0].mxu0
    %v1920 = vadd.f32 0.0, %v1919
    %v1921 = vpop.f32.mrb[0].mxu0
    %1922 = vmatprep.mubr.f32.mxu0 0.0
    %1923 = vmatmul.mubr.f32.gmra.mrb[0].mxu0 %v1469
    %v1924 = vpop.f32.mrb[0].mxu0
    %v1925 = vadd.f32 0.0, %v1924
    %v1926 = vpop.f32.mrb[0].mxu0
    %1927 = vmatprep.mubr.f32.mxu0 0.0
    %1928 = vmatmul.mubr.f32.gmra.mrb[0].mxu0 %v1471
    %v1929 = vpop.f32.mrb[0].mxu0
    %v1930 = vadd.f32 0.0, %v1929
    %v1931 = vpop.f32.mrb[0].mxu0
    %1932 = vmatprep.mubr.f32.mxu0 0.0
    %1933 = vmatmul.mubr.f32.gmra.mrb[0].mxu0 %v1473
    %v1934 = vpop.f32.mrb[0].mxu0
    %v1935 = vadd.f32 0.0, %v1934
    %v1936 = vpop.f32.mrb[0].mxu0
    %1937 = vmatprep.mubr.f32.mxu0 0.0
    %1938 = vmatmul.mubr.f32.gmra.mrb[0].mxu0 %v1475
    %v1939 = vpop.f32.mrb[0].mxu0
    %v1940 = vadd.f32 0.0, %v1939
    %v1941 = vpop.f32.mrb[0].mxu0
    %1942 = vmatprep.mubr.f32.mxu0 0.0
    %1943 = vmatmul.mubr.f32.gmra.mrb[0].mxu0 %v1477
    %v1944 = vpop.f32.mrb[0].mxu0
    %v1945 = vadd.f32 0.0, %v1944
    %v1946 = vpop.f32.mrb[0].mxu0
    %1947 = vmatprep.mubr.f32.mxu0 0.0
    %1948 = vmatmul.mubr.f32.gmra.mrb[0].mxu0 %v1479
    %v1949 = vpop.f32.mrb[0].mxu0
    %v1950 = vadd.f32 0.0, %v1949
    %v1951 = vpop.f32.mrb[0].mxu0
    %1952 = vmatprep.mubr.f32.mxu0 0.0
    %1953 = vmatmul.mubr.f32.gmra.mrb[0].mxu0 %v1481
    %v1954 = vpop.f32.mrb[0].mxu0
    %v1955 = vadd.f32 0.0, %v1954
    %v1956 = vpop.f32.mrb[0].mxu0
    %1957 = vmatprep.mubr.f32.mxu0 0.0
    %1958 = vmatmul.mubr.f32.gmra.mrb[0].mxu0 %v1483
    %v1959 = vpop.f32.mrb[0].mxu0
    %v1960 = vadd.f32 0.0, %v1959
    %v1961 = vpop.f32.mrb[0].mxu0
    %1962 = vmatprep.mubr.f32.mxu0 0.0
    %1963 = vmatmul.mubr.f32.gmra.mrb[0].mxu0 %v1485
    %v1964 = vpop.f32.mrb[0].mxu0
    %v1965 = vadd.f32 0.0, %v1964
    %v1966 = vpop.f32.mrb[0].mxu0
    %1967 = vmatprep.mubr.f32.mxu0 0.0
    %1968 = vmatmul.mubr.f32.gmra.mrb[0].mxu0 %v1487
    %v1969 = vpop.f32.mrb[0].mxu0
    %v1970 = vadd.f32 0.0, %v1969
    %v1971 = vpop.f32.mrb[0].mxu0
    %1972 = vmatprep.mubr.f32.mxu0 0.0
    %1973 = vmatmul.mubr.f32.gmra.mrb[0].mxu0 %v1489
    %v1974 = vpop.f32.mrb[0].mxu0
    %v1975 = vadd.f32 0.0, %v1974
    %v1976 = vpop.f32.mrb[0].mxu0
    %1977 = vdwg.mxu0
    %v1978 = vadd.f32 %v1191, %v1820
    %v1979 = vadd.f32 %v1196, %v1825
    %v1980 = vadd.f32 %v1201, %v1830
    %v1981 = vadd.f32 %v1206, %v1835
    %v1982 = vadd.f32 %v1211, %v1840
    %v1983 = vadd.f32 %v1216, %v1845
    %v1984 = vadd.f32 %v1221, %v1850
    %v1985 = vadd.f32 %v1226, %v1855
    %v1986 = vadd.f32 %v1231, %v1860
    %v1987 = vadd.f32 %v1236, %v1865
    %v1988 = vadd.f32 %v1241, %v1870
    %v1989 = vadd.f32 %v1246, %v1875
    %v1990 = vadd.f32 %v1251, %v1880
    %v1991 = vadd.f32 %v1256, %v1885
    %v1992 = vadd.f32 %v1261, %v1890
    %v1993 = vadd.f32 %v1266, %v1895
    %v1994 = vadd.f32 %v1271, %v1900
    %v1995 = vadd.f32 %v1276, %v1905
    %v1996 = vadd.f32 %v1281, %v1910
    %v1997 = vadd.f32 %v1286, %v1915
    %v1998 = vadd.f32 %v1291, %v1920
    %v1999 = vadd.f32 %v1296, %v1925
    %v2000 = vadd.f32 %v1301, %v1930
    %v2001 = vadd.f32 %v1306, %v1935
    %v2002 = vadd.f32 %v1311, %v1940
    %v2003 = vadd.f32 %v1316, %v1945
    %v2004 = vadd.f32 %v1321, %v1950
    %v2005 = vadd.f32 %v1326, %v1955
    %v2006 = vadd.f32 %v1331, %v1960
    %v2007 = vadd.f32 %v1336, %v1965
    %v2008 = vadd.f32 %v1341, %v1970
    %v2009 = vadd.f32 %v1346, %v1975
    %vm2010 = vcmask 1044480
    %v2011 = vrot.slane %v149, 3
    %v2012 = vrot.slane %v150, 3
    %v2013 = vsel %vm2010, %v2011, %v2012
    %v2014 = vrot.slane %v151, 3
    %v2015 = vsel %vm2010, %v2012, %v2014
    %v2016 = vrot.slane %v152, 3
    %v2017 = vsel %vm2010, %v2014, %v2016
    %v2018 = vrot.slane %v153, 3
    %v2019 = vsel %vm2010, %v2016, %v2018
    %v2020 = vrot.slane %v154, 3
    %v2021 = vrot.slane %v155, 3
    %v2022 = vsel %vm2010, %v2020, %v2021
    %v2023 = vrot.slane %v156, 3
    %v2024 = vsel %vm2010, %v2021, %v2023
    %v2025 = vrot.slane %v157, 3
    %v2026 = vsel %vm2010, %v2023, %v2025
    %v2027 = vrot.slane %v158, 3
    %v2028 = vsel %vm2010, %v2025, %v2027
    %v2029 = vrot.slane %v159, 3
    %v2030 = vrot.slane %v160, 3
    %v2031 = vsel %vm2010, %v2029, %v2030
    %v2032 = vrot.slane %v161, 3
    %v2033 = vsel %vm2010, %v2030, %v2032
    %v2034 = vrot.slane %v162, 3
    %v2035 = vsel %vm2010, %v2032, %v2034
    %v2036 = vrot.slane %v163, 3
    %v2037 = vsel %vm2010, %v2034, %v2036
    %v2038 = vrot.slane %v164, 3
    %v2039 = vrot.slane %v165, 3
    %v2040 = vsel %vm2010, %v2038, %v2039
    %v2041 = vrot.slane %v166, 3
    %v2042 = vsel %vm2010, %v2039, %v2041
    %v2043 = vrot.slane %v167, 3
    %v2044 = vsel %vm2010, %v2041, %v2043
    %v2045 = vrot.slane %v168, 3
    %v2046 = vsel %vm2010, %v2043, %v2045
    %v2047 = vrot.slane %v169, 3
    %v2048 = vrot.slane %v170, 3
    %v2049 = vsel %vm2010, %v2047, %v2048
    %v2050 = vrot.slane %v171, 3
    %v2051 = vsel %vm2010, %v2048, %v2050
    %v2052 = vrot.slane %v172, 3
    %v2053 = vsel %vm2010, %v2050, %v2052
    %v2054 = vrot.slane %v173, 3
    %v2055 = vsel %vm2010, %v2052, %v2054
    %v2056 = vrot.slane %v174, 3
    %v2057 = vrot.slane %v175, 3
    %v2058 = vsel %vm2010, %v2056, %v2057
    %v2059 = vrot.slane %v176, 3
    %v2060 = vsel %vm2010, %v2057, %v2059
    %v2061 = vrot.slane %v177, 3
    %v2062 = vsel %vm2010, %v2059, %v2061
    %v2063 = vrot.slane %v178, 3
    %v2064 = vsel %vm2010, %v2061, %v2063
    %v2065 = vrot.slane %v179, 3
    %v2066 = vrot.slane %v180, 3
    %v2067 = vsel %vm2010, %v2065, %v2066
    %v2068 = vrot.slane %v181, 3
    %v2069 = vsel %vm2010, %v2066, %v2068
    %v2070 = vrot.slane %v182, 3
    %v2071 = vsel %vm2010, %v2068, %v2070
    %v2072 = vrot.slane %v183, 3
    %v2073 = vsel %vm2010, %v2070, %v2072
    %v2074 = vrot.slane %v184, 3
    %v2075 = vrot.slane %v185, 3
    %v2076 = vsel %vm2010, %v2074, %v2075
    %v2077 = vrot.slane %v186, 3
    %v2078 = vsel %vm2010, %v2075, %v2077
    %v2079 = vrot.slane %v187, 3
    %v2080 = vsel %vm2010, %v2077, %v2079
    %v2081 = vrot.slane %v188, 3
    %v2082 = vsel %vm2010, %v2079, %v2081
    %s2083 = scalar_lea.vmem [#allocation4], 96
    %v2084 = vld [vmem:[%s2083] sm:$0xff]
    %v2085 = vld [vmem:[%s2083 + $0x8] sm:$0xff]
    %v2086 = vld [vmem:[%s2083 + $0x10] sm:$0xff]
    %v2087 = vld [vmem:[%s2083 + $0x18] sm:$0xff]
    %v2088 = vsel %vm315, %v2013, 0
    %v2090 = vsel %vm315, %v2015, 0
    %v2092 = vsel %vm315, %v2017, 0
    %v2094 = vsel %vm315, %v2019, 0
    %v2096 = vsel %vm315, %v2022, 0
    %v2098 = vsel %vm315, %v2024, 0
    %v2100 = vsel %vm315, %v2026, 0
    %v2102 = vsel %vm315, %v2028, 0
    %v2104 = vsel %vm315, %v2031, 0
    %v2106 = vsel %vm315, %v2033, 0
    %v2108 = vsel %vm315, %v2035, 0
    %v2110 = vsel %vm315, %v2037, 0
    %v2112 = vsel %vm315, %v2040, 0
    %v2114 = vsel %vm315, %v2042, 0
    %v2116 = vsel %vm315, %v2044, 0
    %v2118 = vsel %vm315, %v2046, 0
    %v2120 = vsel %vm315, %v2049, 0
    %v2122 = vsel %vm315, %v2051, 0
    %v2124 = vsel %vm315, %v2053, 0
    %v2126 = vsel %vm315, %v2055, 0
    %v2128 = vsel %vm315, %v2058, 0
    %v2130 = vsel %vm315, %v2060, 0
    %v2132 = vsel %vm315, %v2062, 0
    %v2134 = vsel %vm315, %v2064, 0
    %v2136 = vsel %vm315, %v2067, 0
    %v2138 = vsel %vm315, %v2069, 0
    %v2140 = vsel %vm315, %v2071, 0
    %v2142 = vsel %vm315, %v2073, 0
    %v2144 = vsel %vm315, %v2076, 0
    %v2146 = vsel %vm315, %v2078, 0
    %v2148 = vsel %vm315, %v2080, 0
    %v2150 = vsel %vm315, %v2082, 0
    %2152 = vmatprep.subr.mxu0 0.0
    %2153 = vmatpush1.msra.mxu0 %v2084
    %2154 = vmatprep.subr.mxu0 0.0
    %2155 = vmatpush1.msra.mxu0 %v2085
    %2156 = vmatprep.subr.mxu0 0.0
    %2157 = vmatpush1.msra.mxu0 %v2086
    %2158 = vmatprep.subr.mxu0 0.0
    %2159 = vmatpush1.msra.mxu0 %v2087
    %2160 = vmatprep.subr.mxu0 0.0
    %2161 = vmatpush1.msra.mxu0 0.0
    %2162 = vmatprep.subr.mxu0 0.0
    %2163 = vmatpush1.msra.mxu0 0.0
    %2164 = vmatprep.subr.mxu0 0.0
    %2165 = vmatpush1.msra.mxu0 0.0
    %2166 = vmatprep.subr.mxu0 0.0
    %2167 = vmatpush1.msra.mxu0 0.0
    %2168 = vmatprep.subr.mxu0 0.0
    %2169 = vmatpush1.msra.mxu0 0.0
    %2170 = vmatprep.subr.mxu0 0.0
    %2171 = vmatpush1.msra.mxu0 0.0
    %2172 = vmatprep.subr.mxu0 0.0
    %2173 = vmatpush1.msra.mxu0 0.0
    %2174 = vmatprep.subr.mxu0 0.0
    %2175 = vmatpush1.msra.mxu0 0.0
    %2176 = vmatprep.subr.mxu0 0.0
    %2177 = vmatpush1.msra.mxu0 0.0
    %2178 = vmatprep.subr.mxu0 0.0
    %2179 = vmatpush1.msra.mxu0 0.0
    %2180 = vmatprep.subr.mxu0 0.0
    %2181 = vmatpush1.msra.mxu0 0.0
    %2182 = vmatprep.subr.mxu0 0.0
    %2183 = vmatpush1.msra.mxu0 0.0
    %2184 = vmatprep.subr.mxu0 0.0
    %2185 = vmatpush1.msra.mxu0 0.0
    %2186 = vmatprep.subr.mxu0 0.0
    %2187 = vmatpush1.msra.mxu0 0.0
    %2188 = vmatprep.subr.mxu0 0.0
    %2189 = vmatpush1.msra.mxu0 0.0
    %2190 = vmatprep.subr.mxu0 0.0
    %2191 = vmatpush1.msra.mxu0 0.0
    %2192 = vmatprep.subr.mxu0 0.0
    %2193 = vmatpush1.msra.mxu0 0.0
    %2194 = vmatprep.subr.mxu0 0.0
    %2195 = vmatpush1.msra.mxu0 0.0
    %2196 = vmatprep.subr.mxu0 0.0
    %2197 = vmatpush1.msra.mxu0 0.0
    %2198 = vmatprep.subr.mxu0 0.0
    %2199 = vmatpush1.msra.mxu0 0.0
    %2200 = vmatprep.subr.mxu0 0.0
    %2201 = vmatpush1.msra.mxu0 0.0
    %2202 = vmatprep.subr.mxu0 0.0
    %2203 = vmatpush1.msra.mxu0 0.0
    %2204 = vmatprep.subr.mxu0 0.0
    %2205 = vmatpush1.msra.mxu0 0.0
    %2206 = vmatprep.subr.mxu0 0.0
    %2207 = vmatpush1.msra.mxu0 0.0
    %2208 = vmatprep.subr.mxu0 0.0
    %2209 = vmatpush1.msra.mxu0 0.0
    %2210 = vmatprep.subr.mxu0 0.0
    %2211 = vmatpush1.msra.mxu0 0.0
    %2212 = vmatprep.subr.mxu0 0.0
    %2213 = vmatpush1.msra.mxu0 0.0
    %2214 = vmatprep.subr.mxu0 0.0
    %2215 = vmatpush1.msra.mxu0 0.0
    %2216 = vmatprep.mubr.f32.mxu0 0.0
    %2217 = vmatmul.mubr.f32.gmra.mrb[0].mxu0 %v2088
    %v2218 = vpop.f32.mrb[0].mxu0
    %v2219 = vadd.f32 0.0, %v2218
    %v2220 = vpop.f32.mrb[0].mxu0
    %2221 = vmatprep.mubr.f32.mxu0 0.0
    %2222 = vmatmul.mubr.f32.gmra.mrb[0].mxu0 %v2090
    %v2223 = vpop.f32.mrb[0].mxu0
    %v2224 = vadd.f32 0.0, %v2223
    %v2225 = vpop.f32.mrb[0].mxu0
    %2226 = vmatprep.mubr.f32.mxu0 0.0
    %2227 = vmatmul.mubr.f32.gmra.mrb[0].mxu0 %v2092
    %v2228 = vpop.f32.mrb[0].mxu0
    %v2229 = vadd.f32 0.0, %v2228
    %v2230 = vpop.f32.mrb[0].mxu0
    %2231 = vmatprep.mubr.f32.mxu0 0.0
    %2232 = vmatmul.mubr.f32.gmra.mrb[0].mxu0 %v2094
    %v2233 = vpop.f32.mrb[0].mxu0
    %v2234 = vadd.f32 0.0, %v2233
    %v2235 = vpop.f32.mrb[0].mxu0
    %2236 = vmatprep.mubr.f32.mxu0 0.0
    %2237 = vmatmul.mubr.f32.gmra.mrb[0].mxu0 %v2096
    %v2238 = vpop.f32.mrb[0].mxu0
    %v2239 = vadd.f32 0.0, %v2238
    %v2240 = vpop.f32.mrb[0].mxu0
    %2241 = vmatprep.mubr.f32.mxu0 0.0
    %2242 = vmatmul.mubr.f32.gmra.mrb[0].mxu0 %v2098
    %v2243 = vpop.f32.mrb[0].mxu0
    %v2244 = vadd.f32 0.0, %v2243
    %v2245 = vpop.f32.mrb[0].mxu0
    %2246 = vmatprep.mubr.f32.mxu0 0.0
    %2247 = vmatmul.mubr.f32.gmra.mrb[0].mxu0 %v2100
    %v2248 = vpop.f32.mrb[0].mxu0
    %v2249 = vadd.f32 0.0, %v2248
    %v2250 = vpop.f32.mrb[0].mxu0
    %2251 = vmatprep.mubr.f32.mxu0 0.0
    %2252 = vmatmul.mubr.f32.gmra.mrb[0].mxu0 %v2102
    %v2253 = vpop.f32.mrb[0].mxu0
    %v2254 = vadd.f32 0.0, %v2253
    %v2255 = vpop.f32.mrb[0].mxu0
    %2256 = vmatprep.mubr.f32.mxu0 0.0
    %2257 = vmatmul.mubr.f32.gmra.mrb[0].mxu0 %v2104
    %v2258 = vpop.f32.mrb[0].mxu0
    %v2259 = vadd.f32 0.0, %v2258
    %v2260 = vpop.f32.mrb[0].mxu0
    %2261 = vmatprep.mubr.f32.mxu0 0.0
    %2262 = vmatmul.mubr.f32.gmra.mrb[0].mxu0 %v2106
    %v2263 = vpop.f32.mrb[0].mxu0
    %v2264 = vadd.f32 0.0, %v2263
    %v2265 = vpop.f32.mrb[0].mxu0
    %2266 = vmatprep.mubr.f32.mxu0 0.0
    %2267 = vmatmul.mubr.f32.gmra.mrb[0].mxu0 %v2108
    %v2268 = vpop.f32.mrb[0].mxu0
    %v2269 = vadd.f32 0.0, %v2268
    %v2270 = vpop.f32.mrb[0].mxu0
    %2271 = vmatprep.mubr.f32.mxu0 0.0
    %2272 = vmatmul.mubr.f32.gmra.mrb[0].mxu0 %v2110
    %v2273 = vpop.f32.mrb[0].mxu0
    %v2274 = vadd.f32 0.0, %v2273
    %v2275 = vpop.f32.mrb[0].mxu0
    %2276 = vmatprep.mubr.f32.mxu0 0.0
    %2277 = vmatmul.mubr.f32.gmra.mrb[0].mxu0 %v2112
    %v2278 = vpop.f32.mrb[0].mxu0
    %v2279 = vadd.f32 0.0, %v2278
    %v2280 = vpop.f32.mrb[0].mxu0
    %2281 = vmatprep.mubr.f32.mxu0 0.0
    %2282 = vmatmul.mubr.f32.gmra.mrb[0].mxu0 %v2114
    %v2283 = vpop.f32.mrb[0].mxu0
    %v2284 = vadd.f32 0.0, %v2283
    %v2285 = vpop.f32.mrb[0].mxu0
    %2286 = vmatprep.mubr.f32.mxu0 0.0
    %2287 = vmatmul.mubr.f32.gmra.mrb[0].mxu0 %v2116
    %v2288 = vpop.f32.mrb[0].mxu0
    %v2289 = vadd.f32 0.0, %v2288
    %v2290 = vpop.f32.mrb[0].mxu0
    %2291 = vmatprep.mubr.f32.mxu0 0.0
    %2292 = vmatmul.mubr.f32.gmra.mrb[0].mxu0 %v2118
    %v2293 = vpop.f32.mrb[0].mxu0
    %v2294 = vadd.f32 0.0, %v2293
    %v2295 = vpop.f32.mrb[0].mxu0
    %2296 = vmatprep.mubr.f32.mxu0 0.0
    %2297 = vmatmul.mubr.f32.gmra.mrb[0].mxu0 %v2120
    %v2298 = vpop.f32.mrb[0].mxu0
    %v2299 = vadd.f32 0.0, %v2298
    %v2300 = vpop.f32.mrb[0].mxu0
    %2301 = vmatprep.mubr.f32.mxu0 0.0
    %2302 = vmatmul.mubr.f32.gmra.mrb[0].mxu0 %v2122
    %v2303 = vpop.f32.mrb[0].mxu0
    %v2304 = vadd.f32 0.0, %v2303
    %v2305 = vpop.f32.mrb[0].mxu0
    %2306 = vmatprep.mubr.f32.mxu0 0.0
    %2307 = vmatmul.mubr.f32.gmra.mrb[0].mxu0 %v2124
    %v2308 = vpop.f32.mrb[0].mxu0
    %v2309 = vadd.f32 0.0, %v2308
    %v2310 = vpop.f32.mrb[0].mxu0
    %2311 = vmatprep.mubr.f32.mxu0 0.0
    %2312 = vmatmul.mubr.f32.gmra.mrb[0].mxu0 %v2126
    %v2313 = vpop.f32.mrb[0].mxu0
    %v2314 = vadd.f32 0.0, %v2313
    %v2315 = vpop.f32.mrb[0].mxu0
    %2316 = vmatprep.mubr.f32.mxu0 0.0
    %2317 = vmatmul.mubr.f32.gmra.mrb[0].mxu0 %v2128
    %v2318 = vpop.f32.mrb[0].mxu0
    %v2319 = vadd.f32 0.0, %v2318
    %v2320 = vpop.f32.mrb[0].mxu0
    %2321 = vmatprep.mubr.f32.mxu0 0.0
    %2322 = vmatmul.mubr.f32.gmra.mrb[0].mxu0 %v2130
    %v2323 = vpop.f32.mrb[0].mxu0
    %v2324 = vadd.f32 0.0, %v2323
    %v2325 = vpop.f32.mrb[0].mxu0
    %2326 = vmatprep.mubr.f32.mxu0 0.0
    %2327 = vmatmul.mubr.f32.gmra.mrb[0].mxu0 %v2132
    %v2328 = vpop.f32.mrb[0].mxu0
    %v2329 = vadd.f32 0.0, %v2328
    %v2330 = vpop.f32.mrb[0].mxu0
    %2331 = vmatprep.mubr.f32.mxu0 0.0
    %2332 = vmatmul.mubr.f32.gmra.mrb[0].mxu0 %v2134
    %v2333 = vpop.f32.mrb[0].mxu0
    %v2334 = vadd.f32 0.0, %v2333
    %v2335 = vpop.f32.mrb[0].mxu0
    %2336 = vmatprep.mubr.f32.mxu0 0.0
    %2337 = vmatmul.mubr.f32.gmra.mrb[0].mxu0 %v2136
    %v2338 = vpop.f32.mrb[0].mxu0
    %v2339 = vadd.f32 0.0, %v2338
    %v2340 = vpop.f32.mrb[0].mxu0
    %2341 = vmatprep.mubr.f32.mxu0 0.0
    %2342 = vmatmul.mubr.f32.gmra.mrb[0].mxu0 %v2138
    %v2343 = vpop.f32.mrb[0].mxu0
    %v2344 = vadd.f32 0.0, %v2343
    %v2345 = vpop.f32.mrb[0].mxu0
    %2346 = vmatprep.mubr.f32.mxu0 0.0
    %2347 = vmatmul.mubr.f32.gmra.mrb[0].mxu0 %v2140
    %v2348 = vpop.f32.mrb[0].mxu0
    %v2349 = vadd.f32 0.0, %v2348
    %v2350 = vpop.f32.mrb[0].mxu0
    %2351 = vmatprep.mubr.f32.mxu0 0.0
    %2352 = vmatmul.mubr.f32.gmra.mrb[0].mxu0 %v2142
    %v2353 = vpop.f32.mrb[0].mxu0
    %v2354 = vadd.f32 0.0, %v2353
    %v2355 = vpop.f32.mrb[0].mxu0
    %2356 = vmatprep.mubr.f32.mxu0 0.0
    %2357 = vmatmul.mubr.f32.gmra.mrb[0].mxu0 %v2144
    %v2358 = vpop.f32.mrb[0].mxu0
    %v2359 = vadd.f32 0.0, %v2358
    %v2360 = vpop.f32.mrb[0].mxu0
    %2361 = vmatprep.mubr.f32.mxu0 0.0
    %2362 = vmatmul.mubr.f32.gmra.mrb[0].mxu0 %v2146
    %v2363 = vpop.f32.mrb[0].mxu0
    %v2364 = vadd.f32 0.0, %v2363
    %v2365 = vpop.f32.mrb[0].mxu0
    %2366 = vmatprep.mubr.f32.mxu0 0.0
    %2367 = vmatmul.mubr.f32.gmra.mrb[0].mxu0 %v2148
    %v2368 = vpop.f32.mrb[0].mxu0
    %v2369 = vadd.f32 0.0, %v2368
    %v2370 = vpop.f32.mrb[0].mxu0
    %2371 = vmatprep.mubr.f32.mxu0 0.0
    %2372 = vmatmul.mubr.f32.gmra.mrb[0].mxu0 %v2150
    %v2373 = vpop.f32.mrb[0].mxu0
    %v2374 = vadd.f32 0.0, %v2373
    %v2375 = vpop.f32.mrb[0].mxu0
    %2376 = vdwg.mxu0
    %v2377 = vadd.f32 %v1716, %v2219
    %v2378 = vadd.f32 %v1717, %v2224
    %v2379 = vadd.f32 %v1718, %v2229
    %v2380 = vadd.f32 %v1719, %v2234
    %v2381 = vadd.f32 %v1720, %v2239
    %v2382 = vadd.f32 %v1721, %v2244
    %v2383 = vadd.f32 %v1722, %v2249
    %v2384 = vadd.f32 %v1723, %v2254
    %v2385 = vadd.f32 %v1724, %v2259
    %v2386 = vadd.f32 %v1725, %v2264
    %v2387 = vadd.f32 %v1726, %v2269
    %v2388 = vadd.f32 %v1727, %v2274
    %v2389 = vadd.f32 %v1728, %v2279
    %v2390 = vadd.f32 %v1729, %v2284
    %v2391 = vadd.f32 %v1730, %v2289
    %v2392 = vadd.f32 %v1731, %v2294
    %v2393 = vadd.f32 %v1732, %v2299
    %v2394 = vadd.f32 %v1733, %v2304
    %v2395 = vadd.f32 %v1734, %v2309
    %v2396 = vadd.f32 %v1735, %v2314
    %v2397 = vadd.f32 %v1736, %v2319
    %v2398 = vadd.f32 %v1737, %v2324
    %v2399 = vadd.f32 %v1738, %v2329
    %v2400 = vadd.f32 %v1739, %v2334
    %v2401 = vadd.f32 %v1740, %v2339
    %v2402 = vadd.f32 %v1741, %v2344
    %v2403 = vadd.f32 %v1742, %v2349
    %v2404 = vadd.f32 %v1743, %v2354
    %v2405 = vadd.f32 %v1744, %v2359
    %v2406 = vadd.f32 %v1745, %v2364
    %v2407 = vadd.f32 %v1746, %v2369
    %v2408 = vadd.f32 %v1747, %v2374
    %s2409 = scalar_lea.vmem [#allocation6], 96
    %v2410 = vld [vmem:[%s2409] sm:$0xff]
    %v2411 = vld [vmem:[%s2409 + $0x8] sm:$0xff]
    %v2412 = vld [vmem:[%s2409 + $0x10] sm:$0xff]
    %v2413 = vld [vmem:[%s2409 + $0x18] sm:$0xff]
    %2414 = vmatprep.subr.mxu0 0.0
    %2415 = vmatpush1.msra.mxu0 %v2410
    %2416 = vmatprep.subr.mxu0 0.0
    %2417 = vmatpush1.msra.mxu0 %v2411
    %2418 = vmatprep.subr.mxu0 0.0
    %2419 = vmatpush1.msra.mxu0 %v2412
    %2420 = vmatprep.subr.mxu0 0.0
    %2421 = vmatpush1.msra.mxu0 %v2413
    %2422 = vmatprep.subr.mxu0 0.0
    %2423 = vmatpush1.msra.mxu0 0.0
    %2424 = vmatprep.subr.mxu0 0.0
    %2425 = vmatpush1.msra.mxu0 0.0
    %2426 = vmatprep.subr.mxu0 0.0
    %2427 = vmatpush1.msra.mxu0 0.0
    %2428 = vmatprep.subr.mxu0 0.0
    %2429 = vmatpush1.msra.mxu0 0.0
    %2430 = vmatprep.subr.mxu0 0.0
    %2431 = vmatpush1.msra.mxu0 0.0
    %2432 = vmatprep.subr.mxu0 0.0
    %2433 = vmatpush1.msra.mxu0 0.0
    %2434 = vmatprep.subr.mxu0 0.0
    %2435 = vmatpush1.msra.mxu0 0.0
    %2436 = vmatprep.subr.mxu0 0.0
    %2437 = vmatpush1.msra.mxu0 0.0
    %2438 = vmatprep.subr.mxu0 0.0
    %2439 = vmatpush1.msra.mxu0 0.0
    %2440 = vmatprep.subr.mxu0 0.0
    %2441 = vmatpush1.msra.mxu0 0.0
    %2442 = vmatprep.subr.mxu0 0.0
    %2443 = vmatpush1.msra.mxu0 0.0
    %2444 = vmatprep.subr.mxu0 0.0
    %2445 = vmatpush1.msra.mxu0 0.0
    %2446 = vmatprep.subr.mxu0 0.0
    %2447 = vmatpush1.msra.mxu0 0.0
    %2448 = vmatprep.subr.mxu0 0.0
    %2449 = vmatpush1.msra.mxu0 0.0
    %2450 = vmatprep.subr.mxu0 0.0
    %2451 = vmatpush1.msra.mxu0 0.0
    %2452 = vmatprep.subr.mxu0 0.0
    %2453 = vmatpush1.msra.mxu0 0.0
    %2454 = vmatprep.subr.mxu0 0.0
    %2455 = vmatpush1.msra.mxu0 0.0
    %2456 = vmatprep.subr.mxu0 0.0
    %2457 = vmatpush1.msra.mxu0 0.0
    %2458 = vmatprep.subr.mxu0 0.0
    %2459 = vmatpush1.msra.mxu0 0.0
    %2460 = vmatprep.subr.mxu0 0.0
    %2461 = vmatpush1.msra.mxu0 0.0
    %2462 = vmatprep.subr.mxu0 0.0
    %2463 = vmatpush1.msra.mxu0 0.0
    %2464 = vmatprep.subr.mxu0 0.0
    %2465 = vmatpush1.msra.mxu0 0.0
    %2466 = vmatprep.subr.mxu0 0.0
    %2467 = vmatpush1.msra.mxu0 0.0
    %2468 = vmatprep.subr.mxu0 0.0
    %2469 = vmatpush1.msra.mxu0 0.0
    %2470 = vmatprep.subr.mxu0 0.0
    %2471 = vmatpush1.msra.mxu0 0.0
    %2472 = vmatprep.subr.mxu0 0.0
    %2473 = vmatpush1.msra.mxu0 0.0
    %2474 = vmatprep.subr.mxu0 0.0
    %2475 = vmatpush1.msra.mxu0 0.0
    %2476 = vmatprep.subr.mxu0 0.0
    %2477 = vmatpush1.msra.mxu0 0.0
    %2478 = vmatprep.mubr.f32.mxu0 0.0
    %2479 = vmatmul.mubr.f32.gmra.mrb[0].mxu0 %v2088
    %v2480 = vpop.f32.mrb[0].mxu0
    %v2481 = vadd.f32 0.0, %v2480
    %v2482 = vpop.f32.mrb[0].mxu0
    %2483 = vmatprep.mubr.f32.mxu0 0.0
    %2484 = vmatmul.mubr.f32.gmra.mrb[0].mxu0 %v2090
    %v2485 = vpop.f32.mrb[0].mxu0
    %v2486 = vadd.f32 0.0, %v2485
    %v2487 = vpop.f32.mrb[0].mxu0
    %2488 = vmatprep.mubr.f32.mxu0 0.0
    %2489 = vmatmul.mubr.f32.gmra.mrb[0].mxu0 %v2092
    %v2490 = vpop.f32.mrb[0].mxu0
    %v2491 = vadd.f32 0.0, %v2490
    %v2492 = vpop.f32.mrb[0].mxu0
    %2493 = vmatprep.mubr.f32.mxu0 0.0
    %2494 = vmatmul.mubr.f32.gmra.mrb[0].mxu0 %v2094
    %v2495 = vpop.f32.mrb[0].mxu0
    %v2496 = vadd.f32 0.0, %v2495
    %v2497 = vpop.f32.mrb[0].mxu0
    %2498 = vmatprep.mubr.f32.mxu0 0.0
    %2499 = vmatmul.mubr.f32.gmra.mrb[0].mxu0 %v2096
    %v2500 = vpop.f32.mrb[0].mxu0
    %v2501 = vadd.f32 0.0, %v2500
    %v2502 = vpop.f32.mrb[0].mxu0
    %2503 = vmatprep.mubr.f32.mxu0 0.0
    %2504 = vmatmul.mubr.f32.gmra.mrb[0].mxu0 %v2098
    %v2505 = vpop.f32.mrb[0].mxu0
    %v2506 = vadd.f32 0.0, %v2505
    %v2507 = vpop.f32.mrb[0].mxu0
    %2508 = vmatprep.mubr.f32.mxu0 0.0
    %2509 = vmatmul.mubr.f32.gmra.mrb[0].mxu0 %v2100
    %v2510 = vpop.f32.mrb[0].mxu0
    %v2511 = vadd.f32 0.0, %v2510
    %v2512 = vpop.f32.mrb[0].mxu0
    %2513 = vmatprep.mubr.f32.mxu0 0.0
    %2514 = vmatmul.mubr.f32.gmra.mrb[0].mxu0 %v2102
    %v2515 = vpop.f32.mrb[0].mxu0
    %v2516 = vadd.f32 0.0, %v2515
    %v2517 = vpop.f32.mrb[0].mxu0
    %2518 = vmatprep.mubr.f32.mxu0 0.0
    %2519 = vmatmul.mubr.f32.gmra.mrb[0].mxu0 %v2104
    %v2520 = vpop.f32.mrb[0].mxu0
    %v2521 = vadd.f32 0.0, %v2520
    %v2522 = vpop.f32.mrb[0].mxu0
    %2523 = vmatprep.mubr.f32.mxu0 0.0
    %2524 = vmatmul.mubr.f32.gmra.mrb[0].mxu0 %v2106
    %v2525 = vpop.f32.mrb[0].mxu0
    %v2526 = vadd.f32 0.0, %v2525
    %v2527 = vpop.f32.mrb[0].mxu0
    %2528 = vmatprep.mubr.f32.mxu0 0.0
    %2529 = vmatmul.mubr.f32.gmra.mrb[0].mxu0 %v2108
    %v2530 = vpop.f32.mrb[0].mxu0
    %v2531 = vadd.f32 0.0, %v2530
    %v2532 = vpop.f32.mrb[0].mxu0
    %2533 = vmatprep.mubr.f32.mxu0 0.0
    %2534 = vmatmul.mubr.f32.gmra.mrb[0].mxu0 %v2110
    %v2535 = vpop.f32.mrb[0].mxu0
    %v2536 = vadd.f32 0.0, %v2535
    %v2537 = vpop.f32.mrb[0].mxu0
    %2538 = vmatprep.mubr.f32.mxu0 0.0
    %2539 = vmatmul.mubr.f32.gmra.mrb[0].mxu0 %v2112
    %v2540 = vpop.f32.mrb[0].mxu0
    %v2541 = vadd.f32 0.0, %v2540
    %v2542 = vpop.f32.mrb[0].mxu0
    %2543 = vmatprep.mubr.f32.mxu0 0.0
    %2544 = vmatmul.mubr.f32.gmra.mrb[0].mxu0 %v2114
    %v2545 = vpop.f32.mrb[0].mxu0
    %v2546 = vadd.f32 0.0, %v2545
    %v2547 = vpop.f32.mrb[0].mxu0
    %2548 = vmatprep.mubr.f32.mxu0 0.0
    %2549 = vmatmul.mubr.f32.gmra.mrb[0].mxu0 %v2116
    %v2550 = vpop.f32.mrb[0].mxu0
    %v2551 = vadd.f32 0.0, %v2550
    %v2552 = vpop.f32.mrb[0].mxu0
    %2553 = vmatprep.mubr.f32.mxu0 0.0
    %2554 = vmatmul.mubr.f32.gmra.mrb[0].mxu0 %v2118
    %v2555 = vpop.f32.mrb[0].mxu0
    %v2556 = vadd.f32 0.0, %v2555
    %v2557 = vpop.f32.mrb[0].mxu0
    %2558 = vmatprep.mubr.f32.mxu0 0.0
    %2559 = vmatmul.mubr.f32.gmra.mrb[0].mxu0 %v2120
    %v2560 = vpop.f32.mrb[0].mxu0
    %v2561 = vadd.f32 0.0, %v2560
    %v2562 = vpop.f32.mrb[0].mxu0
    %2563 = vmatprep.mubr.f32.mxu0 0.0
    %2564 = vmatmul.mubr.f32.gmra.mrb[0].mxu0 %v2122
    %v2565 = vpop.f32.mrb[0].mxu0
    %v2566 = vadd.f32 0.0, %v2565
    %v2567 = vpop.f32.mrb[0].mxu0
    %2568 = vmatprep.mubr.f32.mxu0 0.0
    %2569 = vmatmul.mubr.f32.gmra.mrb[0].mxu0 %v2124
    %v2570 = vpop.f32.mrb[0].mxu0
    %v2571 = vadd.f32 0.0, %v2570
    %v2572 = vpop.f32.mrb[0].mxu0
    %2573 = vmatprep.mubr.f32.mxu0 0.0
    %2574 = vmatmul.mubr.f32.gmra.mrb[0].mxu0 %v2126
    %v2575 = vpop.f32.mrb[0].mxu0
    %v2576 = vadd.f32 0.0, %v2575
    %v2577 = vpop.f32.mrb[0].mxu0
    %2578 = vmatprep.mubr.f32.mxu0 0.0
    %2579 = vmatmul.mubr.f32.gmra.mrb[0].mxu0 %v2128
    %v2580 = vpop.f32.mrb[0].mxu0
    %v2581 = vadd.f32 0.0, %v2580
    %v2582 = vpop.f32.mrb[0].mxu0
    %2583 = vmatprep.mubr.f32.mxu0 0.0
    %2584 = vmatmul.mubr.f32.gmra.mrb[0].mxu0 %v2130
    %v2585 = vpop.f32.mrb[0].mxu0
    %v2586 = vadd.f32 0.0, %v2585
    %v2587 = vpop.f32.mrb[0].mxu0
    %2588 = vmatprep.mubr.f32.mxu0 0.0
    %2589 = vmatmul.mubr.f32.gmra.mrb[0].mxu0 %v2132
    %v2590 = vpop.f32.mrb[0].mxu0
    %v2591 = vadd.f32 0.0, %v2590
    %v2592 = vpop.f32.mrb[0].mxu0
    %2593 = vmatprep.mubr.f32.mxu0 0.0
    %2594 = vmatmul.mubr.f32.gmra.mrb[0].mxu0 %v2134
    %v2595 = vpop.f32.mrb[0].mxu0
    %v2596 = vadd.f32 0.0, %v2595
    %v2597 = vpop.f32.mrb[0].mxu0
    %2598 = vmatprep.mubr.f32.mxu0 0.0
    %2599 = vmatmul.mubr.f32.gmra.mrb[0].mxu0 %v2136
    %v2600 = vpop.f32.mrb[0].mxu0
    %v2601 = vadd.f32 0.0, %v2600
    %v2602 = vpop.f32.mrb[0].mxu0
    %2603 = vmatprep.mubr.f32.mxu0 0.0
    %2604 = vmatmul.mubr.f32.gmra.mrb[0].mxu0 %v2138
    %v2605 = vpop.f32.mrb[0].mxu0
    %v2606 = vadd.f32 0.0, %v2605
    %v2607 = vpop.f32.mrb[0].mxu0
    %2608 = vmatprep.mubr.f32.mxu0 0.0
    %2609 = vmatmul.mubr.f32.gmra.mrb[0].mxu0 %v2140
    %v2610 = vpop.f32.mrb[0].mxu0
    %v2611 = vadd.f32 0.0, %v2610
    %v2612 = vpop.f32.mrb[0].mxu0
    %2613 = vmatprep.mubr.f32.mxu0 0.0
    %2614 = vmatmul.mubr.f32.gmra.mrb[0].mxu0 %v2142
    %v2615 = vpop.f32.mrb[0].mxu0
    %v2616 = vadd.f32 0.0, %v2615
    %v2617 = vpop.f32.mrb[0].mxu0
    %2618 = vmatprep.mubr.f32.mxu0 0.0
    %2619 = vmatmul.mubr.f32.gmra.mrb[0].mxu0 %v2144
    %v2620 = vpop.f32.mrb[0].mxu0
    %v2621 = vadd.f32 0.0, %v2620
    %v2622 = vpop.f32.mrb[0].mxu0
    %2623 = vmatprep.mubr.f32.mxu0 0.0
    %2624 = vmatmul.mubr.f32.gmra.mrb[0].mxu0 %v2146
    %v2625 = vpop.f32.mrb[0].mxu0
    %v2626 = vadd.f32 0.0, %v2625
    %v2627 = vpop.f32.mrb[0].mxu0
    %2628 = vmatprep.mubr.f32.mxu0 0.0
    %2629 = vmatmul.mubr.f32.gmra.mrb[0].mxu0 %v2148
    %v2630 = vpop.f32.mrb[0].mxu0
    %v2631 = vadd.f32 0.0, %v2630
    %v2632 = vpop.f32.mrb[0].mxu0
    %2633 = vmatprep.mubr.f32.mxu0 0.0
    %2634 = vmatmul.mubr.f32.gmra.mrb[0].mxu0 %v2150
    %v2635 = vpop.f32.mrb[0].mxu0
    %v2636 = vadd.f32 0.0, %v2635
    %v2637 = vpop.f32.mrb[0].mxu0
    %2638 = vdwg.mxu0
    %v2639 = vadd.f32 %v1978, %v2481
    %v2640 = vadd.f32 %v1979, %v2486
    %v2641 = vadd.f32 %v1980, %v2491
    %v2642 = vadd.f32 %v1981, %v2496
    %v2643 = vadd.f32 %v1982, %v2501
    %v2644 = vadd.f32 %v1983, %v2506
    %v2645 = vadd.f32 %v1984, %v2511
    %v2646 = vadd.f32 %v1985, %v2516
    %v2647 = vadd.f32 %v1986, %v2521
    %v2648 = vadd.f32 %v1987, %v2526
    %v2649 = vadd.f32 %v1988, %v2531
    %v2650 = vadd.f32 %v1989, %v2536
    %v2651 = vadd.f32 %v1990, %v2541
    %v2652 = vadd.f32 %v1991, %v2546
    %v2653 = vadd.f32 %v1992, %v2551
    %v2654 = vadd.f32 %v1993, %v2556
    %v2655 = vadd.f32 %v1994, %v2561
    %v2656 = vadd.f32 %v1995, %v2566
    %v2657 = vadd.f32 %v1996, %v2571
    %v2658 = vadd.f32 %v1997, %v2576
    %v2659 = vadd.f32 %v1998, %v2581
    %v2660 = vadd.f32 %v1999, %v2586
    %v2661 = vadd.f32 %v2000, %v2591
    %v2662 = vadd.f32 %v2001, %v2596
    %v2663 = vadd.f32 %v2002, %v2601
    %v2664 = vadd.f32 %v2003, %v2606
    %v2665 = vadd.f32 %v2004, %v2611
    %v2666 = vadd.f32 %v2005, %v2616
    %v2667 = vadd.f32 %v2006, %v2621
    %v2668 = vadd.f32 %v2007, %v2626
    %v2669 = vadd.f32 %v2008, %v2631
    %v2670 = vadd.f32 %v2009, %v2636
    %vm2671 = vcmask 1043456
    %v2672 = vrot.slane %v149, 4
    %v2673 = vrot.slane %v150, 4
    %v2674 = vsel %vm2671, %v2672, %v2673
    %v2675 = vrot.slane %v151, 4
    %v2676 = vsel %vm2671, %v2673, %v2675
    %v2677 = vrot.slane %v152, 4
    %v2678 = vsel %vm2671, %v2675, %v2677
    %v2679 = vrot.slane %v153, 4
    %v2680 = vsel %vm2671, %v2677, %v2679
    %v2681 = vrot.slane %v154, 4
    %v2682 = vrot.slane %v155, 4
    %v2683 = vsel %vm2671, %v2681, %v2682
    %v2684 = vrot.slane %v156, 4
    %v2685 = vsel %vm2671, %v2682, %v2684
    %v2686 = vrot.slane %v157, 4
    %v2687 = vsel %vm2671, %v2684, %v2686
    %v2688 = vrot.slane %v158, 4
    %v2689 = vsel %vm2671, %v2686, %v2688
    %v2690 = vrot.slane %v159, 4
    %v2691 = vrot.slane %v160, 4
    %v2692 = vsel %vm2671, %v2690, %v2691
    %v2693 = vrot.slane %v161, 4
    %v2694 = vsel %vm2671, %v2691, %v2693
    %v2695 = vrot.slane %v162, 4
    %v2696 = vsel %vm2671, %v2693, %v2695
    %v2697 = vrot.slane %v163, 4
    %v2698 = vsel %vm2671, %v2695, %v2697
    %v2699 = vrot.slane %v164, 4
    %v2700 = vrot.slane %v165, 4
    %v2701 = vsel %vm2671, %v2699, %v2700
    %v2702 = vrot.slane %v166, 4
    %v2703 = vsel %vm2671, %v2700, %v2702
    %v2704 = vrot.slane %v167, 4
    %v2705 = vsel %vm2671, %v2702, %v2704
    %v2706 = vrot.slane %v168, 4
    %v2707 = vsel %vm2671, %v2704, %v2706
    %v2708 = vrot.slane %v169, 4
    %v2709 = vrot.slane %v170, 4
    %v2710 = vsel %vm2671, %v2708, %v2709
    %v2711 = vrot.slane %v171, 4
    %v2712 = vsel %vm2671, %v2709, %v2711
    %v2713 = vrot.slane %v172, 4
    %v2714 = vsel %vm2671, %v2711, %v2713
    %v2715 = vrot.slane %v173, 4
    %v2716 = vsel %vm2671, %v2713, %v2715
    %v2717 = vrot.slane %v174, 4
    %v2718 = vrot.slane %v175, 4
    %v2719 = vsel %vm2671, %v2717, %v2718
    %v2720 = vrot.slane %v176, 4
    %v2721 = vsel %vm2671, %v2718, %v2720
    %v2722 = vrot.slane %v177, 4
    %v2723 = vsel %vm2671, %v2720, %v2722
    %v2724 = vrot.slane %v178, 4
    %v2725 = vsel %vm2671, %v2722, %v2724
    %v2726 = vrot.slane %v179, 4
    %v2727 = vrot.slane %v180, 4
    %v2728 = vsel %vm2671, %v2726, %v2727
    %v2729 = vrot.slane %v181, 4
    %v2730 = vsel %vm2671, %v2727, %v2729
    %v2731 = vrot.slane %v182, 4
    %v2732 = vsel %vm2671, %v2729, %v2731
    %v2733 = vrot.slane %v183, 4
    %v2734 = vsel %vm2671, %v2731, %v2733
    %v2735 = vrot.slane %v184, 4
    %v2736 = vrot.slane %v185, 4
    %v2737 = vsel %vm2671, %v2735, %v2736
    %v2738 = vrot.slane %v186, 4
    %v2739 = vsel %vm2671, %v2736, %v2738
    %v2740 = vrot.slane %v187, 4
    %v2741 = vsel %vm2671, %v2738, %v2740
    %v2742 = vrot.slane %v188, 4
    %v2743 = vsel %vm2671, %v2740, %v2742
    %s2744 = scalar_lea.vmem [#allocation4], 128
    %v2745 = vld [vmem:[%s2744] sm:$0xff]
    %v2746 = vld [vmem:[%s2744 + $0x8] sm:$0xff]
    %v2747 = vld [vmem:[%s2744 + $0x10] sm:$0xff]
    %v2748 = vld [vmem:[%s2744 + $0x18] sm:$0xff]
    %v2749 = vsel %vm315, %v2674, 0
    %v2751 = vsel %vm315, %v2676, 0
    %v2753 = vsel %vm315, %v2678, 0
    %v2755 = vsel %vm315, %v2680, 0
    %v2757 = vsel %vm315, %v2683, 0
    %v2759 = vsel %vm315, %v2685, 0
    %v2761 = vsel %vm315, %v2687, 0
    %v2763 = vsel %vm315, %v2689, 0
    %v2765 = vsel %vm315, %v2692, 0
    %v2767 = vsel %vm315, %v2694, 0
    %v2769 = vsel %vm315, %v2696, 0
    %v2771 = vsel %vm315, %v2698, 0
    %v2773 = vsel %vm315, %v2701, 0
    %v2775 = vsel %vm315, %v2703, 0
    %v2777 = vsel %vm315, %v2705, 0
    %v2779 = vsel %vm315, %v2707, 0
    %v2781 = vsel %vm315, %v2710, 0
    %v2783 = vsel %vm315, %v2712, 0
    %v2785 = vsel %vm315, %v2714, 0
    %v2787 = vsel %vm315, %v2716, 0
    %v2789 = vsel %vm315, %v2719, 0
    %v2791 = vsel %vm315, %v2721, 0
    %v2793 = vsel %vm315, %v2723, 0
    %v2795 = vsel %vm315, %v2725, 0
    %v2797 = vsel %vm315, %v2728, 0
    %v2799 = vsel %vm315, %v2730, 0
    %v2801 = vsel %vm315, %v2732, 0
    %v2803 = vsel %vm315, %v2734, 0
    %v2805 = vsel %vm315, %v2737, 0
    %v2807 = vsel %vm315, %v2739, 0
    %v2809 = vsel %vm315, %v2741, 0
    %v2811 = vsel %vm315, %v2743, 0
    %2813 = vmatprep.subr.mxu0 0.0
    %2814 = vmatpush1.msra.mxu0 %v2745
    %2815 = vmatprep.subr.mxu0 0.0
    %2816 = vmatpush1.msra.mxu0 %v2746
    %2817 = vmatprep.subr.mxu0 0.0
    %2818 = vmatpush1.msra.mxu0 %v2747
    %2819 = vmatprep.subr.mxu0 0.0
    %2820 = vmatpush1.msra.mxu0 %v2748
    %2821 = vmatprep.subr.mxu0 0.0
    %2822 = vmatpush1.msra.mxu0 0.0
    %2823 = vmatprep.subr.mxu0 0.0
    %2824 = vmatpush1.msra.mxu0 0.0
    %2825 = vmatprep.subr.mxu0 0.0
    %2826 = vmatpush1.msra.mxu0 0.0
    %2827 = vmatprep.subr.mxu0 0.0
    %2828 = vmatpush1.msra.mxu0 0.0
    %2829 = vmatprep.subr.mxu0 0.0
    %2830 = vmatpush1.msra.mxu0 0.0
    %2831 = vmatprep.subr.mxu0 0.0
    %2832 = vmatpush1.msra.mxu0 0.0
    %2833 = vmatprep.subr.mxu0 0.0
    %2834 = vmatpush1.msra.mxu0 0.0
    %2835 = vmatprep.subr.mxu0 0.0
    %2836 = vmatpush1.msra.mxu0 0.0
    %2837 = vmatprep.subr.mxu0 0.0
    %2838 = vmatpush1.msra.mxu0 0.0
    %2839 = vmatprep.subr.mxu0 0.0
    %2840 = vmatpush1.msra.mxu0 0.0
    %2841 = vmatprep.subr.mxu0 0.0
    %2842 = vmatpush1.msra.mxu0 0.0
    %2843 = vmatprep.subr.mxu0 0.0
    %2844 = vmatpush1.msra.mxu0 0.0
    %2845 = vmatprep.subr.mxu0 0.0
    %2846 = vmatpush1.msra.mxu0 0.0
    %2847 = vmatprep.subr.mxu0 0.0
    %2848 = vmatpush1.msra.mxu0 0.0
    %2849 = vmatprep.subr.mxu0 0.0
    %2850 = vmatpush1.msra.mxu0 0.0
    %2851 = vmatprep.subr.mxu0 0.0
    %2852 = vmatpush1.msra.mxu0 0.0
    %2853 = vmatprep.subr.mxu0 0.0
    %2854 = vmatpush1.msra.mxu0 0.0
    %2855 = vmatprep.subr.mxu0 0.0
    %2856 = vmatpush1.msra.mxu0 0.0
    %2857 = vmatprep.subr.mxu0 0.0
    %2858 = vmatpush1.msra.mxu0 0.0
    %2859 = vmatprep.subr.mxu0 0.0
    %2860 = vmatpush1.msra.mxu0 0.0
    %2861 = vmatprep.subr.mxu0 0.0
    %2862 = vmatpush1.msra.mxu0 0.0
    %2863 = vmatprep.subr.mxu0 0.0
    %2864 = vmatpush1.msra.mxu0 0.0
    %2865 = vmatprep.subr.mxu0 0.0
    %2866 = vmatpush1.msra.mxu0 0.0
    %2867 = vmatprep.subr.mxu0 0.0
    %2868 = vmatpush1.msra.mxu0 0.0
    %2869 = vmatprep.subr.mxu0 0.0
    %2870 = vmatpush1.msra.mxu0 0.0
    %2871 = vmatprep.subr.mxu0 0.0
    %2872 = vmatpush1.msra.mxu0 0.0
    %2873 = vmatprep.subr.mxu0 0.0
    %2874 = vmatpush1.msra.mxu0 0.0
    %2875 = vmatprep.subr.mxu0 0.0
    %2876 = vmatpush1.msra.mxu0 0.0
    %2877 = vmatprep.mubr.f32.mxu0 0.0
    %2878 = vmatmul.mubr.f32.gmra.mrb[0].mxu0 %v2749
    %v2879 = vpop.f32.mrb[0].mxu0
    %v2880 = vadd.f32 0.0, %v2879
    %v2881 = vpop.f32.mrb[0].mxu0
    %2882 = vmatprep.mubr.f32.mxu0 0.0
    %2883 = vmatmul.mubr.f32.gmra.mrb[0].mxu0 %v2751
    %v2884 = vpop.f32.mrb[0].mxu0
    %v2885 = vadd.f32 0.0, %v2884
    %v2886 = vpop.f32.mrb[0].mxu0
    %2887 = vmatprep.mubr.f32.mxu0 0.0
    %2888 = vmatmul.mubr.f32.gmra.mrb[0].mxu0 %v2753
    %v2889 = vpop.f32.mrb[0].mxu0
    %v2890 = vadd.f32 0.0, %v2889
    %v2891 = vpop.f32.mrb[0].mxu0
    %2892 = vmatprep.mubr.f32.mxu0 0.0
    %2893 = vmatmul.mubr.f32.gmra.mrb[0].mxu0 %v2755
    %v2894 = vpop.f32.mrb[0].mxu0
    %v2895 = vadd.f32 0.0, %v2894
    %v2896 = vpop.f32.mrb[0].mxu0
    %2897 = vmatprep.mubr.f32.mxu0 0.0
    %2898 = vmatmul.mubr.f32.gmra.mrb[0].mxu0 %v2757
    %v2899 = vpop.f32.mrb[0].mxu0
    %v2900 = vadd.f32 0.0, %v2899
    %v2901 = vpop.f32.mrb[0].mxu0
    %2902 = vmatprep.mubr.f32.mxu0 0.0
    %2903 = vmatmul.mubr.f32.gmra.mrb[0].mxu0 %v2759
    %v2904 = vpop.f32.mrb[0].mxu0
    %v2905 = vadd.f32 0.0, %v2904
    %v2906 = vpop.f32.mrb[0].mxu0
    %2907 = vmatprep.mubr.f32.mxu0 0.0
    %2908 = vmatmul.mubr.f32.gmra.mrb[0].mxu0 %v2761
    %v2909 = vpop.f32.mrb[0].mxu0
    %v2910 = vadd.f32 0.0, %v2909
    %v2911 = vpop.f32.mrb[0].mxu0
    %2912 = vmatprep.mubr.f32.mxu0 0.0
    %2913 = vmatmul.mubr.f32.gmra.mrb[0].mxu0 %v2763
    %v2914 = vpop.f32.mrb[0].mxu0
    %v2915 = vadd.f32 0.0, %v2914
    %v2916 = vpop.f32.mrb[0].mxu0
    %2917 = vmatprep.mubr.f32.mxu0 0.0
    %2918 = vmatmul.mubr.f32.gmra.mrb[0].mxu0 %v2765
    %v2919 = vpop.f32.mrb[0].mxu0
    %v2920 = vadd.f32 0.0, %v2919
    %v2921 = vpop.f32.mrb[0].mxu0
    %2922 = vmatprep.mubr.f32.mxu0 0.0
    %2923 = vmatmul.mubr.f32.gmra.mrb[0].mxu0 %v2767
    %v2924 = vpop.f32.mrb[0].mxu0
    %v2925 = vadd.f32 0.0, %v2924
    %v2926 = vpop.f32.mrb[0].mxu0
    %2927 = vmatprep.mubr.f32.mxu0 0.0
    %2928 = vmatmul.mubr.f32.gmra.mrb[0].mxu0 %v2769
    %v2929 = vpop.f32.mrb[0].mxu0
    %v2930 = vadd.f32 0.0, %v2929
    %v2931 = vpop.f32.mrb[0].mxu0
    %2932 = vmatprep.mubr.f32.mxu0 0.0
    %2933 = vmatmul.mubr.f32.gmra.mrb[0].mxu0 %v2771
    %v2934 = vpop.f32.mrb[0].mxu0
    %v2935 = vadd.f32 0.0, %v2934
    %v2936 = vpop.f32.mrb[0].mxu0
    %2937 = vmatprep.mubr.f32.mxu0 0.0
    %2938 = vmatmul.mubr.f32.gmra.mrb[0].mxu0 %v2773
    %v2939 = vpop.f32.mrb[0].mxu0
    %v2940 = vadd.f32 0.0, %v2939
    %v2941 = vpop.f32.mrb[0].mxu0
    %2942 = vmatprep.mubr.f32.mxu0 0.0
    %2943 = vmatmul.mubr.f32.gmra.mrb[0].mxu0 %v2775
    %v2944 = vpop.f32.mrb[0].mxu0
    %v2945 = vadd.f32 0.0, %v2944
    %v2946 = vpop.f32.mrb[0].mxu0
    %2947 = vmatprep.mubr.f32.mxu0 0.0
    %2948 = vmatmul.mubr.f32.gmra.mrb[0].mxu0 %v2777
    %v2949 = vpop.f32.mrb[0].mxu0
    %v2950 = vadd.f32 0.0, %v2949
    %v2951 = vpop.f32.mrb[0].mxu0
    %2952 = vmatprep.mubr.f32.mxu0 0.0
    %2953 = vmatmul.mubr.f32.gmra.mrb[0].mxu0 %v2779
    %v2954 = vpop.f32.mrb[0].mxu0
    %v2955 = vadd.f32 0.0, %v2954
    %v2956 = vpop.f32.mrb[0].mxu0
    %2957 = vmatprep.mubr.f32.mxu0 0.0
    %2958 = vmatmul.mubr.f32.gmra.mrb[0].mxu0 %v2781
    %v2959 = vpop.f32.mrb[0].mxu0
    %v2960 = vadd.f32 0.0, %v2959
    %v2961 = vpop.f32.mrb[0].mxu0
    %2962 = vmatprep.mubr.f32.mxu0 0.0
    %2963 = vmatmul.mubr.f32.gmra.mrb[0].mxu0 %v2783
    %v2964 = vpop.f32.mrb[0].mxu0
    %v2965 = vadd.f32 0.0, %v2964
    %v2966 = vpop.f32.mrb[0].mxu0
    %2967 = vmatprep.mubr.f32.mxu0 0.0
    %2968 = vmatmul.mubr.f32.gmra.mrb[0].mxu0 %v2785
    %v2969 = vpop.f32.mrb[0].mxu0
    %v2970 = vadd.f32 0.0, %v2969
    %v2971 = vpop.f32.mrb[0].mxu0
    %2972 = vmatprep.mubr.f32.mxu0 0.0
    %2973 = vmatmul.mubr.f32.gmra.mrb[0].mxu0 %v2787
    %v2974 = vpop.f32.mrb[0].mxu0
    %v2975 = vadd.f32 0.0, %v2974
    %v2976 = vpop.f32.mrb[0].mxu0
    %2977 = vmatprep.mubr.f32.mxu0 0.0
    %2978 = vmatmul.mubr.f32.gmra.mrb[0].mxu0 %v2789
    %v2979 = vpop.f32.mrb[0].mxu0
    %v2980 = vadd.f32 0.0, %v2979
    %v2981 = vpop.f32.mrb[0].mxu0
    %2982 = vmatprep.mubr.f32.mxu0 0.0
    %2983 = vmatmul.mubr.f32.gmra.mrb[0].mxu0 %v2791
    %v2984 = vpop.f32.mrb[0].mxu0
    %v2985 = vadd.f32 0.0, %v2984
    %v2986 = vpop.f32.mrb[0].mxu0
    %2987 = vmatprep.mubr.f32.mxu0 0.0
    %2988 = vmatmul.mubr.f32.gmra.mrb[0].mxu0 %v2793
    %v2989 = vpop.f32.mrb[0].mxu0
    %v2990 = vadd.f32 0.0, %v2989
    %v2991 = vpop.f32.mrb[0].mxu0
    %2992 = vmatprep.mubr.f32.mxu0 0.0
    %2993 = vmatmul.mubr.f32.gmra.mrb[0].mxu0 %v2795
    %v2994 = vpop.f32.mrb[0].mxu0
    %v2995 = vadd.f32 0.0, %v2994
    %v2996 = vpop.f32.mrb[0].mxu0
    %2997 = vmatprep.mubr.f32.mxu0 0.0
    %2998 = vmatmul.mubr.f32.gmra.mrb[0].mxu0 %v2797
    %v2999 = vpop.f32.mrb[0].mxu0
    %v3000 = vadd.f32 0.0, %v2999
    %v3001 = vpop.f32.mrb[0].mxu0
    %3002 = vmatprep.mubr.f32.mxu0 0.0
    %3003 = vmatmul.mubr.f32.gmra.mrb[0].mxu0 %v2799
    %v3004 = vpop.f32.mrb[0].mxu0
    %v3005 = vadd.f32 0.0, %v3004
    %v3006 = vpop.f32.mrb[0].mxu0
    %3007 = vmatprep.mubr.f32.mxu0 0.0
    %3008 = vmatmul.mubr.f32.gmra.mrb[0].mxu0 %v2801
    %v3009 = vpop.f32.mrb[0].mxu0
    %v3010 = vadd.f32 0.0, %v3009
    %v3011 = vpop.f32.mrb[0].mxu0
    %3012 = vmatprep.mubr.f32.mxu0 0.0
    %3013 = vmatmul.mubr.f32.gmra.mrb[0].mxu0 %v2803
    %v3014 = vpop.f32.mrb[0].mxu0
    %v3015 = vadd.f32 0.0, %v3014
    %v3016 = vpop.f32.mrb[0].mxu0
    %3017 = vmatprep.mubr.f32.mxu0 0.0
    %3018 = vmatmul.mubr.f32.gmra.mrb[0].mxu0 %v2805
    %v3019 = vpop.f32.mrb[0].mxu0
    %v3020 = vadd.f32 0.0, %v3019
    %v3021 = vpop.f32.mrb[0].mxu0
    %3022 = vmatprep.mubr.f32.mxu0 0.0
    %3023 = vmatmul.mubr.f32.gmra.mrb[0].mxu0 %v2807
    %v3024 = vpop.f32.mrb[0].mxu0
    %v3025 = vadd.f32 0.0, %v3024
    %v3026 = vpop.f32.mrb[0].mxu0
    %3027 = vmatprep.mubr.f32.mxu0 0.0
    %3028 = vmatmul.mubr.f32.gmra.mrb[0].mxu0 %v2809
    %v3029 = vpop.f32.mrb[0].mxu0
    %v3030 = vadd.f32 0.0, %v3029
    %v3031 = vpop.f32.mrb[0].mxu0
    %3032 = vmatprep.mubr.f32.mxu0 0.0
    %3033 = vmatmul.mubr.f32.gmra.mrb[0].mxu0 %v2811
    %v3034 = vpop.f32.mrb[0].mxu0
    %v3035 = vadd.f32 0.0, %v3034
    %v3036 = vpop.f32.mrb[0].mxu0
    %3037 = vdwg.mxu0
    %v3038 = vadd.f32 %v2377, %v2880
    %v3039 = vadd.f32 %v2378, %v2885
    %v3040 = vadd.f32 %v2379, %v2890
    %v3041 = vadd.f32 %v2380, %v2895
    %v3042 = vadd.f32 %v2381, %v2900
    %v3043 = vadd.f32 %v2382, %v2905
    %v3044 = vadd.f32 %v2383, %v2910
    %v3045 = vadd.f32 %v2384, %v2915
    %v3046 = vadd.f32 %v2385, %v2920
    %v3047 = vadd.f32 %v2386, %v2925
    %v3048 = vadd.f32 %v2387, %v2930
    %v3049 = vadd.f32 %v2388, %v2935
    %v3050 = vadd.f32 %v2389, %v2940
    %v3051 = vadd.f32 %v2390, %v2945
    %v3052 = vadd.f32 %v2391, %v2950
    %v3053 = vadd.f32 %v2392, %v2955
    %v3054 = vadd.f32 %v2393, %v2960
    %v3055 = vadd.f32 %v2394, %v2965
    %v3056 = vadd.f32 %v2395, %v2970
    %v3057 = vadd.f32 %v2396, %v2975
    %v3058 = vadd.f32 %v2397, %v2980
    %v3059 = vadd.f32 %v2398, %v2985
    %v3060 = vadd.f32 %v2399, %v2990
    %v3061 = vadd.f32 %v2400, %v2995
    %v3062 = vadd.f32 %v2401, %v3000
    %v3063 = vadd.f32 %v2402, %v3005
    %v3064 = vadd.f32 %v2403, %v3010
    %v3065 = vadd.f32 %v2404, %v3015
    %v3066 = vadd.f32 %v2405, %v3020
    %v3067 = vadd.f32 %v2406, %v3025
    %v3068 = vadd.f32 %v2407, %v3030
    %v3069 = vadd.f32 %v2408, %v3035
    %s3070 = scalar_lea.vmem [#allocation6], 128
    %v3071 = vld [vmem:[%s3070] sm:$0xff]
    %v3072 = vld [vmem:[%s3070 + $0x8] sm:$0xff]
    %v3073 = vld [vmem:[%s3070 + $0x10] sm:$0xff]
    %v3074 = vld [vmem:[%s3070 + $0x18] sm:$0xff]
    %3075 = vmatprep.subr.mxu0 0.0
    %3076 = vmatpush1.msra.mxu0 %v3071
    %3077 = vmatprep.subr.mxu0 0.0
    %3078 = vmatpush1.msra.mxu0 %v3072
    %3079 = vmatprep.subr.mxu0 0.0
    %3080 = vmatpush1.msra.mxu0 %v3073
    %3081 = vmatprep.subr.mxu0 0.0
    %3082 = vmatpush1.msra.mxu0 %v3074
    %3083 = vmatprep.subr.mxu0 0.0
    %3084 = vmatpush1.msra.mxu0 0.0
    %3085 = vmatprep.subr.mxu0 0.0
    %3086 = vmatpush1.msra.mxu0 0.0
    %3087 = vmatprep.subr.mxu0 0.0
    %3088 = vmatpush1.msra.mxu0 0.0
    %3089 = vmatprep.subr.mxu0 0.0
    %3090 = vmatpush1.msra.mxu0 0.0
    %3091 = vmatprep.subr.mxu0 0.0
    %3092 = vmatpush1.msra.mxu0 0.0
    %3093 = vmatprep.subr.mxu0 0.0
    %3094 = vmatpush1.msra.mxu0 0.0
    %3095 = vmatprep.subr.mxu0 0.0
    %3096 = vmatpush1.msra.mxu0 0.0
    %3097 = vmatprep.subr.mxu0 0.0
    %3098 = vmatpush1.msra.mxu0 0.0
    %3099 = vmatprep.subr.mxu0 0.0
    %3100 = vmatpush1.msra.mxu0 0.0
    %3101 = vmatprep.subr.mxu0 0.0
    %3102 = vmatpush1.msra.mxu0 0.0
    %3103 = vmatprep.subr.mxu0 0.0
    %3104 = vmatpush1.msra.mxu0 0.0
    %3105 = vmatprep.subr.mxu0 0.0
    %3106 = vmatpush1.msra.mxu0 0.0
    %3107 = vmatprep.subr.mxu0 0.0
    %3108 = vmatpush1.msra.mxu0 0.0
    %3109 = vmatprep.subr.mxu0 0.0
    %3110 = vmatpush1.msra.mxu0 0.0
    %3111 = vmatprep.subr.mxu0 0.0
    %3112 = vmatpush1.msra.mxu0 0.0
    %3113 = vmatprep.subr.mxu0 0.0
    %3114 = vmatpush1.msra.mxu0 0.0
    %3115 = vmatprep.subr.mxu0 0.0
    %3116 = vmatpush1.msra.mxu0 0.0
    %3117 = vmatprep.subr.mxu0 0.0
    %3118 = vmatpush1.msra.mxu0 0.0
    %3119 = vmatprep.subr.mxu0 0.0
    %3120 = vmatpush1.msra.mxu0 0.0
    %3121 = vmatprep.subr.mxu0 0.0
    %3122 = vmatpush1.msra.mxu0 0.0
    %3123 = vmatprep.subr.mxu0 0.0
    %3124 = vmatpush1.msra.mxu0 0.0
    %3125 = vmatprep.subr.mxu0 0.0
    %3126 = vmatpush1.msra.mxu0 0.0
    %3127 = vmatprep.subr.mxu0 0.0
    %3128 = vmatpush1.msra.mxu0 0.0
    %3129 = vmatprep.subr.mxu0 0.0
    %3130 = vmatpush1.msra.mxu0 0.0
    %3131 = vmatprep.subr.mxu0 0.0
    %3132 = vmatpush1.msra.mxu0 0.0
    %3133 = vmatprep.subr.mxu0 0.0
    %3134 = vmatpush1.msra.mxu0 0.0
    %3135 = vmatprep.subr.mxu0 0.0
    %3136 = vmatpush1.msra.mxu0 0.0
    %3137 = vmatprep.subr.mxu0 0.0
    %3138 = vmatpush1.msra.mxu0 0.0
    %3139 = vmatprep.mubr.f32.mxu0 0.0
    %3140 = vmatmul.mubr.f32.gmra.mrb[0].mxu0 %v2749
    %v3141 = vpop.f32.mrb[0].mxu0
    %v3142 = vadd.f32 0.0, %v3141
    %v3143 = vpop.f32.mrb[0].mxu0
    %3144 = vmatprep.mubr.f32.mxu0 0.0
    %3145 = vmatmul.mubr.f32.gmra.mrb[0].mxu0 %v2751
    %v3146 = vpop.f32.mrb[0].mxu0
    %v3147 = vadd.f32 0.0, %v3146
    %v3148 = vpop.f32.mrb[0].mxu0
    %3149 = vmatprep.mubr.f32.mxu0 0.0
    %3150 = vmatmul.mubr.f32.gmra.mrb[0].mxu0 %v2753
    %v3151 = vpop.f32.mrb[0].mxu0
    %v3152 = vadd.f32 0.0, %v3151
    %v3153 = vpop.f32.mrb[0].mxu0
    %3154 = vmatprep.mubr.f32.mxu0 0.0
    %3155 = vmatmul.mubr.f32.gmra.mrb[0].mxu0 %v2755
    %v3156 = vpop.f32.mrb[0].mxu0
    %v3157 = vadd.f32 0.0, %v3156
    %v3158 = vpop.f32.mrb[0].mxu0
    %3159 = vmatprep.mubr.f32.mxu0 0.0
    %3160 = vmatmul.mubr.f32.gmra.mrb[0].mxu0 %v2757
    %v3161 = vpop.f32.mrb[0].mxu0
    %v3162 = vadd.f32 0.0, %v3161
    %v3163 = vpop.f32.mrb[0].mxu0
    %3164 = vmatprep.mubr.f32.mxu0 0.0
    %3165 = vmatmul.mubr.f32.gmra.mrb[0].mxu0 %v2759
    %v3166 = vpop.f32.mrb[0].mxu0
    %v3167 = vadd.f32 0.0, %v3166
    %v3168 = vpop.f32.mrb[0].mxu0
    %3169 = vmatprep.mubr.f32.mxu0 0.0
    %3170 = vmatmul.mubr.f32.gmra.mrb[0].mxu0 %v2761
    %v3171 = vpop.f32.mrb[0].mxu0
    %v3172 = vadd.f32 0.0, %v3171
    %v3173 = vpop.f32.mrb[0].mxu0
    %3174 = vmatprep.mubr.f32.mxu0 0.0
    %3175 = vmatmul.mubr.f32.gmra.mrb[0].mxu0 %v2763
    %v3176 = vpop.f32.mrb[0].mxu0
    %v3177 = vadd.f32 0.0, %v3176
    %v3178 = vpop.f32.mrb[0].mxu0
    %3179 = vmatprep.mubr.f32.mxu0 0.0
    %3180 = vmatmul.mubr.f32.gmra.mrb[0].mxu0 %v2765
    %v3181 = vpop.f32.mrb[0].mxu0
    %v3182 = vadd.f32 0.0, %v3181
    %v3183 = vpop.f32.mrb[0].mxu0
    %3184 = vmatprep.mubr.f32.mxu0 0.0
    %3185 = vmatmul.mubr.f32.gmra.mrb[0].mxu0 %v2767
    %v3186 = vpop.f32.mrb[0].mxu0
    %v3187 = vadd.f32 0.0, %v3186
    %v3188 = vpop.f32.mrb[0].mxu0
    %3189 = vmatprep.mubr.f32.mxu0 0.0
    %3190 = vmatmul.mubr.f32.gmra.mrb[0].mxu0 %v2769
    %v3191 = vpop.f32.mrb[0].mxu0
    %v3192 = vadd.f32 0.0, %v3191
    %v3193 = vpop.f32.mrb[0].mxu0
    %3194 = vmatprep.mubr.f32.mxu0 0.0
    %3195 = vmatmul.mubr.f32.gmra.mrb[0].mxu0 %v2771
    %v3196 = vpop.f32.mrb[0].mxu0
    %v3197 = vadd.f32 0.0, %v3196
    %v3198 = vpop.f32.mrb[0].mxu0
    %3199 = vmatprep.mubr.f32.mxu0 0.0
    %3200 = vmatmul.mubr.f32.gmra.mrb[0].mxu0 %v2773
    %v3201 = vpop.f32.mrb[0].mxu0
    %v3202 = vadd.f32 0.0, %v3201
    %v3203 = vpop.f32.mrb[0].mxu0
    %3204 = vmatprep.mubr.f32.mxu0 0.0
    %3205 = vmatmul.mubr.f32.gmra.mrb[0].mxu0 %v2775
    %v3206 = vpop.f32.mrb[0].mxu0
    %v3207 = vadd.f32 0.0, %v3206
    %v3208 = vpop.f32.mrb[0].mxu0
    %3209 = vmatprep.mubr.f32.mxu0 0.0
    %3210 = vmatmul.mubr.f32.gmra.mrb[0].mxu0 %v2777
    %v3211 = vpop.f32.mrb[0].mxu0
    %v3212 = vadd.f32 0.0, %v3211
    %v3213 = vpop.f32.mrb[0].mxu0
    %3214 = vmatprep.mubr.f32.mxu0 0.0
    %3215 = vmatmul.mubr.f32.gmra.mrb[0].mxu0 %v2779
    %v3216 = vpop.f32.mrb[0].mxu0
    %v3217 = vadd.f32 0.0, %v3216
    %v3218 = vpop.f32.mrb[0].mxu0
    %3219 = vmatprep.mubr.f32.mxu0 0.0
    %3220 = vmatmul.mubr.f32.gmra.mrb[0].mxu0 %v2781
    %v3221 = vpop.f32.mrb[0].mxu0
    %v3222 = vadd.f32 0.0, %v3221
    %v3223 = vpop.f32.mrb[0].mxu0
    %3224 = vmatprep.mubr.f32.mxu0 0.0
    %3225 = vmatmul.mubr.f32.gmra.mrb[0].mxu0 %v2783
    %v3226 = vpop.f32.mrb[0].mxu0
    %v3227 = vadd.f32 0.0, %v3226
    %v3228 = vpop.f32.mrb[0].mxu0
    %3229 = vmatprep.mubr.f32.mxu0 0.0
    %3230 = vmatmul.mubr.f32.gmra.mrb[0].mxu0 %v2785
    %v3231 = vpop.f32.mrb[0].mxu0
    %v3232 = vadd.f32 0.0, %v3231
    %v3233 = vpop.f32.mrb[0].mxu0
    %3234 = vmatprep.mubr.f32.mxu0 0.0
    %3235 = vmatmul.mubr.f32.gmra.mrb[0].mxu0 %v2787
    %v3236 = vpop.f32.mrb[0].mxu0
    %v3237 = vadd.f32 0.0, %v3236
    %v3238 = vpop.f32.mrb[0].mxu0
    %3239 = vmatprep.mubr.f32.mxu0 0.0
    %3240 = vmatmul.mubr.f32.gmra.mrb[0].mxu0 %v2789
    %v3241 = vpop.f32.mrb[0].mxu0
    %v3242 = vadd.f32 0.0, %v3241
    %v3243 = vpop.f32.mrb[0].mxu0
    %3244 = vmatprep.mubr.f32.mxu0 0.0
    %3245 = vmatmul.mubr.f32.gmra.mrb[0].mxu0 %v2791
    %v3246 = vpop.f32.mrb[0].mxu0
    %v3247 = vadd.f32 0.0, %v3246
    %v3248 = vpop.f32.mrb[0].mxu0
    %3249 = vmatprep.mubr.f32.mxu0 0.0
    %3250 = vmatmul.mubr.f32.gmra.mrb[0].mxu0 %v2793
    %v3251 = vpop.f32.mrb[0].mxu0
    %v3252 = vadd.f32 0.0, %v3251
    %v3253 = vpop.f32.mrb[0].mxu0
    %3254 = vmatprep.mubr.f32.mxu0 0.0
    %3255 = vmatmul.mubr.f32.gmra.mrb[0].mxu0 %v2795
    %v3256 = vpop.f32.mrb[0].mxu0
    %v3257 = vadd.f32 0.0, %v3256
    %v3258 = vpop.f32.mrb[0].mxu0
    %3259 = vmatprep.mubr.f32.mxu0 0.0
    %3260 = vmatmul.mubr.f32.gmra.mrb[0].mxu0 %v2797
    %v3261 = vpop.f32.mrb[0].mxu0
    %v3262 = vadd.f32 0.0, %v3261
    %v3263 = vpop.f32.mrb[0].mxu0
    %3264 = vmatprep.mubr.f32.mxu0 0.0
    %3265 = vmatmul.mubr.f32.gmra.mrb[0].mxu0 %v2799
    %v3266 = vpop.f32.mrb[0].mxu0
    %v3267 = vadd.f32 0.0, %v3266
    %v3268 = vpop.f32.mrb[0].mxu0
    %3269 = vmatprep.mubr.f32.mxu0 0.0
    %3270 = vmatmul.mubr.f32.gmra.mrb[0].mxu0 %v2801
    %v3271 = vpop.f32.mrb[0].mxu0
    %v3272 = vadd.f32 0.0, %v3271
    %v3273 = vpop.f32.mrb[0].mxu0
    %3274 = vmatprep.mubr.f32.mxu0 0.0
    %3275 = vmatmul.mubr.f32.gmra.mrb[0].mxu0 %v2803
    %v3276 = vpop.f32.mrb[0].mxu0
    %v3277 = vadd.f32 0.0, %v3276
    %v3278 = vpop.f32.mrb[0].mxu0
    %3279 = vmatprep.mubr.f32.mxu0 0.0
    %3280 = vmatmul.mubr.f32.gmra.mrb[0].mxu0 %v2805
    %v3281 = vpop.f32.mrb[0].mxu0
    %v3282 = vadd.f32 0.0, %v3281
    %v3283 = vpop.f32.mrb[0].mxu0
    %3284 = vmatprep.mubr.f32.mxu0 0.0
    %3285 = vmatmul.mubr.f32.gmra.mrb[0].mxu0 %v2807
    %v3286 = vpop.f32.mrb[0].mxu0
    %v3287 = vadd.f32 0.0, %v3286
    %v3288 = vpop.f32.mrb[0].mxu0
    %3289 = vmatprep.mubr.f32.mxu0 0.0
    %3290 = vmatmul.mubr.f32.gmra.mrb[0].mxu0 %v2809
    %v3291 = vpop.f32.mrb[0].mxu0
    %v3292 = vadd.f32 0.0, %v3291
    %v3293 = vpop.f32.mrb[0].mxu0
    %3294 = vmatprep.mubr.f32.mxu0 0.0
    %3295 = vmatmul.mubr.f32.gmra.mrb[0].mxu0 %v2811
    %v3296 = vpop.f32.mrb[0].mxu0
    %v3297 = vadd.f32 0.0, %v3296
    %v3298 = vpop.f32.mrb[0].mxu0
    %3299 = vdwg.mxu0
    %v3300 = vadd.f32 %v2639, %v3142
    %v3301 = vadd.f32 %v2640, %v3147
    %v3302 = vadd.f32 %v2641, %v3152
    %v3303 = vadd.f32 %v2642, %v3157
    %v3304 = vadd.f32 %v2643, %v3162
    %v3305 = vadd.f32 %v2644, %v3167
    %v3306 = vadd.f32 %v2645, %v3172
    %v3307 = vadd.f32 %v2646, %v3177
    %v3308 = vadd.f32 %v2647, %v3182
    %v3309 = vadd.f32 %v2648, %v3187
    %v3310 = vadd.f32 %v2649, %v3192
    %v3311 = vadd.f32 %v2650, %v3197
    %v3312 = vadd.f32 %v2651, %v3202
    %v3313 = vadd.f32 %v2652, %v3207
    %v3314 = vadd.f32 %v2653, %v3212
    %v3315 = vadd.f32 %v2654, %v3217
    %v3316 = vadd.f32 %v2655, %v3222
    %v3317 = vadd.f32 %v2656, %v3227
    %v3318 = vadd.f32 %v2657, %v3232
    %v3319 = vadd.f32 %v2658, %v3237
    %v3320 = vadd.f32 %v2659, %v3242
    %v3321 = vadd.f32 %v2660, %v3247
    %v3322 = vadd.f32 %v2661, %v3252
    %v3323 = vadd.f32 %v2662, %v3257
    %v3324 = vadd.f32 %v2663, %v3262
    %v3325 = vadd.f32 %v2664, %v3267
    %v3326 = vadd.f32 %v2665, %v3272
    %v3327 = vadd.f32 %v2666, %v3277
    %v3328 = vadd.f32 %v2667, %v3282
    %v3329 = vadd.f32 %v2668, %v3287
    %v3330 = vadd.f32 %v2669, %v3292
    %v3331 = vadd.f32 %v2670, %v3297
    %v3332 = vmax.f32 %v3038, %v3300
    %v3333 = vmax.f32 %v3039, %v3301
    %v3334 = vmax.f32 %v3040, %v3302
    %v3335 = vmax.f32 %v3041, %v3303
    %v3336 = vmax.f32 %v3042, %v3304
    %v3337 = vmax.f32 %v3043, %v3305
    %v3338 = vmax.f32 %v3044, %v3306
    %v3339 = vmax.f32 %v3045, %v3307
    %v3340 = vmax.f32 %v3046, %v3308
    %v3341 = vmax.f32 %v3047, %v3309
    %v3342 = vmax.f32 %v3048, %v3310
    %v3343 = vmax.f32 %v3049, %v3311
    %v3344 = vmax.f32 %v3050, %v3312
    %v3345 = vmax.f32 %v3051, %v3313
    %v3346 = vmax.f32 %v3052, %v3314
    %v3347 = vmax.f32 %v3053, %v3315
    %v3348 = vmax.f32 %v3054, %v3316
    %v3349 = vmax.f32 %v3055, %v3317
    %v3350 = vmax.f32 %v3056, %v3318
    %v3351 = vmax.f32 %v3057, %v3319
    %v3352 = vmax.f32 %v3058, %v3320
    %v3353 = vmax.f32 %v3059, %v3321
    %v3354 = vmax.f32 %v3060, %v3322
    %v3355 = vmax.f32 %v3061, %v3323
    %v3356 = vmax.f32 %v3062, %v3324
    %v3357 = vmax.f32 %v3063, %v3325
    %v3358 = vmax.f32 %v3064, %v3326
    %v3359 = vmax.f32 %v3065, %v3327
    %v3360 = vmax.f32 %v3066, %v3328
    %v3361 = vmax.f32 %v3067, %v3329
    %v3362 = vmax.f32 %v3068, %v3330
    %v3363 = vmax.f32 %v3069, %v3331
    %v3364 = vld [vmem:[%s3] sm:$0x1]
    %v3366 = vlaneseq
    %v3367 = vshrl.u32 %v3366, 7
    %v3368 = vsub.s32 0, %v3367
    %v3369 = vrot.slane %v3364, %v3368
    %v3371 = vadd.f32 %v3332, %v3369
    %v3372 = vadd.f32 %v3333, %v3369
    %v3373 = vadd.f32 %v3334, %v3369
    %v3374 = vadd.f32 %v3335, %v3369
    %v3375 = vadd.f32 %v3336, %v3369
    %v3376 = vadd.f32 %v3337, %v3369
    %v3377 = vadd.f32 %v3338, %v3369
    %v3378 = vadd.f32 %v3339, %v3369
    %v3379 = vadd.f32 %v3340, %v3369
    %v3380 = vadd.f32 %v3341, %v3369
    %v3381 = vadd.f32 %v3342, %v3369
    %v3382 = vadd.f32 %v3343, %v3369
    %v3383 = vadd.f32 %v3344, %v3369
    %v3384 = vadd.f32 %v3345, %v3369
    %v3385 = vadd.f32 %v3346, %v3369
    %v3386 = vadd.f32 %v3347, %v3369
    %v3387 = vadd.f32 %v3348, %v3369
    %v3388 = vadd.f32 %v3349, %v3369
    %v3389 = vadd.f32 %v3350, %v3369
    %v3390 = vadd.f32 %v3351, %v3369
    %v3391 = vadd.f32 %v3352, %v3369
    %v3392 = vadd.f32 %v3353, %v3369
    %v3393 = vadd.f32 %v3354, %v3369
    %v3394 = vadd.f32 %v3355, %v3369
    %v3395 = vadd.f32 %v3356, %v3369
    %v3396 = vadd.f32 %v3357, %v3369
    %v3397 = vadd.f32 %v3358, %v3369
    %v3398 = vadd.f32 %v3359, %v3369
    %v3399 = vadd.f32 %v3360, %v3369
    %v3400 = vadd.f32 %v3361, %v3369
    %v3401 = vadd.f32 %v3362, %v3369
    %v3402 = vadd.f32 %v3363, %v3369
    %v3403 = vmax.f32 %v3371, 0.0
    %v3404 = vmax.f32 %v3372, 0.0
    %v3405 = vmax.f32 %v3373, 0.0
    %v3406 = vmax.f32 %v3374, 0.0
    %v3407 = vmax.f32 %v3375, 0.0
    %v3408 = vmax.f32 %v3376, 0.0
    %v3409 = vmax.f32 %v3377, 0.0
    %v3410 = vmax.f32 %v3378, 0.0
    %v3411 = vmax.f32 %v3379, 0.0
    %v3412 = vmax.f32 %v3380, 0.0
    %v3413 = vmax.f32 %v3381, 0.0
    %v3414 = vmax.f32 %v3382, 0.0
    %v3415 = vmax.f32 %v3383, 0.0
    %v3416 = vmax.f32 %v3384, 0.0
    %v3417 = vmax.f32 %v3385, 0.0
    %v3418 = vmax.f32 %v3386, 0.0
    %v3419 = vmax.f32 %v3387, 0.0
    %v3420 = vmax.f32 %v3388, 0.0
    %v3421 = vmax.f32 %v3389, 0.0
    %v3422 = vmax.f32 %v3390, 0.0
    %v3423 = vmax.f32 %v3391, 0.0
    %v3424 = vmax.f32 %v3392, 0.0
    %v3425 = vmax.f32 %v3393, 0.0
    %v3426 = vmax.f32 %v3394, 0.0
    %v3427 = vmax.f32 %v3395, 0.0
    %v3428 = vmax.f32 %v3396, 0.0
    %v3429 = vmax.f32 %v3397, 0.0
    %v3430 = vmax.f32 %v3398, 0.0
    %v3431 = vmax.f32 %v3399, 0.0
    %v3432 = vmax.f32 %v3400, 0.0
    %v3433 = vmax.f32 %v3401, 0.0
    %v3434 = vmax.f32 %v3402, 0.0
    %3435 = vst [vmem:[#allocation2] sm:$0xff] %v3403
    %3436 = vst [vmem:[#allocation2 + $0x8] sm:$0xff] %v3404
    %3437 = vst [vmem:[#allocation2 + $0x10] sm:$0xff] %v3405
    %3438 = vst [vmem:[#allocation2 + $0x18] sm:$0xff] %v3406
    %3439 = vst [vmem:[#allocation2 + $0x20] sm:$0xff] %v3407
    %3440 = vst [vmem:[#allocation2 + $0x28] sm:$0xff] %v3408
    %3441 = vst [vmem:[#allocation2 + $0x30] sm:$0xff] %v3409
    %3442 = vst [vmem:[#allocation2 + $0x38] sm:$0xff] %v3410
    %3443 = vst [vmem:[#allocation2 + $0x40] sm:$0xff] %v3411
    %3444 = vst [vmem:[#allocation2 + $0x48] sm:$0xff] %v3412
    %3445 = vst [vmem:[#allocation2 + $0x50] sm:$0xff] %v3413
    %3446 = vst [vmem:[#allocation2 + $0x58] sm:$0xff] %v3414
    %3447 = vst [vmem:[#allocation2 + $0x60] sm:$0xff] %v3415
    %3448 = vst [vmem:[#allocation2 + $0x68] sm:$0xff] %v3416
    %3449 = vst [vmem:[#allocation2 + $0x70] sm:$0xff] %v3417
    %3450 = vst [vmem:[#allocation2 + $0x78] sm:$0xff] %v3418
    %3451 = vst [vmem:[#allocation2 + $0x80] sm:$0xff] %v3419
    %3452 = vst [vmem:[#allocation2 + $0x88] sm:$0xff] %v3420
    %3453 = vst [vmem:[#allocation2 + $0x90] sm:$0xff] %v3421
    %3454 = vst [vmem:[#allocation2 + $0x98] sm:$0xff] %v3422
    %3455 = vst [vmem:[#allocation2 + $0xa0] sm:$0xff] %v3423
    %3456 = vst [vmem:[#allocation2 + $0xa8] sm:$0xff] %v3424
    %3457 = vst [vmem:[#allocation2 + $0xb0] sm:$0xff] %v3425
    %3458 = vst [vmem:[#allocation2 + $0xb8] sm:$0xff] %v3426
    %3459 = vst [vmem:[#allocation2 + $0xc0] sm:$0xff] %v3427
    %3460 = vst [vmem:[#allocation2 + $0xc8] sm:$0xff] %v3428
    %3461 = vst [vmem:[#allocation2 + $0xd0] sm:$0xff] %v3429
    %3462 = vst [vmem:[#allocation2 + $0xd8] sm:$0xff] %v3430
    %3463 = vst [vmem:[#allocation2 + $0xe0] sm:$0xff] %v3431
    %3464 = vst [vmem:[#allocation2 + $0xe8] sm:$0xff] %v3432
    %3465 = vst [vmem:[#allocation2 + $0xf0] sm:$0xff] %v3433
    %3466 = vst [vmem:[#allocation2 + $0xf8] sm:$0xff] %v3434
    %v3467 = vld [vmem:[#allocation2] ss:$2 sm:$0xff]
    %s3468 = scalar_lea.vmem [#allocation2], 16
    %v3469 = vld [vmem:[%s3468] ss:$2 sm:$0xff]
    %s3470 = scalar_lea.vmem [#allocation2], 32
    %v3471 = vld [vmem:[%s3470] ss:$2 sm:$0xff]
    %s3472 = scalar_lea.vmem [#allocation2], 48
    %v3473 = vld [vmem:[%s3472] ss:$2 sm:$0xff]
    %s3474 = scalar_lea.vmem [#allocation2], 64
    %v3475 = vld [vmem:[%s3474] ss:$2 sm:$0xff]
    %s3476 = scalar_lea.vmem [#allocation2], 80
    %v3477 = vld [vmem:[%s3476] ss:$2 sm:$0xff]
    %s3478 = scalar_lea.vmem [#allocation2], 96
    %v3479 = vld [vmem:[%s3478] ss:$2 sm:$0xff]
    %s3480 = scalar_lea.vmem [#allocation2], 112
    %v3481 = vld [vmem:[%s3480] ss:$2 sm:$0xff]
    %s3482 = scalar_lea.vmem [#allocation2], 128
    %v3483 = vld [vmem:[%s3482] ss:$2 sm:$0xff]
    %s3484 = scalar_lea.vmem [#allocation2], 144
    %v3485 = vld [vmem:[%s3484] ss:$2 sm:$0xff]
    %s3486 = scalar_lea.vmem [#allocation2], 160
    %v3487 = vld [vmem:[%s3486] ss:$2 sm:$0xff]
    %s3488 = scalar_lea.vmem [#allocation2], 176
    %v3489 = vld [vmem:[%s3488] ss:$2 sm:$0xff]
    %s3490 = scalar_lea.vmem [#allocation2], 192
    %v3491 = vld [vmem:[%s3490] ss:$2 sm:$0xff]
    %s3492 = scalar_lea.vmem [#allocation2], 208
    %v3493 = vld [vmem:[%s3492] ss:$2 sm:$0xff]
    %s3494 = scalar_lea.vmem [#allocation2], 224
    %v3495 = vld [vmem:[%s3494] ss:$2 sm:$0xff]
    %s3496 = scalar_lea.vmem [#allocation2], 240
    %v3497 = vld [vmem:[%s3496] ss:$2 sm:$0xff]
    %s3498 = scalar_lea.vmem [#allocation2], 1
    %v3499 = vld [vmem:[%s3498] ss:$2 sm:$0xff]
    %s3500 = scalar_lea.vmem [#allocation2], 17
    %v3501 = vld [vmem:[%s3500] ss:$2 sm:$0xff]
    %s3502 = scalar_lea.vmem [#allocation2], 33
    %v3503 = vld [vmem:[%s3502] ss:$2 sm:$0xff]
    %s3504 = scalar_lea.vmem [#allocation2], 49
    %v3505 = vld [vmem:[%s3504] ss:$2 sm:$0xff]
    %s3506 = scalar_lea.vmem [#allocation2], 65
    %v3507 = vld [vmem:[%s3506] ss:$2 sm:$0xff]
    %s3508 = scalar_lea.vmem [#allocation2], 81
    %v3509 = vld [vmem:[%s3508] ss:$2 sm:$0xff]
    %s3510 = scalar_lea.vmem [#allocation2], 97
    %v3511 = vld [vmem:[%s3510] ss:$2 sm:$0xff]
    %s3512 = scalar_lea.vmem [#allocation2], 113
    %v3513 = vld [vmem:[%s3512] ss:$2 sm:$0xff]
    %s3514 = scalar_lea.vmem [#allocation2], 129
    %v3515 = vld [vmem:[%s3514] ss:$2 sm:$0xff]
    %s3516 = scalar_lea.vmem [#allocation2], 145
    %v3517 = vld [vmem:[%s3516] ss:$2 sm:$0xff]
    %s3518 = scalar_lea.vmem [#allocation2], 161
    %v3519 = vld [vmem:[%s3518] ss:$2 sm:$0xff]
    %s3520 = scalar_lea.vmem [#allocation2], 177
    %v3521 = vld [vmem:[%s3520] ss:$2 sm:$0xff]
    %s3522 = scalar_lea.vmem [#allocation2], 193
    %v3523 = vld [vmem:[%s3522] ss:$2 sm:$0xff]
    %s3524 = scalar_lea.vmem [#allocation2], 209
    %v3525 = vld [vmem:[%s3524] ss:$2 sm:$0xff]
    %s3526 = scalar_lea.vmem [#allocation2], 225
    %v3527 = vld [vmem:[%s3526] ss:$2 sm:$0xff]
    %s3528 = scalar_lea.vmem [#allocation2], 241
    %v3529 = vld [vmem:[%s3528] ss:$2 sm:$0xff]
    %v3530 = vmax.f32 %v3467, %v3499
    %v3531 = vmax.f32 %v3469, %v3501
    %v3532 = vmax.f32 %v3471, %v3503
    %v3533 = vmax.f32 %v3473, %v3505
    %v3534 = vmax.f32 %v3475, %v3507
    %v3535 = vmax.f32 %v3477, %v3509
    %v3536 = vmax.f32 %v3479, %v3511
    %v3537 = vmax.f32 %v3481, %v3513
    %v3538 = vmax.f32 %v3483, %v3515
    %v3539 = vmax.f32 %v3485, %v3517
    %v3540 = vmax.f32 %v3487, %v3519
    %v3541 = vmax.f32 %v3489, %v3521
    %v3542 = vmax.f32 %v3491, %v3523
    %v3543 = vmax.f32 %v3493, %v3525
    %v3544 = vmax.f32 %v3495, %v3527
    %v3545 = vmax.f32 %v3497, %v3529
    %v3546 = vld [vmem:[%s4] sm:$0xff]
    %v3547 = vld [vmem:[%s4 + $0x8] sm:$0xff]
    %v3548 = vld [vmem:[%s4 + $0x10] sm:$0xff]
    %v3549 = vld [vmem:[%s4 + $0x18] sm:$0xff]
    %v3550 = vld [vmem:[%s4 + $0x20] sm:$0xff]
    %v3551 = vld [vmem:[%s4 + $0x28] sm:$0xff]
    %v3552 = vld [vmem:[%s4 + $0x30] sm:$0xff]
    %v3553 = vld [vmem:[%s4 + $0x38] sm:$0xff]
    %v3554 = vld [vmem:[%s4 + $0x40] sm:$0xff]
    %v3555 = vld [vmem:[%s4 + $0x48] sm:$0xff]
    %v3556 = vld [vmem:[%s4 + $0x50] sm:$0xff]
    %v3557 = vld [vmem:[%s4 + $0x58] sm:$0xff]
    %v3558 = vld [vmem:[%s4 + $0x60] sm:$0xff]
    %v3559 = vld [vmem:[%s4 + $0x68] sm:$0xff]
    %v3560 = vld [vmem:[%s4 + $0x70] sm:$0xff]
    %v3561 = vld [vmem:[%s4 + $0x78] sm:$0xff]
    %v3562 = vld [vmem:[#allocation8] sm:$0xff]
    %v3563 = vld [vmem:[#allocation8 + $0x8] sm:$0xff]
    %v3564 = vld [vmem:[#allocation8 + $0x10] sm:$0xff]
    %v3565 = vld [vmem:[#allocation8 + $0x18] sm:$0xff]
    %v3566 = vld [vmem:[#allocation8 + $0x20] sm:$0xff]
    %v3567 = vld [vmem:[#allocation8 + $0x28] sm:$0xff]
    %v3568 = vld [vmem:[#allocation8 + $0x30] sm:$0xff]
    %v3569 = vld [vmem:[#allocation8 + $0x38] sm:$0xff]
    %v3570 = vld [vmem:[#allocation8 + $0x40] sm:$0xff]
    %v3571 = vld [vmem:[#allocation8 + $0x48] sm:$0xff]
    %v3572 = vld [vmem:[#allocation8 + $0x50] sm:$0xff]
    %v3573 = vld [vmem:[#allocation8 + $0x58] sm:$0xff]
    %v3574 = vld [vmem:[#allocation8 + $0x60] sm:$0xff]
    %v3575 = vld [vmem:[#allocation8 + $0x68] sm:$0xff]
    %v3576 = vld [vmem:[#allocation8 + $0x70] sm:$0xff]
    %v3577 = vld [vmem:[#allocation8 + $0x78] sm:$0xff]
    %v3595 = vrot.slane %v3530, 1
    %v3596 = vrot.slane %v3531, 1
    %v3597 = vsel %vm237, %v3595, %v3596
    %v3598 = vrot.slane 0.0, 1
    %v3599 = vsel %vm237, %v3596, %v3598
    %v3600 = vrot.slane %v3532, 1
    %v3601 = vrot.slane %v3533, 1
    %v3602 = vsel %vm237, %v3600, %v3601
    %v3603 = vsel %vm237, %v3601, %v3598
    %v3604 = vrot.slane %v3534, 1
    %v3605 = vrot.slane %v3535, 1
    %v3606 = vsel %vm237, %v3604, %v3605
    %v3607 = vsel %vm237, %v3605, %v3598
    %v3608 = vrot.slane %v3536, 1
    %v3609 = vrot.slane %v3537, 1
    %v3610 = vsel %vm237, %v3608, %v3609
    %v3611 = vsel %vm237, %v3609, %v3598
    %v3612 = vrot.slane %v3538, 1
    %v3613 = vrot.slane %v3539, 1
    %v3614 = vsel %vm237, %v3612, %v3613
    %v3615 = vsel %vm237, %v3613, %v3598
    %v3616 = vrot.slane %v3540, 1
    %v3617 = vrot.slane %v3541, 1
    %v3618 = vsel %vm237, %v3616, %v3617
    %v3619 = vsel %vm237, %v3617, %v3598
    %v3620 = vrot.slane %v3542, 1
    %v3621 = vrot.slane %v3543, 1
    %v3622 = vsel %vm237, %v3620, %v3621
    %v3623 = vsel %vm237, %v3621, %v3598
    %v3624 = vrot.slane %v3544, 1
    %v3625 = vrot.slane %v3545, 1
    %v3626 = vsel %vm237, %v3624, %v3625
    %v3627 = vsel %vm237, %v3625, %v3598
    %s3644 = scalar_lea.vmem %s4, 128
    %v3645 = vld [vmem:[%s3644] sm:$0xff]
    %v3646 = vld [vmem:[%s3644 + $0x8] sm:$0xff]
    %v3647 = vld [vmem:[%s3644 + $0x10] sm:$0xff]
    %v3648 = vld [vmem:[%s3644 + $0x18] sm:$0xff]
    %v3649 = vld [vmem:[%s3644 + $0x20] sm:$0xff]
    %v3650 = vld [vmem:[%s3644 + $0x28] sm:$0xff]
    %v3651 = vld [vmem:[%s3644 + $0x30] sm:$0xff]
    %v3652 = vld [vmem:[%s3644 + $0x38] sm:$0xff]
    %v3653 = vld [vmem:[%s3644 + $0x40] sm:$0xff]
    %v3654 = vld [vmem:[%s3644 + $0x48] sm:$0xff]
    %v3655 = vld [vmem:[%s3644 + $0x50] sm:$0xff]
    %v3656 = vld [vmem:[%s3644 + $0x58] sm:$0xff]
    %v3657 = vld [vmem:[%s3644 + $0x60] sm:$0xff]
    %v3658 = vld [vmem:[%s3644 + $0x68] sm:$0xff]
    %v3659 = vld [vmem:[%s3644 + $0x70] sm:$0xff]
    %v3660 = vld [vmem:[%s3644 + $0x78] sm:$0xff]
    %3661 = vmatprep.subr.mxu0 0.0
    %3662 = vmatpush1.msra.mxu0 %v3645
    %3663 = vmatprep.subr.mxu0 0.0
    %3664 = vmatpush1.msra.mxu0 %v3646
    %3665 = vmatprep.subr.mxu0 0.0
    %3666 = vmatpush1.msra.mxu0 %v3647
    %3667 = vmatprep.subr.mxu0 0.0
    %3668 = vmatpush1.msra.mxu0 %v3648
    %3669 = vmatprep.subr.mxu0 0.0
    %3670 = vmatpush1.msra.mxu0 %v3649
    %3671 = vmatprep.subr.mxu0 0.0
    %3672 = vmatpush1.msra.mxu0 %v3650
    %3673 = vmatprep.subr.mxu0 0.0
    %3674 = vmatpush1.msra.mxu0 %v3651
    %3675 = vmatprep.subr.mxu0 0.0
    %3676 = vmatpush1.msra.mxu0 %v3652
    %3677 = vmatprep.subr.mxu0 0.0
    %3678 = vmatpush1.msra.mxu0 %v3653
    %3679 = vmatprep.subr.mxu0 0.0
    %3680 = vmatpush1.msra.mxu0 %v3654
    %3681 = vmatprep.subr.mxu0 0.0
    %3682 = vmatpush1.msra.mxu0 %v3655
    %3683 = vmatprep.subr.mxu0 0.0
    %3684 = vmatpush1.msra.mxu0 %v3656
    %3685 = vmatprep.subr.mxu0 0.0
    %3686 = vmatpush1.msra.mxu0 %v3657
    %3687 = vmatprep.subr.mxu0 0.0
    %3688 = vmatpush1.msra.mxu0 %v3658
    %3689 = vmatprep.subr.mxu0 0.0
    %3690 = vmatpush1.msra.mxu0 %v3659
    %3691 = vmatprep.subr.mxu0 0.0
    %3692 = vmatpush1.msra.mxu0 %v3660
    %3693 = vmatprep.subr.mxu0 0.0
    %3694 = vmatpush1.msra.mxu0 0.0
    %3695 = vmatprep.subr.mxu0 0.0
    %3696 = vmatpush1.msra.mxu0 0.0
    %3697 = vmatprep.subr.mxu0 0.0
    %3698 = vmatpush1.msra.mxu0 0.0
    %3699 = vmatprep.subr.mxu0 0.0
    %3700 = vmatpush1.msra.mxu0 0.0
    %3701 = vmatprep.subr.mxu0 0.0
    %3702 = vmatpush1.msra.mxu0 0.0
    %3703 = vmatprep.subr.mxu0 0.0
    %3704 = vmatpush1.msra.mxu0 0.0
    %3705 = vmatprep.subr.mxu0 0.0
    %3706 = vmatpush1.msra.mxu0 0.0
    %3707 = vmatprep.subr.mxu0 0.0
    %3708 = vmatpush1.msra.mxu0 0.0
    %3709 = vmatprep.subr.mxu0 0.0
    %3710 = vmatpush1.msra.mxu0 0.0
    %3711 = vmatprep.subr.mxu0 0.0
    %3712 = vmatpush1.msra.mxu0 0.0
    %3713 = vmatprep.subr.mxu0 0.0
    %3714 = vmatpush1.msra.mxu0 0.0
    %3715 = vmatprep.subr.mxu0 0.0
    %3716 = vmatpush1.msra.mxu0 0.0
    %3717 = vmatprep.subr.mxu0 0.0
    %3718 = vmatpush1.msra.mxu0 0.0
    %3719 = vmatprep.subr.mxu0 0.0
    %3720 = vmatpush1.msra.mxu0 0.0
    %3721 = vmatprep.subr.mxu0 0.0
    %3722 = vmatpush1.msra.mxu0 0.0
    %3723 = vmatprep.subr.mxu0 0.0
    %3724 = vmatpush1.msra.mxu0 0.0
    %3725 = vmatprep.mubr.f32.mxu0 0.0
    %3726 = vmatmul.mubr.f32.gmra.mrb[0].mxu0 %v3597
    %v3727 = vpop.f32.mrb[0].mxu0
    %v3728 = vadd.f32 0.0, %v3727
    %v3729 = vpop.f32.mrb[0].mxu0
    %3730 = vmatprep.mubr.f32.mxu0 0.0
    %3731 = vmatmul.mubr.f32.gmra.mrb[0].mxu0 %v3599
    %v3732 = vpop.f32.mrb[0].mxu0
    %v3733 = vadd.f32 0.0, %v3732
    %v3734 = vpop.f32.mrb[0].mxu0
    %3735 = vmatprep.mubr.f32.mxu0 0.0
    %3736 = vmatmul.mubr.f32.gmra.mrb[0].mxu0 %v3602
    %v3737 = vpop.f32.mrb[0].mxu0
    %v3738 = vadd.f32 0.0, %v3737
    %v3739 = vpop.f32.mrb[0].mxu0
    %3740 = vmatprep.mubr.f32.mxu0 0.0
    %3741 = vmatmul.mubr.f32.gmra.mrb[0].mxu0 %v3603
    %v3742 = vpop.f32.mrb[0].mxu0
    %v3743 = vadd.f32 0.0, %v3742
    %v3744 = vpop.f32.mrb[0].mxu0
    %3745 = vmatprep.mubr.f32.mxu0 0.0
    %3746 = vmatmul.mubr.f32.gmra.mrb[0].mxu0 %v3606
    %v3747 = vpop.f32.mrb[0].mxu0
    %v3748 = vadd.f32 0.0, %v3747
    %v3749 = vpop.f32.mrb[0].mxu0
    %3750 = vmatprep.mubr.f32.mxu0 0.0
    %3751 = vmatmul.mubr.f32.gmra.mrb[0].mxu0 %v3607
    %v3752 = vpop.f32.mrb[0].mxu0
    %v3753 = vadd.f32 0.0, %v3752
    %v3754 = vpop.f32.mrb[0].mxu0
    %3755 = vmatprep.mubr.f32.mxu0 0.0
    %3756 = vmatmul.mubr.f32.gmra.mrb[0].mxu0 %v3610
    %v3757 = vpop.f32.mrb[0].mxu0
    %v3758 = vadd.f32 0.0, %v3757
    %v3759 = vpop.f32.mrb[0].mxu0
    %3760 = vmatprep.mubr.f32.mxu0 0.0
    %3761 = vmatmul.mubr.f32.gmra.mrb[0].mxu0 %v3611
    %v3762 = vpop.f32.mrb[0].mxu0
    %v3763 = vadd.f32 0.0, %v3762
    %v3764 = vpop.f32.mrb[0].mxu0
    %3765 = vmatprep.mubr.f32.mxu0 0.0
    %3766 = vmatmul.mubr.f32.gmra.mrb[0].mxu0 %v3614
    %v3767 = vpop.f32.mrb[0].mxu0
    %v3768 = vadd.f32 0.0, %v3767
    %v3769 = vpop.f32.mrb[0].mxu0
    %3770 = vmatprep.mubr.f32.mxu0 0.0
    %3771 = vmatmul.mubr.f32.gmra.mrb[0].mxu0 %v3615
    %v3772 = vpop.f32.mrb[0].mxu0
    %v3773 = vadd.f32 0.0, %v3772
    %v3774 = vpop.f32.mrb[0].mxu0
    %3775 = vmatprep.mubr.f32.mxu0 0.0
    %3776 = vmatmul.mubr.f32.gmra.mrb[0].mxu0 %v3618
    %v3777 = vpop.f32.mrb[0].mxu0
    %v3778 = vadd.f32 0.0, %v3777
    %v3779 = vpop.f32.mrb[0].mxu0
    %3780 = vmatprep.mubr.f32.mxu0 0.0
    %3781 = vmatmul.mubr.f32.gmra.mrb[0].mxu0 %v3619
    %v3782 = vpop.f32.mrb[0].mxu0
    %v3783 = vadd.f32 0.0, %v3782
    %v3784 = vpop.f32.mrb[0].mxu0
    %3785 = vmatprep.mubr.f32.mxu0 0.0
    %3786 = vmatmul.mubr.f32.gmra.mrb[0].mxu0 %v3622
    %v3787 = vpop.f32.mrb[0].mxu0
    %v3788 = vadd.f32 0.0, %v3787
    %v3789 = vpop.f32.mrb[0].mxu0
    %3790 = vmatprep.mubr.f32.mxu0 0.0
    %3791 = vmatmul.mubr.f32.gmra.mrb[0].mxu0 %v3623
    %v3792 = vpop.f32.mrb[0].mxu0
    %v3793 = vadd.f32 0.0, %v3792
    %v3794 = vpop.f32.mrb[0].mxu0
    %3795 = vmatprep.mubr.f32.mxu0 0.0
    %3796 = vmatmul.mubr.f32.gmra.mrb[0].mxu0 %v3626
    %v3797 = vpop.f32.mrb[0].mxu0
    %v3798 = vadd.f32 0.0, %v3797
    %v3799 = vpop.f32.mrb[0].mxu0
    %3800 = vmatprep.mubr.f32.mxu0 0.0
    %3801 = vmatmul.mubr.f32.gmra.mrb[0].mxu0 %v3627
    %v3802 = vpop.f32.mrb[0].mxu0
    %v3803 = vadd.f32 0.0, %v3802
    %v3804 = vpop.f32.mrb[0].mxu0
    %3805 = vdwg.mxu0
    %3806 = vmatprep.subr.mxu0 0.0
    %3807 = vmatpush1.msra.mxu0 %v3546
    %3808 = vmatprep.subr.mxu0 0.0
    %3809 = vmatpush1.msra.mxu0 %v3547
    %3810 = vmatprep.subr.mxu0 0.0
    %3811 = vmatpush1.msra.mxu0 %v3548
    %3812 = vmatprep.subr.mxu0 0.0
    %3813 = vmatpush1.msra.mxu0 %v3549
    %3814 = vmatprep.subr.mxu0 0.0
    %3815 = vmatpush1.msra.mxu0 %v3550
    %3816 = vmatprep.subr.mxu0 0.0
    %3817 = vmatpush1.msra.mxu0 %v3551
    %3818 = vmatprep.subr.mxu0 0.0
    %3819 = vmatpush1.msra.mxu0 %v3552
    %3820 = vmatprep.subr.mxu0 0.0
    %3821 = vmatpush1.msra.mxu0 %v3553
    %3822 = vmatprep.subr.mxu0 0.0
    %3823 = vmatpush1.msra.mxu0 %v3554
    %3824 = vmatprep.subr.mxu0 0.0
    %3825 = vmatpush1.msra.mxu0 %v3555
    %3826 = vmatprep.subr.mxu0 0.0
    %3827 = vmatpush1.msra.mxu0 %v3556
    %3828 = vmatprep.subr.mxu0 0.0
    %3829 = vmatpush1.msra.mxu0 %v3557
    %3830 = vmatprep.subr.mxu0 0.0
    %3831 = vmatpush1.msra.mxu0 %v3558
    %3832 = vmatprep.subr.mxu0 0.0
    %3833 = vmatpush1.msra.mxu0 %v3559
    %3834 = vmatprep.subr.mxu0 0.0
    %3835 = vmatpush1.msra.mxu0 %v3560
    %3836 = vmatprep.subr.mxu0 0.0
    %3837 = vmatpush1.msra.mxu0 %v3561
    %3838 = vmatprep.subr.mxu0 0.0
    %3839 = vmatpush1.msra.mxu0 0.0
    %3840 = vmatprep.subr.mxu0 0.0
    %3841 = vmatpush1.msra.mxu0 0.0
    %3842 = vmatprep.subr.mxu0 0.0
    %3843 = vmatpush1.msra.mxu0 0.0
    %3844 = vmatprep.subr.mxu0 0.0
    %3845 = vmatpush1.msra.mxu0 0.0
    %3846 = vmatprep.subr.mxu0 0.0
    %3847 = vmatpush1.msra.mxu0 0.0
    %3848 = vmatprep.subr.mxu0 0.0
    %3849 = vmatpush1.msra.mxu0 0.0
    %3850 = vmatprep.subr.mxu0 0.0
    %3851 = vmatpush1.msra.mxu0 0.0
    %3852 = vmatprep.subr.mxu0 0.0
    %3853 = vmatpush1.msra.mxu0 0.0
    %3854 = vmatprep.subr.mxu0 0.0
    %3855 = vmatpush1.msra.mxu0 0.0
    %3856 = vmatprep.subr.mxu0 0.0
    %3857 = vmatpush1.msra.mxu0 0.0
    %3858 = vmatprep.subr.mxu0 0.0
    %3859 = vmatpush1.msra.mxu0 0.0
    %3860 = vmatprep.subr.mxu0 0.0
    %3861 = vmatpush1.msra.mxu0 0.0
    %3862 = vmatprep.subr.mxu0 0.0
    %3863 = vmatpush1.msra.mxu0 0.0
    %3864 = vmatprep.subr.mxu0 0.0
    %3865 = vmatpush1.msra.mxu0 0.0
    %3866 = vmatprep.subr.mxu0 0.0
    %3867 = vmatpush1.msra.mxu0 0.0
    %3868 = vmatprep.subr.mxu0 0.0
    %3869 = vmatpush1.msra.mxu0 0.0
    %3870 = vmatprep.mubr.f32.mxu0 0.0
    %3871 = vmatmul.mubr.f32.gmra.mrb[0].mxu0 %v3530
    %v3872 = vpop.f32.mrb[0].mxu0
    %v3873 = vadd.f32 %v3728, %v3872
    %v3874 = vpop.f32.mrb[0].mxu0
    %3875 = vmatprep.mubr.f32.mxu0 0.0
    %3876 = vmatmul.mubr.f32.gmra.mrb[0].mxu0 %v3531
    %v3877 = vpop.f32.mrb[0].mxu0
    %v3878 = vadd.f32 %v3733, %v3877
    %v3879 = vpop.f32.mrb[0].mxu0
    %3880 = vmatprep.mubr.f32.mxu0 0.0
    %3881 = vmatmul.mubr.f32.gmra.mrb[0].mxu0 %v3532
    %v3882 = vpop.f32.mrb[0].mxu0
    %v3883 = vadd.f32 %v3738, %v3882
    %v3884 = vpop.f32.mrb[0].mxu0
    %3885 = vmatprep.mubr.f32.mxu0 0.0
    %3886 = vmatmul.mubr.f32.gmra.mrb[0].mxu0 %v3533
    %v3887 = vpop.f32.mrb[0].mxu0
    %v3888 = vadd.f32 %v3743, %v3887
    %v3889 = vpop.f32.mrb[0].mxu0
    %3890 = vmatprep.mubr.f32.mxu0 0.0
    %3891 = vmatmul.mubr.f32.gmra.mrb[0].mxu0 %v3534
    %v3892 = vpop.f32.mrb[0].mxu0
    %v3893 = vadd.f32 %v3748, %v3892
    %v3894 = vpop.f32.mrb[0].mxu0
    %3895 = vmatprep.mubr.f32.mxu0 0.0
    %3896 = vmatmul.mubr.f32.gmra.mrb[0].mxu0 %v3535
    %v3897 = vpop.f32.mrb[0].mxu0
    %v3898 = vadd.f32 %v3753, %v3897
    %v3899 = vpop.f32.mrb[0].mxu0
    %3900 = vmatprep.mubr.f32.mxu0 0.0
    %3901 = vmatmul.mubr.f32.gmra.mrb[0].mxu0 %v3536
    %v3902 = vpop.f32.mrb[0].mxu0
    %v3903 = vadd.f32 %v3758, %v3902
    %v3904 = vpop.f32.mrb[0].mxu0
    %3905 = vmatprep.mubr.f32.mxu0 0.0
    %3906 = vmatmul.mubr.f32.gmra.mrb[0].mxu0 %v3537
    %v3907 = vpop.f32.mrb[0].mxu0
    %v3908 = vadd.f32 %v3763, %v3907
    %v3909 = vpop.f32.mrb[0].mxu0
    %3910 = vmatprep.mubr.f32.mxu0 0.0
    %3911 = vmatmul.mubr.f32.gmra.mrb[0].mxu0 %v3538
    %v3912 = vpop.f32.mrb[0].mxu0
    %v3913 = vadd.f32 %v3768, %v3912
    %v3914 = vpop.f32.mrb[0].mxu0
    %3915 = vmatprep.mubr.f32.mxu0 0.0
    %3916 = vmatmul.mubr.f32.gmra.mrb[0].mxu0 %v3539
    %v3917 = vpop.f32.mrb[0].mxu0
    %v3918 = vadd.f32 %v3773, %v3917
    %v3919 = vpop.f32.mrb[0].mxu0
    %3920 = vmatprep.mubr.f32.mxu0 0.0
    %3921 = vmatmul.mubr.f32.gmra.mrb[0].mxu0 %v3540
    %v3922 = vpop.f32.mrb[0].mxu0
    %v3923 = vadd.f32 %v3778, %v3922
    %v3924 = vpop.f32.mrb[0].mxu0
    %3925 = vmatprep.mubr.f32.mxu0 0.0
    %3926 = vmatmul.mubr.f32.gmra.mrb[0].mxu0 %v3541
    %v3927 = vpop.f32.mrb[0].mxu0
    %v3928 = vadd.f32 %v3783, %v3927
    %v3929 = vpop.f32.mrb[0].mxu0
    %3930 = vmatprep.mubr.f32.mxu0 0.0
    %3931 = vmatmul.mubr.f32.gmra.mrb[0].mxu0 %v3542
    %v3932 = vpop.f32.mrb[0].mxu0
    %v3933 = vadd.f32 %v3788, %v3932
    %v3934 = vpop.f32.mrb[0].mxu0
    %3935 = vmatprep.mubr.f32.mxu0 0.0
    %3936 = vmatmul.mubr.f32.gmra.mrb[0].mxu0 %v3543
    %v3937 = vpop.f32.mrb[0].mxu0
    %v3938 = vadd.f32 %v3793, %v3937
    %v3939 = vpop.f32.mrb[0].mxu0
    %3940 = vmatprep.mubr.f32.mxu0 0.0
    %3941 = vmatmul.mubr.f32.gmra.mrb[0].mxu0 %v3544
    %v3942 = vpop.f32.mrb[0].mxu0
    %v3943 = vadd.f32 %v3798, %v3942
    %v3944 = vpop.f32.mrb[0].mxu0
    %3945 = vmatprep.mubr.f32.mxu0 0.0
    %3946 = vmatmul.mubr.f32.gmra.mrb[0].mxu0 %v3545
    %v3947 = vpop.f32.mrb[0].mxu0
    %v3948 = vadd.f32 %v3803, %v3947
    %v3949 = vpop.f32.mrb[0].mxu0
    %3950 = vdwg.mxu0
    %s3951 = scalar_lea.vmem [#allocation8], 128
    %v3952 = vld [vmem:[%s3951] sm:$0xff]
    %v3953 = vld [vmem:[%s3951 + $0x8] sm:$0xff]
    %v3954 = vld [vmem:[%s3951 + $0x10] sm:$0xff]
    %v3955 = vld [vmem:[%s3951 + $0x18] sm:$0xff]
    %v3956 = vld [vmem:[%s3951 + $0x20] sm:$0xff]
    %v3957 = vld [vmem:[%s3951 + $0x28] sm:$0xff]
    %v3958 = vld [vmem:[%s3951 + $0x30] sm:$0xff]
    %v3959 = vld [vmem:[%s3951 + $0x38] sm:$0xff]
    %v3960 = vld [vmem:[%s3951 + $0x40] sm:$0xff]
    %v3961 = vld [vmem:[%s3951 + $0x48] sm:$0xff]
    %v3962 = vld [vmem:[%s3951 + $0x50] sm:$0xff]
    %v3963 = vld [vmem:[%s3951 + $0x58] sm:$0xff]
    %v3964 = vld [vmem:[%s3951 + $0x60] sm:$0xff]
    %v3965 = vld [vmem:[%s3951 + $0x68] sm:$0xff]
    %v3966 = vld [vmem:[%s3951 + $0x70] sm:$0xff]
    %v3967 = vld [vmem:[%s3951 + $0x78] sm:$0xff]
    %3968 = vmatprep.subr.mxu0 0.0
    %3969 = vmatpush1.msra.mxu0 %v3952
    %3970 = vmatprep.subr.mxu0 0.0
    %3971 = vmatpush1.msra.mxu0 %v3953
    %3972 = vmatprep.subr.mxu0 0.0
    %3973 = vmatpush1.msra.mxu0 %v3954
    %3974 = vmatprep.subr.mxu0 0.0
    %3975 = vmatpush1.msra.mxu0 %v3955
    %3976 = vmatprep.subr.mxu0 0.0
    %3977 = vmatpush1.msra.mxu0 %v3956
    %3978 = vmatprep.subr.mxu0 0.0
    %3979 = vmatpush1.msra.mxu0 %v3957
    %3980 = vmatprep.subr.mxu0 0.0
    %3981 = vmatpush1.msra.mxu0 %v3958
    %3982 = vmatprep.subr.mxu0 0.0
    %3983 = vmatpush1.msra.mxu0 %v3959
    %3984 = vmatprep.subr.mxu0 0.0
    %3985 = vmatpush1.msra.mxu0 %v3960
    %3986 = vmatprep.subr.mxu0 0.0
    %3987 = vmatpush1.msra.mxu0 %v3961
    %3988 = vmatprep.subr.mxu0 0.0
    %3989 = vmatpush1.msra.mxu0 %v3962
    %3990 = vmatprep.subr.mxu0 0.0
    %3991 = vmatpush1.msra.mxu0 %v3963
    %3992 = vmatprep.subr.mxu0 0.0
    %3993 = vmatpush1.msra.mxu0 %v3964
    %3994 = vmatprep.subr.mxu0 0.0
    %3995 = vmatpush1.msra.mxu0 %v3965
    %3996 = vmatprep.subr.mxu0 0.0
    %3997 = vmatpush1.msra.mxu0 %v3966
    %3998 = vmatprep.subr.mxu0 0.0
    %3999 = vmatpush1.msra.mxu0 %v3967
    %4000 = vmatprep.subr.mxu0 0.0
    %4001 = vmatpush1.msra.mxu0 0.0
    %4002 = vmatprep.subr.mxu0 0.0
    %4003 = vmatpush1.msra.mxu0 0.0
    %4004 = vmatprep.subr.mxu0 0.0
    %4005 = vmatpush1.msra.mxu0 0.0
    %4006 = vmatprep.subr.mxu0 0.0
    %4007 = vmatpush1.msra.mxu0 0.0
    %4008 = vmatprep.subr.mxu0 0.0
    %4009 = vmatpush1.msra.mxu0 0.0
    %4010 = vmatprep.subr.mxu0 0.0
    %4011 = vmatpush1.msra.mxu0 0.0
    %4012 = vmatprep.subr.mxu0 0.0
    %4013 = vmatpush1.msra.mxu0 0.0
    %4014 = vmatprep.subr.mxu0 0.0
    %4015 = vmatpush1.msra.mxu0 0.0
    %4016 = vmatprep.subr.mxu0 0.0
    %4017 = vmatpush1.msra.mxu0 0.0
    %4018 = vmatprep.subr.mxu0 0.0
    %4019 = vmatpush1.msra.mxu0 0.0
    %4020 = vmatprep.subr.mxu0 0.0
    %4021 = vmatpush1.msra.mxu0 0.0
    %4022 = vmatprep.subr.mxu0 0.0
    %4023 = vmatpush1.msra.mxu0 0.0
    %4024 = vmatprep.subr.mxu0 0.0
    %4025 = vmatpush1.msra.mxu0 0.0
    %4026 = vmatprep.subr.mxu0 0.0
    %4027 = vmatpush1.msra.mxu0 0.0
    %4028 = vmatprep.subr.mxu0 0.0
    %4029 = vmatpush1.msra.mxu0 0.0
    %4030 = vmatprep.subr.mxu0 0.0
    %4031 = vmatpush1.msra.mxu0 0.0
    %4032 = vmatprep.mubr.f32.mxu0 0.0
    %4033 = vmatmul.mubr.f32.gmra.mrb[0].mxu0 %v3597
    %v4034 = vpop.f32.mrb[0].mxu0
    %v4035 = vadd.f32 0.0, %v4034
    %v4036 = vpop.f32.mrb[0].mxu0
    %4037 = vmatprep.mubr.f32.mxu0 0.0
    %4038 = vmatmul.mubr.f32.gmra.mrb[0].mxu0 %v3599
    %v4039 = vpop.f32.mrb[0].mxu0
    %v4040 = vadd.f32 0.0, %v4039
    %v4041 = vpop.f32.mrb[0].mxu0
    %4042 = vmatprep.mubr.f32.mxu0 0.0
    %4043 = vmatmul.mubr.f32.gmra.mrb[0].mxu0 %v3602
    %v4044 = vpop.f32.mrb[0].mxu0
    %v4045 = vadd.f32 0.0, %v4044
    %v4046 = vpop.f32.mrb[0].mxu0
    %4047 = vmatprep.mubr.f32.mxu0 0.0
    %4048 = vmatmul.mubr.f32.gmra.mrb[0].mxu0 %v3603
    %v4049 = vpop.f32.mrb[0].mxu0
    %v4050 = vadd.f32 0.0, %v4049
    %v4051 = vpop.f32.mrb[0].mxu0
    %4052 = vmatprep.mubr.f32.mxu0 0.0
    %4053 = vmatmul.mubr.f32.gmra.mrb[0].mxu0 %v3606
    %v4054 = vpop.f32.mrb[0].mxu0
    %v4055 = vadd.f32 0.0, %v4054
    %v4056 = vpop.f32.mrb[0].mxu0
    %4057 = vmatprep.mubr.f32.mxu0 0.0
    %4058 = vmatmul.mubr.f32.gmra.mrb[0].mxu0 %v3607
    %v4059 = vpop.f32.mrb[0].mxu0
    %v4060 = vadd.f32 0.0, %v4059
    %v4061 = vpop.f32.mrb[0].mxu0
    %4062 = vmatprep.mubr.f32.mxu0 0.0
    %4063 = vmatmul.mubr.f32.gmra.mrb[0].mxu0 %v3610
    %v4064 = vpop.f32.mrb[0].mxu0
    %v4065 = vadd.f32 0.0, %v4064
    %v4066 = vpop.f32.mrb[0].mxu0
    %4067 = vmatprep.mubr.f32.mxu0 0.0
    %4068 = vmatmul.mubr.f32.gmra.mrb[0].mxu0 %v3611
    %v4069 = vpop.f32.mrb[0].mxu0
    %v4070 = vadd.f32 0.0, %v4069
    %v4071 = vpop.f32.mrb[0].mxu0
    %4072 = vmatprep.mubr.f32.mxu0 0.0
    %4073 = vmatmul.mubr.f32.gmra.mrb[0].mxu0 %v3614
    %v4074 = vpop.f32.mrb[0].mxu0
    %v4075 = vadd.f32 0.0, %v4074
    %v4076 = vpop.f32.mrb[0].mxu0
    %4077 = vmatprep.mubr.f32.mxu0 0.0
    %4078 = vmatmul.mubr.f32.gmra.mrb[0].mxu0 %v3615
    %v4079 = vpop.f32.mrb[0].mxu0
    %v4080 = vadd.f32 0.0, %v4079
    %v4081 = vpop.f32.mrb[0].mxu0
    %4082 = vmatprep.mubr.f32.mxu0 0.0
    %4083 = vmatmul.mubr.f32.gmra.mrb[0].mxu0 %v3618
    %v4084 = vpop.f32.mrb[0].mxu0
    %v4085 = vadd.f32 0.0, %v4084
    %v4086 = vpop.f32.mrb[0].mxu0
    %4087 = vmatprep.mubr.f32.mxu0 0.0
    %4088 = vmatmul.mubr.f32.gmra.mrb[0].mxu0 %v3619
    %v4089 = vpop.f32.mrb[0].mxu0
    %v4090 = vadd.f32 0.0, %v4089
    %v4091 = vpop.f32.mrb[0].mxu0
    %4092 = vmatprep.mubr.f32.mxu0 0.0
    %4093 = vmatmul.mubr.f32.gmra.mrb[0].mxu0 %v3622
    %v4094 = vpop.f32.mrb[0].mxu0
    %v4095 = vadd.f32 0.0, %v4094
    %v4096 = vpop.f32.mrb[0].mxu0
    %4097 = vmatprep.mubr.f32.mxu0 0.0
    %4098 = vmatmul.mubr.f32.gmra.mrb[0].mxu0 %v3623
    %v4099 = vpop.f32.mrb[0].mxu0
    %v4100 = vadd.f32 0.0, %v4099
    %v4101 = vpop.f32.mrb[0].mxu0
    %4102 = vmatprep.mubr.f32.mxu0 0.0
    %4103 = vmatmul.mubr.f32.gmra.mrb[0].mxu0 %v3626
    %v4104 = vpop.f32.mrb[0].mxu0
    %v4105 = vadd.f32 0.0, %v4104
    %v4106 = vpop.f32.mrb[0].mxu0
    %4107 = vmatprep.mubr.f32.mxu0 0.0
    %4108 = vmatmul.mubr.f32.gmra.mrb[0].mxu0 %v3627
    %v4109 = vpop.f32.mrb[0].mxu0
    %v4110 = vadd.f32 0.0, %v4109
    %v4111 = vpop.f32.mrb[0].mxu0
    %4112 = vdwg.mxu0
    %4113 = vmatprep.subr.mxu0 0.0
    %4114 = vmatpush1.msra.mxu0 %v3562
    %4115 = vmatprep.subr.mxu0 0.0
    %4116 = vmatpush1.msra.mxu0 %v3563
    %4117 = vmatprep.subr.mxu0 0.0
    %4118 = vmatpush1.msra.mxu0 %v3564
    %4119 = vmatprep.subr.mxu0 0.0
    %4120 = vmatpush1.msra.mxu0 %v3565
    %4121 = vmatprep.subr.mxu0 0.0
    %4122 = vmatpush1.msra.mxu0 %v3566
    %4123 = vmatprep.subr.mxu0 0.0
    %4124 = vmatpush1.msra.mxu0 %v3567
    %4125 = vmatprep.subr.mxu0 0.0
    %4126 = vmatpush1.msra.mxu0 %v3568
    %4127 = vmatprep.subr.mxu0 0.0
    %4128 = vmatpush1.msra.mxu0 %v3569
    %4129 = vmatprep.subr.mxu0 0.0
    %4130 = vmatpush1.msra.mxu0 %v3570
    %4131 = vmatprep.subr.mxu0 0.0
    %4132 = vmatpush1.msra.mxu0 %v3571
    %4133 = vmatprep.subr.mxu0 0.0
    %4134 = vmatpush1.msra.mxu0 %v3572
    %4135 = vmatprep.subr.mxu0 0.0
    %4136 = vmatpush1.msra.mxu0 %v3573
    %4137 = vmatprep.subr.mxu0 0.0
    %4138 = vmatpush1.msra.mxu0 %v3574
    %4139 = vmatprep.subr.mxu0 0.0
    %4140 = vmatpush1.msra.mxu0 %v3575
    %4141 = vmatprep.subr.mxu0 0.0
    %4142 = vmatpush1.msra.mxu0 %v3576
    %4143 = vmatprep.subr.mxu0 0.0
    %4144 = vmatpush1.msra.mxu0 %v3577
    %4145 = vmatprep.subr.mxu0 0.0
    %4146 = vmatpush1.msra.mxu0 0.0
    %4147 = vmatprep.subr.mxu0 0.0
    %4148 = vmatpush1.msra.mxu0 0.0
    %4149 = vmatprep.subr.mxu0 0.0
    %4150 = vmatpush1.msra.mxu0 0.0
    %4151 = vmatprep.subr.mxu0 0.0
    %4152 = vmatpush1.msra.mxu0 0.0
    %4153 = vmatprep.subr.mxu0 0.0
    %4154 = vmatpush1.msra.mxu0 0.0
    %4155 = vmatprep.subr.mxu0 0.0
    %4156 = vmatpush1.msra.mxu0 0.0
    %4157 = vmatprep.subr.mxu0 0.0
    %4158 = vmatpush1.msra.mxu0 0.0
    %4159 = vmatprep.subr.mxu0 0.0
    %4160 = vmatpush1.msra.mxu0 0.0
    %4161 = vmatprep.subr.mxu0 0.0
    %4162 = vmatpush1.msra.mxu0 0.0
    %4163 = vmatprep.subr.mxu0 0.0
    %4164 = vmatpush1.msra.mxu0 0.0
    %4165 = vmatprep.subr.mxu0 0.0
    %4166 = vmatpush1.msra.mxu0 0.0
    %4167 = vmatprep.subr.mxu0 0.0
    %4168 = vmatpush1.msra.mxu0 0.0
    %4169 = vmatprep.subr.mxu0 0.0
    %4170 = vmatpush1.msra.mxu0 0.0
    %4171 = vmatprep.subr.mxu0 0.0
    %4172 = vmatpush1.msra.mxu0 0.0
    %4173 = vmatprep.subr.mxu0 0.0
    %4174 = vmatpush1.msra.mxu0 0.0
    %4175 = vmatprep.subr.mxu0 0.0
    %4176 = vmatpush1.msra.mxu0 0.0
    %4177 = vmatprep.mubr.f32.mxu0 0.0
    %4178 = vmatmul.mubr.f32.gmra.mrb[0].mxu0 %v3530
    %v4179 = vpop.f32.mrb[0].mxu0
    %v4180 = vadd.f32 %v4035, %v4179
    %v4181 = vpop.f32.mrb[0].mxu0
    %4182 = vmatprep.mubr.f32.mxu0 0.0
    %4183 = vmatmul.mubr.f32.gmra.mrb[0].mxu0 %v3531
    %v4184 = vpop.f32.mrb[0].mxu0
    %v4185 = vadd.f32 %v4040, %v4184
    %v4186 = vpop.f32.mrb[0].mxu0
    %4187 = vmatprep.mubr.f32.mxu0 0.0
    %4188 = vmatmul.mubr.f32.gmra.mrb[0].mxu0 %v3532
    %v4189 = vpop.f32.mrb[0].mxu0
    %v4190 = vadd.f32 %v4045, %v4189
    %v4191 = vpop.f32.mrb[0].mxu0
    %4192 = vmatprep.mubr.f32.mxu0 0.0
    %4193 = vmatmul.mubr.f32.gmra.mrb[0].mxu0 %v3533
    %v4194 = vpop.f32.mrb[0].mxu0
    %v4195 = vadd.f32 %v4050, %v4194
    %v4196 = vpop.f32.mrb[0].mxu0
    %4197 = vmatprep.mubr.f32.mxu0 0.0
    %4198 = vmatmul.mubr.f32.gmra.mrb[0].mxu0 %v3534
    %v4199 = vpop.f32.mrb[0].mxu0
    %v4200 = vadd.f32 %v4055, %v4199
    %v4201 = vpop.f32.mrb[0].mxu0
    %4202 = vmatprep.mubr.f32.mxu0 0.0
    %4203 = vmatmul.mubr.f32.gmra.mrb[0].mxu0 %v3535
    %v4204 = vpop.f32.mrb[0].mxu0
    %v4205 = vadd.f32 %v4060, %v4204
    %v4206 = vpop.f32.mrb[0].mxu0
    %4207 = vmatprep.mubr.f32.mxu0 0.0
    %4208 = vmatmul.mubr.f32.gmra.mrb[0].mxu0 %v3536
    %v4209 = vpop.f32.mrb[0].mxu0
    %v4210 = vadd.f32 %v4065, %v4209
    %v4211 = vpop.f32.mrb[0].mxu0
    %4212 = vmatprep.mubr.f32.mxu0 0.0
    %4213 = vmatmul.mubr.f32.gmra.mrb[0].mxu0 %v3537
    %v4214 = vpop.f32.mrb[0].mxu0
    %v4215 = vadd.f32 %v4070, %v4214
    %v4216 = vpop.f32.mrb[0].mxu0
    %4217 = vmatprep.mubr.f32.mxu0 0.0
    %4218 = vmatmul.mubr.f32.gmra.mrb[0].mxu0 %v3538
    %v4219 = vpop.f32.mrb[0].mxu0
    %v4220 = vadd.f32 %v4075, %v4219
    %v4221 = vpop.f32.mrb[0].mxu0
    %4222 = vmatprep.mubr.f32.mxu0 0.0
    %4223 = vmatmul.mubr.f32.gmra.mrb[0].mxu0 %v3539
    %v4224 = vpop.f32.mrb[0].mxu0
    %v4225 = vadd.f32 %v4080, %v4224
    %v4226 = vpop.f32.mrb[0].mxu0
    %4227 = vmatprep.mubr.f32.mxu0 0.0
    %4228 = vmatmul.mubr.f32.gmra.mrb[0].mxu0 %v3540
    %v4229 = vpop.f32.mrb[0].mxu0
    %v4230 = vadd.f32 %v4085, %v4229
    %v4231 = vpop.f32.mrb[0].mxu0
    %4232 = vmatprep.mubr.f32.mxu0 0.0
    %4233 = vmatmul.mubr.f32.gmra.mrb[0].mxu0 %v3541
    %v4234 = vpop.f32.mrb[0].mxu0
    %v4235 = vadd.f32 %v4090, %v4234
    %v4236 = vpop.f32.mrb[0].mxu0
    %4237 = vmatprep.mubr.f32.mxu0 0.0
    %4238 = vmatmul.mubr.f32.gmra.mrb[0].mxu0 %v3542
    %v4239 = vpop.f32.mrb[0].mxu0
    %v4240 = vadd.f32 %v4095, %v4239
    %v4241 = vpop.f32.mrb[0].mxu0
    %4242 = vmatprep.mubr.f32.mxu0 0.0
    %4243 = vmatmul.mubr.f32.gmra.mrb[0].mxu0 %v3543
    %v4244 = vpop.f32.mrb[0].mxu0
    %v4245 = vadd.f32 %v4100, %v4244
    %v4246 = vpop.f32.mrb[0].mxu0
    %4247 = vmatprep.mubr.f32.mxu0 0.0
    %4248 = vmatmul.mubr.f32.gmra.mrb[0].mxu0 %v3544
    %v4249 = vpop.f32.mrb[0].mxu0
    %v4250 = vadd.f32 %v4105, %v4249
    %v4251 = vpop.f32.mrb[0].mxu0
    %4252 = vmatprep.mubr.f32.mxu0 0.0
    %4253 = vmatmul.mubr.f32.gmra.mrb[0].mxu0 %v3545
    %v4254 = vpop.f32.mrb[0].mxu0
    %v4255 = vadd.f32 %v4110, %v4254
    %v4256 = vpop.f32.mrb[0].mxu0
    %4257 = vdwg.mxu0
    %v4258 = vrot.slane %v3530, 2
    %v4259 = vrot.slane %v3531, 2
    %v4260 = vsel %vm1349, %v4258, %v4259
    %v4261 = vrot.slane 0.0, 2
    %v4262 = vsel %vm1349, %v4259, %v4261
    %v4263 = vrot.slane %v3532, 2
    %v4264 = vrot.slane %v3533, 2
    %v4265 = vsel %vm1349, %v4263, %v4264
    %v4266 = vsel %vm1349, %v4264, %v4261
    %v4267 = vrot.slane %v3534, 2
    %v4268 = vrot.slane %v3535, 2
    %v4269 = vsel %vm1349, %v4267, %v4268
    %v4270 = vsel %vm1349, %v4268, %v4261
    %v4271 = vrot.slane %v3536, 2
    %v4272 = vrot.slane %v3537, 2
    %v4273 = vsel %vm1349, %v4271, %v4272
    %v4274 = vsel %vm1349, %v4272, %v4261
    %v4275 = vrot.slane %v3538, 2
    %v4276 = vrot.slane %v3539, 2
    %v4277 = vsel %vm1349, %v4275, %v4276
    %v4278 = vsel %vm1349, %v4276, %v4261
    %v4279 = vrot.slane %v3540, 2
    %v4280 = vrot.slane %v3541, 2
    %v4281 = vsel %vm1349, %v4279, %v4280
    %v4282 = vsel %vm1349, %v4280, %v4261
    %v4283 = vrot.slane %v3542, 2
    %v4284 = vrot.slane %v3543, 2
    %v4285 = vsel %vm1349, %v4283, %v4284
    %v4286 = vsel %vm1349, %v4284, %v4261
    %v4287 = vrot.slane %v3544, 2
    %v4288 = vrot.slane %v3545, 2
    %v4289 = vsel %vm1349, %v4287, %v4288
    %v4290 = vsel %vm1349, %v4288, %v4261
    %s4307 = scalar_lea.vmem %s4, 256
    %v4308 = vld [vmem:[%s4307] sm:$0xff]
    %v4309 = vld [vmem:[%s4307 + $0x8] sm:$0xff]
    %v4310 = vld [vmem:[%s4307 + $0x10] sm:$0xff]
    %v4311 = vld [vmem:[%s4307 + $0x18] sm:$0xff]
    %v4312 = vld [vmem:[%s4307 + $0x20] sm:$0xff]
    %v4313 = vld [vmem:[%s4307 + $0x28] sm:$0xff]
    %v4314 = vld [vmem:[%s4307 + $0x30] sm:$0xff]
    %v4315 = vld [vmem:[%s4307 + $0x38] sm:$0xff]
    %v4316 = vld [vmem:[%s4307 + $0x40] sm:$0xff]
    %v4317 = vld [vmem:[%s4307 + $0x48] sm:$0xff]
    %v4318 = vld [vmem:[%s4307 + $0x50] sm:$0xff]
    %v4319 = vld [vmem:[%s4307 + $0x58] sm:$0xff]
    %v4320 = vld [vmem:[%s4307 + $0x60] sm:$0xff]
    %v4321 = vld [vmem:[%s4307 + $0x68] sm:$0xff]
    %v4322 = vld [vmem:[%s4307 + $0x70] sm:$0xff]
    %v4323 = vld [vmem:[%s4307 + $0x78] sm:$0xff]
    %4324 = vmatprep.subr.mxu0 0.0
    %4325 = vmatpush1.msra.mxu0 %v4308
    %4326 = vmatprep.subr.mxu0 0.0
    %4327 = vmatpush1.msra.mxu0 %v4309
    %4328 = vmatprep.subr.mxu0 0.0
    %4329 = vmatpush1.msra.mxu0 %v4310
    %4330 = vmatprep.subr.mxu0 0.0
    %4331 = vmatpush1.msra.mxu0 %v4311
    %4332 = vmatprep.subr.mxu0 0.0
    %4333 = vmatpush1.msra.mxu0 %v4312
    %4334 = vmatprep.subr.mxu0 0.0
    %4335 = vmatpush1.msra.mxu0 %v4313
    %4336 = vmatprep.subr.mxu0 0.0
    %4337 = vmatpush1.msra.mxu0 %v4314
    %4338 = vmatprep.subr.mxu0 0.0
    %4339 = vmatpush1.msra.mxu0 %v4315
    %4340 = vmatprep.subr.mxu0 0.0
    %4341 = vmatpush1.msra.mxu0 %v4316
    %4342 = vmatprep.subr.mxu0 0.0
    %4343 = vmatpush1.msra.mxu0 %v4317
    %4344 = vmatprep.subr.mxu0 0.0
    %4345 = vmatpush1.msra.mxu0 %v4318
    %4346 = vmatprep.subr.mxu0 0.0
    %4347 = vmatpush1.msra.mxu0 %v4319
    %4348 = vmatprep.subr.mxu0 0.0
    %4349 = vmatpush1.msra.mxu0 %v4320
    %4350 = vmatprep.subr.mxu0 0.0
    %4351 = vmatpush1.msra.mxu0 %v4321
    %4352 = vmatprep.subr.mxu0 0.0
    %4353 = vmatpush1.msra.mxu0 %v4322
    %4354 = vmatprep.subr.mxu0 0.0
    %4355 = vmatpush1.msra.mxu0 %v4323
    %4356 = vmatprep.subr.mxu0 0.0
    %4357 = vmatpush1.msra.mxu0 0.0
    %4358 = vmatprep.subr.mxu0 0.0
    %4359 = vmatpush1.msra.mxu0 0.0
    %4360 = vmatprep.subr.mxu0 0.0
    %4361 = vmatpush1.msra.mxu0 0.0
    %4362 = vmatprep.subr.mxu0 0.0
    %4363 = vmatpush1.msra.mxu0 0.0
    %4364 = vmatprep.subr.mxu0 0.0
    %4365 = vmatpush1.msra.mxu0 0.0
    %4366 = vmatprep.subr.mxu0 0.0
    %4367 = vmatpush1.msra.mxu0 0.0
    %4368 = vmatprep.subr.mxu0 0.0
    %4369 = vmatpush1.msra.mxu0 0.0
    %4370 = vmatprep.subr.mxu0 0.0
    %4371 = vmatpush1.msra.mxu0 0.0
    %4372 = vmatprep.subr.mxu0 0.0
    %4373 = vmatpush1.msra.mxu0 0.0
    %4374 = vmatprep.subr.mxu0 0.0
    %4375 = vmatpush1.msra.mxu0 0.0
    %4376 = vmatprep.subr.mxu0 0.0
    %4377 = vmatpush1.msra.mxu0 0.0
    %4378 = vmatprep.subr.mxu0 0.0
    %4379 = vmatpush1.msra.mxu0 0.0
    %4380 = vmatprep.subr.mxu0 0.0
    %4381 = vmatpush1.msra.mxu0 0.0
    %4382 = vmatprep.subr.mxu0 0.0
    %4383 = vmatpush1.msra.mxu0 0.0
    %4384 = vmatprep.subr.mxu0 0.0
    %4385 = vmatpush1.msra.mxu0 0.0
    %4386 = vmatprep.subr.mxu0 0.0
    %4387 = vmatpush1.msra.mxu0 0.0
    %4388 = vmatprep.mubr.f32.mxu0 0.0
    %4389 = vmatmul.mubr.f32.gmra.mrb[0].mxu0 %v4260
    %v4390 = vpop.f32.mrb[0].mxu0
    %v4391 = vadd.f32 0.0, %v4390
    %v4392 = vpop.f32.mrb[0].mxu0
    %4393 = vmatprep.mubr.f32.mxu0 0.0
    %4394 = vmatmul.mubr.f32.gmra.mrb[0].mxu0 %v4262
    %v4395 = vpop.f32.mrb[0].mxu0
    %v4396 = vadd.f32 0.0, %v4395
    %v4397 = vpop.f32.mrb[0].mxu0
    %4398 = vmatprep.mubr.f32.mxu0 0.0
    %4399 = vmatmul.mubr.f32.gmra.mrb[0].mxu0 %v4265
    %v4400 = vpop.f32.mrb[0].mxu0
    %v4401 = vadd.f32 0.0, %v4400
    %v4402 = vpop.f32.mrb[0].mxu0
    %4403 = vmatprep.mubr.f32.mxu0 0.0
    %4404 = vmatmul.mubr.f32.gmra.mrb[0].mxu0 %v4266
    %v4405 = vpop.f32.mrb[0].mxu0
    %v4406 = vadd.f32 0.0, %v4405
    %v4407 = vpop.f32.mrb[0].mxu0
    %4408 = vmatprep.mubr.f32.mxu0 0.0
    %4409 = vmatmul.mubr.f32.gmra.mrb[0].mxu0 %v4269
    %v4410 = vpop.f32.mrb[0].mxu0
    %v4411 = vadd.f32 0.0, %v4410
    %v4412 = vpop.f32.mrb[0].mxu0
    %4413 = vmatprep.mubr.f32.mxu0 0.0
    %4414 = vmatmul.mubr.f32.gmra.mrb[0].mxu0 %v4270
    %v4415 = vpop.f32.mrb[0].mxu0
    %v4416 = vadd.f32 0.0, %v4415
    %v4417 = vpop.f32.mrb[0].mxu0
    %4418 = vmatprep.mubr.f32.mxu0 0.0
    %4419 = vmatmul.mubr.f32.gmra.mrb[0].mxu0 %v4273
    %v4420 = vpop.f32.mrb[0].mxu0
    %v4421 = vadd.f32 0.0, %v4420
    %v4422 = vpop.f32.mrb[0].mxu0
    %4423 = vmatprep.mubr.f32.mxu0 0.0
    %4424 = vmatmul.mubr.f32.gmra.mrb[0].mxu0 %v4274
    %v4425 = vpop.f32.mrb[0].mxu0
    %v4426 = vadd.f32 0.0, %v4425
    %v4427 = vpop.f32.mrb[0].mxu0
    %4428 = vmatprep.mubr.f32.mxu0 0.0
    %4429 = vmatmul.mubr.f32.gmra.mrb[0].mxu0 %v4277
    %v4430 = vpop.f32.mrb[0].mxu0
    %v4431 = vadd.f32 0.0, %v4430
    %v4432 = vpop.f32.mrb[0].mxu0
    %4433 = vmatprep.mubr.f32.mxu0 0.0
    %4434 = vmatmul.mubr.f32.gmra.mrb[0].mxu0 %v4278
    %v4435 = vpop.f32.mrb[0].mxu0
    %v4436 = vadd.f32 0.0, %v4435
    %v4437 = vpop.f32.mrb[0].mxu0
    %4438 = vmatprep.mubr.f32.mxu0 0.0
    %4439 = vmatmul.mubr.f32.gmra.mrb[0].mxu0 %v4281
    %v4440 = vpop.f32.mrb[0].mxu0
    %v4441 = vadd.f32 0.0, %v4440
    %v4442 = vpop.f32.mrb[0].mxu0
    %4443 = vmatprep.mubr.f32.mxu0 0.0
    %4444 = vmatmul.mubr.f32.gmra.mrb[0].mxu0 %v4282
    %v4445 = vpop.f32.mrb[0].mxu0
    %v4446 = vadd.f32 0.0, %v4445
    %v4447 = vpop.f32.mrb[0].mxu0
    %4448 = vmatprep.mubr.f32.mxu0 0.0
    %4449 = vmatmul.mubr.f32.gmra.mrb[0].mxu0 %v4285
    %v4450 = vpop.f32.mrb[0].mxu0
    %v4451 = vadd.f32 0.0, %v4450
    %v4452 = vpop.f32.mrb[0].mxu0
    %4453 = vmatprep.mubr.f32.mxu0 0.0
    %4454 = vmatmul.mubr.f32.gmra.mrb[0].mxu0 %v4286
    %v4455 = vpop.f32.mrb[0].mxu0
    %v4456 = vadd.f32 0.0, %v4455
    %v4457 = vpop.f32.mrb[0].mxu0
    %4458 = vmatprep.mubr.f32.mxu0 0.0
    %4459 = vmatmul.mubr.f32.gmra.mrb[0].mxu0 %v4289
    %v4460 = vpop.f32.mrb[0].mxu0
    %v4461 = vadd.f32 0.0, %v4460
    %v4462 = vpop.f32.mrb[0].mxu0
    %4463 = vmatprep.mubr.f32.mxu0 0.0
    %4464 = vmatmul.mubr.f32.gmra.mrb[0].mxu0 %v4290
    %v4465 = vpop.f32.mrb[0].mxu0
    %v4466 = vadd.f32 0.0, %v4465
    %v4467 = vpop.f32.mrb[0].mxu0
    %4468 = vdwg.mxu0
    %v4469 = vadd.f32 %v3873, %v4391
    %v4470 = vadd.f32 %v3878, %v4396
    %v4471 = vadd.f32 %v3883, %v4401
    %v4472 = vadd.f32 %v3888, %v4406
    %v4473 = vadd.f32 %v3893, %v4411
    %v4474 = vadd.f32 %v3898, %v4416
    %v4475 = vadd.f32 %v3903, %v4421
    %v4476 = vadd.f32 %v3908, %v4426
    %v4477 = vadd.f32 %v3913, %v4431
    %v4478 = vadd.f32 %v3918, %v4436
    %v4479 = vadd.f32 %v3923, %v4441
    %v4480 = vadd.f32 %v3928, %v4446
    %v4481 = vadd.f32 %v3933, %v4451
    %v4482 = vadd.f32 %v3938, %v4456
    %v4483 = vadd.f32 %v3943, %v4461
    %v4484 = vadd.f32 %v3948, %v4466
    %s4485 = scalar_lea.vmem [#allocation8], 256
    %v4486 = vld [vmem:[%s4485] sm:$0xff]
    %v4487 = vld [vmem:[%s4485 + $0x8] sm:$0xff]
    %v4488 = vld [vmem:[%s4485 + $0x10] sm:$0xff]
    %v4489 = vld [vmem:[%s4485 + $0x18] sm:$0xff]
    %v4490 = vld [vmem:[%s4485 + $0x20] sm:$0xff]
    %v4491 = vld [vmem:[%s4485 + $0x28] sm:$0xff]
    %v4492 = vld [vmem:[%s4485 + $0x30] sm:$0xff]
    %v4493 = vld [vmem:[%s4485 + $0x38] sm:$0xff]
    %v4494 = vld [vmem:[%s4485 + $0x40] sm:$0xff]
    %v4495 = vld [vmem:[%s4485 + $0x48] sm:$0xff]
    %v4496 = vld [vmem:[%s4485 + $0x50] sm:$0xff]
    %v4497 = vld [vmem:[%s4485 + $0x58] sm:$0xff]
    %v4498 = vld [vmem:[%s4485 + $0x60] sm:$0xff]
    %v4499 = vld [vmem:[%s4485 + $0x68] sm:$0xff]
    %v4500 = vld [vmem:[%s4485 + $0x70] sm:$0xff]
    %v4501 = vld [vmem:[%s4485 + $0x78] sm:$0xff]
    %4502 = vmatprep.subr.mxu0 0.0
    %4503 = vmatpush1.msra.mxu0 %v4486
    %4504 = vmatprep.subr.mxu0 0.0
    %4505 = vmatpush1.msra.mxu0 %v4487
    %4506 = vmatprep.subr.mxu0 0.0
    %4507 = vmatpush1.msra.mxu0 %v4488
    %4508 = vmatprep.subr.mxu0 0.0
    %4509 = vmatpush1.msra.mxu0 %v4489
    %4510 = vmatprep.subr.mxu0 0.0
    %4511 = vmatpush1.msra.mxu0 %v4490
    %4512 = vmatprep.subr.mxu0 0.0
    %4513 = vmatpush1.msra.mxu0 %v4491
    %4514 = vmatprep.subr.mxu0 0.0
    %4515 = vmatpush1.msra.mxu0 %v4492
    %4516 = vmatprep.subr.mxu0 0.0
    %4517 = vmatpush1.msra.mxu0 %v4493
    %4518 = vmatprep.subr.mxu0 0.0
    %4519 = vmatpush1.msra.mxu0 %v4494
    %4520 = vmatprep.subr.mxu0 0.0
    %4521 = vmatpush1.msra.mxu0 %v4495
    %4522 = vmatprep.subr.mxu0 0.0
    %4523 = vmatpush1.msra.mxu0 %v4496
    %4524 = vmatprep.subr.mxu0 0.0
    %4525 = vmatpush1.msra.mxu0 %v4497
    %4526 = vmatprep.subr.mxu0 0.0
    %4527 = vmatpush1.msra.mxu0 %v4498
    %4528 = vmatprep.subr.mxu0 0.0
    %4529 = vmatpush1.msra.mxu0 %v4499
    %4530 = vmatprep.subr.mxu0 0.0
    %4531 = vmatpush1.msra.mxu0 %v4500
    %4532 = vmatprep.subr.mxu0 0.0
    %4533 = vmatpush1.msra.mxu0 %v4501
    %4534 = vmatprep.subr.mxu0 0.0
    %4535 = vmatpush1.msra.mxu0 0.0
    %4536 = vmatprep.subr.mxu0 0.0
    %4537 = vmatpush1.msra.mxu0 0.0
    %4538 = vmatprep.subr.mxu0 0.0
    %4539 = vmatpush1.msra.mxu0 0.0
    %4540 = vmatprep.subr.mxu0 0.0
    %4541 = vmatpush1.msra.mxu0 0.0
    %4542 = vmatprep.subr.mxu0 0.0
    %4543 = vmatpush1.msra.mxu0 0.0
    %4544 = vmatprep.subr.mxu0 0.0
    %4545 = vmatpush1.msra.mxu0 0.0
    %4546 = vmatprep.subr.mxu0 0.0
    %4547 = vmatpush1.msra.mxu0 0.0
    %4548 = vmatprep.subr.mxu0 0.0
    %4549 = vmatpush1.msra.mxu0 0.0
    %4550 = vmatprep.subr.mxu0 0.0
    %4551 = vmatpush1.msra.mxu0 0.0
    %4552 = vmatprep.subr.mxu0 0.0
    %4553 = vmatpush1.msra.mxu0 0.0
    %4554 = vmatprep.subr.mxu0 0.0
    %4555 = vmatpush1.msra.mxu0 0.0
    %4556 = vmatprep.subr.mxu0 0.0
    %4557 = vmatpush1.msra.mxu0 0.0
    %4558 = vmatprep.subr.mxu0 0.0
    %4559 = vmatpush1.msra.mxu0 0.0
    %4560 = vmatprep.subr.mxu0 0.0
    %4561 = vmatpush1.msra.mxu0 0.0
    %4562 = vmatprep.subr.mxu0 0.0
    %4563 = vmatpush1.msra.mxu0 0.0
    %4564 = vmatprep.subr.mxu0 0.0
    %4565 = vmatpush1.msra.mxu0 0.0
    %4566 = vmatprep.mubr.f32.mxu0 0.0
    %4567 = vmatmul.mubr.f32.gmra.mrb[0].mxu0 %v4260
    %v4568 = vpop.f32.mrb[0].mxu0
    %v4569 = vadd.f32 0.0, %v4568
    %v4570 = vpop.f32.mrb[0].mxu0
    %4571 = vmatprep.mubr.f32.mxu0 0.0
    %4572 = vmatmul.mubr.f32.gmra.mrb[0].mxu0 %v4262
    %v4573 = vpop.f32.mrb[0].mxu0
    %v4574 = vadd.f32 0.0, %v4573
    %v4575 = vpop.f32.mrb[0].mxu0
    %4576 = vmatprep.mubr.f32.mxu0 0.0
    %4577 = vmatmul.mubr.f32.gmra.mrb[0].mxu0 %v4265
    %v4578 = vpop.f32.mrb[0].mxu0
    %v4579 = vadd.f32 0.0, %v4578
    %v4580 = vpop.f32.mrb[0].mxu0
    %4581 = vmatprep.mubr.f32.mxu0 0.0
    %4582 = vmatmul.mubr.f32.gmra.mrb[0].mxu0 %v4266
    %v4583 = vpop.f32.mrb[0].mxu0
    %v4584 = vadd.f32 0.0, %v4583
    %v4585 = vpop.f32.mrb[0].mxu0
    %4586 = vmatprep.mubr.f32.mxu0 0.0
    %4587 = vmatmul.mubr.f32.gmra.mrb[0].mxu0 %v4269
    %v4588 = vpop.f32.mrb[0].mxu0
    %v4589 = vadd.f32 0.0, %v4588
    %v4590 = vpop.f32.mrb[0].mxu0
    %4591 = vmatprep.mubr.f32.mxu0 0.0
    %4592 = vmatmul.mubr.f32.gmra.mrb[0].mxu0 %v4270
    %v4593 = vpop.f32.mrb[0].mxu0
    %v4594 = vadd.f32 0.0, %v4593
    %v4595 = vpop.f32.mrb[0].mxu0
    %4596 = vmatprep.mubr.f32.mxu0 0.0
    %4597 = vmatmul.mubr.f32.gmra.mrb[0].mxu0 %v4273
    %v4598 = vpop.f32.mrb[0].mxu0
    %v4599 = vadd.f32 0.0, %v4598
    %v4600 = vpop.f32.mrb[0].mxu0
    %4601 = vmatprep.mubr.f32.mxu0 0.0
    %4602 = vmatmul.mubr.f32.gmra.mrb[0].mxu0 %v4274
    %v4603 = vpop.f32.mrb[0].mxu0
    %v4604 = vadd.f32 0.0, %v4603
    %v4605 = vpop.f32.mrb[0].mxu0
    %4606 = vmatprep.mubr.f32.mxu0 0.0
    %4607 = vmatmul.mubr.f32.gmra.mrb[0].mxu0 %v4277
    %v4608 = vpop.f32.mrb[0].mxu0
    %v4609 = vadd.f32 0.0, %v4608
    %v4610 = vpop.f32.mrb[0].mxu0
    %4611 = vmatprep.mubr.f32.mxu0 0.0
    %4612 = vmatmul.mubr.f32.gmra.mrb[0].mxu0 %v4278
    %v4613 = vpop.f32.mrb[0].mxu0
    %v4614 = vadd.f32 0.0, %v4613
    %v4615 = vpop.f32.mrb[0].mxu0
    %4616 = vmatprep.mubr.f32.mxu0 0.0
    %4617 = vmatmul.mubr.f32.gmra.mrb[0].mxu0 %v4281
    %v4618 = vpop.f32.mrb[0].mxu0
    %v4619 = vadd.f32 0.0, %v4618
    %v4620 = vpop.f32.mrb[0].mxu0
    %4621 = vmatprep.mubr.f32.mxu0 0.0
    %4622 = vmatmul.mubr.f32.gmra.mrb[0].mxu0 %v4282
    %v4623 = vpop.f32.mrb[0].mxu0
    %v4624 = vadd.f32 0.0, %v4623
    %v4625 = vpop.f32.mrb[0].mxu0
    %4626 = vmatprep.mubr.f32.mxu0 0.0
    %4627 = vmatmul.mubr.f32.gmra.mrb[0].mxu0 %v4285
    %v4628 = vpop.f32.mrb[0].mxu0
    %v4629 = vadd.f32 0.0, %v4628
    %v4630 = vpop.f32.mrb[0].mxu0
    %4631 = vmatprep.mubr.f32.mxu0 0.0
    %4632 = vmatmul.mubr.f32.gmra.mrb[0].mxu0 %v4286
    %v4633 = vpop.f32.mrb[0].mxu0
    %v4634 = vadd.f32 0.0, %v4633
    %v4635 = vpop.f32.mrb[0].mxu0
    %4636 = vmatprep.mubr.f32.mxu0 0.0
    %4637 = vmatmul.mubr.f32.gmra.mrb[0].mxu0 %v4289
    %v4638 = vpop.f32.mrb[0].mxu0
    %v4639 = vadd.f32 0.0, %v4638
    %v4640 = vpop.f32.mrb[0].mxu0
    %4641 = vmatprep.mubr.f32.mxu0 0.0
    %4642 = vmatmul.mubr.f32.gmra.mrb[0].mxu0 %v4290
    %v4643 = vpop.f32.mrb[0].mxu0
    %v4644 = vadd.f32 0.0, %v4643
    %v4645 = vpop.f32.mrb[0].mxu0
    %4646 = vdwg.mxu0
    %v4647 = vadd.f32 %v4180, %v4569
    %v4648 = vadd.f32 %v4185, %v4574
    %v4649 = vadd.f32 %v4190, %v4579
    %v4650 = vadd.f32 %v4195, %v4584
    %v4651 = vadd.f32 %v4200, %v4589
    %v4652 = vadd.f32 %v4205, %v4594
    %v4653 = vadd.f32 %v4210, %v4599
    %v4654 = vadd.f32 %v4215, %v4604
    %v4655 = vadd.f32 %v4220, %v4609
    %v4656 = vadd.f32 %v4225, %v4614
    %v4657 = vadd.f32 %v4230, %v4619
    %v4658 = vadd.f32 %v4235, %v4624
    %v4659 = vadd.f32 %v4240, %v4629
    %v4660 = vadd.f32 %v4245, %v4634
    %v4661 = vadd.f32 %v4250, %v4639
    %v4662 = vadd.f32 %v4255, %v4644
    %v4663 = vrot.slane %v3530, 3
    %v4664 = vrot.slane %v3531, 3
    %v4665 = vsel %vm2010, %v4663, %v4664
    %v4666 = vrot.slane 0.0, 3
    %v4667 = vsel %vm2010, %v4664, %v4666
    %v4668 = vrot.slane %v3532, 3
    %v4669 = vrot.slane %v3533, 3
    %v4670 = vsel %vm2010, %v4668, %v4669
    %v4671 = vsel %vm2010, %v4669, %v4666
    %v4672 = vrot.slane %v3534, 3
    %v4673 = vrot.slane %v3535, 3
    %v4674 = vsel %vm2010, %v4672, %v4673
    %v4675 = vsel %vm2010, %v4673, %v4666
    %v4676 = vrot.slane %v3536, 3
    %v4677 = vrot.slane %v3537, 3
    %v4678 = vsel %vm2010, %v4676, %v4677
    %v4679 = vsel %vm2010, %v4677, %v4666
    %v4680 = vrot.slane %v3538, 3
    %v4681 = vrot.slane %v3539, 3
    %v4682 = vsel %vm2010, %v4680, %v4681
    %v4683 = vsel %vm2010, %v4681, %v4666
    %v4684 = vrot.slane %v3540, 3
    %v4685 = vrot.slane %v3541, 3
    %v4686 = vsel %vm2010, %v4684, %v4685
    %v4687 = vsel %vm2010, %v4685, %v4666
    %v4688 = vrot.slane %v3542, 3
    %v4689 = vrot.slane %v3543, 3
    %v4690 = vsel %vm2010, %v4688, %v4689
    %v4691 = vsel %vm2010, %v4689, %v4666
    %v4692 = vrot.slane %v3544, 3
    %v4693 = vrot.slane %v3545, 3
    %v4694 = vsel %vm2010, %v4692, %v4693
    %v4695 = vsel %vm2010, %v4693, %v4666
    %s4712 = scalar_lea.vmem %s4, 384
    %v4713 = vld [vmem:[%s4712] sm:$0xff]
    %v4714 = vld [vmem:[%s4712 + $0x8] sm:$0xff]
    %v4715 = vld [vmem:[%s4712 + $0x10] sm:$0xff]
    %v4716 = vld [vmem:[%s4712 + $0x18] sm:$0xff]
    %v4717 = vld [vmem:[%s4712 + $0x20] sm:$0xff]
    %v4718 = vld [vmem:[%s4712 + $0x28] sm:$0xff]
    %v4719 = vld [vmem:[%s4712 + $0x30] sm:$0xff]
    %v4720 = vld [vmem:[%s4712 + $0x38] sm:$0xff]
    %v4721 = vld [vmem:[%s4712 + $0x40] sm:$0xff]
    %v4722 = vld [vmem:[%s4712 + $0x48] sm:$0xff]
    %v4723 = vld [vmem:[%s4712 + $0x50] sm:$0xff]
    %v4724 = vld [vmem:[%s4712 + $0x58] sm:$0xff]
    %v4725 = vld [vmem:[%s4712 + $0x60] sm:$0xff]
    %v4726 = vld [vmem:[%s4712 + $0x68] sm:$0xff]
    %v4727 = vld [vmem:[%s4712 + $0x70] sm:$0xff]
    %v4728 = vld [vmem:[%s4712 + $0x78] sm:$0xff]
    %4729 = vmatprep.subr.mxu0 0.0
    %4730 = vmatpush1.msra.mxu0 %v4713
    %4731 = vmatprep.subr.mxu0 0.0
    %4732 = vmatpush1.msra.mxu0 %v4714
    %4733 = vmatprep.subr.mxu0 0.0
    %4734 = vmatpush1.msra.mxu0 %v4715
    %4735 = vmatprep.subr.mxu0 0.0
    %4736 = vmatpush1.msra.mxu0 %v4716
    %4737 = vmatprep.subr.mxu0 0.0
    %4738 = vmatpush1.msra.mxu0 %v4717
    %4739 = vmatprep.subr.mxu0 0.0
    %4740 = vmatpush1.msra.mxu0 %v4718
    %4741 = vmatprep.subr.mxu0 0.0
    %4742 = vmatpush1.msra.mxu0 %v4719
    %4743 = vmatprep.subr.mxu0 0.0
    %4744 = vmatpush1.msra.mxu0 %v4720
    %4745 = vmatprep.subr.mxu0 0.0
    %4746 = vmatpush1.msra.mxu0 %v4721
    %4747 = vmatprep.subr.mxu0 0.0
    %4748 = vmatpush1.msra.mxu0 %v4722
    %4749 = vmatprep.subr.mxu0 0.0
    %4750 = vmatpush1.msra.mxu0 %v4723
    %4751 = vmatprep.subr.mxu0 0.0
    %4752 = vmatpush1.msra.mxu0 %v4724
    %4753 = vmatprep.subr.mxu0 0.0
    %4754 = vmatpush1.msra.mxu0 %v4725
    %4755 = vmatprep.subr.mxu0 0.0
    %4756 = vmatpush1.msra.mxu0 %v4726
    %4757 = vmatprep.subr.mxu0 0.0
    %4758 = vmatpush1.msra.mxu0 %v4727
    %4759 = vmatprep.subr.mxu0 0.0
    %4760 = vmatpush1.msra.mxu0 %v4728
    %4761 = vmatprep.subr.mxu0 0.0
    %4762 = vmatpush1.msra.mxu0 0.0
    %4763 = vmatprep.subr.mxu0 0.0
    %4764 = vmatpush1.msra.mxu0 0.0
    %4765 = vmatprep.subr.mxu0 0.0
    %4766 = vmatpush1.msra.mxu0 0.0
    %4767 = vmatprep.subr.mxu0 0.0
    %4768 = vmatpush1.msra.mxu0 0.0
    %4769 = vmatprep.subr.mxu0 0.0
    %4770 = vmatpush1.msra.mxu0 0.0
    %4771 = vmatprep.subr.mxu0 0.0
    %4772 = vmatpush1.msra.mxu0 0.0
    %4773 = vmatprep.subr.mxu0 0.0
    %4774 = vmatpush1.msra.mxu0 0.0
    %4775 = vmatprep.subr.mxu0 0.0
    %4776 = vmatpush1.msra.mxu0 0.0
    %4777 = vmatprep.subr.mxu0 0.0
    %4778 = vmatpush1.msra.mxu0 0.0
    %4779 = vmatprep.subr.mxu0 0.0
    %4780 = vmatpush1.msra.mxu0 0.0
    %4781 = vmatprep.subr.mxu0 0.0
    %4782 = vmatpush1.msra.mxu0 0.0
    %4783 = vmatprep.subr.mxu0 0.0
    %4784 = vmatpush1.msra.mxu0 0.0
    %4785 = vmatprep.subr.mxu0 0.0
    %4786 = vmatpush1.msra.mxu0 0.0
    %4787 = vmatprep.subr.mxu0 0.0
    %4788 = vmatpush1.msra.mxu0 0.0
    %4789 = vmatprep.subr.mxu0 0.0
    %4790 = vmatpush1.msra.mxu0 0.0
    %4791 = vmatprep.subr.mxu0 0.0
    %4792 = vmatpush1.msra.mxu0 0.0
    %4793 = vmatprep.mubr.f32.mxu0 0.0
    %4794 = vmatmul.mubr.f32.gmra.mrb[0].mxu0 %v4665
    %v4795 = vpop.f32.mrb[0].mxu0
    %v4796 = vadd.f32 0.0, %v4795
    %v4797 = vpop.f32.mrb[0].mxu0
    %4798 = vmatprep.mubr.f32.mxu0 0.0
    %4799 = vmatmul.mubr.f32.gmra.mrb[0].mxu0 %v4667
    %v4800 = vpop.f32.mrb[0].mxu0
    %v4801 = vadd.f32 0.0, %v4800
    %v4802 = vpop.f32.mrb[0].mxu0
    %4803 = vmatprep.mubr.f32.mxu0 0.0
    %4804 = vmatmul.mubr.f32.gmra.mrb[0].mxu0 %v4670
    %v4805 = vpop.f32.mrb[0].mxu0
    %v4806 = vadd.f32 0.0, %v4805
    %v4807 = vpop.f32.mrb[0].mxu0
    %4808 = vmatprep.mubr.f32.mxu0 0.0
    %4809 = vmatmul.mubr.f32.gmra.mrb[0].mxu0 %v4671
    %v4810 = vpop.f32.mrb[0].mxu0
    %v4811 = vadd.f32 0.0, %v4810
    %v4812 = vpop.f32.mrb[0].mxu0
    %4813 = vmatprep.mubr.f32.mxu0 0.0
    %4814 = vmatmul.mubr.f32.gmra.mrb[0].mxu0 %v4674
    %v4815 = vpop.f32.mrb[0].mxu0
    %v4816 = vadd.f32 0.0, %v4815
    %v4817 = vpop.f32.mrb[0].mxu0
    %4818 = vmatprep.mubr.f32.mxu0 0.0
    %4819 = vmatmul.mubr.f32.gmra.mrb[0].mxu0 %v4675
    %v4820 = vpop.f32.mrb[0].mxu0
    %v4821 = vadd.f32 0.0, %v4820
    %v4822 = vpop.f32.mrb[0].mxu0
    %4823 = vmatprep.mubr.f32.mxu0 0.0
    %4824 = vmatmul.mubr.f32.gmra.mrb[0].mxu0 %v4678
    %v4825 = vpop.f32.mrb[0].mxu0
    %v4826 = vadd.f32 0.0, %v4825
    %v4827 = vpop.f32.mrb[0].mxu0
    %4828 = vmatprep.mubr.f32.mxu0 0.0
    %4829 = vmatmul.mubr.f32.gmra.mrb[0].mxu0 %v4679
    %v4830 = vpop.f32.mrb[0].mxu0
    %v4831 = vadd.f32 0.0, %v4830
    %v4832 = vpop.f32.mrb[0].mxu0
    %4833 = vmatprep.mubr.f32.mxu0 0.0
    %4834 = vmatmul.mubr.f32.gmra.mrb[0].mxu0 %v4682
    %v4835 = vpop.f32.mrb[0].mxu0
    %v4836 = vadd.f32 0.0, %v4835
    %v4837 = vpop.f32.mrb[0].mxu0
    %4838 = vmatprep.mubr.f32.mxu0 0.0
    %4839 = vmatmul.mubr.f32.gmra.mrb[0].mxu0 %v4683
    %v4840 = vpop.f32.mrb[0].mxu0
    %v4841 = vadd.f32 0.0, %v4840
    %v4842 = vpop.f32.mrb[0].mxu0
    %4843 = vmatprep.mubr.f32.mxu0 0.0
    %4844 = vmatmul.mubr.f32.gmra.mrb[0].mxu0 %v4686
    %v4845 = vpop.f32.mrb[0].mxu0
    %v4846 = vadd.f32 0.0, %v4845
    %v4847 = vpop.f32.mrb[0].mxu0
    %4848 = vmatprep.mubr.f32.mxu0 0.0
    %4849 = vmatmul.mubr.f32.gmra.mrb[0].mxu0 %v4687
    %v4850 = vpop.f32.mrb[0].mxu0
    %v4851 = vadd.f32 0.0, %v4850
    %v4852 = vpop.f32.mrb[0].mxu0
    %4853 = vmatprep.mubr.f32.mxu0 0.0
    %4854 = vmatmul.mubr.f32.gmra.mrb[0].mxu0 %v4690
    %v4855 = vpop.f32.mrb[0].mxu0
    %v4856 = vadd.f32 0.0, %v4855
    %v4857 = vpop.f32.mrb[0].mxu0
    %4858 = vmatprep.mubr.f32.mxu0 0.0
    %4859 = vmatmul.mubr.f32.gmra.mrb[0].mxu0 %v4691
    %v4860 = vpop.f32.mrb[0].mxu0
    %v4861 = vadd.f32 0.0, %v4860
    %v4862 = vpop.f32.mrb[0].mxu0
    %4863 = vmatprep.mubr.f32.mxu0 0.0
    %4864 = vmatmul.mubr.f32.gmra.mrb[0].mxu0 %v4694
    %v4865 = vpop.f32.mrb[0].mxu0
    %v4866 = vadd.f32 0.0, %v4865
    %v4867 = vpop.f32.mrb[0].mxu0
    %4868 = vmatprep.mubr.f32.mxu0 0.0
    %4869 = vmatmul.mubr.f32.gmra.mrb[0].mxu0 %v4695
    %v4870 = vpop.f32.mrb[0].mxu0
    %v4871 = vadd.f32 0.0, %v4870
    %v4872 = vpop.f32.mrb[0].mxu0
    %4873 = vdwg.mxu0
    %v4874 = vadd.f32 %v4469, %v4796
    %v4875 = vadd.f32 %v4470, %v4801
    %v4876 = vadd.f32 %v4471, %v4806
    %v4877 = vadd.f32 %v4472, %v4811
    %v4878 = vadd.f32 %v4473, %v4816
    %v4879 = vadd.f32 %v4474, %v4821
    %v4880 = vadd.f32 %v4475, %v4826
    %v4881 = vadd.f32 %v4476, %v4831
    %v4882 = vadd.f32 %v4477, %v4836
    %v4883 = vadd.f32 %v4478, %v4841
    %v4884 = vadd.f32 %v4479, %v4846
    %v4885 = vadd.f32 %v4480, %v4851
    %v4886 = vadd.f32 %v4481, %v4856
    %v4887 = vadd.f32 %v4482, %v4861
    %v4888 = vadd.f32 %v4483, %v4866
    %v4889 = vadd.f32 %v4484, %v4871
    %s4890 = scalar_lea.vmem [#allocation8], 384
    %v4891 = vld [vmem:[%s4890] sm:$0xff]
    %v4892 = vld [vmem:[%s4890 + $0x8] sm:$0xff]
    %v4893 = vld [vmem:[%s4890 + $0x10] sm:$0xff]
    %v4894 = vld [vmem:[%s4890 + $0x18] sm:$0xff]
    %v4895 = vld [vmem:[%s4890 + $0x20] sm:$0xff]
    %v4896 = vld [vmem:[%s4890 + $0x28] sm:$0xff]
    %v4897 = vld [vmem:[%s4890 + $0x30] sm:$0xff]
    %v4898 = vld [vmem:[%s4890 + $0x38] sm:$0xff]
    %v4899 = vld [vmem:[%s4890 + $0x40] sm:$0xff]
    %v4900 = vld [vmem:[%s4890 + $0x48] sm:$0xff]
    %v4901 = vld [vmem:[%s4890 + $0x50] sm:$0xff]
    %v4902 = vld [vmem:[%s4890 + $0x58] sm:$0xff]
    %v4903 = vld [vmem:[%s4890 + $0x60] sm:$0xff]
    %v4904 = vld [vmem:[%s4890 + $0x68] sm:$0xff]
    %v4905 = vld [vmem:[%s4890 + $0x70] sm:$0xff]
    %v4906 = vld [vmem:[%s4890 + $0x78] sm:$0xff]
    %4907 = vmatprep.subr.mxu0 0.0
    %4908 = vmatpush1.msra.mxu0 %v4891
    %4909 = vmatprep.subr.mxu0 0.0
    %4910 = vmatpush1.msra.mxu0 %v4892
    %4911 = vmatprep.subr.mxu0 0.0
    %4912 = vmatpush1.msra.mxu0 %v4893
    %4913 = vmatprep.subr.mxu0 0.0
    %4914 = vmatpush1.msra.mxu0 %v4894
    %4915 = vmatprep.subr.mxu0 0.0
    %4916 = vmatpush1.msra.mxu0 %v4895
    %4917 = vmatprep.subr.mxu0 0.0
    %4918 = vmatpush1.msra.mxu0 %v4896
    %4919 = vmatprep.subr.mxu0 0.0
    %4920 = vmatpush1.msra.mxu0 %v4897
    %4921 = vmatprep.subr.mxu0 0.0
    %4922 = vmatpush1.msra.mxu0 %v4898
    %4923 = vmatprep.subr.mxu0 0.0
    %4924 = vmatpush1.msra.mxu0 %v4899
    %4925 = vmatprep.subr.mxu0 0.0
    %4926 = vmatpush1.msra.mxu0 %v4900
    %4927 = vmatprep.subr.mxu0 0.0
    %4928 = vmatpush1.msra.mxu0 %v4901
    %4929 = vmatprep.subr.mxu0 0.0
    %4930 = vmatpush1.msra.mxu0 %v4902
    %4931 = vmatprep.subr.mxu0 0.0
    %4932 = vmatpush1.msra.mxu0 %v4903
    %4933 = vmatprep.subr.mxu0 0.0
    %4934 = vmatpush1.msra.mxu0 %v4904
    %4935 = vmatprep.subr.mxu0 0.0
    %4936 = vmatpush1.msra.mxu0 %v4905
    %4937 = vmatprep.subr.mxu0 0.0
    %4938 = vmatpush1.msra.mxu0 %v4906
    %4939 = vmatprep.subr.mxu0 0.0
    %4940 = vmatpush1.msra.mxu0 0.0
    %4941 = vmatprep.subr.mxu0 0.0
    %4942 = vmatpush1.msra.mxu0 0.0
    %4943 = vmatprep.subr.mxu0 0.0
    %4944 = vmatpush1.msra.mxu0 0.0
    %4945 = vmatprep.subr.mxu0 0.0
    %4946 = vmatpush1.msra.mxu0 0.0
    %4947 = vmatprep.subr.mxu0 0.0
    %4948 = vmatpush1.msra.mxu0 0.0
    %4949 = vmatprep.subr.mxu0 0.0
    %4950 = vmatpush1.msra.mxu0 0.0
    %4951 = vmatprep.subr.mxu0 0.0
    %4952 = vmatpush1.msra.mxu0 0.0
    %4953 = vmatprep.subr.mxu0 0.0
    %4954 = vmatpush1.msra.mxu0 0.0
    %4955 = vmatprep.subr.mxu0 0.0
    %4956 = vmatpush1.msra.mxu0 0.0
    %4957 = vmatprep.subr.mxu0 0.0
    %4958 = vmatpush1.msra.mxu0 0.0
    %4959 = vmatprep.subr.mxu0 0.0
    %4960 = vmatpush1.msra.mxu0 0.0
    %4961 = vmatprep.subr.mxu0 0.0
    %4962 = vmatpush1.msra.mxu0 0.0
    %4963 = vmatprep.subr.mxu0 0.0
    %4964 = vmatpush1.msra.mxu0 0.0
    %4965 = vmatprep.subr.mxu0 0.0
    %4966 = vmatpush1.msra.mxu0 0.0
    %4967 = vmatprep.subr.mxu0 0.0
    %4968 = vmatpush1.msra.mxu0 0.0
    %4969 = vmatprep.subr.mxu0 0.0
    %4970 = vmatpush1.msra.mxu0 0.0
    %4971 = vmatprep.mubr.f32.mxu0 0.0
    %4972 = vmatmul.mubr.f32.gmra.mrb[0].mxu0 %v4665
    %v4973 = vpop.f32.mrb[0].mxu0
    %v4974 = vadd.f32 0.0, %v4973
    %v4975 = vpop.f32.mrb[0].mxu0
    %4976 = vmatprep.mubr.f32.mxu0 0.0
    %4977 = vmatmul.mubr.f32.gmra.mrb[0].mxu0 %v4667
    %v4978 = vpop.f32.mrb[0].mxu0
    %v4979 = vadd.f32 0.0, %v4978
    %v4980 = vpop.f32.mrb[0].mxu0
    %4981 = vmatprep.mubr.f32.mxu0 0.0
    %4982 = vmatmul.mubr.f32.gmra.mrb[0].mxu0 %v4670
    %v4983 = vpop.f32.mrb[0].mxu0
    %v4984 = vadd.f32 0.0, %v4983
    %v4985 = vpop.f32.mrb[0].mxu0
    %4986 = vmatprep.mubr.f32.mxu0 0.0
    %4987 = vmatmul.mubr.f32.gmra.mrb[0].mxu0 %v4671
    %v4988 = vpop.f32.mrb[0].mxu0
    %v4989 = vadd.f32 0.0, %v4988
    %v4990 = vpop.f32.mrb[0].mxu0
    %4991 = vmatprep.mubr.f32.mxu0 0.0
    %4992 = vmatmul.mubr.f32.gmra.mrb[0].mxu0 %v4674
    %v4993 = vpop.f32.mrb[0].mxu0
    %v4994 = vadd.f32 0.0, %v4993
    %v4995 = vpop.f32.mrb[0].mxu0
    %4996 = vmatprep.mubr.f32.mxu0 0.0
    %4997 = vmatmul.mubr.f32.gmra.mrb[0].mxu0 %v4675
    %v4998 = vpop.f32.mrb[0].mxu0
    %v4999 = vadd.f32 0.0, %v4998
    %v5000 = vpop.f32.mrb[0].mxu0
    %5001 = vmatprep.mubr.f32.mxu0 0.0
    %5002 = vmatmul.mubr.f32.gmra.mrb[0].mxu0 %v4678
    %v5003 = vpop.f32.mrb[0].mxu0
    %v5004 = vadd.f32 0.0, %v5003
    %v5005 = vpop.f32.mrb[0].mxu0
    %5006 = vmatprep.mubr.f32.mxu0 0.0
    %5007 = vmatmul.mubr.f32.gmra.mrb[0].mxu0 %v4679
    %v5008 = vpop.f32.mrb[0].mxu0
    %v5009 = vadd.f32 0.0, %v5008
    %v5010 = vpop.f32.mrb[0].mxu0
    %5011 = vmatprep.mubr.f32.mxu0 0.0
    %5012 = vmatmul.mubr.f32.gmra.mrb[0].mxu0 %v4682
    %v5013 = vpop.f32.mrb[0].mxu0
    %v5014 = vadd.f32 0.0, %v5013
    %v5015 = vpop.f32.mrb[0].mxu0
    %5016 = vmatprep.mubr.f32.mxu0 0.0
    %5017 = vmatmul.mubr.f32.gmra.mrb[0].mxu0 %v4683
    %v5018 = vpop.f32.mrb[0].mxu0
    %v5019 = vadd.f32 0.0, %v5018
    %v5020 = vpop.f32.mrb[0].mxu0
    %5021 = vmatprep.mubr.f32.mxu0 0.0
    %5022 = vmatmul.mubr.f32.gmra.mrb[0].mxu0 %v4686
    %v5023 = vpop.f32.mrb[0].mxu0
    %v5024 = vadd.f32 0.0, %v5023
    %v5025 = vpop.f32.mrb[0].mxu0
    %5026 = vmatprep.mubr.f32.mxu0 0.0
    %5027 = vmatmul.mubr.f32.gmra.mrb[0].mxu0 %v4687
    %v5028 = vpop.f32.mrb[0].mxu0
    %v5029 = vadd.f32 0.0, %v5028
    %v5030 = vpop.f32.mrb[0].mxu0
    %5031 = vmatprep.mubr.f32.mxu0 0.0
    %5032 = vmatmul.mubr.f32.gmra.mrb[0].mxu0 %v4690
    %v5033 = vpop.f32.mrb[0].mxu0
    %v5034 = vadd.f32 0.0, %v5033
    %v5035 = vpop.f32.mrb[0].mxu0
    %5036 = vmatprep.mubr.f32.mxu0 0.0
    %5037 = vmatmul.mubr.f32.gmra.mrb[0].mxu0 %v4691
    %v5038 = vpop.f32.mrb[0].mxu0
    %v5039 = vadd.f32 0.0, %v5038
    %v5040 = vpop.f32.mrb[0].mxu0
    %5041 = vmatprep.mubr.f32.mxu0 0.0
    %5042 = vmatmul.mubr.f32.gmra.mrb[0].mxu0 %v4694
    %v5043 = vpop.f32.mrb[0].mxu0
    %v5044 = vadd.f32 0.0, %v5043
    %v5045 = vpop.f32.mrb[0].mxu0
    %5046 = vmatprep.mubr.f32.mxu0 0.0
    %5047 = vmatmul.mubr.f32.gmra.mrb[0].mxu0 %v4695
    %v5048 = vpop.f32.mrb[0].mxu0
    %v5049 = vadd.f32 0.0, %v5048
    %v5050 = vpop.f32.mrb[0].mxu0
    %5051 = vdwg.mxu0
    %v5052 = vadd.f32 %v4647, %v4974
    %v5053 = vadd.f32 %v4648, %v4979
    %v5054 = vadd.f32 %v4649, %v4984
    %v5055 = vadd.f32 %v4650, %v4989
    %v5056 = vadd.f32 %v4651, %v4994
    %v5057 = vadd.f32 %v4652, %v4999
    %v5058 = vadd.f32 %v4653, %v5004
    %v5059 = vadd.f32 %v4654, %v5009
    %v5060 = vadd.f32 %v4655, %v5014
    %v5061 = vadd.f32 %v4656, %v5019
    %v5062 = vadd.f32 %v4657, %v5024
    %v5063 = vadd.f32 %v4658, %v5029
    %v5064 = vadd.f32 %v4659, %v5034
    %v5065 = vadd.f32 %v4660, %v5039
    %v5066 = vadd.f32 %v4661, %v5044
    %v5067 = vadd.f32 %v4662, %v5049
    %v5068 = vrot.slane %v3530, 4
    %v5069 = vrot.slane %v3531, 4
    %v5070 = vsel %vm2671, %v5068, %v5069
    %v5071 = vrot.slane 0.0, 4
    %v5072 = vsel %vm2671, %v5069, %v5071
    %v5073 = vrot.slane %v3532, 4
    %v5074 = vrot.slane %v3533, 4
    %v5075 = vsel %vm2671, %v5073, %v5074
    %v5076 = vsel %vm2671, %v5074, %v5071
    %v5077 = vrot.slane %v3534, 4
    %v5078 = vrot.slane %v3535, 4
    %v5079 = vsel %vm2671, %v5077, %v5078
    %v5080 = vsel %vm2671, %v5078, %v5071
    %v5081 = vrot.slane %v3536, 4
    %v5082 = vrot.slane %v3537, 4
    %v5083 = vsel %vm2671, %v5081, %v5082
    %v5084 = vsel %vm2671, %v5082, %v5071
    %v5085 = vrot.slane %v3538, 4
    %v5086 = vrot.slane %v3539, 4
    %v5087 = vsel %vm2671, %v5085, %v5086
    %v5088 = vsel %vm2671, %v5086, %v5071
    %v5089 = vrot.slane %v3540, 4
    %v5090 = vrot.slane %v3541, 4
    %v5091 = vsel %vm2671, %v5089, %v5090
    %v5092 = vsel %vm2671, %v5090, %v5071
    %v5093 = vrot.slane %v3542, 4
    %v5094 = vrot.slane %v3543, 4
    %v5095 = vsel %vm2671, %v5093, %v5094
    %v5096 = vsel %vm2671, %v5094, %v5071
    %v5097 = vrot.slane %v3544, 4
    %v5098 = vrot.slane %v3545, 4
    %v5099 = vsel %vm2671, %v5097, %v5098
    %v5100 = vsel %vm2671, %v5098, %v5071
    %s5117 = scalar_lea.vmem %s4, 512
    %v5118 = vld [vmem:[%s5117] sm:$0xff]
    %v5119 = vld [vmem:[%s5117 + $0x8] sm:$0xff]
    %v5120 = vld [vmem:[%s5117 + $0x10] sm:$0xff]
    %v5121 = vld [vmem:[%s5117 + $0x18] sm:$0xff]
    %v5122 = vld [vmem:[%s5117 + $0x20] sm:$0xff]
    %v5123 = vld [vmem:[%s5117 + $0x28] sm:$0xff]
    %v5124 = vld [vmem:[%s5117 + $0x30] sm:$0xff]
    %v5125 = vld [vmem:[%s5117 + $0x38] sm:$0xff]
    %v5126 = vld [vmem:[%s5117 + $0x40] sm:$0xff]
    %v5127 = vld [vmem:[%s5117 + $0x48] sm:$0xff]
    %v5128 = vld [vmem:[%s5117 + $0x50] sm:$0xff]
    %v5129 = vld [vmem:[%s5117 + $0x58] sm:$0xff]
    %v5130 = vld [vmem:[%s5117 + $0x60] sm:$0xff]
    %v5131 = vld [vmem:[%s5117 + $0x68] sm:$0xff]
    %v5132 = vld [vmem:[%s5117 + $0x70] sm:$0xff]
    %v5133 = vld [vmem:[%s5117 + $0x78] sm:$0xff]
    %5134 = vmatprep.subr.mxu0 0.0
    %5135 = vmatpush1.msra.mxu0 %v5118
    %5136 = vmatprep.subr.mxu0 0.0
    %5137 = vmatpush1.msra.mxu0 %v5119
    %5138 = vmatprep.subr.mxu0 0.0
    %5139 = vmatpush1.msra.mxu0 %v5120
    %5140 = vmatprep.subr.mxu0 0.0
    %5141 = vmatpush1.msra.mxu0 %v5121
    %5142 = vmatprep.subr.mxu0 0.0
    %5143 = vmatpush1.msra.mxu0 %v5122
    %5144 = vmatprep.subr.mxu0 0.0
    %5145 = vmatpush1.msra.mxu0 %v5123
    %5146 = vmatprep.subr.mxu0 0.0
    %5147 = vmatpush1.msra.mxu0 %v5124
    %5148 = vmatprep.subr.mxu0 0.0
    %5149 = vmatpush1.msra.mxu0 %v5125
    %5150 = vmatprep.subr.mxu0 0.0
    %5151 = vmatpush1.msra.mxu0 %v5126
    %5152 = vmatprep.subr.mxu0 0.0
    %5153 = vmatpush1.msra.mxu0 %v5127
    %5154 = vmatprep.subr.mxu0 0.0
    %5155 = vmatpush1.msra.mxu0 %v5128
    %5156 = vmatprep.subr.mxu0 0.0
    %5157 = vmatpush1.msra.mxu0 %v5129
    %5158 = vmatprep.subr.mxu0 0.0
    %5159 = vmatpush1.msra.mxu0 %v5130
    %5160 = vmatprep.subr.mxu0 0.0
    %5161 = vmatpush1.msra.mxu0 %v5131
    %5162 = vmatprep.subr.mxu0 0.0
    %5163 = vmatpush1.msra.mxu0 %v5132
    %5164 = vmatprep.subr.mxu0 0.0
    %5165 = vmatpush1.msra.mxu0 %v5133
    %5166 = vmatprep.subr.mxu0 0.0
    %5167 = vmatpush1.msra.mxu0 0.0
    %5168 = vmatprep.subr.mxu0 0.0
    %5169 = vmatpush1.msra.mxu0 0.0
    %5170 = vmatprep.subr.mxu0 0.0
    %5171 = vmatpush1.msra.mxu0 0.0
    %5172 = vmatprep.subr.mxu0 0.0
    %5173 = vmatpush1.msra.mxu0 0.0
    %5174 = vmatprep.subr.mxu0 0.0
    %5175 = vmatpush1.msra.mxu0 0.0
    %5176 = vmatprep.subr.mxu0 0.0
    %5177 = vmatpush1.msra.mxu0 0.0
    %5178 = vmatprep.subr.mxu0 0.0
    %5179 = vmatpush1.msra.mxu0 0.0
    %5180 = vmatprep.subr.mxu0 0.0
    %5181 = vmatpush1.msra.mxu0 0.0
    %5182 = vmatprep.subr.mxu0 0.0
    %5183 = vmatpush1.msra.mxu0 0.0
    %5184 = vmatprep.subr.mxu0 0.0
    %5185 = vmatpush1.msra.mxu0 0.0
    %5186 = vmatprep.subr.mxu0 0.0
    %5187 = vmatpush1.msra.mxu0 0.0
    %5188 = vmatprep.subr.mxu0 0.0
    %5189 = vmatpush1.msra.mxu0 0.0
    %5190 = vmatprep.subr.mxu0 0.0
    %5191 = vmatpush1.msra.mxu0 0.0
    %5192 = vmatprep.subr.mxu0 0.0
    %5193 = vmatpush1.msra.mxu0 0.0
    %5194 = vmatprep.subr.mxu0 0.0
    %5195 = vmatpush1.msra.mxu0 0.0
    %5196 = vmatprep.subr.mxu0 0.0
    %5197 = vmatpush1.msra.mxu0 0.0
    %5198 = vmatprep.mubr.f32.mxu0 0.0
    %5199 = vmatmul.mubr.f32.gmra.mrb[0].mxu0 %v5070
    %v5200 = vpop.f32.mrb[0].mxu0
    %v5201 = vadd.f32 0.0, %v5200
    %v5202 = vpop.f32.mrb[0].mxu0
    %5203 = vmatprep.mubr.f32.mxu0 0.0
    %5204 = vmatmul.mubr.f32.gmra.mrb[0].mxu0 %v5072
    %v5205 = vpop.f32.mrb[0].mxu0
    %v5206 = vadd.f32 0.0, %v5205
    %v5207 = vpop.f32.mrb[0].mxu0
    %5208 = vmatprep.mubr.f32.mxu0 0.0
    %5209 = vmatmul.mubr.f32.gmra.mrb[0].mxu0 %v5075
    %v5210 = vpop.f32.mrb[0].mxu0
    %v5211 = vadd.f32 0.0, %v5210
    %v5212 = vpop.f32.mrb[0].mxu0
    %5213 = vmatprep.mubr.f32.mxu0 0.0
    %5214 = vmatmul.mubr.f32.gmra.mrb[0].mxu0 %v5076
    %v5215 = vpop.f32.mrb[0].mxu0
    %v5216 = vadd.f32 0.0, %v5215
    %v5217 = vpop.f32.mrb[0].mxu0
    %5218 = vmatprep.mubr.f32.mxu0 0.0
    %5219 = vmatmul.mubr.f32.gmra.mrb[0].mxu0 %v5079
    %v5220 = vpop.f32.mrb[0].mxu0
    %v5221 = vadd.f32 0.0, %v5220
    %v5222 = vpop.f32.mrb[0].mxu0
    %5223 = vmatprep.mubr.f32.mxu0 0.0
    %5224 = vmatmul.mubr.f32.gmra.mrb[0].mxu0 %v5080
    %v5225 = vpop.f32.mrb[0].mxu0
    %v5226 = vadd.f32 0.0, %v5225
    %v5227 = vpop.f32.mrb[0].mxu0
    %5228 = vmatprep.mubr.f32.mxu0 0.0
    %5229 = vmatmul.mubr.f32.gmra.mrb[0].mxu0 %v5083
    %v5230 = vpop.f32.mrb[0].mxu0
    %v5231 = vadd.f32 0.0, %v5230
    %v5232 = vpop.f32.mrb[0].mxu0
    %5233 = vmatprep.mubr.f32.mxu0 0.0
    %5234 = vmatmul.mubr.f32.gmra.mrb[0].mxu0 %v5084
    %v5235 = vpop.f32.mrb[0].mxu0
    %v5236 = vadd.f32 0.0, %v5235
    %v5237 = vpop.f32.mrb[0].mxu0
    %5238 = vmatprep.mubr.f32.mxu0 0.0
    %5239 = vmatmul.mubr.f32.gmra.mrb[0].mxu0 %v5087
    %v5240 = vpop.f32.mrb[0].mxu0
    %v5241 = vadd.f32 0.0, %v5240
    %v5242 = vpop.f32.mrb[0].mxu0
    %5243 = vmatprep.mubr.f32.mxu0 0.0
    %5244 = vmatmul.mubr.f32.gmra.mrb[0].mxu0 %v5088
    %v5245 = vpop.f32.mrb[0].mxu0
    %v5246 = vadd.f32 0.0, %v5245
    %v5247 = vpop.f32.mrb[0].mxu0
    %5248 = vmatprep.mubr.f32.mxu0 0.0
    %5249 = vmatmul.mubr.f32.gmra.mrb[0].mxu0 %v5091
    %v5250 = vpop.f32.mrb[0].mxu0
    %v5251 = vadd.f32 0.0, %v5250
    %v5252 = vpop.f32.mrb[0].mxu0
    %5253 = vmatprep.mubr.f32.mxu0 0.0
    %5254 = vmatmul.mubr.f32.gmra.mrb[0].mxu0 %v5092
    %v5255 = vpop.f32.mrb[0].mxu0
    %v5256 = vadd.f32 0.0, %v5255
    %v5257 = vpop.f32.mrb[0].mxu0
    %5258 = vmatprep.mubr.f32.mxu0 0.0
    %5259 = vmatmul.mubr.f32.gmra.mrb[0].mxu0 %v5095
    %v5260 = vpop.f32.mrb[0].mxu0
    %v5261 = vadd.f32 0.0, %v5260
    %v5262 = vpop.f32.mrb[0].mxu0
    %5263 = vmatprep.mubr.f32.mxu0 0.0
    %5264 = vmatmul.mubr.f32.gmra.mrb[0].mxu0 %v5096
    %v5265 = vpop.f32.mrb[0].mxu0
    %v5266 = vadd.f32 0.0, %v5265
    %v5267 = vpop.f32.mrb[0].mxu0
    %5268 = vmatprep.mubr.f32.mxu0 0.0
    %5269 = vmatmul.mubr.f32.gmra.mrb[0].mxu0 %v5099
    %v5270 = vpop.f32.mrb[0].mxu0
    %v5271 = vadd.f32 0.0, %v5270
    %v5272 = vpop.f32.mrb[0].mxu0
    %5273 = vmatprep.mubr.f32.mxu0 0.0
    %5274 = vmatmul.mubr.f32.gmra.mrb[0].mxu0 %v5100
    %v5275 = vpop.f32.mrb[0].mxu0
    %v5276 = vadd.f32 0.0, %v5275
    %v5277 = vpop.f32.mrb[0].mxu0
    %5278 = vdwg.mxu0
    %v5279 = vadd.f32 %v4874, %v5201
    %v5280 = vadd.f32 %v4875, %v5206
    %v5281 = vadd.f32 %v4876, %v5211
    %v5282 = vadd.f32 %v4877, %v5216
    %v5283 = vadd.f32 %v4878, %v5221
    %v5284 = vadd.f32 %v4879, %v5226
    %v5285 = vadd.f32 %v4880, %v5231
    %v5286 = vadd.f32 %v4881, %v5236
    %v5287 = vadd.f32 %v4882, %v5241
    %v5288 = vadd.f32 %v4883, %v5246
    %v5289 = vadd.f32 %v4884, %v5251
    %v5290 = vadd.f32 %v4885, %v5256
    %v5291 = vadd.f32 %v4886, %v5261
    %v5292 = vadd.f32 %v4887, %v5266
    %v5293 = vadd.f32 %v4888, %v5271
    %v5294 = vadd.f32 %v4889, %v5276
    %s5295 = scalar_lea.vmem [#allocation8], 512
    %v5296 = vld [vmem:[%s5295] sm:$0xff]
    %v5297 = vld [vmem:[%s5295 + $0x8] sm:$0xff]
    %v5298 = vld [vmem:[%s5295 + $0x10] sm:$0xff]
    %v5299 = vld [vmem:[%s5295 + $0x18] sm:$0xff]
    %v5300 = vld [vmem:[%s5295 + $0x20] sm:$0xff]
    %v5301 = vld [vmem:[%s5295 + $0x28] sm:$0xff]
    %v5302 = vld [vmem:[%s5295 + $0x30] sm:$0xff]
    %v5303 = vld [vmem:[%s5295 + $0x38] sm:$0xff]
    %v5304 = vld [vmem:[%s5295 + $0x40] sm:$0xff]
    %v5305 = vld [vmem:[%s5295 + $0x48] sm:$0xff]
    %v5306 = vld [vmem:[%s5295 + $0x50] sm:$0xff]
    %v5307 = vld [vmem:[%s5295 + $0x58] sm:$0xff]
    %v5308 = vld [vmem:[%s5295 + $0x60] sm:$0xff]
    %v5309 = vld [vmem:[%s5295 + $0x68] sm:$0xff]
    %v5310 = vld [vmem:[%s5295 + $0x70] sm:$0xff]
    %v5311 = vld [vmem:[%s5295 + $0x78] sm:$0xff]
    %5312 = vmatprep.subr.mxu0 0.0
    %5313 = vmatpush1.msra.mxu0 %v5296
    %5314 = vmatprep.subr.mxu0 0.0
    %5315 = vmatpush1.msra.mxu0 %v5297
    %5316 = vmatprep.subr.mxu0 0.0
    %5317 = vmatpush1.msra.mxu0 %v5298
    %5318 = vmatprep.subr.mxu0 0.0
    %5319 = vmatpush1.msra.mxu0 %v5299
    %5320 = vmatprep.subr.mxu0 0.0
    %5321 = vmatpush1.msra.mxu0 %v5300
    %5322 = vmatprep.subr.mxu0 0.0
    %5323 = vmatpush1.msra.mxu0 %v5301
    %5324 = vmatprep.subr.mxu0 0.0
    %5325 = vmatpush1.msra.mxu0 %v5302
    %5326 = vmatprep.subr.mxu0 0.0
    %5327 = vmatpush1.msra.mxu0 %v5303
    %5328 = vmatprep.subr.mxu0 0.0
    %5329 = vmatpush1.msra.mxu0 %v5304
    %5330 = vmatprep.subr.mxu0 0.0
    %5331 = vmatpush1.msra.mxu0 %v5305
    %5332 = vmatprep.subr.mxu0 0.0
    %5333 = vmatpush1.msra.mxu0 %v5306
    %5334 = vmatprep.subr.mxu0 0.0
    %5335 = vmatpush1.msra.mxu0 %v5307
    %5336 = vmatprep.subr.mxu0 0.0
    %5337 = vmatpush1.msra.mxu0 %v5308
    %5338 = vmatprep.subr.mxu0 0.0
    %5339 = vmatpush1.msra.mxu0 %v5309
    %5340 = vmatprep.subr.mxu0 0.0
    %5341 = vmatpush1.msra.mxu0 %v5310
    %5342 = vmatprep.subr.mxu0 0.0
    %5343 = vmatpush1.msra.mxu0 %v5311
    %5344 = vmatprep.subr.mxu0 0.0
    %5345 = vmatpush1.msra.mxu0 0.0
    %5346 = vmatprep.subr.mxu0 0.0
    %5347 = vmatpush1.msra.mxu0 0.0
    %5348 = vmatprep.subr.mxu0 0.0
    %5349 = vmatpush1.msra.mxu0 0.0
    %5350 = vmatprep.subr.mxu0 0.0
    %5351 = vmatpush1.msra.mxu0 0.0
    %5352 = vmatprep.subr.mxu0 0.0
    %5353 = vmatpush1.msra.mxu0 0.0
    %5354 = vmatprep.subr.mxu0 0.0
    %5355 = vmatpush1.msra.mxu0 0.0
    %5356 = vmatprep.subr.mxu0 0.0
    %5357 = vmatpush1.msra.mxu0 0.0
    %5358 = vmatprep.subr.mxu0 0.0
    %5359 = vmatpush1.msra.mxu0 0.0
    %5360 = vmatprep.subr.mxu0 0.0
    %5361 = vmatpush1.msra.mxu0 0.0
    %5362 = vmatprep.subr.mxu0 0.0
    %5363 = vmatpush1.msra.mxu0 0.0
    %5364 = vmatprep.subr.mxu0 0.0
    %5365 = vmatpush1.msra.mxu0 0.0
    %5366 = vmatprep.subr.mxu0 0.0
    %5367 = vmatpush1.msra.mxu0 0.0
    %5368 = vmatprep.subr.mxu0 0.0
    %5369 = vmatpush1.msra.mxu0 0.0
    %5370 = vmatprep.subr.mxu0 0.0
    %5371 = vmatpush1.msra.mxu0 0.0
    %5372 = vmatprep.subr.mxu0 0.0
    %5373 = vmatpush1.msra.mxu0 0.0
    %5374 = vmatprep.subr.mxu0 0.0
    %5375 = vmatpush1.msra.mxu0 0.0
    %5376 = vmatprep.mubr.f32.mxu0 0.0
    %5377 = vmatmul.mubr.f32.gmra.mrb[0].mxu0 %v5070
    %v5378 = vpop.f32.mrb[0].mxu0
    %v5379 = vadd.f32 0.0, %v5378
    %v5380 = vpop.f32.mrb[0].mxu0
    %5381 = vmatprep.mubr.f32.mxu0 0.0
    %5382 = vmatmul.mubr.f32.gmra.mrb[0].mxu0 %v5072
    %v5383 = vpop.f32.mrb[0].mxu0
    %v5384 = vadd.f32 0.0, %v5383
    %v5385 = vpop.f32.mrb[0].mxu0
    %5386 = vmatprep.mubr.f32.mxu0 0.0
    %5387 = vmatmul.mubr.f32.gmra.mrb[0].mxu0 %v5075
    %v5388 = vpop.f32.mrb[0].mxu0
    %v5389 = vadd.f32 0.0, %v5388
    %v5390 = vpop.f32.mrb[0].mxu0
    %5391 = vmatprep.mubr.f32.mxu0 0.0
    %5392 = vmatmul.mubr.f32.gmra.mrb[0].mxu0 %v5076
    %v5393 = vpop.f32.mrb[0].mxu0
    %v5394 = vadd.f32 0.0, %v5393
    %v5395 = vpop.f32.mrb[0].mxu0
    %5396 = vmatprep.mubr.f32.mxu0 0.0
    %5397 = vmatmul.mubr.f32.gmra.mrb[0].mxu0 %v5079
    %v5398 = vpop.f32.mrb[0].mxu0
    %v5399 = vadd.f32 0.0, %v5398
    %v5400 = vpop.f32.mrb[0].mxu0
    %5401 = vmatprep.mubr.f32.mxu0 0.0
    %5402 = vmatmul.mubr.f32.gmra.mrb[0].mxu0 %v5080
    %v5403 = vpop.f32.mrb[0].mxu0
    %v5404 = vadd.f32 0.0, %v5403
    %v5405 = vpop.f32.mrb[0].mxu0
    %5406 = vmatprep.mubr.f32.mxu0 0.0
    %5407 = vmatmul.mubr.f32.gmra.mrb[0].mxu0 %v5083
    %v5408 = vpop.f32.mrb[0].mxu0
    %v5409 = vadd.f32 0.0, %v5408
    %v5410 = vpop.f32.mrb[0].mxu0
    %5411 = vmatprep.mubr.f32.mxu0 0.0
    %5412 = vmatmul.mubr.f32.gmra.mrb[0].mxu0 %v5084
    %v5413 = vpop.f32.mrb[0].mxu0
    %v5414 = vadd.f32 0.0, %v5413
    %v5415 = vpop.f32.mrb[0].mxu0
    %5416 = vmatprep.mubr.f32.mxu0 0.0
    %5417 = vmatmul.mubr.f32.gmra.mrb[0].mxu0 %v5087
    %v5418 = vpop.f32.mrb[0].mxu0
    %v5419 = vadd.f32 0.0, %v5418
    %v5420 = vpop.f32.mrb[0].mxu0
    %5421 = vmatprep.mubr.f32.mxu0 0.0
    %5422 = vmatmul.mubr.f32.gmra.mrb[0].mxu0 %v5088
    %v5423 = vpop.f32.mrb[0].mxu0
    %v5424 = vadd.f32 0.0, %v5423
    %v5425 = vpop.f32.mrb[0].mxu0
    %5426 = vmatprep.mubr.f32.mxu0 0.0
    %5427 = vmatmul.mubr.f32.gmra.mrb[0].mxu0 %v5091
    %v5428 = vpop.f32.mrb[0].mxu0
    %v5429 = vadd.f32 0.0, %v5428
    %v5430 = vpop.f32.mrb[0].mxu0
    %5431 = vmatprep.mubr.f32.mxu0 0.0
    %5432 = vmatmul.mubr.f32.gmra.mrb[0].mxu0 %v5092
    %v5433 = vpop.f32.mrb[0].mxu0
    %v5434 = vadd.f32 0.0, %v5433
    %v5435 = vpop.f32.mrb[0].mxu0
    %5436 = vmatprep.mubr.f32.mxu0 0.0
    %5437 = vmatmul.mubr.f32.gmra.mrb[0].mxu0 %v5095
    %v5438 = vpop.f32.mrb[0].mxu0
    %v5439 = vadd.f32 0.0, %v5438
    %v5440 = vpop.f32.mrb[0].mxu0
    %5441 = vmatprep.mubr.f32.mxu0 0.0
    %5442 = vmatmul.mubr.f32.gmra.mrb[0].mxu0 %v5096
    %v5443 = vpop.f32.mrb[0].mxu0
    %v5444 = vadd.f32 0.0, %v5443
    %v5445 = vpop.f32.mrb[0].mxu0
    %5446 = vmatprep.mubr.f32.mxu0 0.0
    %5447 = vmatmul.mubr.f32.gmra.mrb[0].mxu0 %v5099
    %v5448 = vpop.f32.mrb[0].mxu0
    %v5449 = vadd.f32 0.0, %v5448
    %v5450 = vpop.f32.mrb[0].mxu0
    %5451 = vmatprep.mubr.f32.mxu0 0.0
    %5452 = vmatmul.mubr.f32.gmra.mrb[0].mxu0 %v5100
    %v5453 = vpop.f32.mrb[0].mxu0
    %v5454 = vadd.f32 0.0, %v5453
    %v5455 = vpop.f32.mrb[0].mxu0
    %5456 = vdwg.mxu0
    %v5457 = vadd.f32 %v5052, %v5379
    %v5458 = vadd.f32 %v5053, %v5384
    %v5459 = vadd.f32 %v5054, %v5389
    %v5460 = vadd.f32 %v5055, %v5394
    %v5461 = vadd.f32 %v5056, %v5399
    %v5462 = vadd.f32 %v5057, %v5404
    %v5463 = vadd.f32 %v5058, %v5409
    %v5464 = vadd.f32 %v5059, %v5414
    %v5465 = vadd.f32 %v5060, %v5419
    %v5466 = vadd.f32 %v5061, %v5424
    %v5467 = vadd.f32 %v5062, %v5429
    %v5468 = vadd.f32 %v5063, %v5434
    %v5469 = vadd.f32 %v5064, %v5439
    %v5470 = vadd.f32 %v5065, %v5444
    %v5471 = vadd.f32 %v5066, %v5449
    %v5472 = vadd.f32 %v5067, %v5454
    %v5473 = vmax.f32 %v5279, %v5457
    %v5474 = vmax.f32 %v5280, %v5458
    %v5475 = vmax.f32 %v5281, %v5459
    %v5476 = vmax.f32 %v5282, %v5460
    %v5477 = vmax.f32 %v5283, %v5461
    %v5478 = vmax.f32 %v5284, %v5462
    %v5479 = vmax.f32 %v5285, %v5463
    %v5480 = vmax.f32 %v5286, %v5464
    %v5481 = vmax.f32 %v5287, %v5465
    %v5482 = vmax.f32 %v5288, %v5466
    %v5483 = vmax.f32 %v5289, %v5467
    %v5484 = vmax.f32 %v5290, %v5468
    %v5485 = vmax.f32 %v5291, %v5469
    %v5486 = vmax.f32 %v5292, %v5470
    %v5487 = vmax.f32 %v5293, %v5471
    %v5488 = vmax.f32 %v5294, %v5472
    %v5489 = vld [vmem:[%s6] sm:$0x1]
    %v5491 = vlaneseq
    %v5492 = vshrl.u32 %v5491, 7
    %v5493 = vsub.s32 0, %v5492
    %v5494 = vrot.slane %v5489, %v5493
    %v5496 = vadd.f32 %v5473, %v5494
    %v5497 = vadd.f32 %v5474, %v5494
    %v5498 = vadd.f32 %v5475, %v5494
    %v5499 = vadd.f32 %v5476, %v5494
    %v5500 = vadd.f32 %v5477, %v5494
    %v5501 = vadd.f32 %v5478, %v5494
    %v5502 = vadd.f32 %v5479, %v5494
    %v5503 = vadd.f32 %v5480, %v5494
    %v5504 = vadd.f32 %v5481, %v5494
    %v5505 = vadd.f32 %v5482, %v5494
    %v5506 = vadd.f32 %v5483, %v5494
    %v5507 = vadd.f32 %v5484, %v5494
    %v5508 = vadd.f32 %v5485, %v5494
    %v5509 = vadd.f32 %v5486, %v5494
    %v5510 = vadd.f32 %v5487, %v5494
    %v5511 = vadd.f32 %v5488, %v5494
    %v5512 = vmax.f32 %v5496, 0.0
    %v5513 = vmax.f32 %v5497, 0.0
    %v5514 = vmax.f32 %v5498, 0.0
    %v5515 = vmax.f32 %v5499, 0.0
    %v5516 = vmax.f32 %v5500, 0.0
    %v5517 = vmax.f32 %v5501, 0.0
    %v5518 = vmax.f32 %v5502, 0.0
    %v5519 = vmax.f32 %v5503, 0.0
    %v5520 = vmax.f32 %v5504, 0.0
    %v5521 = vmax.f32 %v5505, 0.0
    %v5522 = vmax.f32 %v5506, 0.0
    %v5523 = vmax.f32 %v5507, 0.0
    %v5524 = vmax.f32 %v5508, 0.0
    %v5525 = vmax.f32 %v5509, 0.0
    %v5526 = vmax.f32 %v5510, 0.0
    %v5527 = vmax.f32 %v5511, 0.0
    %5528 = vst [vmem:[#allocation3] sm:$0xff] %v5512
    %5529 = vst [vmem:[#allocation3 + $0x8] sm:$0xff] %v5513
    %5530 = vst [vmem:[#allocation3 + $0x10] sm:$0xff] %v5514
    %5531 = vst [vmem:[#allocation3 + $0x18] sm:$0xff] %v5515
    %5532 = vst [vmem:[#allocation3 + $0x20] sm:$0xff] %v5516
    %5533 = vst [vmem:[#allocation3 + $0x28] sm:$0xff] %v5517
    %5534 = vst [vmem:[#allocation3 + $0x30] sm:$0xff] %v5518
    %5535 = vst [vmem:[#allocation3 + $0x38] sm:$0xff] %v5519
    %5536 = vst [vmem:[#allocation3 + $0x40] sm:$0xff] %v5520
    %5537 = vst [vmem:[#allocation3 + $0x48] sm:$0xff] %v5521
    %5538 = vst [vmem:[#allocation3 + $0x50] sm:$0xff] %v5522
    %5539 = vst [vmem:[#allocation3 + $0x58] sm:$0xff] %v5523
    %5540 = vst [vmem:[#allocation3 + $0x60] sm:$0xff] %v5524
    %5541 = vst [vmem:[#allocation3 + $0x68] sm:$0xff] %v5525
    %5542 = vst [vmem:[#allocation3 + $0x70] sm:$0xff] %v5526
    %5543 = vst [vmem:[#allocation3 + $0x78] sm:$0xff] %v5527
    %v5544 = vld [vmem:[#allocation3] ss:$2 sm:$0xff]
    %s5545 = scalar_lea.vmem [#allocation3], 16
    %v5546 = vld [vmem:[%s5545] ss:$2 sm:$0xff]
    %s5547 = scalar_lea.vmem [#allocation3], 32
    %v5548 = vld [vmem:[%s5547] ss:$2 sm:$0xff]
    %s5549 = scalar_lea.vmem [#allocation3], 48
    %v5550 = vld [vmem:[%s5549] ss:$2 sm:$0xff]
    %s5551 = scalar_lea.vmem [#allocation3], 64
    %v5552 = vld [vmem:[%s5551] ss:$2 sm:$0xff]
    %s5553 = scalar_lea.vmem [#allocation3], 80
    %v5554 = vld [vmem:[%s5553] ss:$2 sm:$0xff]
    %s5555 = scalar_lea.vmem [#allocation3], 96
    %v5556 = vld [vmem:[%s5555] ss:$2 sm:$0xff]
    %s5557 = scalar_lea.vmem [#allocation3], 112
    %v5558 = vld [vmem:[%s5557] ss:$2 sm:$0xff]
    %s5559 = scalar_lea.vmem [#allocation3], 1
    %v5560 = vld [vmem:[%s5559] ss:$2 sm:$0xff]
    %s5561 = scalar_lea.vmem [#allocation3], 17
    %v5562 = vld [vmem:[%s5561] ss:$2 sm:$0xff]
    %s5563 = scalar_lea.vmem [#allocation3], 33
    %v5564 = vld [vmem:[%s5563] ss:$2 sm:$0xff]
    %s5565 = scalar_lea.vmem [#allocation3], 49
    %v5566 = vld [vmem:[%s5565] ss:$2 sm:$0xff]
    %s5567 = scalar_lea.vmem [#allocation3], 65
    %v5568 = vld [vmem:[%s5567] ss:$2 sm:$0xff]
    %s5569 = scalar_lea.vmem [#allocation3], 81
    %v5570 = vld [vmem:[%s5569] ss:$2 sm:$0xff]
    %s5571 = scalar_lea.vmem [#allocation3], 97
    %v5572 = vld [vmem:[%s5571] ss:$2 sm:$0xff]
    %s5573 = scalar_lea.vmem [#allocation3], 113
    %v5574 = vld [vmem:[%s5573] ss:$2 sm:$0xff]
    %v5575 = vmax.f32 %v5544, %v5560
    %v5576 = vmax.f32 %v5546, %v5562
    %v5577 = vmax.f32 %v5548, %v5564
    %v5578 = vmax.f32 %v5550, %v5566
    %v5579 = vmax.f32 %v5552, %v5568
    %v5580 = vmax.f32 %v5554, %v5570
    %v5581 = vmax.f32 %v5556, %v5572
    %v5582 = vmax.f32 %v5558, %v5574
    %v5583 = vld [vmem:[#allocation9] sm:$0xff]
    %v5584 = vld [vmem:[#allocation9 + $0x8] sm:$0xff]
    %v5585 = vld [vmem:[#allocation9 + $0x10] sm:$0xff]
    %v5586 = vld [vmem:[#allocation9 + $0x18] sm:$0xff]
    %v5587 = vld [vmem:[#allocation9 + $0x20] sm:$0xff]
    %v5588 = vld [vmem:[#allocation9 + $0x28] sm:$0xff]
    %v5589 = vld [vmem:[#allocation9 + $0x30] sm:$0xff]
    %v5590 = vld [vmem:[#allocation9 + $0x38] sm:$0xff]
    %v5591 = vld [vmem:[#allocation9 + $0x40] sm:$0xff]
    %v5592 = vld [vmem:[#allocation9 + $0x48] sm:$0xff]
    %v5593 = vld [vmem:[#allocation9 + $0x50] sm:$0xff]
    %v5594 = vld [vmem:[#allocation9 + $0x58] sm:$0xff]
    %v5595 = vld [vmem:[#allocation9 + $0x60] sm:$0xff]
    %v5596 = vld [vmem:[#allocation9 + $0x68] sm:$0xff]
    %v5597 = vld [vmem:[#allocation9 + $0x70] sm:$0xff]
    %v5598 = vld [vmem:[#allocation9 + $0x78] sm:$0xff]
    %s5599 = scalar_lea.vmem [#allocation9], 128
    %v5600 = vld [vmem:[%s5599] sm:$0xff]
    %v5601 = vld [vmem:[%s5599 + $0x8] sm:$0xff]
    %v5602 = vld [vmem:[%s5599 + $0x10] sm:$0xff]
    %v5603 = vld [vmem:[%s5599 + $0x18] sm:$0xff]
    %v5604 = vld [vmem:[%s5599 + $0x20] sm:$0xff]
    %v5605 = vld [vmem:[%s5599 + $0x28] sm:$0xff]
    %v5606 = vld [vmem:[%s5599 + $0x30] sm:$0xff]
    %v5607 = vld [vmem:[%s5599 + $0x38] sm:$0xff]
    %v5608 = vld [vmem:[%s5599 + $0x40] sm:$0xff]
    %v5609 = vld [vmem:[%s5599 + $0x48] sm:$0xff]
    %v5610 = vld [vmem:[%s5599 + $0x50] sm:$0xff]
    %v5611 = vld [vmem:[%s5599 + $0x58] sm:$0xff]
    %v5612 = vld [vmem:[%s5599 + $0x60] sm:$0xff]
    %v5613 = vld [vmem:[%s5599 + $0x68] sm:$0xff]
    %v5614 = vld [vmem:[%s5599 + $0x70] sm:$0xff]
    %v5615 = vld [vmem:[%s5599 + $0x78] sm:$0xff]
    %v5624 = vrot.slane %v5575, 1
    %vm5625 = vcmask 1041409
    %v5626 = vsel %vm5625, %v5576, %v5624
    %v5627 = vrot.slane %v5577, 7
    %vm5628 = vcmask 1042434
    %v5629 = vsel %vm5628, %v5627, %v5626
    %v5630 = vrot.slane %v5578, 6
    %vm5631 = vcmask 1043459
    %v5632 = vsel %vm5631, %v5630, %v5629
    %v5633 = vrot.slane %v5579, 5
    %vm5634 = vcmask 1044484
    %v5635 = vsel %vm5634, %v5633, %v5632
    %v5636 = vrot.slane %v5580, 4
    %vm5637 = vcmask 1045509
    %v5638 = vsel %vm5637, %v5636, %v5635
    %v5639 = vrot.slane %v5581, 3
    %vm5640 = vcmask 1046534
    %v5641 = vsel %vm5640, %v5639, %v5638
    %v5642 = vrot.slane %v5582, 2
    %vm5643 = vcmask 1047559
    %v5644 = vsel %vm5643, %v5642, %v5641
    %5646 = vmatprep.subr.mxu0 0.0
    %5647 = vmatpush1.msra.mxu0 %v5600
    %5648 = vmatprep.subr.mxu0 0.0
    %5649 = vmatpush1.msra.mxu0 %v5601
    %5650 = vmatprep.subr.mxu0 0.0
    %5651 = vmatpush1.msra.mxu0 %v5602
    %5652 = vmatprep.subr.mxu0 0.0
    %5653 = vmatpush1.msra.mxu0 %v5603
    %5654 = vmatprep.subr.mxu0 0.0
    %5655 = vmatpush1.msra.mxu0 %v5604
    %5656 = vmatprep.subr.mxu0 0.0
    %5657 = vmatpush1.msra.mxu0 %v5605
    %5658 = vmatprep.subr.mxu0 0.0
    %5659 = vmatpush1.msra.mxu0 %v5606
    %5660 = vmatprep.subr.mxu0 0.0
    %5661 = vmatpush1.msra.mxu0 %v5607
    %5662 = vmatprep.subr.mxu0 0.0
    %5663 = vmatpush1.msra.mxu0 %v5608
    %5664 = vmatprep.subr.mxu0 0.0
    %5665 = vmatpush1.msra.mxu0 %v5609
    %5666 = vmatprep.subr.mxu0 0.0
    %5667 = vmatpush1.msra.mxu0 %v5610
    %5668 = vmatprep.subr.mxu0 0.0
    %5669 = vmatpush1.msra.mxu0 %v5611
    %5670 = vmatprep.subr.mxu0 0.0
    %5671 = vmatpush1.msra.mxu0 %v5612
    %5672 = vmatprep.subr.mxu0 0.0
    %5673 = vmatpush1.msra.mxu0 %v5613
    %5674 = vmatprep.subr.mxu0 0.0
    %5675 = vmatpush1.msra.mxu0 %v5614
    %5676 = vmatprep.subr.mxu0 0.0
    %5677 = vmatpush1.msra.mxu0 %v5615
    %5678 = vmatprep.subr.mxu0 0.0
    %5679 = vmatpush1.msra.mxu0 0.0
    %5680 = vmatprep.subr.mxu0 0.0
    %5681 = vmatpush1.msra.mxu0 0.0
    %5682 = vmatprep.subr.mxu0 0.0
    %5683 = vmatpush1.msra.mxu0 0.0
    %5684 = vmatprep.subr.mxu0 0.0
    %5685 = vmatpush1.msra.mxu0 0.0
    %5686 = vmatprep.subr.mxu0 0.0
    %5687 = vmatpush1.msra.mxu0 0.0
    %5688 = vmatprep.subr.mxu0 0.0
    %5689 = vmatpush1.msra.mxu0 0.0
    %5690 = vmatprep.subr.mxu0 0.0
    %5691 = vmatpush1.msra.mxu0 0.0
    %5692 = vmatprep.subr.mxu0 0.0
    %5693 = vmatpush1.msra.mxu0 0.0
    %5694 = vmatprep.subr.mxu0 0.0
    %5695 = vmatpush1.msra.mxu0 0.0
    %5696 = vmatprep.subr.mxu0 0.0
    %5697 = vmatpush1.msra.mxu0 0.0
    %5698 = vmatprep.subr.mxu0 0.0
    %5699 = vmatpush1.msra.mxu0 0.0
    %5700 = vmatprep.subr.mxu0 0.0
    %5701 = vmatpush1.msra.mxu0 0.0
    %5702 = vmatprep.subr.mxu0 0.0
    %5703 = vmatpush1.msra.mxu0 0.0
    %5704 = vmatprep.subr.mxu0 0.0
    %5705 = vmatpush1.msra.mxu0 0.0
    %5706 = vmatprep.subr.mxu0 0.0
    %5707 = vmatpush1.msra.mxu0 0.0
    %5708 = vmatprep.subr.mxu0 0.0
    %5709 = vmatpush1.msra.mxu0 0.0
    %5710 = vmatprep.mubr.f32.mxu0 0.0
    %5711 = vmatmul.mubr.f32.gmra.mrb[0].mxu0 %v5644
    %v5712 = vpop.f32.mrb[0].mxu0
    %v5713 = vadd.f32 0.0, %v5712
    %v5714 = vpop.f32.mrb[0].mxu0
    %5715 = vdwg.mxu0
    %v5716 = vrot.slane %v5576, 7
    %v5717 = vsel %vm5625, %v5716, %v5575
    %v5718 = vrot.slane %v5577, 6
    %v5719 = vsel %vm5628, %v5718, %v5717
    %v5720 = vrot.slane %v5578, 5
    %v5721 = vsel %vm5631, %v5720, %v5719
    %v5722 = vrot.slane %v5579, 4
    %v5723 = vsel %vm5634, %v5722, %v5721
    %v5724 = vrot.slane %v5580, 3
    %v5725 = vsel %vm5637, %v5724, %v5723
    %v5726 = vrot.slane %v5581, 2
    %v5727 = vsel %vm5640, %v5726, %v5725
    %v5728 = vrot.slane %v5582, 1
    %v5729 = vsel %vm5643, %v5728, %v5727
    %5731 = vmatprep.subr.mxu0 0.0
    %5732 = vmatpush1.msra.mxu0 %v5583
    %5733 = vmatprep.subr.mxu0 0.0
    %5734 = vmatpush1.msra.mxu0 %v5584
    %5735 = vmatprep.subr.mxu0 0.0
    %5736 = vmatpush1.msra.mxu0 %v5585
    %5737 = vmatprep.subr.mxu0 0.0
    %5738 = vmatpush1.msra.mxu0 %v5586
    %5739 = vmatprep.subr.mxu0 0.0
    %5740 = vmatpush1.msra.mxu0 %v5587
    %5741 = vmatprep.subr.mxu0 0.0
    %5742 = vmatpush1.msra.mxu0 %v5588
    %5743 = vmatprep.subr.mxu0 0.0
    %5744 = vmatpush1.msra.mxu0 %v5589
    %5745 = vmatprep.subr.mxu0 0.0
    %5746 = vmatpush1.msra.mxu0 %v5590
    %5747 = vmatprep.subr.mxu0 0.0
    %5748 = vmatpush1.msra.mxu0 %v5591
    %5749 = vmatprep.subr.mxu0 0.0
    %5750 = vmatpush1.msra.mxu0 %v5592
    %5751 = vmatprep.subr.mxu0 0.0
    %5752 = vmatpush1.msra.mxu0 %v5593
    %5753 = vmatprep.subr.mxu0 0.0
    %5754 = vmatpush1.msra.mxu0 %v5594
    %5755 = vmatprep.subr.mxu0 0.0
    %5756 = vmatpush1.msra.mxu0 %v5595
    %5757 = vmatprep.subr.mxu0 0.0
    %5758 = vmatpush1.msra.mxu0 %v5596
    %5759 = vmatprep.subr.mxu0 0.0
    %5760 = vmatpush1.msra.mxu0 %v5597
    %5761 = vmatprep.subr.mxu0 0.0
    %5762 = vmatpush1.msra.mxu0 %v5598
    %5763 = vmatprep.subr.mxu0 0.0
    %5764 = vmatpush1.msra.mxu0 0.0
    %5765 = vmatprep.subr.mxu0 0.0
    %5766 = vmatpush1.msra.mxu0 0.0
    %5767 = vmatprep.subr.mxu0 0.0
    %5768 = vmatpush1.msra.mxu0 0.0
    %5769 = vmatprep.subr.mxu0 0.0
    %5770 = vmatpush1.msra.mxu0 0.0
    %5771 = vmatprep.subr.mxu0 0.0
    %5772 = vmatpush1.msra.mxu0 0.0
    %5773 = vmatprep.subr.mxu0 0.0
    %5774 = vmatpush1.msra.mxu0 0.0
    %5775 = vmatprep.subr.mxu0 0.0
    %5776 = vmatpush1.msra.mxu0 0.0
    %5777 = vmatprep.subr.mxu0 0.0
    %5778 = vmatpush1.msra.mxu0 0.0
    %5779 = vmatprep.subr.mxu0 0.0
    %5780 = vmatpush1.msra.mxu0 0.0
    %5781 = vmatprep.subr.mxu0 0.0
    %5782 = vmatpush1.msra.mxu0 0.0
    %5783 = vmatprep.subr.mxu0 0.0
    %5784 = vmatpush1.msra.mxu0 0.0
    %5785 = vmatprep.subr.mxu0 0.0
    %5786 = vmatpush1.msra.mxu0 0.0
    %5787 = vmatprep.subr.mxu0 0.0
    %5788 = vmatpush1.msra.mxu0 0.0
    %5789 = vmatprep.subr.mxu0 0.0
    %5790 = vmatpush1.msra.mxu0 0.0
    %5791 = vmatprep.subr.mxu0 0.0
    %5792 = vmatpush1.msra.mxu0 0.0
    %5793 = vmatprep.subr.mxu0 0.0
    %5794 = vmatpush1.msra.mxu0 0.0
    %5795 = vmatprep.mubr.f32.mxu0 0.0
    %5796 = vmatmul.mubr.f32.gmra.mrb[0].mxu0 %v5729
    %v5797 = vpop.f32.mrb[0].mxu0
    %v5798 = vadd.f32 %v5713, %v5797
    %v5799 = vpop.f32.mrb[0].mxu0
    %5800 = vdwg.mxu0
    %s5801 = scalar_lea.vmem [#allocation9], 256
    %v5802 = vld [vmem:[%s5801] sm:$0xff]
    %v5803 = vld [vmem:[%s5801 + $0x8] sm:$0xff]
    %v5804 = vld [vmem:[%s5801 + $0x10] sm:$0xff]
    %v5805 = vld [vmem:[%s5801 + $0x18] sm:$0xff]
    %v5806 = vld [vmem:[%s5801 + $0x20] sm:$0xff]
    %v5807 = vld [vmem:[%s5801 + $0x28] sm:$0xff]
    %v5808 = vld [vmem:[%s5801 + $0x30] sm:$0xff]
    %v5809 = vld [vmem:[%s5801 + $0x38] sm:$0xff]
    %v5810 = vld [vmem:[%s5801 + $0x40] sm:$0xff]
    %v5811 = vld [vmem:[%s5801 + $0x48] sm:$0xff]
    %v5812 = vld [vmem:[%s5801 + $0x50] sm:$0xff]
    %v5813 = vld [vmem:[%s5801 + $0x58] sm:$0xff]
    %v5814 = vld [vmem:[%s5801 + $0x60] sm:$0xff]
    %v5815 = vld [vmem:[%s5801 + $0x68] sm:$0xff]
    %v5816 = vld [vmem:[%s5801 + $0x70] sm:$0xff]
    %v5817 = vld [vmem:[%s5801 + $0x78] sm:$0xff]
    %v5818 = vrot.slane %v5575, 2
    %v5819 = vrot.slane %v5576, 1
    %v5820 = vsel %vm5625, %v5819, %v5818
    %v5821 = vsel %vm5628, %v5577, %v5820
    %v5822 = vrot.slane %v5578, 7
    %v5823 = vsel %vm5631, %v5822, %v5821
    %v5824 = vrot.slane %v5579, 6
    %v5825 = vsel %vm5634, %v5824, %v5823
    %v5826 = vrot.slane %v5580, 5
    %v5827 = vsel %vm5637, %v5826, %v5825
    %v5828 = vrot.slane %v5581, 4
    %v5829 = vsel %vm5640, %v5828, %v5827
    %v5830 = vrot.slane %v5582, 3
    %v5831 = vsel %vm5643, %v5830, %v5829
    %5833 = vmatprep.subr.mxu0 0.0
    %5834 = vmatpush1.msra.mxu0 %v5802
    %5835 = vmatprep.subr.mxu0 0.0
    %5836 = vmatpush1.msra.mxu0 %v5803
    %5837 = vmatprep.subr.mxu0 0.0
    %5838 = vmatpush1.msra.mxu0 %v5804
    %5839 = vmatprep.subr.mxu0 0.0
    %5840 = vmatpush1.msra.mxu0 %v5805
    %5841 = vmatprep.subr.mxu0 0.0
    %5842 = vmatpush1.msra.mxu0 %v5806
    %5843 = vmatprep.subr.mxu0 0.0
    %5844 = vmatpush1.msra.mxu0 %v5807
    %5845 = vmatprep.subr.mxu0 0.0
    %5846 = vmatpush1.msra.mxu0 %v5808
    %5847 = vmatprep.subr.mxu0 0.0
    %5848 = vmatpush1.msra.mxu0 %v5809
    %5849 = vmatprep.subr.mxu0 0.0
    %5850 = vmatpush1.msra.mxu0 %v5810
    %5851 = vmatprep.subr.mxu0 0.0
    %5852 = vmatpush1.msra.mxu0 %v5811
    %5853 = vmatprep.subr.mxu0 0.0
    %5854 = vmatpush1.msra.mxu0 %v5812
    %5855 = vmatprep.subr.mxu0 0.0
    %5856 = vmatpush1.msra.mxu0 %v5813
    %5857 = vmatprep.subr.mxu0 0.0
    %5858 = vmatpush1.msra.mxu0 %v5814
    %5859 = vmatprep.subr.mxu0 0.0
    %5860 = vmatpush1.msra.mxu0 %v5815
    %5861 = vmatprep.subr.mxu0 0.0
    %5862 = vmatpush1.msra.mxu0 %v5816
    %5863 = vmatprep.subr.mxu0 0.0
    %5864 = vmatpush1.msra.mxu0 %v5817
    %5865 = vmatprep.subr.mxu0 0.0
    %5866 = vmatpush1.msra.mxu0 0.0
    %5867 = vmatprep.subr.mxu0 0.0
    %5868 = vmatpush1.msra.mxu0 0.0
    %5869 = vmatprep.subr.mxu0 0.0
    %5870 = vmatpush1.msra.mxu0 0.0
    %5871 = vmatprep.subr.mxu0 0.0
    %5872 = vmatpush1.msra.mxu0 0.0
    %5873 = vmatprep.subr.mxu0 0.0
    %5874 = vmatpush1.msra.mxu0 0.0
    %5875 = vmatprep.subr.mxu0 0.0
    %5876 = vmatpush1.msra.mxu0 0.0
    %5877 = vmatprep.subr.mxu0 0.0
    %5878 = vmatpush1.msra.mxu0 0.0
    %5879 = vmatprep.subr.mxu0 0.0
    %5880 = vmatpush1.msra.mxu0 0.0
    %5881 = vmatprep.subr.mxu0 0.0
    %5882 = vmatpush1.msra.mxu0 0.0
    %5883 = vmatprep.subr.mxu0 0.0
    %5884 = vmatpush1.msra.mxu0 0.0
    %5885 = vmatprep.subr.mxu0 0.0
    %5886 = vmatpush1.msra.mxu0 0.0
    %5887 = vmatprep.subr.mxu0 0.0
    %5888 = vmatpush1.msra.mxu0 0.0
    %5889 = vmatprep.subr.mxu0 0.0
    %5890 = vmatpush1.msra.mxu0 0.0
    %5891 = vmatprep.subr.mxu0 0.0
    %5892 = vmatpush1.msra.mxu0 0.0
    %5893 = vmatprep.subr.mxu0 0.0
    %5894 = vmatpush1.msra.mxu0 0.0
    %5895 = vmatprep.subr.mxu0 0.0
    %5896 = vmatpush1.msra.mxu0 0.0
    %5897 = vmatprep.mubr.f32.mxu0 0.0
    %5898 = vmatmul.mubr.f32.gmra.mrb[0].mxu0 %v5831
    %v5899 = vpop.f32.mrb[0].mxu0
    %v5900 = vadd.f32 0.0, %v5899
    %v5901 = vpop.f32.mrb[0].mxu0
    %5902 = vdwg.mxu0
    %v5903 = vadd.f32 %v5798, %v5900
    %s5904 = scalar_lea.vmem [#allocation9], 384
    %v5905 = vld [vmem:[%s5904] sm:$0xff]
    %v5906 = vld [vmem:[%s5904 + $0x8] sm:$0xff]
    %v5907 = vld [vmem:[%s5904 + $0x10] sm:$0xff]
    %v5908 = vld [vmem:[%s5904 + $0x18] sm:$0xff]
    %v5909 = vld [vmem:[%s5904 + $0x20] sm:$0xff]
    %v5910 = vld [vmem:[%s5904 + $0x28] sm:$0xff]
    %v5911 = vld [vmem:[%s5904 + $0x30] sm:$0xff]
    %v5912 = vld [vmem:[%s5904 + $0x38] sm:$0xff]
    %v5913 = vld [vmem:[%s5904 + $0x40] sm:$0xff]
    %v5914 = vld [vmem:[%s5904 + $0x48] sm:$0xff]
    %v5915 = vld [vmem:[%s5904 + $0x50] sm:$0xff]
    %v5916 = vld [vmem:[%s5904 + $0x58] sm:$0xff]
    %v5917 = vld [vmem:[%s5904 + $0x60] sm:$0xff]
    %v5918 = vld [vmem:[%s5904 + $0x68] sm:$0xff]
    %v5919 = vld [vmem:[%s5904 + $0x70] sm:$0xff]
    %v5920 = vld [vmem:[%s5904 + $0x78] sm:$0xff]
    %v5921 = vrot.slane %v5575, 3
    %v5922 = vrot.slane %v5576, 2
    %v5923 = vsel %vm5625, %v5922, %v5921
    %v5924 = vrot.slane %v5577, 1
    %v5925 = vsel %vm5628, %v5924, %v5923
    %v5926 = vsel %vm5631, %v5578, %v5925
    %v5927 = vrot.slane %v5579, 7
    %v5928 = vsel %vm5634, %v5927, %v5926
    %v5929 = vrot.slane %v5580, 6
    %v5930 = vsel %vm5637, %v5929, %v5928
    %v5931 = vrot.slane %v5581, 5
    %v5932 = vsel %vm5640, %v5931, %v5930
    %v5933 = vrot.slane %v5582, 4
    %v5934 = vsel %vm5643, %v5933, %v5932
    %5936 = vmatprep.subr.mxu0 0.0
    %5937 = vmatpush1.msra.mxu0 %v5905
    %5938 = vmatprep.subr.mxu0 0.0
    %5939 = vmatpush1.msra.mxu0 %v5906
    %5940 = vmatprep.subr.mxu0 0.0
    %5941 = vmatpush1.msra.mxu0 %v5907
    %5942 = vmatprep.subr.mxu0 0.0
    %5943 = vmatpush1.msra.mxu0 %v5908
    %5944 = vmatprep.subr.mxu0 0.0
    %5945 = vmatpush1.msra.mxu0 %v5909
    %5946 = vmatprep.subr.mxu0 0.0
    %5947 = vmatpush1.msra.mxu0 %v5910
    %5948 = vmatprep.subr.mxu0 0.0
    %5949 = vmatpush1.msra.mxu0 %v5911
    %5950 = vmatprep.subr.mxu0 0.0
    %5951 = vmatpush1.msra.mxu0 %v5912
    %5952 = vmatprep.subr.mxu0 0.0
    %5953 = vmatpush1.msra.mxu0 %v5913
    %5954 = vmatprep.subr.mxu0 0.0
    %5955 = vmatpush1.msra.mxu0 %v5914
    %5956 = vmatprep.subr.mxu0 0.0
    %5957 = vmatpush1.msra.mxu0 %v5915
    %5958 = vmatprep.subr.mxu0 0.0
    %5959 = vmatpush1.msra.mxu0 %v5916
    %5960 = vmatprep.subr.mxu0 0.0
    %5961 = vmatpush1.msra.mxu0 %v5917
    %5962 = vmatprep.subr.mxu0 0.0
    %5963 = vmatpush1.msra.mxu0 %v5918
    %5964 = vmatprep.subr.mxu0 0.0
    %5965 = vmatpush1.msra.mxu0 %v5919
    %5966 = vmatprep.subr.mxu0 0.0
    %5967 = vmatpush1.msra.mxu0 %v5920
    %5968 = vmatprep.subr.mxu0 0.0
    %5969 = vmatpush1.msra.mxu0 0.0
    %5970 = vmatprep.subr.mxu0 0.0
    %5971 = vmatpush1.msra.mxu0 0.0
    %5972 = vmatprep.subr.mxu0 0.0
    %5973 = vmatpush1.msra.mxu0 0.0
    %5974 = vmatprep.subr.mxu0 0.0
    %5975 = vmatpush1.msra.mxu0 0.0
    %5976 = vmatprep.subr.mxu0 0.0
    %5977 = vmatpush1.msra.mxu0 0.0
    %5978 = vmatprep.subr.mxu0 0.0
    %5979 = vmatpush1.msra.mxu0 0.0
    %5980 = vmatprep.subr.mxu0 0.0
    %5981 = vmatpush1.msra.mxu0 0.0
    %5982 = vmatprep.subr.mxu0 0.0
    %5983 = vmatpush1.msra.mxu0 0.0
    %5984 = vmatprep.subr.mxu0 0.0
    %5985 = vmatpush1.msra.mxu0 0.0
    %5986 = vmatprep.subr.mxu0 0.0
    %5987 = vmatpush1.msra.mxu0 0.0
    %5988 = vmatprep.subr.mxu0 0.0
    %5989 = vmatpush1.msra.mxu0 0.0
    %5990 = vmatprep.subr.mxu0 0.0
    %5991 = vmatpush1.msra.mxu0 0.0
    %5992 = vmatprep.subr.mxu0 0.0
    %5993 = vmatpush1.msra.mxu0 0.0
    %5994 = vmatprep.subr.mxu0 0.0
    %5995 = vmatpush1.msra.mxu0 0.0
    %5996 = vmatprep.subr.mxu0 0.0
    %5997 = vmatpush1.msra.mxu0 0.0
    %5998 = vmatprep.subr.mxu0 0.0
    %5999 = vmatpush1.msra.mxu0 0.0
    %6000 = vmatprep.mubr.f32.mxu0 0.0
    %6001 = vmatmul.mubr.f32.gmra.mrb[0].mxu0 %v5934
    %v6002 = vpop.f32.mrb[0].mxu0
    %v6003 = vadd.f32 0.0, %v6002
    %v6004 = vpop.f32.mrb[0].mxu0
    %6005 = vdwg.mxu0
    %v6006 = vadd.f32 %v5903, %v6003
    %s6007 = scalar_lea.vmem [#allocation9], 512
    %v6008 = vld [vmem:[%s6007] sm:$0xff]
    %v6009 = vld [vmem:[%s6007 + $0x8] sm:$0xff]
    %v6010 = vld [vmem:[%s6007 + $0x10] sm:$0xff]
    %v6011 = vld [vmem:[%s6007 + $0x18] sm:$0xff]
    %v6012 = vld [vmem:[%s6007 + $0x20] sm:$0xff]
    %v6013 = vld [vmem:[%s6007 + $0x28] sm:$0xff]
    %v6014 = vld [vmem:[%s6007 + $0x30] sm:$0xff]
    %v6015 = vld [vmem:[%s6007 + $0x38] sm:$0xff]
    %v6016 = vld [vmem:[%s6007 + $0x40] sm:$0xff]
    %v6017 = vld [vmem:[%s6007 + $0x48] sm:$0xff]
    %v6018 = vld [vmem:[%s6007 + $0x50] sm:$0xff]
    %v6019 = vld [vmem:[%s6007 + $0x58] sm:$0xff]
    %v6020 = vld [vmem:[%s6007 + $0x60] sm:$0xff]
    %v6021 = vld [vmem:[%s6007 + $0x68] sm:$0xff]
    %v6022 = vld [vmem:[%s6007 + $0x70] sm:$0xff]
    %v6023 = vld [vmem:[%s6007 + $0x78] sm:$0xff]
    %v6024 = vrot.slane %v5575, 4
    %v6025 = vrot.slane %v5576, 3
    %v6026 = vsel %vm5625, %v6025, %v6024
    %v6027 = vrot.slane %v5577, 2
    %v6028 = vsel %vm5628, %v6027, %v6026
    %v6029 = vrot.slane %v5578, 1
    %v6030 = vsel %vm5631, %v6029, %v6028
    %v6031 = vsel %vm5634, %v5579, %v6030
    %v6032 = vrot.slane %v5580, 7
    %v6033 = vsel %vm5637, %v6032, %v6031
    %v6034 = vrot.slane %v5581, 6
    %v6035 = vsel %vm5640, %v6034, %v6033
    %v6036 = vrot.slane %v5582, 5
    %v6037 = vsel %vm5643, %v6036, %v6035
    %6039 = vmatprep.subr.mxu0 0.0
    %6040 = vmatpush1.msra.mxu0 %v6008
    %6041 = vmatprep.subr.mxu0 0.0
    %6042 = vmatpush1.msra.mxu0 %v6009
    %6043 = vmatprep.subr.mxu0 0.0
    %6044 = vmatpush1.msra.mxu0 %v6010
    %6045 = vmatprep.subr.mxu0 0.0
    %6046 = vmatpush1.msra.mxu0 %v6011
    %6047 = vmatprep.subr.mxu0 0.0
    %6048 = vmatpush1.msra.mxu0 %v6012
    %6049 = vmatprep.subr.mxu0 0.0
    %6050 = vmatpush1.msra.mxu0 %v6013
    %6051 = vmatprep.subr.mxu0 0.0
    %6052 = vmatpush1.msra.mxu0 %v6014
    %6053 = vmatprep.subr.mxu0 0.0
    %6054 = vmatpush1.msra.mxu0 %v6015
    %6055 = vmatprep.subr.mxu0 0.0
    %6056 = vmatpush1.msra.mxu0 %v6016
    %6057 = vmatprep.subr.mxu0 0.0
    %6058 = vmatpush1.msra.mxu0 %v6017
    %6059 = vmatprep.subr.mxu0 0.0
    %6060 = vmatpush1.msra.mxu0 %v6018
    %6061 = vmatprep.subr.mxu0 0.0
    %6062 = vmatpush1.msra.mxu0 %v6019
    %6063 = vmatprep.subr.mxu0 0.0
    %6064 = vmatpush1.msra.mxu0 %v6020
    %6065 = vmatprep.subr.mxu0 0.0
    %6066 = vmatpush1.msra.mxu0 %v6021
    %6067 = vmatprep.subr.mxu0 0.0
    %6068 = vmatpush1.msra.mxu0 %v6022
    %6069 = vmatprep.subr.mxu0 0.0
    %6070 = vmatpush1.msra.mxu0 %v6023
    %6071 = vmatprep.subr.mxu0 0.0
    %6072 = vmatpush1.msra.mxu0 0.0
    %6073 = vmatprep.subr.mxu0 0.0
    %6074 = vmatpush1.msra.mxu0 0.0
    %6075 = vmatprep.subr.mxu0 0.0
    %6076 = vmatpush1.msra.mxu0 0.0
    %6077 = vmatprep.subr.mxu0 0.0
    %6078 = vmatpush1.msra.mxu0 0.0
    %6079 = vmatprep.subr.mxu0 0.0
    %6080 = vmatpush1.msra.mxu0 0.0
    %6081 = vmatprep.subr.mxu0 0.0
    %6082 = vmatpush1.msra.mxu0 0.0
    %6083 = vmatprep.subr.mxu0 0.0
    %6084 = vmatpush1.msra.mxu0 0.0
    %6085 = vmatprep.subr.mxu0 0.0
    %6086 = vmatpush1.msra.mxu0 0.0
    %6087 = vmatprep.subr.mxu0 0.0
    %6088 = vmatpush1.msra.mxu0 0.0
    %6089 = vmatprep.subr.mxu0 0.0
    %6090 = vmatpush1.msra.mxu0 0.0
    %6091 = vmatprep.subr.mxu0 0.0
    %6092 = vmatpush1.msra.mxu0 0.0
    %6093 = vmatprep.subr.mxu0 0.0
    %6094 = vmatpush1.msra.mxu0 0.0
    %6095 = vmatprep.subr.mxu0 0.0
    %6096 = vmatpush1.msra.mxu0 0.0
    %6097 = vmatprep.subr.mxu0 0.0
    %6098 = vmatpush1.msra.mxu0 0.0
    %6099 = vmatprep.subr.mxu0 0.0
    %6100 = vmatpush1.msra.mxu0 0.0
    %6101 = vmatprep.subr.mxu0 0.0
    %6102 = vmatpush1.msra.mxu0 0.0
    %6103 = vmatprep.mubr.f32.mxu0 0.0
    %6104 = vmatmul.mubr.f32.gmra.mrb[0].mxu0 %v6037
    %v6105 = vpop.f32.mrb[0].mxu0
    %v6106 = vadd.f32 0.0, %v6105
    %v6107 = vpop.f32.mrb[0].mxu0
    %6108 = vdwg.mxu0
    %v6109 = vadd.f32 %v6006, %v6106
    %v6110 = vld [vmem:[%s8] sm:$0x1]
    %v6112 = vlaneseq
    %v6113 = vshrl.u32 %v6112, 7
    %v6114 = vsub.s32 0, %v6113
    %v6115 = vrot.slane %v6110, %v6114
    %v6117 = vadd.f32 %v6109, %v6115
    %v6118 = vmax.f32 %v6117, 0.0
    %v6119 = vld [vmem:[#allocation11] sm:$0xff]
    %v6120 = vld [vmem:[#allocation11 + $0x8] sm:$0xff]
    %v6121 = vld [vmem:[#allocation11 + $0x10] sm:$0xff]
    %v6122 = vld [vmem:[#allocation11 + $0x18] sm:$0xff]
    %v6123 = vld [vmem:[#allocation11 + $0x20] sm:$0xff]
    %v6124 = vld [vmem:[#allocation11 + $0x28] sm:$0xff]
    %v6125 = vld [vmem:[#allocation11 + $0x30] sm:$0xff]
    %v6126 = vld [vmem:[#allocation11 + $0x38] sm:$0xff]
    %v6127 = vld [vmem:[#allocation11 + $0x40] sm:$0xff]
    %v6128 = vld [vmem:[#allocation11 + $0x48] sm:$0xff]
    %v6129 = vld [vmem:[#allocation11 + $0x50] sm:$0xff]
    %v6130 = vld [vmem:[#allocation11 + $0x58] sm:$0xff]
    %v6131 = vld [vmem:[#allocation11 + $0x60] sm:$0xff]
    %v6132 = vld [vmem:[#allocation11 + $0x68] sm:$0xff]
    %v6133 = vld [vmem:[#allocation11 + $0x70] sm:$0xff]
    %v6134 = vld [vmem:[#allocation11 + $0x78] sm:$0xff]
    %v6135 = vld [vmem:[#allocation12] sm:$0x1]
    %v6137 = vlaneseq
    %v6138 = vshrl.u32 %v6137, 7
    %v6139 = vsub.s32 0, %v6138
    %v6140 = vrot.slane %v6135, %v6139
    %6142 = vmatprep.subr.mxu0 0.0
    %6143 = vmatpush1.msra.mxu0 %v6119
    %6144 = vmatprep.subr.mxu0 0.0
    %6145 = vmatpush1.msra.mxu0 %v6120
    %6146 = vmatprep.subr.mxu0 0.0
    %6147 = vmatpush1.msra.mxu0 %v6121
    %6148 = vmatprep.subr.mxu0 0.0
    %6149 = vmatpush1.msra.mxu0 %v6122
    %6150 = vmatprep.subr.mxu0 0.0
    %6151 = vmatpush1.msra.mxu0 %v6123
    %6152 = vmatprep.subr.mxu0 0.0
    %6153 = vmatpush1.msra.mxu0 %v6124
    %6154 = vmatprep.subr.mxu0 0.0
    %6155 = vmatpush1.msra.mxu0 %v6125
    %6156 = vmatprep.subr.mxu0 0.0
    %6157 = vmatpush1.msra.mxu0 %v6126
    %6158 = vmatprep.subr.mxu0 0.0
    %6159 = vmatpush1.msra.mxu0 %v6127
    %6160 = vmatprep.subr.mxu0 0.0
    %6161 = vmatpush1.msra.mxu0 %v6128
    %6162 = vmatprep.subr.mxu0 0.0
    %6163 = vmatpush1.msra.mxu0 %v6129
    %6164 = vmatprep.subr.mxu0 0.0
    %6165 = vmatpush1.msra.mxu0 %v6130
    %6166 = vmatprep.subr.mxu0 0.0
    %6167 = vmatpush1.msra.mxu0 %v6131
    %6168 = vmatprep.subr.mxu0 0.0
    %6169 = vmatpush1.msra.mxu0 %v6132
    %6170 = vmatprep.subr.mxu0 0.0
    %6171 = vmatpush1.msra.mxu0 %v6133
    %6172 = vmatprep.subr.mxu0 0.0
    %6173 = vmatpush1.msra.mxu0 %v6134
    %6174 = vmatprep.subr.mxu0 0.0
    %6175 = vmatpush1.msra.mxu0 0.0
    %6176 = vmatprep.subr.mxu0 0.0
    %6177 = vmatpush1.msra.mxu0 0.0
    %6178 = vmatprep.subr.mxu0 0.0
    %6179 = vmatpush1.msra.mxu0 0.0
    %6180 = vmatprep.subr.mxu0 0.0
    %6181 = vmatpush1.msra.mxu0 0.0
    %6182 = vmatprep.subr.mxu0 0.0
    %6183 = vmatpush1.msra.mxu0 0.0
    %6184 = vmatprep.subr.mxu0 0.0
    %6185 = vmatpush1.msra.mxu0 0.0
    %6186 = vmatprep.subr.mxu0 0.0
    %6187 = vmatpush1.msra.mxu0 0.0
    %6188 = vmatprep.subr.mxu0 0.0
    %6189 = vmatpush1.msra.mxu0 0.0
    %6190 = vmatprep.subr.mxu0 0.0
    %6191 = vmatpush1.msra.mxu0 0.0
    %6192 = vmatprep.subr.mxu0 0.0
    %6193 = vmatpush1.msra.mxu0 0.0
    %6194 = vmatprep.subr.mxu0 0.0
    %6195 = vmatpush1.msra.mxu0 0.0
    %6196 = vmatprep.subr.mxu0 0.0
    %6197 = vmatpush1.msra.mxu0 0.0
    %6198 = vmatprep.subr.mxu0 0.0
    %6199 = vmatpush1.msra.mxu0 0.0
    %6200 = vmatprep.subr.mxu0 0.0
    %6201 = vmatpush1.msra.mxu0 0.0
    %6202 = vmatprep.subr.mxu0 0.0
    %6203 = vmatpush1.msra.mxu0 0.0
    %6204 = vmatprep.subr.mxu0 0.0
    %6205 = vmatpush1.msra.mxu0 0.0
    %6206 = vmatprep.mubr.f32.mxu0 0.0
    %6207 = vmatmul.mubr.f32.gmra.mrb[0].mxu0 %v6118
    %v6208 = vpop.f32.mrb[0].mxu0
    %v6209 = vadd.f32 %v6140, %v6208
    %v6210 = vpop.f32.mrb[0].mxu0
    %6211 = vdwg.mxu0
    %v6212 = vmax.f32 %v6209, 0.0
    %v6213 = vld [vmem:[#allocation14] sm:$0xff]
    %v6214 = vld [vmem:[#allocation14 + $0x8] sm:$0xff]
    %v6215 = vld [vmem:[#allocation14 + $0x10] sm:$0xff]
    %v6216 = vld [vmem:[#allocation14 + $0x18] sm:$0xff]
    %v6217 = vld [vmem:[#allocation14 + $0x20] sm:$0xff]
    %v6218 = vld [vmem:[#allocation14 + $0x28] sm:$0xff]
    %v6219 = vld [vmem:[#allocation14 + $0x30] sm:$0xff]
    %v6220 = vld [vmem:[#allocation14 + $0x38] sm:$0xff]
    %v6221 = vld [vmem:[#allocation14 + $0x40] sm:$0xff]
    %v6222 = vld [vmem:[#allocation14 + $0x48] sm:$0xff]
    %v6223 = vld [vmem:[#allocation14 + $0x50] sm:$0xff]
    %v6224 = vld [vmem:[#allocation14 + $0x58] sm:$0xff]
    %v6225 = vld [vmem:[#allocation14 + $0x60] sm:$0xff]
    %v6226 = vld [vmem:[#allocation14 + $0x68] sm:$0xff]
    %v6227 = vld [vmem:[#allocation14 + $0x70] sm:$0xff]
    %v6228 = vld [vmem:[#allocation14 + $0x78] sm:$0xff]
    %v6229 = vld [vmem:[#allocation15] sm:$0x1]
    %v6231 = vlaneseq
    %v6232 = vshrl.u32 %v6231, 7
    %v6233 = vsub.s32 0, %v6232
    %v6234 = vrot.slane %v6229, %v6233
    %6236 = vmatprep.subr.mxu0 0.0
    %6237 = vmatpush1.msra.mxu0 %v6213
    %6238 = vmatprep.subr.mxu0 0.0
    %6239 = vmatpush1.msra.mxu0 %v6214
    %6240 = vmatprep.subr.mxu0 0.0
    %6241 = vmatpush1.msra.mxu0 %v6215
    %6242 = vmatprep.subr.mxu0 0.0
    %6243 = vmatpush1.msra.mxu0 %v6216
    %6244 = vmatprep.subr.mxu0 0.0
    %6245 = vmatpush1.msra.mxu0 %v6217
    %6246 = vmatprep.subr.mxu0 0.0
    %6247 = vmatpush1.msra.mxu0 %v6218
    %6248 = vmatprep.subr.mxu0 0.0
    %6249 = vmatpush1.msra.mxu0 %v6219
    %6250 = vmatprep.subr.mxu0 0.0
    %6251 = vmatpush1.msra.mxu0 %v6220
    %6252 = vmatprep.subr.mxu0 0.0
    %6253 = vmatpush1.msra.mxu0 %v6221
    %6254 = vmatprep.subr.mxu0 0.0
    %6255 = vmatpush1.msra.mxu0 %v6222
    %6256 = vmatprep.subr.mxu0 0.0
    %6257 = vmatpush1.msra.mxu0 %v6223
    %6258 = vmatprep.subr.mxu0 0.0
    %6259 = vmatpush1.msra.mxu0 %v6224
    %6260 = vmatprep.subr.mxu0 0.0
    %6261 = vmatpush1.msra.mxu0 %v6225
    %6262 = vmatprep.subr.mxu0 0.0
    %6263 = vmatpush1.msra.mxu0 %v6226
    %6264 = vmatprep.subr.mxu0 0.0
    %6265 = vmatpush1.msra.mxu0 %v6227
    %6266 = vmatprep.subr.mxu0 0.0
    %6267 = vmatpush1.msra.mxu0 %v6228
    %6268 = vmatprep.subr.mxu0 0.0
    %6269 = vmatpush1.msra.mxu0 0.0
    %6270 = vmatprep.subr.mxu0 0.0
    %6271 = vmatpush1.msra.mxu0 0.0
    %6272 = vmatprep.subr.mxu0 0.0
    %6273 = vmatpush1.msra.mxu0 0.0
    %6274 = vmatprep.subr.mxu0 0.0
    %6275 = vmatpush1.msra.mxu0 0.0
    %6276 = vmatprep.subr.mxu0 0.0
    %6277 = vmatpush1.msra.mxu0 0.0
    %6278 = vmatprep.subr.mxu0 0.0
    %6279 = vmatpush1.msra.mxu0 0.0
    %6280 = vmatprep.subr.mxu0 0.0
    %6281 = vmatpush1.msra.mxu0 0.0
    %6282 = vmatprep.subr.mxu0 0.0
    %6283 = vmatpush1.msra.mxu0 0.0
    %6284 = vmatprep.subr.mxu0 0.0
    %6285 = vmatpush1.msra.mxu0 0.0
    %6286 = vmatprep.subr.mxu0 0.0
    %6287 = vmatpush1.msra.mxu0 0.0
    %6288 = vmatprep.subr.mxu0 0.0
    %6289 = vmatpush1.msra.mxu0 0.0
    %6290 = vmatprep.subr.mxu0 0.0
    %6291 = vmatpush1.msra.mxu0 0.0
    %6292 = vmatprep.subr.mxu0 0.0
    %6293 = vmatpush1.msra.mxu0 0.0
    %6294 = vmatprep.subr.mxu0 0.0
    %6295 = vmatpush1.msra.mxu0 0.0
    %6296 = vmatprep.subr.mxu0 0.0
    %6297 = vmatpush1.msra.mxu0 0.0
    %6298 = vmatprep.subr.mxu0 0.0
    %6299 = vmatpush1.msra.mxu0 0.0
    %6300 = vmatprep.mubr.f32.mxu0 0.0
    %6301 = vmatmul.mubr.f32.gmra.mrb[0].mxu0 %v6212
    %v6302 = vpop.f32.mrb[0].mxu0
    %v6303 = vadd.f32 %v6234, %v6302
    %v6304 = vpop.f32.mrb[0].mxu0
    %6305 = vdwg.mxu0
    %6306 = vst [vmem:[%s13] sm:$0xff] %v6303
    // Predicated region
    $region86: #{cnn_forward.1} parent=1 // pred_check
      _
    $region87: #{cnn_forward.1} parent=1 // pred_check_branch
      %6308 = sbr.rel (0) target = $region89
    $region88: #{cnn_forward.1} parent=1 // pred_region
      _
    $region89: #{cnn_forward.1} parent=1 // pred_fallthru
      _
    // Predicated region
    $region90: #{cnn_forward.1} parent=1 // pred_check
      _
    $region91: #{cnn_forward.1} parent=1 // pred_check_branch
      %6310 = sbr.rel (0) target = $region93
    $region92: #{cnn_forward.1} parent=1 // pred_region
      _
    $region93: #{cnn_forward.1} parent=1 // pred_fallthru
      _
    %6311 = vsyncpa [#allocation5], 1
    %6312 = vsyncpa [#allocation7], 1
    %6313 = vsyncpa [#allocation10], 1
    %6314 = vsyncpa [#allocation13], 1
    %6315 = vsyncpa [#allocation16], 1

</llo_original>
